<compile_context>
chip_gen: v7x
topology: tpu7x:2x2x1
jax: 0.10.0
libtpu: 0.0.40
codegen_flags: <defaults>
</compile_context>

<pallas_src>
import numpy as np

import jax
import jax.numpy as jnp
from jax.experimental import pallas as pl
from jax.experimental.pallas import tpu as pltpu


# ---------------------------------------------------------------------------
# Geometry: activations live in VMEM as (C, N*Hp*Wp), channel-major with a
# flattened zero-padded spatial grid in lanes (image at rows/cols [1, H]).
# ---------------------------------------------------------------------------
H1, W1, HP1, WP1 = 28, 28, 32, 32   # layer1 input grid
H2, W2, HP2, WP2 = 14, 14, 16, 16   # layer2 input grid (= layer1 pooled output)
H3, W3, HP3, WP3 = 7, 7, 16, 16     # layer3 input grid (= layer2 pooled output)
PO3 = 3                             # layer3 pooled output is 3x3 -> flatten 128*3*3

# Geometry contract for the cyclic-roll + one-hot-gather scheme: every padded
# grid keeps a >=1-pixel zero ring and pooling / flatten only ever read
# interior (valid) positions, so roll wrap-around is never observed.
assert HP1 >= H1 + 2 and HP2 >= H2 + 2 and HP3 >= H3 + 2
assert (H2, H3, PO3) == (H1 // 2, H2 // 2, H3 // 2)


# ---------------------------------------------------------------------------
# The fused kernel
# ---------------------------------------------------------------------------
def _fused_cnn_kernel(
    x_ref,                                   # (1, N*1024)              f32
    wc1_ref, g1_ref, t1_ref,                 # (32,9) bf16, (32,1)x2 f32
    wc2_ref, g2_ref, t2_ref,                 # (64,288) bf16, (64,1)x2 f32
    wc3_ref, g3_ref, t3_ref,                 # (128,576) bf16, (128,1)x2 f32
    pool1_hbm, pool2_hbm, fc1w_hbm, fc2w_hbm,  # pl.ANY (HBM) -> manual DMA
    fc1b_ref, fc2b_ref, fc3w_ref, fc3b_ref,  # (1,1024),(1,512) f32, (512,10) bf16, (1,10) f32
    out_ref,                                 # (N, 10) f32
    pool1_vm, pool2_vm, fc1w_vm, fc2w_vm,    # VMEM landing buffers (bf16)
    sems,                                    # DMA semaphores (4,)
):
    f32, bf16 = jnp.float32, jnp.bfloat16
    n = out_ref.shape[0]
    l1, l2, l3 = n * HP1 * WP1, n * HP2 * WP2, n * HP3 * WP3

    # Kick off the ~4 MB of pool-gather / fc weight DMAs now; they complete
    # underneath the conv stack instead of serializing before compute starts.
    cps = [
        pltpu.make_async_copy(pool1_hbm, pool1_vm, sems.at[0]),
        pltpu.make_async_copy(pool2_hbm, pool2_vm, sems.at[1]),
        pltpu.make_async_copy(fc1w_hbm, fc1w_vm, sems.at[2]),
        pltpu.make_async_copy(fc2w_hbm, fc2w_vm, sems.at[3]),
    ]
    for cp in cps:
        cp.start()

    def shifted(v, off, length):
        # shifted[p] == v[p + off] (cyclic).  Wrap-around can only land on
        # padded-border positions that the one-hot gathers / row picks skip.
        if off == 0:
            return v
        return pltpu.roll(v, shift=(-off) % length, axis=1)

    def conv_bn_relu_winmax(x_cm, wc_ref, g_ref, t_ref, wp, length):
        # Conv2d(3x3, pad=1) as ONE bf16 MXU dot on the tap-stacked activation
        # (9*Cin, L): feature index = k*Cin + ci with k = ky*3 + kx.
        stacked = jnp.concatenate(
            [shifted(x_cm, (ky - 1) * wp + (kx - 1), length)
             for ky in range(3) for kx in range(3)],
            axis=0)
        conv = jnp.dot(wc_ref[...], stacked.astype(bf16),
                       preferred_element_type=f32)
        # Folded BatchNorm (eval running stats) + ReLU.
        a = jnp.maximum(conv * g_ref[...] + t_ref[...], 0.0)
        # MaxPool2d(2,2): 2x2 windowed max at every position; the one-hot
        # gather / row picks downstream select the valid window origins.
        return jnp.maximum(jnp.maximum(a, shifted(a, 1, length)),
                           jnp.maximum(shifted(a, wp, length),
                                       shifted(a, wp + 1, length)))

    def pool_gather(mw, pool_vm, lin_img):
        # Batch-independent one-hot (Lin_img, Lout_img) gather, applied per
        # image (the map is block-diagonal over the batch) and re-concatenated
        # along lanes.  Produces the next layer's zero-padded input grid.
        mw_bf = mw.astype(bf16)
        pieces = [jnp.dot(mw_bf[:, i * lin_img:(i + 1) * lin_img], pool_vm[...],
                          preferred_element_type=f32) for i in range(n)]
        return jnp.concatenate(pieces, axis=1)

    # --- layer 1: Conv(1->32) + BN + ReLU + MaxPool -------------------------
    m1 = conv_bn_relu_winmax(x_ref[...], wc1_ref, g1_ref, t1_ref, WP1, l1)
    cps[0].wait()
    x2 = pool_gather(m1, pool1_vm, HP1 * WP1)            # (32, N*256) f32

    # --- layer 2: Conv(32->64) + BN + ReLU + MaxPool ------------------------
    m2 = conv_bn_relu_winmax(x2, wc2_ref, g2_ref, t2_ref, WP2, l2)
    cps[1].wait()
    x3 = pool_gather(m2, pool2_vm, HP2 * WP2)            # (64, N*256) f32

    # --- layer 3: Conv(64->128) + BN + ReLU + MaxPool -----------------------
    m3 = conv_bn_relu_winmax(x3, wc3_ref, g3_ref, t3_ref, WP3, l3)  # (128, N*256)

    # --- flatten to batch-major (N, 1152) ------------------------------------
    # One (128, N*256) -> (N*256, 128) transpose, then pick the 9 pooled rows
    # per image and lane-concatenate; fc1's weight rows were permuted to the
    # matching s*128 + c feature order in prepare_params.
    m3t = m3.T                                            # (N*256, 128) f32
    img_rows = []
    for img in range(n):
        base = img * HP3 * WP3
        picks = []
        for yo in range(PO3):
            for xo in range(PO3):
                p = base + (2 * yo + 1) * WP3 + (2 * xo + 1)
                picks.append(m3t[p:p + 1, :])             # (1, 128)
        img_rows.append(jnp.concatenate(picks, axis=1))   # (1, 1152)
    a3 = jnp.concatenate(img_rows, axis=0).astype(bf16)   # (N, 1152)

    # --- fc1 -> Dropout(eval identity) -> fc2 -> fc3, batch-major ------------
    cps[2].wait()
    h1 = jnp.dot(a3, fc1w_vm[...], preferred_element_type=f32) + fc1b_ref[...]
    # TODO(synk): Dropout(0.5) is eval-mode identity; a training-mode mask
    # would use pltpu.prng_seed / pltpu.prng_random_bits here.
    cps[3].wait()
    h2 = jnp.dot(h1.astype(bf16), fc2w_vm[...],
                 preferred_element_type=f32) + fc2b_ref[...]
    out_ref[...] = jnp.dot(h2.astype(bf16), fc3w_ref[...],
                           preferred_element_type=f32) + fc3b_ref[...]


def _fused_forward(x_flat, p, n_batch):
    args = (x_flat,
            p["wc1"], p["bn1_scale"], p["bn1_shift"],
            p["wc2"], p["bn2_scale"], p["bn2_shift"],
            p["wc3"], p["bn3_scale"], p["bn3_shift"],
            p["pool1"], p["pool2"], p["fc1_w"], p["fc2_w"],
            p["fc1_b"], p["fc2_b"], p["fc3_w"], p["fc3_b"])
    vmem = lambda: pl.BlockSpec(memory_space=pltpu.MemorySpace.VMEM)
    hbm = lambda: pl.BlockSpec(memory_space=pl.ANY)
    # x + conv/BN params go straight to VMEM (small, needed immediately);
    # pool1/pool2/fc1_w/fc2_w stay in HBM and are manually overlapped.
    in_specs = [vmem()] * 10 + [hbm()] * 4 + [vmem()] * 4
    # NOTE(v7x): for batch >> 2 add a leading "parallel" batch grid axis so the
    # second TensorCore is used; at batch=2 a gridless call is latency-optimal.
    return pl.pallas_call(
        _fused_cnn_kernel,
        out_shape=jax.ShapeDtypeStruct((n_batch, 10), jnp.float32),
        in_specs=in_specs,
        out_specs=vmem(),
        scratch_shapes=[
            pltpu.VMEM(tuple(p["pool1"].shape), jnp.bfloat16),
            pltpu.VMEM(tuple(p["pool2"].shape), jnp.bfloat16),
            pltpu.VMEM(tuple(p["fc1_w"].shape), jnp.bfloat16),
            pltpu.VMEM(tuple(p["fc2_w"].shape), jnp.bfloat16),
            pltpu.SemaphoreType.DMA((4,)),
        ],
        compiler_params=pltpu.CompilerParams(
            vmem_limit_bytes=32 * 1024 * 1024),
    )(*args)


def fashion_mnist_cnn_forward(x_nchw, prepped):
    """Forward pass matching FashionMNISTCNN (inference). x: (N, 1, 28, 28)."""
    assert x_nchw.shape[1:] == (1, H1, W1), x_nchw.shape
    n = x_nchw.shape[0]
    # Tiny boundary prep: zero-pad 28x28 -> 32x32 and flatten to (1, N*1024).
    xp = jnp.pad(x_nchw[:, 0, :, :],
                 ((0, 0), (1, HP1 - H1 - 1), (1, WP1 - W1 - 1)))
    x_flat = xp.reshape(1, n * HP1 * WP1).astype(jnp.float32)
    return _fused_forward(x_flat, prepped, n)            # (N, 10)


# ---------------------------------------------------------------------------
# One-time parameter preparation (eager, outside the jitted per-call path):
# BN folding, tap-stacked conv weights, fc permutation/transpose, bf16 casts,
# batch-independent pooling gather maps.
# ---------------------------------------------------------------------------
def _conv_weight_stack(w_oihw):
    # (Cout, Cin, 3, 3) -> (Cout, 9*Cin) with column index k*Cin + ci.
    cout, cin = w_oihw.shape[0], w_oihw.shape[1]
    return (jnp.transpose(w_oihw, (0, 2, 3, 1))
            .reshape(cout, 9 * cin).astype(jnp.bfloat16))


def _bn_fold(gamma, beta, mean, var, conv_b, eps=1e-5):
    scale = gamma / jnp.sqrt(var + eps)
    shift = beta + scale * (conv_b - mean)
    c = scale.shape[0]
    return (scale.reshape(c, 1).astype(jnp.float32),
            shift.reshape(c, 1).astype(jnp.float32))


def _pool_gather_matrix(hp_in, wp_in, h_out, w_out, hp_out, wp_out):
    """Batch-independent one-hot (Hp_in*Wp_in, Hp_out*Wp_out): 2x2-window
    origin on the padded input grid -> (1+yo, 1+xo) on the next layer's padded
    grid; padding rows/cols of the output stay exactly zero."""
    s = np.zeros((hp_in * wp_in, hp_out * wp_out), np.float32)
    for yo in range(h_out):
        for xo in range(w_out):
            p = (2 * yo + 1) * wp_in + (2 * xo + 1)
            q = (yo + 1) * wp_out + (xo + 1)
            s[p, q] = 1.0
    return jnp.asarray(s, jnp.bfloat16)


def prepare_params(params):
    prepped = {}
    for i in (1, 2, 3):
        p = params[f"layer{i}"]
        prepped[f"wc{i}"] = _conv_weight_stack(p["conv_w"])
        sc, sh = _bn_fold(p["bn_gamma"], p["bn_beta"], p["bn_mean"],
                          p["bn_var"], p["conv_b"])
        prepped[f"bn{i}_scale"] = sc
        prepped[f"bn{i}_shift"] = sh
    prepped["pool1"] = _pool_gather_matrix(HP1, WP1, H2, W2, HP2, WP2)  # (1024,256)
    prepped["pool2"] = _pool_gather_matrix(HP2, WP2, H3, W3, HP3, WP3)  # (256,256)
    # fc1: PyTorch feature index c*9 + s  ->  kernel feature index s*128 + c,
    # stored as (in, out) for the batch-major dot.
    w1 = params["fc1_w"].reshape(1024, 128, 9)              # [out, c, s]
    prepped["fc1_w"] = (jnp.transpose(w1, (2, 1, 0))        # [s, c, out]
                        .reshape(9 * 128, 1024).astype(jnp.bfloat16))
    prepped["fc1_b"] = params["fc1_b"].reshape(1, 1024).astype(jnp.float32)
    prepped["fc2_w"] = params["fc2_w"].T.astype(jnp.bfloat16)   # (1024, 512)
    prepped["fc2_b"] = params["fc2_b"].reshape(1, 512).astype(jnp.float32)
    prepped["fc3_w"] = params["fc3_w"].T.astype(jnp.bfloat16)   # (512, 10)
    prepped["fc3_b"] = params["fc3_b"].reshape(1, 10).astype(jnp.float32)
    return prepped
    # NOTE(perf): on v5e/v6e fc1_w/fc2_w could additionally be int8 with
    # per-row scales (native MXU int8); on v7x use fp8 or keep bf16 (no int MXU).


# ---------------------------------------------------------------------------
# Pure-JAX f32 reference (for a tolerance check -- bf16 weights/activations
# in the kernel mean results match to ~1e-2, not bitwise).
# ---------------------------------------------------------------------------
def _reference_forward(x, params):
    def block(y, p):
        y = jax.lax.conv_general_dilated(
            y, p["conv_w"], window_strides=(1, 1), padding=((1, 1), (1, 1)),
            dimension_numbers=("NCHW", "OIHW", "NCHW"))
        y = y + p["conv_b"][None, :, None, None]
        scale = p["bn_gamma"] / jnp.sqrt(p["bn_var"] + 1e-5)
        y = (scale[None, :, None, None] * (y - p["bn_mean"][None, :, None, None])
             + p["bn_beta"][None, :, None, None])
        y = jnp.maximum(y, 0.0)
        return jax.lax.reduce_window(y, -jnp.inf, jax.lax.max,
                                     (1, 1, 2, 2), (1, 1, 2, 2), "VALID")

    out = x
    for i in (1, 2, 3):
        out = block(out, params[f"layer{i}"])
    out = out.reshape(out.shape[0], -1)
    out = out @ params["fc1_w"].T + params["fc1_b"]      # Dropout eval = identity
    out = out @ params["fc2_w"].T + params["fc2_b"]
    return out @ params["fc3_w"].T + params["fc3_b"]


# ---------------------------------------------------------------------------
# Deterministic parameter initialization (shapes from the PyTorch __init__)
# ---------------------------------------------------------------------------
def init_params(key):
    def nrm(k, shape, scale=0.05):
        return scale * jax.random.normal(k, shape, dtype=jnp.float32)

    keys = iter(jax.random.split(key, 32))
    params = {}
    conv_cfg = [(1, 32), (32, 64), (64, 128)]
    for i, (cin, cout) in enumerate(conv_cfg, start=1):
        params[f"layer{i}"] = {
            "conv_w": nrm(next(keys), (cout, cin, 3, 3)),
            "conv_b": nrm(next(keys), (cout,)),
            "bn_gamma": 1.0 + nrm(next(keys), (cout,), 0.1),
            "bn_beta": nrm(next(keys), (cout,), 0.1),
            "bn_mean": nrm(next(keys), (cout,), 0.1),
            "bn_var": 1.0 + jnp.abs(nrm(next(keys), (cout,), 0.1)),
        }
    params["fc1_w"] = nrm(next(keys), (1024, 128 * 3 * 3), 0.02)
    params["fc1_b"] = nrm(next(keys), (1024,), 0.02)
    params["fc2_w"] = nrm(next(keys), (512, 1024), 0.02)
    params["fc2_b"] = nrm(next(keys), (512,), 0.02)
    params["fc3_w"] = nrm(next(keys), (10, 512), 0.02)
    params["fc3_b"] = nrm(next(keys), (10,), 0.02)
    return params


# ---------------------------------------------------------------------------
# Main
# ---------------------------------------------------------------------------
if __name__ == "__main__":
    key = jax.random.PRNGKey(0)
    pkey, xkey = jax.random.split(key)
    params = init_params(pkey)

    # FashionMNIST-shaped input (fc1's in_features=128*3*3 pins H=W=28).
    batch = 2
    x = jax.random.normal(xkey, (batch, 1, 28, 28), dtype=jnp.float32)

    prepped = prepare_params(params)          # one-time weight/layout folding
    fwd = jax.jit(fashion_mnist_cnn_forward)
    out = fwd(x, prepped)
    jax.block_until_ready(out)

    assert out.shape == (batch, 10), out.shape
    assert out.dtype == jnp.float32
    assert bool(jnp.all(jnp.isfinite(out)))

    ref = _reference_forward(x, params)       # f32 reference, loose tolerance
    np.testing.assert_allclose(np.asarray(out), np.asarray(ref),
                               rtol=0.05, atol=0.02)
    print("KERNEL_OK")
</pallas_src>

<mosaic_0001>
module attributes {stable_mosaic.version = 11 : i64} {
  func.func @_fused_cnn_kernel(%arg0: memref<1x2048xf32, #tpu.memory_space<vmem>>, %arg1: memref<32x9xbf16, #tpu.memory_space<vmem>>, %arg2: memref<32x1xf32, #tpu.memory_space<vmem>>, %arg3: memref<32x1xf32, #tpu.memory_space<vmem>>, %arg4: memref<64x288xbf16, #tpu.memory_space<vmem>>, %arg5: memref<64x1xf32, #tpu.memory_space<vmem>>, %arg6: memref<64x1xf32, #tpu.memory_space<vmem>>, %arg7: memref<128x576xbf16, #tpu.memory_space<vmem>>, %arg8: memref<128x1xf32, #tpu.memory_space<vmem>>, %arg9: memref<128x1xf32, #tpu.memory_space<vmem>>, %arg10: memref<1024x256xbf16, #tpu.memory_space<any>>, %arg11: memref<256x256xbf16, #tpu.memory_space<any>>, %arg12: memref<1152x1024xbf16, #tpu.memory_space<any>>, %arg13: memref<1024x512xbf16, #tpu.memory_space<any>>, %arg14: memref<1x1024xf32, #tpu.memory_space<vmem>>, %arg15: memref<1x512xf32, #tpu.memory_space<vmem>>, %arg16: memref<512x10xbf16, #tpu.memory_space<vmem>>, %arg17: memref<1x10xf32, #tpu.memory_space<vmem>>, %arg18: memref<2x10xf32, #tpu.memory_space<vmem>>, %arg19: memref<1024x256xbf16, #tpu.memory_space<vmem>>, %arg20: memref<256x256xbf16, #tpu.memory_space<vmem>>, %arg21: memref<1152x1024xbf16, #tpu.memory_space<vmem>>, %arg22: memref<1024x512xbf16, #tpu.memory_space<vmem>>, %arg23: memref<4x!tpu.dma_semaphore, #tpu.memory_space<semaphore_mem>>) attributes {dimension_semantics = [], scalar_prefetch = 0 : i64, scratch_operands = 5 : i64, tpu.core_type = #tpu.core_type<tc>} {
    %c0_i32 = arith.constant 0 : i32
    %0 = tpu.memref_slice %arg23[%c0_i32] : memref<4x!tpu.dma_semaphore, #tpu.memory_space<semaphore_mem>> -> memref<1x!tpu.dma_semaphore, #tpu.memory_space<semaphore_mem>>
    %1 = tpu.memref_squeeze %0 : memref<1x!tpu.dma_semaphore, #tpu.memory_space<semaphore_mem>> -> memref<!tpu.dma_semaphore, #tpu.memory_space<semaphore_mem>>
    tpu.enqueue_dma source(%arg10 : memref<1024x256xbf16, #tpu.memory_space<any>>) target(%arg19 : memref<1024x256xbf16, #tpu.memory_space<vmem>>) target_semaphore(%1 : memref<!tpu.dma_semaphore, #tpu.memory_space<semaphore_mem>>)
    %c1_i32 = arith.constant 1 : i32
    %2 = tpu.memref_slice %arg23[%c1_i32] : memref<4x!tpu.dma_semaphore, #tpu.memory_space<semaphore_mem>> -> memref<1x!tpu.dma_semaphore, #tpu.memory_space<semaphore_mem>>
    %3 = tpu.memref_squeeze %2 : memref<1x!tpu.dma_semaphore, #tpu.memory_space<semaphore_mem>> -> memref<!tpu.dma_semaphore, #tpu.memory_space<semaphore_mem>>
    tpu.enqueue_dma source(%arg11 : memref<256x256xbf16, #tpu.memory_space<any>>) target(%arg20 : memref<256x256xbf16, #tpu.memory_space<vmem>>) target_semaphore(%3 : memref<!tpu.dma_semaphore, #tpu.memory_space<semaphore_mem>>)
    %c2_i32 = arith.constant 2 : i32
    %4 = tpu.memref_slice %arg23[%c2_i32] : memref<4x!tpu.dma_semaphore, #tpu.memory_space<semaphore_mem>> -> memref<1x!tpu.dma_semaphore, #tpu.memory_space<semaphore_mem>>
    %5 = tpu.memref_squeeze %4 : memref<1x!tpu.dma_semaphore, #tpu.memory_space<semaphore_mem>> -> memref<!tpu.dma_semaphore, #tpu.memory_space<semaphore_mem>>
    tpu.enqueue_dma source(%arg12 : memref<1152x1024xbf16, #tpu.memory_space<any>>) target(%arg21 : memref<1152x1024xbf16, #tpu.memory_space<vmem>>) target_semaphore(%5 : memref<!tpu.dma_semaphore, #tpu.memory_space<semaphore_mem>>)
    %c3_i32 = arith.constant 3 : i32
    %6 = tpu.memref_slice %arg23[%c3_i32] : memref<4x!tpu.dma_semaphore, #tpu.memory_space<semaphore_mem>> -> memref<1x!tpu.dma_semaphore, #tpu.memory_space<semaphore_mem>>
    %7 = tpu.memref_squeeze %6 : memref<1x!tpu.dma_semaphore, #tpu.memory_space<semaphore_mem>> -> memref<!tpu.dma_semaphore, #tpu.memory_space<semaphore_mem>>
    tpu.enqueue_dma source(%arg13 : memref<1024x512xbf16, #tpu.memory_space<any>>) target(%arg22 : memref<1024x512xbf16, #tpu.memory_space<vmem>>) target_semaphore(%7 : memref<!tpu.dma_semaphore, #tpu.memory_space<semaphore_mem>>)
    %c0 = arith.constant 0 : index
    %c0_0 = arith.constant 0 : index
    %8 = vector.load %arg0[%c0, %c0_0] : memref<1x2048xf32, #tpu.memory_space<vmem>>, vector<1x2048xf32>
    %c33_i32 = arith.constant 33 : i32
    %9 = tpu.dynamic_rotate %8 by %c33_i32 dim 1 : vector<1x2048xf32>, i32 -> vector<1x2048xf32>
    %c32_i32 = arith.constant 32 : i32
    %10 = tpu.dynamic_rotate %8 by %c32_i32 dim 1 : vector<1x2048xf32>, i32 -> vector<1x2048xf32>
    %c31_i32 = arith.constant 31 : i32
    %11 = tpu.dynamic_rotate %8 by %c31_i32 dim 1 : vector<1x2048xf32>, i32 -> vector<1x2048xf32>
    %c1_i32_1 = arith.constant 1 : i32
    %12 = tpu.dynamic_rotate %8 by %c1_i32_1 dim 1 : vector<1x2048xf32>, i32 -> vector<1x2048xf32>
    %c2047_i32 = arith.constant 2047 : i32
    %13 = tpu.dynamic_rotate %8 by %c2047_i32 dim 1 : vector<1x2048xf32>, i32 -> vector<1x2048xf32>
    %c2017_i32 = arith.constant 2017 : i32
    %14 = tpu.dynamic_rotate %8 by %c2017_i32 dim 1 : vector<1x2048xf32>, i32 -> vector<1x2048xf32>
    %c2016_i32 = arith.constant 2016 : i32
    %15 = tpu.dynamic_rotate %8 by %c2016_i32 dim 1 : vector<1x2048xf32>, i32 -> vector<1x2048xf32>
    %c2015_i32 = arith.constant 2015 : i32
    %16 = tpu.dynamic_rotate %8 by %c2015_i32 dim 1 : vector<1x2048xf32>, i32 -> vector<1x2048xf32>
    %17 = tpu.concatenate %9, %10, %11, %12, %8, %13, %14, %15, %16 in 0 : vector<1x2048xf32>, vector<1x2048xf32>, vector<1x2048xf32>, vector<1x2048xf32>, vector<1x2048xf32>, vector<1x2048xf32>, vector<1x2048xf32>, vector<1x2048xf32>, vector<1x2048xf32> -> vector<9x2048xf32>
    %c0_2 = arith.constant 0 : index
    %c0_3 = arith.constant 0 : index
    %18 = vector.load %arg1[%c0_2, %c0_3] : memref<32x9xbf16, #tpu.memory_space<vmem>>, vector<32x9xbf16>
    %19 = arith.truncf %17 : vector<9x2048xf32> to vector<9x2048xbf16>
    %cst = arith.constant dense<0.000000e+00> : vector<32x2048xf32>
    %20 = tpu.matmul %18, %19, %cst {dimension_numbers = #tpu.dot_dimension_numbers<[1], [0], [0], [1], [0, 0, 1, 1], [], []>} : vector<32x9xbf16>, vector<9x2048xbf16>, vector<32x2048xf32> -> vector<32x2048xf32>
    %c0_4 = arith.constant 0 : index
    %c0_5 = arith.constant 0 : index
    %21 = vector.load %arg2[%c0_4, %c0_5] : memref<32x1xf32, #tpu.memory_space<vmem>>, vector<32x1xf32>
    %22 = vector.broadcast %21 : vector<32x1xf32> to vector<32x2048xf32>
    %23 = arith.mulf %20, %22 : vector<32x2048xf32>
    %c0_6 = arith.constant 0 : index
    %c0_7 = arith.constant 0 : index
    %24 = vector.load %arg3[%c0_6, %c0_7] : memref<32x1xf32, #tpu.memory_space<vmem>>, vector<32x1xf32>
    %25 = vector.broadcast %24 : vector<32x1xf32> to vector<32x2048xf32>
    %26 = arith.addf %23, %25 : vector<32x2048xf32>
    %cst_8 = arith.constant 0.000000e+00 : f32
    %27 = vector.broadcast %cst_8 : f32 to vector<32x2048xf32>
    %28 = arith.maximumf %26, %27 : vector<32x2048xf32>
    %c2047_i32_9 = arith.constant 2047 : i32
    %29 = tpu.dynamic_rotate %28 by %c2047_i32_9 dim 1 : vector<32x2048xf32>, i32 -> vector<32x2048xf32>
    %30 = arith.maximumf %28, %29 : vector<32x2048xf32>
    %c2016_i32_10 = arith.constant 2016 : i32
    %31 = tpu.dynamic_rotate %28 by %c2016_i32_10 dim 1 : vector<32x2048xf32>, i32 -> vector<32x2048xf32>
    %c2015_i32_11 = arith.constant 2015 : i32
    %32 = tpu.dynamic_rotate %28 by %c2015_i32_11 dim 1 : vector<32x2048xf32>, i32 -> vector<32x2048xf32>
    %33 = arith.maximumf %31, %32 : vector<32x2048xf32>
    %34 = arith.maximumf %30, %33 : vector<32x2048xf32>
    %c0_i32_12 = arith.constant 0 : i32
    %35 = tpu.memref_slice %arg23[%c0_i32_12] : memref<4x!tpu.dma_semaphore, #tpu.memory_space<semaphore_mem>> -> memref<1x!tpu.dma_semaphore, #tpu.memory_space<semaphore_mem>>
    %36 = tpu.memref_squeeze %35 : memref<1x!tpu.dma_semaphore, #tpu.memory_space<semaphore_mem>> -> memref<!tpu.dma_semaphore, #tpu.memory_space<semaphore_mem>>
    tpu.wait_dma2 semaphore(%36 : memref<!tpu.dma_semaphore, #tpu.memory_space<semaphore_mem>>) src(%arg10 : memref<1024x256xbf16, #tpu.memory_space<any>>) dst(%arg19 : memref<1024x256xbf16, #tpu.memory_space<vmem>>)
    %37 = arith.truncf %34 : vector<32x2048xf32> to vector<32x2048xbf16>
    %38 = vector.extract_strided_slice %37 {offsets = [0, 0], sizes = [32, 1024], strides = [1, 1]} : vector<32x2048xbf16> to vector<32x1024xbf16>
    %c0_13 = arith.constant 0 : index
    %c0_14 = arith.constant 0 : index
    %39 = vector.load %arg19[%c0_13, %c0_14] : memref<1024x256xbf16, #tpu.memory_space<vmem>>, vector<1024x256xbf16>
    %cst_15 = arith.constant dense<0.000000e+00> : vector<32x256xf32>
    %40 = tpu.matmul %38, %39, %cst_15 {dimension_numbers = #tpu.dot_dimension_numbers<[1], [0], [0], [1], [0, 0, 1, 1], [], []>} : vector<32x1024xbf16>, vector<1024x256xbf16>, vector<32x256xf32> -> vector<32x256xf32>
    %41 = vector.extract_strided_slice %37 {offsets = [0, 1024], sizes = [32, 1024], strides = [1, 1]} : vector<32x2048xbf16> to vector<32x1024xbf16>
    %c0_16 = arith.constant 0 : index
    %c0_17 = arith.constant 0 : index
    %42 = vector.load %arg19[%c0_16, %c0_17] : memref<1024x256xbf16, #tpu.memory_space<vmem>>, vector<1024x256xbf16>
    %cst_18 = arith.constant dense<0.000000e+00> : vector<32x256xf32>
    %43 = tpu.matmul %41, %42, %cst_18 {dimension_numbers = #tpu.dot_dimension_numbers<[1], [0], [0], [1], [0, 0, 1, 1], [], []>} : vector<32x1024xbf16>, vector<1024x256xbf16>, vector<32x256xf32> -> vector<32x256xf32>
    %44 = tpu.concatenate %40, %43 in 1 : vector<32x256xf32>, vector<32x256xf32> -> vector<32x512xf32>
    %c17_i32 = arith.constant 17 : i32
    %45 = tpu.dynamic_rotate %44 by %c17_i32 dim 1 : vector<32x512xf32>, i32 -> vector<32x512xf32>
    %c16_i32 = arith.constant 16 : i32
    %46 = tpu.dynamic_rotate %44 by %c16_i32 dim 1 : vector<32x512xf32>, i32 -> vector<32x512xf32>
    %c15_i32 = arith.constant 15 : i32
    %47 = tpu.dynamic_rotate %44 by %c15_i32 dim 1 : vector<32x512xf32>, i32 -> vector<32x512xf32>
    %c1_i32_19 = arith.constant 1 : i32
    %48 = tpu.dynamic_rotate %44 by %c1_i32_19 dim 1 : vector<32x512xf32>, i32 -> vector<32x512xf32>
    %c511_i32 = arith.constant 511 : i32
    %49 = tpu.dynamic_rotate %44 by %c511_i32 dim 1 : vector<32x512xf32>, i32 -> vector<32x512xf32>
    %c497_i32 = arith.constant 497 : i32
    %50 = tpu.dynamic_rotate %44 by %c497_i32 dim 1 : vector<32x512xf32>, i32 -> vector<32x512xf32>
    %c496_i32 = arith.constant 496 : i32
    %51 = tpu.dynamic_rotate %44 by %c496_i32 dim 1 : vector<32x512xf32>, i32 -> vector<32x512xf32>
    %c495_i32 = arith.constant 495 : i32
    %52 = tpu.dynamic_rotate %44 by %c495_i32 dim 1 : vector<32x512xf32>, i32 -> vector<32x512xf32>
    %53 = tpu.concatenate %45, %46, %47, %48, %44, %49, %50, %51, %52 in 0 : vector<32x512xf32>, vector<32x512xf32>, vector<32x512xf32>, vector<32x512xf32>, vector<32x512xf32>, vector<32x512xf32>, vector<32x512xf32>, vector<32x512xf32>, vector<32x512xf32> -> vector<288x512xf32>
    %c0_20 = arith.constant 0 : index
    %c0_21 = arith.constant 0 : index
    %54 = vector.load %arg4[%c0_20, %c0_21] : memref<64x288xbf16, #tpu.memory_space<vmem>>, vector<64x288xbf16>
    %55 = arith.truncf %53 : vector<288x512xf32> to vector<288x512xbf16>
    %cst_22 = arith.constant dense<0.000000e+00> : vector<64x512xf32>
    %56 = tpu.matmul %54, %55, %cst_22 {dimension_numbers = #tpu.dot_dimension_numbers<[1], [0], [0], [1], [0, 0, 1, 1], [], []>} : vector<64x288xbf16>, vector<288x512xbf16>, vector<64x512xf32> -> vector<64x512xf32>
    %c0_23 = arith.constant 0 : index
    %c0_24 = arith.constant 0 : index
    %57 = vector.load %arg5[%c0_23, %c0_24] : memref<64x1xf32, #tpu.memory_space<vmem>>, vector<64x1xf32>
    %58 = vector.broadcast %57 : vector<64x1xf32> to vector<64x512xf32>
    %59 = arith.mulf %56, %58 : vector<64x512xf32>
    %c0_25 = arith.constant 0 : index
    %c0_26 = arith.constant 0 : index
    %60 = vector.load %arg6[%c0_25, %c0_26] : memref<64x1xf32, #tpu.memory_space<vmem>>, vector<64x1xf32>
    %61 = vector.broadcast %60 : vector<64x1xf32> to vector<64x512xf32>
    %62 = arith.addf %59, %61 : vector<64x512xf32>
    %cst_27 = arith.constant 0.000000e+00 : f32
    %63 = vector.broadcast %cst_27 : f32 to vector<64x512xf32>
    %64 = arith.maximumf %62, %63 : vector<64x512xf32>
    %c511_i32_28 = arith.constant 511 : i32
    %65 = tpu.dynamic_rotate %64 by %c511_i32_28 dim 1 : vector<64x512xf32>, i32 -> vector<64x512xf32>
    %66 = arith.maximumf %64, %65 : vector<64x512xf32>
    %c496_i32_29 = arith.constant 496 : i32
    %67 = tpu.dynamic_rotate %64 by %c496_i32_29 dim 1 : vector<64x512xf32>, i32 -> vector<64x512xf32>
    %c495_i32_30 = arith.constant 495 : i32
    %68 = tpu.dynamic_rotate %64 by %c495_i32_30 dim 1 : vector<64x512xf32>, i32 -> vector<64x512xf32>
    %69 = arith.maximumf %67, %68 : vector<64x512xf32>
    %70 = arith.maximumf %66, %69 : vector<64x512xf32>
    %c1_i32_31 = arith.constant 1 : i32
    %71 = tpu.memref_slice %arg23[%c1_i32_31] : memref<4x!tpu.dma_semaphore, #tpu.memory_space<semaphore_mem>> -> memref<1x!tpu.dma_semaphore, #tpu.memory_space<semaphore_mem>>
    %72 = tpu.memref_squeeze %71 : memref<1x!tpu.dma_semaphore, #tpu.memory_space<semaphore_mem>> -> memref<!tpu.dma_semaphore, #tpu.memory_space<semaphore_mem>>
    tpu.wait_dma2 semaphore(%72 : memref<!tpu.dma_semaphore, #tpu.memory_space<semaphore_mem>>) src(%arg11 : memref<256x256xbf16, #tpu.memory_space<any>>) dst(%arg20 : memref<256x256xbf16, #tpu.memory_space<vmem>>)
    %73 = arith.truncf %70 : vector<64x512xf32> to vector<64x512xbf16>
    %74 = vector.extract_strided_slice %73 {offsets = [0, 0], sizes = [64, 256], strides = [1, 1]} : vector<64x512xbf16> to vector<64x256xbf16>
    %c0_32 = arith.constant 0 : index
    %c0_33 = arith.constant 0 : index
    %75 = vector.load %arg20[%c0_32, %c0_33] : memref<256x256xbf16, #tpu.memory_space<vmem>>, vector<256x256xbf16>
    %cst_34 = arith.constant dense<0.000000e+00> : vector<64x256xf32>
    %76 = tpu.matmul %74, %75, %cst_34 {dimension_numbers = #tpu.dot_dimension_numbers<[1], [0], [0], [1], [0, 0, 1, 1], [], []>} : vector<64x256xbf16>, vector<256x256xbf16>, vector<64x256xf32> -> vector<64x256xf32>
    %77 = vector.extract_strided_slice %73 {offsets = [0, 256], sizes = [64, 256], strides = [1, 1]} : vector<64x512xbf16> to vector<64x256xbf16>
    %c0_35 = arith.constant 0 : index
    %c0_36 = arith.constant 0 : index
    %78 = vector.load %arg20[%c0_35, %c0_36] : memref<256x256xbf16, #tpu.memory_space<vmem>>, vector<256x256xbf16>
    %cst_37 = arith.constant dense<0.000000e+00> : vector<64x256xf32>
    %79 = tpu.matmul %77, %78, %cst_37 {dimension_numbers = #tpu.dot_dimension_numbers<[1], [0], [0], [1], [0, 0, 1, 1], [], []>} : vector<64x256xbf16>, vector<256x256xbf16>, vector<64x256xf32> -> vector<64x256xf32>
    %80 = tpu.concatenate %76, %79 in 1 : vector<64x256xf32>, vector<64x256xf32> -> vector<64x512xf32>
    %c17_i32_38 = arith.constant 17 : i32
    %81 = tpu.dynamic_rotate %80 by %c17_i32_38 dim 1 : vector<64x512xf32>, i32 -> vector<64x512xf32>
    %c16_i32_39 = arith.constant 16 : i32
    %82 = tpu.dynamic_rotate %80 by %c16_i32_39 dim 1 : vector<64x512xf32>, i32 -> vector<64x512xf32>
    %c15_i32_40 = arith.constant 15 : i32
    %83 = tpu.dynamic_rotate %80 by %c15_i32_40 dim 1 : vector<64x512xf32>, i32 -> vector<64x512xf32>
    %c1_i32_41 = arith.constant 1 : i32
    %84 = tpu.dynamic_rotate %80 by %c1_i32_41 dim 1 : vector<64x512xf32>, i32 -> vector<64x512xf32>
    %c511_i32_42 = arith.constant 511 : i32
    %85 = tpu.dynamic_rotate %80 by %c511_i32_42 dim 1 : vector<64x512xf32>, i32 -> vector<64x512xf32>
    %c497_i32_43 = arith.constant 497 : i32
    %86 = tpu.dynamic_rotate %80 by %c497_i32_43 dim 1 : vector<64x512xf32>, i32 -> vector<64x512xf32>
    %c496_i32_44 = arith.constant 496 : i32
    %87 = tpu.dynamic_rotate %80 by %c496_i32_44 dim 1 : vector<64x512xf32>, i32 -> vector<64x512xf32>
    %c495_i32_45 = arith.constant 495 : i32
    %88 = tpu.dynamic_rotate %80 by %c495_i32_45 dim 1 : vector<64x512xf32>, i32 -> vector<64x512xf32>
    %89 = tpu.concatenate %81, %82, %83, %84, %80, %85, %86, %87, %88 in 0 : vector<64x512xf32>, vector<64x512xf32>, vector<64x512xf32>, vector<64x512xf32>, vector<64x512xf32>, vector<64x512xf32>, vector<64x512xf32>, vector<64x512xf32>, vector<64x512xf32> -> vector<576x512xf32>
    %c0_46 = arith.constant 0 : index
    %c0_47 = arith.constant 0 : index
    %90 = vector.load %arg7[%c0_46, %c0_47] : memref<128x576xbf16, #tpu.memory_space<vmem>>, vector<128x576xbf16>
    %91 = arith.truncf %89 : vector<576x512xf32> to vector<576x512xbf16>
    %cst_48 = arith.constant dense<0.000000e+00> : vector<128x512xf32>
    %92 = tpu.matmul %90, %91, %cst_48 {dimension_numbers = #tpu.dot_dimension_numbers<[1], [0], [0], [1], [0, 0, 1, 1], [], []>} : vector<128x576xbf16>, vector<576x512xbf16>, vector<128x512xf32> -> vector<128x512xf32>
    %c0_49 = arith.constant 0 : index
    %c0_50 = arith.constant 0 : index
    %93 = vector.load %arg8[%c0_49, %c0_50] : memref<128x1xf32, #tpu.memory_space<vmem>>, vector<128x1xf32>
    %94 = vector.broadcast %93 : vector<128x1xf32> to vector<128x512xf32>
    %95 = arith.mulf %92, %94 : vector<128x512xf32>
    %c0_51 = arith.constant 0 : index
    %c0_52 = arith.constant 0 : index
    %96 = vector.load %arg9[%c0_51, %c0_52] : memref<128x1xf32, #tpu.memory_space<vmem>>, vector<128x1xf32>
    %97 = vector.broadcast %96 : vector<128x1xf32> to vector<128x512xf32>
    %98 = arith.addf %95, %97 : vector<128x512xf32>
    %cst_53 = arith.constant 0.000000e+00 : f32
    %99 = vector.broadcast %cst_53 : f32 to vector<128x512xf32>
    %100 = arith.maximumf %98, %99 : vector<128x512xf32>
    %c511_i32_54 = arith.constant 511 : i32
    %101 = tpu.dynamic_rotate %100 by %c511_i32_54 dim 1 : vector<128x512xf32>, i32 -> vector<128x512xf32>
    %102 = arith.maximumf %100, %101 : vector<128x512xf32>
    %c496_i32_55 = arith.constant 496 : i32
    %103 = tpu.dynamic_rotate %100 by %c496_i32_55 dim 1 : vector<128x512xf32>, i32 -> vector<128x512xf32>
    %c495_i32_56 = arith.constant 495 : i32
    %104 = tpu.dynamic_rotate %100 by %c495_i32_56 dim 1 : vector<128x512xf32>, i32 -> vector<128x512xf32>
    %105 = arith.maximumf %103, %104 : vector<128x512xf32>
    %106 = arith.maximumf %102, %105 : vector<128x512xf32>
    %107 = tpu.transpose %106, [1, 0] : vector<128x512xf32> -> vector<512x128xf32>
    %108 = vector.extract_strided_slice %107 {offsets = [17, 0], sizes = [1, 128], strides = [1, 1]} : vector<512x128xf32> to vector<1x128xf32>
    %109 = vector.extract_strided_slice %107 {offsets = [19, 0], sizes = [1, 128], strides = [1, 1]} : vector<512x128xf32> to vector<1x128xf32>
    %110 = vector.extract_strided_slice %107 {offsets = [21, 0], sizes = [1, 128], strides = [1, 1]} : vector<512x128xf32> to vector<1x128xf32>
    %111 = vector.extract_strided_slice %107 {offsets = [49, 0], sizes = [1, 128], strides = [1, 1]} : vector<512x128xf32> to vector<1x128xf32>
    %112 = vector.extract_strided_slice %107 {offsets = [51, 0], sizes = [1, 128], strides = [1, 1]} : vector<512x128xf32> to vector<1x128xf32>
    %113 = vector.extract_strided_slice %107 {offsets = [53, 0], sizes = [1, 128], strides = [1, 1]} : vector<512x128xf32> to vector<1x128xf32>
    %114 = vector.extract_strided_slice %107 {offsets = [81, 0], sizes = [1, 128], strides = [1, 1]} : vector<512x128xf32> to vector<1x128xf32>
    %115 = vector.extract_strided_slice %107 {offsets = [83, 0], sizes = [1, 128], strides = [1, 1]} : vector<512x128xf32> to vector<1x128xf32>
    %116 = vector.extract_strided_slice %107 {offsets = [85, 0], sizes = [1, 128], strides = [1, 1]} : vector<512x128xf32> to vector<1x128xf32>
    %117 = tpu.concatenate %108, %109, %110, %111, %112, %113, %114, %115, %116 in 1 : vector<1x128xf32>, vector<1x128xf32>, vector<1x128xf32>, vector<1x128xf32>, vector<1x128xf32>, vector<1x128xf32>, vector<1x128xf32>, vector<1x128xf32>, vector<1x128xf32> -> vector<1x1152xf32>
    %118 = vector.extract_strided_slice %107 {offsets = [273, 0], sizes = [1, 128], strides = [1, 1]} : vector<512x128xf32> to vector<1x128xf32>
    %119 = vector.extract_strided_slice %107 {offsets = [275, 0], sizes = [1, 128], strides = [1, 1]} : vector<512x128xf32> to vector<1x128xf32>
    %120 = vector.extract_strided_slice %107 {offsets = [277, 0], sizes = [1, 128], strides = [1, 1]} : vector<512x128xf32> to vector<1x128xf32>
    %121 = vector.extract_strided_slice %107 {offsets = [305, 0], sizes = [1, 128], strides = [1, 1]} : vector<512x128xf32> to vector<1x128xf32>
    %122 = vector.extract_strided_slice %107 {offsets = [307, 0], sizes = [1, 128], strides = [1, 1]} : vector<512x128xf32> to vector<1x128xf32>
    %123 = vector.extract_strided_slice %107 {offsets = [309, 0], sizes = [1, 128], strides = [1, 1]} : vector<512x128xf32> to vector<1x128xf32>
    %124 = vector.extract_strided_slice %107 {offsets = [337, 0], sizes = [1, 128], strides = [1, 1]} : vector<512x128xf32> to vector<1x128xf32>
    %125 = vector.extract_strided_slice %107 {offsets = [339, 0], sizes = [1, 128], strides = [1, 1]} : vector<512x128xf32> to vector<1x128xf32>
    %126 = vector.extract_strided_slice %107 {offsets = [341, 0], sizes = [1, 128], strides = [1, 1]} : vector<512x128xf32> to vector<1x128xf32>
    %127 = tpu.concatenate %118, %119, %120, %121, %122, %123, %124, %125, %126 in 1 : vector<1x128xf32>, vector<1x128xf32>, vector<1x128xf32>, vector<1x128xf32>, vector<1x128xf32>, vector<1x128xf32>, vector<1x128xf32>, vector<1x128xf32>, vector<1x128xf32> -> vector<1x1152xf32>
    %128 = tpu.concatenate %117, %127 in 0 : vector<1x1152xf32>, vector<1x1152xf32> -> vector<2x1152xf32>
    %129 = arith.truncf %128 : vector<2x1152xf32> to vector<2x1152xbf16>
    %c2_i32_57 = arith.constant 2 : i32
    %130 = tpu.memref_slice %arg23[%c2_i32_57] : memref<4x!tpu.dma_semaphore, #tpu.memory_space<semaphore_mem>> -> memref<1x!tpu.dma_semaphore, #tpu.memory_space<semaphore_mem>>
    %131 = tpu.memref_squeeze %130 : memref<1x!tpu.dma_semaphore, #tpu.memory_space<semaphore_mem>> -> memref<!tpu.dma_semaphore, #tpu.memory_space<semaphore_mem>>
    tpu.wait_dma2 semaphore(%131 : memref<!tpu.dma_semaphore, #tpu.memory_space<semaphore_mem>>) src(%arg12 : memref<1152x1024xbf16, #tpu.memory_space<any>>) dst(%arg21 : memref<1152x1024xbf16, #tpu.memory_space<vmem>>)
    %c0_58 = arith.constant 0 : index
    %c0_59 = arith.constant 0 : index
    %132 = vector.load %arg21[%c0_58, %c0_59] : memref<1152x1024xbf16, #tpu.memory_space<vmem>>, vector<1152x1024xbf16>
    %cst_60 = arith.constant dense<0.000000e+00> : vector<2x1024xf32>
    %133 = tpu.matmul %129, %132, %cst_60 {dimension_numbers = #tpu.dot_dimension_numbers<[1], [0], [0], [1], [0, 0, 1, 1], [], []>} : vector<2x1152xbf16>, vector<1152x1024xbf16>, vector<2x1024xf32> -> vector<2x1024xf32>
    %c0_61 = arith.constant 0 : index
    %c0_62 = arith.constant 0 : index
    %134 = vector.load %arg14[%c0_61, %c0_62] : memref<1x1024xf32, #tpu.memory_space<vmem>>, vector<1x1024xf32>
    %135 = vector.broadcast %134 : vector<1x1024xf32> to vector<2x1024xf32>
    %136 = arith.addf %133, %135 : vector<2x1024xf32>
    %c3_i32_63 = arith.constant 3 : i32
    %137 = tpu.memref_slice %arg23[%c3_i32_63] : memref<4x!tpu.dma_semaphore, #tpu.memory_space<semaphore_mem>> -> memref<1x!tpu.dma_semaphore, #tpu.memory_space<semaphore_mem>>
    %138 = tpu.memref_squeeze %137 : memref<1x!tpu.dma_semaphore, #tpu.memory_space<semaphore_mem>> -> memref<!tpu.dma_semaphore, #tpu.memory_space<semaphore_mem>>
    tpu.wait_dma2 semaphore(%138 : memref<!tpu.dma_semaphore, #tpu.memory_space<semaphore_mem>>) src(%arg13 : memref<1024x512xbf16, #tpu.memory_space<any>>) dst(%arg22 : memref<1024x512xbf16, #tpu.memory_space<vmem>>)
    %139 = arith.truncf %136 : vector<2x1024xf32> to vector<2x1024xbf16>
    %c0_64 = arith.constant 0 : index
    %c0_65 = arith.constant 0 : index
    %140 = vector.load %arg22[%c0_64, %c0_65] : memref<1024x512xbf16, #tpu.memory_space<vmem>>, vector<1024x512xbf16>
    %cst_66 = arith.constant dense<0.000000e+00> : vector<2x512xf32>
    %141 = tpu.matmul %139, %140, %cst_66 {dimension_numbers = #tpu.dot_dimension_numbers<[1], [0], [0], [1], [0, 0, 1, 1], [], []>} : vector<2x1024xbf16>, vector<1024x512xbf16>, vector<2x512xf32> -> vector<2x512xf32>
    %c0_67 = arith.constant 0 : index
    %c0_68 = arith.constant 0 : index
    %142 = vector.load %arg15[%c0_67, %c0_68] : memref<1x512xf32, #tpu.memory_space<vmem>>, vector<1x512xf32>
    %143 = vector.broadcast %142 : vector<1x512xf32> to vector<2x512xf32>
    %144 = arith.addf %141, %143 : vector<2x512xf32>
    %145 = arith.truncf %144 : vector<2x512xf32> to vector<2x512xbf16>
    %c0_69 = arith.constant 0 : index
    %c0_70 = arith.constant 0 : index
    %146 = vector.load %arg16[%c0_69, %c0_70] : memref<512x10xbf16, #tpu.memory_space<vmem>>, vector<512x10xbf16>
    %cst_71 = arith.constant dense<0.000000e+00> : vector<2x10xf32>
    %147 = tpu.matmul %145, %146, %cst_71 {dimension_numbers = #tpu.dot_dimension_numbers<[1], [0], [0], [1], [0, 0, 1, 1], [], []>} : vector<2x512xbf16>, vector<512x10xbf16>, vector<2x10xf32> -> vector<2x10xf32>
    %c0_72 = arith.constant 0 : index
    %c0_73 = arith.constant 0 : index
    %148 = vector.load %arg17[%c0_72, %c0_73] : memref<1x10xf32, #tpu.memory_space<vmem>>, vector<1x10xf32>
    %149 = vector.broadcast %148 : vector<1x10xf32> to vector<2x10xf32>
    %150 = arith.addf %147, %149 : vector<2x10xf32>
    %c0_74 = arith.constant 0 : index
    %c0_75 = arith.constant 0 : index
    %151 = vector.load %arg18[%c0_74, %c0_75] : memref<2x10xf32, #tpu.memory_space<vmem>>, vector<2x10xf32>
    tpu.vector_store %arg18[%c0_74, %c0_75], %150 {strides = array<i32>} : memref<2x10xf32, #tpu.memory_space<vmem>>, vector<2x10xf32>,
    return
  }
}

</mosaic_0001>

<llo_original>
// kernel: fashion_mnist_cnn_forward.1
$region0: #{fashion_mnist_cnn_forward.1}
  #allocation0 [shape = 'u32[]', space=smem, size = 0x4, offset = 0x4, fixed_abs, tag = 'smem constant byte address 0x4 - core index']
  #allocation1 [shape = 'u32[144,128]{1,0:T(1,128)}', space=vmem, size = 0x12000, scoped, tag = 'internal scratch']
  #allocation2 [shape = 'bf16[1024,256]{1,0:T(16,128)(2,1)}', space=vmem, size = 0x80000, scoped, tag = 'scratch operand']
  #allocation3 [shape = 'bf16[256,256]{1,0:T(16,128)(2,1)}', space=vmem, size = 0x20000, scoped, tag = 'scratch operand']
  #allocation4 [shape = 'bf16[1152,1024]{1,0:T(16,128)(2,1)}', space=vmem, size = 0x240000, scoped, tag = 'scratch operand']
  #allocation5 [shape = 'bf16[1024,512]{1,0:T(16,128)(2,1)}', space=vmem, size = 0x100000, scoped, tag = 'scratch operand']
  #allocation6 [shape = 's32[4]{0}', space=sflag, size = 0x10, scoped, tag = 'scratch operand']
  #allocation16 [shape = 's32[]', space=sflag, size = 0x4, offset = 0, fixed_abs, tag = 'sflag constant byte address 0x0 - dummy sync flag']
  #allocation18 [shape = 's32[]', space=sflag, size = 0x4, offset = 0, fixed_abs, tag = 'sflag constant byte address 0x0 - dummy sync flag']
  #allocation20 [shape = 's32[]', space=sflag, size = 0x4, offset = 0, fixed_abs, tag = 'sflag constant byte address 0x0 - dummy sync flag']
  #allocation22 [shape = 's32[]', space=sflag, size = 0x4, offset = 0, fixed_abs, tag = 'sflag constant byte address 0x0 - dummy sync flag']
  %s0 = inlined_call_operand.vmem [shape: f32[1,2048], index: 0, kind: input, shape index: {}]
  %s1 = inlined_call_operand.vmem [shape: bf16[32,9], index: 1, kind: input, shape index: {}]
  %s2 = inlined_call_operand.vmem [shape: f32[32,1], index: 2, kind: input, shape index: {}]
  %s3 = inlined_call_operand.vmem [shape: f32[32,1], index: 3, kind: input, shape index: {}]
  %s4 = inlined_call_operand.hbm [shape: bf16[64,288], index: 4, kind: input, shape index: {}]
  %s5 = inlined_call_operand.vmem [shape: f32[64,1], index: 5, kind: input, shape index: {}]
  %s6 = inlined_call_operand.vmem [shape: f32[64,1], index: 6, kind: input, shape index: {}]
  %s7 = inlined_call_operand.vmem [shape: bf16[128,576], index: 7, kind: input, shape index: {}]
  %s8 = inlined_call_operand.vmem [shape: f32[128,1], index: 8, kind: input, shape index: {}]
  %s9 = inlined_call_operand.vmem [shape: f32[128,1], index: 9, kind: input, shape index: {}]
  %s10 = inlined_call_operand.hbm [shape: bf16[1024,256], index: 10, kind: input, shape index: {}]
  %s11 = inlined_call_operand.hbm [shape: bf16[256,256], index: 11, kind: input, shape index: {}]
  %s12 = inlined_call_operand.hbm [shape: bf16[1152,1024], index: 12, kind: input, shape index: {}]
  %s13 = inlined_call_operand.hbm [shape: bf16[1024,512], index: 13, kind: input, shape index: {}]
  %s14 = inlined_call_operand.hbm [shape: f32[1,1024], index: 14, kind: input, shape index: {}]
  %s15 = inlined_call_operand.hbm [shape: f32[1,512], index: 15, kind: input, shape index: {}]
  %s16 = inlined_call_operand.vmem [shape: bf16[512,10], index: 16, kind: input, shape index: {}]
  %s17 = inlined_call_operand.hbm [shape: f32[1,10], index: 17, kind: input, shape index: {}]
  %s18 = inlined_call_operand.hbm [shape: f32[2,10], index: 18, kind: output, shape index: {}]
  %s19 = sld [smem:[#allocation0]]
  $region82: #{fashion_mnist_cnn_forward.1} parent=0
    _
  %s21 = ssub.s32 1, %s19
  %s22 = scalar_select 0, %s21, %s19
  $region1: #{fashion_mnist_cnn_forward.1} parent=0
    #allocation7 [shape = 'u8[49152]{0}', space=vmem, size = 0xc000, scoped, tag = 'input window, operand 4, single buffered']
    #allocation8 [shape = 's32[1]{0}', space=sflag, size = 0x4, scoped, tag = 'scoped memory for fashion_mnist_cnn_forward.1']
    #allocation9 [shape = 's32[1]{0}', space=sflag, size = 0x4, scoped, tag = 'scoped memory for fashion_mnist_cnn_forward.1']
    #allocation10 [shape = 'u8[4096]{0}', space=vmem, size = 0x1000, scoped, tag = 'input window, operand 14, single buffered']
    #allocation11 [shape = 's32[1]{0}', space=sflag, size = 0x4, scoped, tag = 'scoped memory for fashion_mnist_cnn_forward.1']
    #allocation12 [shape = 'u8[2048]{0}', space=vmem, size = 0x800, scoped, tag = 'input window, operand 15, single buffered']
    #allocation13 [shape = 'u8[512]{0}', space=vmem, size = 0x400, scoped, tag = 'input window, operand 17, single buffered']
    #allocation14 [shape = 's32[1]{0}', space=sflag, size = 0x4, scoped, tag = 'scoped memory for fashion_mnist_cnn_forward.1']
    #allocation15 [shape = 'u8[1024]{0}', space=vmem, size = 0x400, scoped, tag = 'output window, operand 0, single buffered']
    #allocation17 [shape = 'u32[9]{0}', space=smem, size = 0x24, scoped, tag = 'DMA stride descriptor']
    #allocation19 [shape = 'u32[9]{0}', space=smem, size = 0x24, scoped, tag = 'DMA stride descriptor']
    #allocation21 [shape = 'u32[9]{0}', space=smem, size = 0x24, scoped, tag = 'DMA stride descriptor']
    #allocation23 [shape = 'u32[9]{0}', space=smem, size = 0x24, scoped, tag = 'DMA stride descriptor']
    %23 = vsyncpa [#allocation8], 0
    %24 = vsyncpa [#allocation11], 0
    %25 = vsyncpa [#allocation14], 0
    %26 = vsyncpa [#allocation9], 0
    // Predicated region
    $region2: #{fashion_mnist_cnn_forward.1} parent=1 // pred_check
      _
    $region3: #{fashion_mnist_cnn_forward.1} parent=1 // pred_check_branch
      %28 = sbr.rel (0) target = $region5
    $region4: #{fashion_mnist_cnn_forward.1} parent=1 // pred_region
      _
    $region5: #{fashion_mnist_cnn_forward.1} parent=1 // pred_fallthru
      _
    // Predicated region
    $region6: #{fashion_mnist_cnn_forward.1} parent=1 // pred_check
      _
    $region7: #{fashion_mnist_cnn_forward.1} parent=1 // pred_check_branch
      %30 = sbr.rel (0) target = $region9
    $region8: #{fashion_mnist_cnn_forward.1} parent=1 // pred_region
      _
    $region9: #{fashion_mnist_cnn_forward.1} parent=1 // pred_fallthru
      _
    // Predicated region
    $region10: #{fashion_mnist_cnn_forward.1} parent=1 // pred_check
      _
    $region11: #{fashion_mnist_cnn_forward.1} parent=1 // pred_check_branch
      %32 = sbr.rel (0) target = $region13
    $region12: #{fashion_mnist_cnn_forward.1} parent=1 // pred_region
      _
    $region13: #{fashion_mnist_cnn_forward.1} parent=1 // pred_fallthru
      _
    // Predicated region
    $region14: #{fashion_mnist_cnn_forward.1} parent=1 // pred_check
      _
    $region15: #{fashion_mnist_cnn_forward.1} parent=1 // pred_check_branch
      %34 = sbr.rel (0) target = $region17
    $region16: #{fashion_mnist_cnn_forward.1} parent=1 // pred_region
      _
    $region17: #{fashion_mnist_cnn_forward.1} parent=1 // pred_fallthru
      _
    // Predicated region
    $region18: #{fashion_mnist_cnn_forward.1} parent=1 // pred_check
      _
    $region19: #{fashion_mnist_cnn_forward.1} parent=1 // pred_check_branch
      %36 = sbr.rel (0) target = $region21
    $region20: #{fashion_mnist_cnn_forward.1} parent=1 // pred_region
      %s38 = ssub.s32 1536, 1536
      %39 = vsyncadd [#allocation8], %s38
      %s40 = sshll.u32 [#allocation7], 4
      %s41 = int_to_ptr.vmem [resolvable:$true] %s40
      %46 = dma.hbm_to_vmem [thread:$0]  %s4, 1536, %s41, [#allocation8], 192, 192, 12
    $region21: #{fashion_mnist_cnn_forward.1} parent=1 // pred_fallthru
      _
    // Predicated region
    $region22: #{fashion_mnist_cnn_forward.1} parent=1 // pred_check
      _
    $region23: #{fashion_mnist_cnn_forward.1} parent=1 // pred_check_branch
      %48 = sbr.rel (0) target = $region25
    $region24: #{fashion_mnist_cnn_forward.1} parent=1 // pred_region
      _
    $region25: #{fashion_mnist_cnn_forward.1} parent=1 // pred_fallthru
      _
    // Predicated region
    $region26: #{fashion_mnist_cnn_forward.1} parent=1 // pred_check
      _
    $region27: #{fashion_mnist_cnn_forward.1} parent=1 // pred_check_branch
      %50 = sbr.rel (0) target = $region29
    $region28: #{fashion_mnist_cnn_forward.1} parent=1 // pred_region
      _
    $region29: #{fashion_mnist_cnn_forward.1} parent=1 // pred_fallthru
      _
    // Predicated region
    $region30: #{fashion_mnist_cnn_forward.1} parent=1 // pred_check
      _
    $region31: #{fashion_mnist_cnn_forward.1} parent=1 // pred_check_branch
      %52 = sbr.rel (0) target = $region33
    $region32: #{fashion_mnist_cnn_forward.1} parent=1 // pred_region
      _
    $region33: #{fashion_mnist_cnn_forward.1} parent=1 // pred_fallthru
      _
    // Predicated region
    $region34: #{fashion_mnist_cnn_forward.1} parent=1 // pred_check
      _
    $region35: #{fashion_mnist_cnn_forward.1} parent=1 // pred_check_branch
      %54 = sbr.rel (0) target = $region37
    $region36: #{fashion_mnist_cnn_forward.1} parent=1 // pred_region
      _
    $region37: #{fashion_mnist_cnn_forward.1} parent=1 // pred_fallthru
      _
    // Predicated region
    $region38: #{fashion_mnist_cnn_forward.1} parent=1 // pred_check
      _
    $region39: #{fashion_mnist_cnn_forward.1} parent=1 // pred_check_branch
      %56 = sbr.rel (0) target = $region41
    $region40: #{fashion_mnist_cnn_forward.1} parent=1 // pred_region
      _
    $region41: #{fashion_mnist_cnn_forward.1} parent=1 // pred_fallthru
      _
    // Predicated region
    $region42: #{fashion_mnist_cnn_forward.1} parent=1 // pred_check
      _
    $region43: #{fashion_mnist_cnn_forward.1} parent=1 // pred_check_branch
      %58 = sbr.rel (0) target = $region45
    $region44: #{fashion_mnist_cnn_forward.1} parent=1 // pred_region
      %s60 = ssub.s32 128, 128
      %61 = vsyncadd [#allocation11], %s60
      %s63 = sshll.u32 [#allocation10], 4
      %s64 = int_to_ptr.vmem [resolvable:$true] %s63
      %66 = dma.hbm_to_vmem [thread:$0]  %s14, 128, %s64, [#allocation11]
    $region45: #{fashion_mnist_cnn_forward.1} parent=1 // pred_fallthru
      _
    // Predicated region
    $region46: #{fashion_mnist_cnn_forward.1} parent=1 // pred_check
      _
    $region47: #{fashion_mnist_cnn_forward.1} parent=1 // pred_check_branch
      %68 = sbr.rel (0) target = $region49
    $region48: #{fashion_mnist_cnn_forward.1} parent=1 // pred_region
      %s70 = ssub.s32 64, 64
      %71 = vsyncadd [#allocation11], %s70
      %s73 = sshll.u32 [#allocation12], 4
      %s74 = int_to_ptr.vmem [resolvable:$true] %s73
      %76 = dma.hbm_to_vmem [thread:$0]  %s15, 64, %s74, [#allocation11]
    $region49: #{fashion_mnist_cnn_forward.1} parent=1 // pred_fallthru
      _
    // Predicated region
    $region50: #{fashion_mnist_cnn_forward.1} parent=1 // pred_check
      _
    $region51: #{fashion_mnist_cnn_forward.1} parent=1 // pred_check_branch
      %78 = sbr.rel (0) target = $region53
    $region52: #{fashion_mnist_cnn_forward.1} parent=1 // pred_region
      _
    $region53: #{fashion_mnist_cnn_forward.1} parent=1 // pred_fallthru
      _
    // Predicated region
    $region54: #{fashion_mnist_cnn_forward.1} parent=1 // pred_check
      _
    $region55: #{fashion_mnist_cnn_forward.1} parent=1 // pred_check_branch
      %80 = sbr.rel (0) target = $region57
    $region56: #{fashion_mnist_cnn_forward.1} parent=1 // pred_region
      %s82 = ssub.s32 16, 16
      %83 = vsyncadd [#allocation14], %s82
      %s85 = sshll.u32 [#allocation13], 4
      %s86 = int_to_ptr.vmem [resolvable:$true] %s85
      %88 = dma.hbm_to_vmem [thread:$0]  %s17, 16, %s86, [#allocation14]
    $region57: #{fashion_mnist_cnn_forward.1} parent=1 // pred_fallthru
      _
    // Predicated region
    $region58: #{fashion_mnist_cnn_forward.1} parent=1 // pred_check
      _
    $region59: #{fashion_mnist_cnn_forward.1} parent=1 // pred_check_branch
      %90 = sbr.rel (0) target = $region61
    $region60: #{fashion_mnist_cnn_forward.1} parent=1 // pred_region
      %91 = dma.done [#allocation8], 1536
    $region61: #{fashion_mnist_cnn_forward.1} parent=1 // pred_fallthru
      _
    // Predicated region
    $region62: #{fashion_mnist_cnn_forward.1} parent=1 // pred_check
      _
    $region63: #{fashion_mnist_cnn_forward.1} parent=1 // pred_check_branch
      %93 = sbr.rel (0) target = $region65
    $region64: #{fashion_mnist_cnn_forward.1} parent=1 // pred_region
      %94 = dma.done [#allocation11], 128
    $region65: #{fashion_mnist_cnn_forward.1} parent=1 // pred_fallthru
      _
    // Predicated region
    $region66: #{fashion_mnist_cnn_forward.1} parent=1 // pred_check
      _
    $region67: #{fashion_mnist_cnn_forward.1} parent=1 // pred_check_branch
      %96 = sbr.rel (0) target = $region69
    $region68: #{fashion_mnist_cnn_forward.1} parent=1 // pred_region
      %97 = dma.done [#allocation11], 64
    $region69: #{fashion_mnist_cnn_forward.1} parent=1 // pred_fallthru
      _
    // Predicated region
    $region70: #{fashion_mnist_cnn_forward.1} parent=1 // pred_check
      _
    $region71: #{fashion_mnist_cnn_forward.1} parent=1 // pred_check_branch
      %99 = sbr.rel (0) target = $region73
    $region72: #{fashion_mnist_cnn_forward.1} parent=1 // pred_region
      %100 = dma.done [#allocation14], 16
    $region73: #{fashion_mnist_cnn_forward.1} parent=1 // pred_fallthru
      _
    %s103 = sshll.u32 1, 14
    %s104 = sxor.u32 4294967295, %s103
    %s106 = sld [smem:[#allocation0]]
    %s107 = sadd.s32 2, %s106
    %s109 = sshll.u32 7, 26
    %s110 = sxor.u32 4294967295, %s109
    %s111 = sand.u32 0, %s110
    %s112 = sshll.u32 %s107, 26
    %s113 = sor.u32 %s111, %s112
    %s114 = sshll.u32 [#allocation2], 4
    %s115 = int_to_ptr.vmem [resolvable:$true] %s114
    %118 = sst [smem:[#allocation17]] 256
    %s119 = scalar_lea.smem [#allocation17], 1
    %120 = sst [smem:[%s119]] 256
    %s121 = scalar_lea.smem [#allocation17], 2
    %122 = sst [smem:[%s121]] 2
    %s123 = scalar_lea.smem [#allocation17], 3
    %124 = sst [smem:[%s123]] 64
    %s125 = scalar_lea.smem [#allocation17], 4
    %126 = sst [smem:[%s125]] 128
    %s127 = scalar_lea.smem [#allocation17], 5
    %128 = sst [smem:[%s127]] 2
    %s129 = scalar_lea.smem [#allocation17], 6
    %130 = sst [smem:[%s129]] 128
    %s131 = scalar_lea.smem [#allocation17], 7
    %132 = sst [smem:[%s131]] 64
    %s133 = scalar_lea.smem [#allocation17], 8
    %134 = sst [smem:[%s133]] 4
    %136 = dma.general %s10, 16384, %s115, [#allocation6], [#allocation16], [#allocation17], %s113, 0
    %s137 = scalar_lea.sflag [#allocation6], 1
    %s139 = sshll.u32 1, 14
    %s140 = sxor.u32 4294967295, %s139
    %s142 = sadd.s32 2, %s106
    %s144 = sshll.u32 7, 26
    %s145 = sxor.u32 4294967295, %s144
    %s146 = sand.u32 0, %s145
    %s147 = sshll.u32 %s142, 26
    %s148 = sor.u32 %s146, %s147
    %s149 = sshll.u32 [#allocation3], 4
    %s150 = int_to_ptr.vmem [resolvable:$true] %s149
    %153 = sst [smem:[#allocation19]] 256
    %s154 = scalar_lea.smem [#allocation19], 1
    %155 = sst [smem:[%s154]] 256
    %s156 = scalar_lea.smem [#allocation19], 2
    %157 = sst [smem:[%s156]] 2
    %s158 = scalar_lea.smem [#allocation19], 3
    %159 = sst [smem:[%s158]] 64
    %s160 = scalar_lea.smem [#allocation19], 4
    %161 = sst [smem:[%s160]] 128
    %s162 = scalar_lea.smem [#allocation19], 5
    %163 = sst [smem:[%s162]] 2
    %s164 = scalar_lea.smem [#allocation19], 6
    %165 = sst [smem:[%s164]] 128
    %s166 = scalar_lea.smem [#allocation19], 7
    %167 = sst [smem:[%s166]] 64
    %s168 = scalar_lea.smem [#allocation19], 8
    %169 = sst [smem:[%s168]] 4
    %171 = dma.general %s11, 4096, %s150, %s137, [#allocation18], [#allocation19], %s148, 0
    %s172 = scalar_lea.sflag [#allocation6], 2
    %s174 = sshll.u32 1, 14
    %s175 = sxor.u32 4294967295, %s174
    %s177 = sadd.s32 2, %s106
    %s179 = sshll.u32 7, 26
    %s180 = sxor.u32 4294967295, %s179
    %s181 = sand.u32 0, %s180
    %s182 = sshll.u32 %s177, 26
    %s183 = sor.u32 %s181, %s182
    %s184 = sshll.u32 [#allocation4], 4
    %s185 = int_to_ptr.vmem [resolvable:$true] %s184
    %188 = sst [smem:[#allocation21]] 1024
    %s189 = scalar_lea.smem [#allocation21], 1
    %190 = sst [smem:[%s189]] 1024
    %s191 = scalar_lea.smem [#allocation21], 2
    %192 = sst [smem:[%s191]] 8
    %s193 = scalar_lea.smem [#allocation21], 3
    %194 = sst [smem:[%s193]] 64
    %s195 = scalar_lea.smem [#allocation21], 4
    %196 = sst [smem:[%s195]] 128
    %s197 = scalar_lea.smem [#allocation21], 5
    %198 = sst [smem:[%s197]] 2
    %s199 = scalar_lea.smem [#allocation21], 6
    %200 = sst [smem:[%s199]] 512
    %s201 = scalar_lea.smem [#allocation21], 7
    %202 = sst [smem:[%s201]] 64
    %s203 = scalar_lea.smem [#allocation21], 8
    %204 = sst [smem:[%s203]] 4
    %206 = dma.general %s12, 73728, %s185, %s172, [#allocation20], [#allocation21], %s183, 0
    %s207 = scalar_lea.sflag [#allocation6], 3
    %s209 = sshll.u32 1, 14
    %s210 = sxor.u32 4294967295, %s209
    %s212 = sadd.s32 2, %s106
    %s214 = sshll.u32 7, 26
    %s215 = sxor.u32 4294967295, %s214
    %s216 = sand.u32 0, %s215
    %s217 = sshll.u32 %s212, 26
    %s218 = sor.u32 %s216, %s217
    %s219 = sshll.u32 [#allocation5], 4
    %s220 = int_to_ptr.vmem [resolvable:$true] %s219
    %223 = sst [smem:[#allocation23]] 512
    %s224 = scalar_lea.smem [#allocation23], 1
    %225 = sst [smem:[%s224]] 512
    %s226 = scalar_lea.smem [#allocation23], 2
    %227 = sst [smem:[%s226]] 4
    %s228 = scalar_lea.smem [#allocation23], 3
    %229 = sst [smem:[%s228]] 64
    %s230 = scalar_lea.smem [#allocation23], 4
    %231 = sst [smem:[%s230]] 128
    %s232 = scalar_lea.smem [#allocation23], 5
    %233 = sst [smem:[%s232]] 2
    %s234 = scalar_lea.smem [#allocation23], 6
    %235 = sst [smem:[%s234]] 256
    %s236 = scalar_lea.smem [#allocation23], 7
    %237 = sst [smem:[%s236]] 64
    %s238 = scalar_lea.smem [#allocation23], 8
    %239 = sst [smem:[%s238]] 4
    %241 = dma.general %s13, 32768, %s220, %s207, [#allocation22], [#allocation23], %s218, 0
    %v242 = vld [vmem:[%s0] sm:$0xff]
    %v243 = vld [vmem:[%s0 + $0x8] sm:$0xff]
    %v246 = vlaneseq
    %v247 = vshrl.u32 %v246, 7
    %v248 = vsub.s32 0, %v247
    %v249 = vrot.slane %v242, %v248
    %v250 = vlaneseq
    %v251 = vshrl.u32 %v250, 7
    %v252 = vsub.s32 1, %v251
    %v253 = vrot.slane %v242, %v252
    %v254 = vlaneseq
    %v255 = vshrl.u32 %v254, 7
    %v256 = vsub.s32 2, %v255
    %v257 = vrot.slane %v242, %v256
    %v258 = vlaneseq
    %v259 = vshrl.u32 %v258, 7
    %v260 = vsub.s32 3, %v259
    %v261 = vrot.slane %v242, %v260
    %v262 = vlaneseq
    %v263 = vshrl.u32 %v262, 7
    %v264 = vsub.s32 4, %v263
    %v265 = vrot.slane %v242, %v264
    %v266 = vlaneseq
    %v267 = vshrl.u32 %v266, 7
    %v268 = vsub.s32 5, %v267
    %v269 = vrot.slane %v242, %v268
    %v270 = vlaneseq
    %v271 = vshrl.u32 %v270, 7
    %v272 = vsub.s32 6, %v271
    %v273 = vrot.slane %v242, %v272
    %v274 = vlaneseq
    %v275 = vshrl.u32 %v274, 7
    %v276 = vsub.s32 7, %v275
    %v277 = vrot.slane %v242, %v276
    %v278 = vlaneseq
    %v279 = vshrl.u32 %v278, 7
    %v280 = vsub.s32 0, %v279
    %v281 = vrot.slane %v243, %v280
    %v282 = vlaneseq
    %v283 = vshrl.u32 %v282, 7
    %v284 = vsub.s32 1, %v283
    %v285 = vrot.slane %v243, %v284
    %v286 = vlaneseq
    %v287 = vshrl.u32 %v286, 7
    %v288 = vsub.s32 2, %v287
    %v289 = vrot.slane %v243, %v288
    %v290 = vlaneseq
    %v291 = vshrl.u32 %v290, 7
    %v292 = vsub.s32 3, %v291
    %v293 = vrot.slane %v243, %v292
    %v294 = vlaneseq
    %v295 = vshrl.u32 %v294, 7
    %v296 = vsub.s32 4, %v295
    %v297 = vrot.slane %v243, %v296
    %v298 = vlaneseq
    %v299 = vshrl.u32 %v298, 7
    %v300 = vsub.s32 5, %v299
    %v301 = vrot.slane %v243, %v300
    %v302 = vlaneseq
    %v303 = vshrl.u32 %v302, 7
    %v304 = vsub.s32 6, %v303
    %v305 = vrot.slane %v243, %v304
    %v306 = vlaneseq
    %v307 = vshrl.u32 %v306, 7
    %v308 = vsub.s32 7, %v307
    %v309 = vrot.slane %v243, %v308
    %326 = vrot.lane.b32.xlu0 %v249, 33
    %v327 = vpop.permute.xlu0 %326
    %328 = vrot.lane.b32.xlu0 %v253, 33
    %v329 = vpop.permute.xlu0 %328
    %330 = vrot.lane.b32.xlu0 %v257, 33
    %v331 = vpop.permute.xlu0 %330
    %332 = vrot.lane.b32.xlu0 %v261, 33
    %v333 = vpop.permute.xlu0 %332
    %334 = vrot.lane.b32.xlu0 %v265, 33
    %v335 = vpop.permute.xlu0 %334
    %336 = vrot.lane.b32.xlu0 %v269, 33
    %v337 = vpop.permute.xlu0 %336
    %338 = vrot.lane.b32.xlu0 %v273, 33
    %v339 = vpop.permute.xlu0 %338
    %340 = vrot.lane.b32.xlu0 %v277, 33
    %v341 = vpop.permute.xlu0 %340
    %342 = vrot.lane.b32.xlu0 %v281, 33
    %v343 = vpop.permute.xlu0 %342
    %344 = vrot.lane.b32.xlu0 %v285, 33
    %v345 = vpop.permute.xlu0 %344
    %346 = vrot.lane.b32.xlu0 %v289, 33
    %v347 = vpop.permute.xlu0 %346
    %348 = vrot.lane.b32.xlu0 %v293, 33
    %v349 = vpop.permute.xlu0 %348
    %350 = vrot.lane.b32.xlu0 %v297, 33
    %v351 = vpop.permute.xlu0 %350
    %352 = vrot.lane.b32.xlu0 %v301, 33
    %v353 = vpop.permute.xlu0 %352
    %354 = vrot.lane.b32.xlu0 %v305, 33
    %v355 = vpop.permute.xlu0 %354
    %356 = vrot.lane.b32.xlu0 %v309, 33
    %v357 = vpop.permute.xlu0 %356
    %v358 = vlaneseq
    %v359 = vand.u32 %v358, 127
    %vm360 = vcmp.lt.s32.totalorder %v359, 33
    %v361 = vsel %vm360, %v355, %v357
    %v362 = vsel %vm360, %v353, %v355
    %v363 = vsel %vm360, %v351, %v353
    %v364 = vsel %vm360, %v349, %v351
    %v365 = vsel %vm360, %v347, %v349
    %v366 = vsel %vm360, %v345, %v347
    %v367 = vsel %vm360, %v343, %v345
    %v368 = vsel %vm360, %v341, %v343
    %v369 = vsel %vm360, %v339, %v341
    %v370 = vsel %vm360, %v337, %v339
    %v371 = vsel %vm360, %v335, %v337
    %v372 = vsel %vm360, %v333, %v335
    %v373 = vsel %vm360, %v331, %v333
    %v374 = vsel %vm360, %v329, %v331
    %v375 = vsel %vm360, %v327, %v329
    %v376 = vsel %vm360, %v357, %v327
    %377 = vrot.lane.b32.xlu0 %v249, 32
    %v378 = vpop.permute.xlu0 %377
    %379 = vrot.lane.b32.xlu0 %v253, 32
    %v380 = vpop.permute.xlu0 %379
    %381 = vrot.lane.b32.xlu0 %v257, 32
    %v382 = vpop.permute.xlu0 %381
    %383 = vrot.lane.b32.xlu0 %v261, 32
    %v384 = vpop.permute.xlu0 %383
    %385 = vrot.lane.b32.xlu0 %v265, 32
    %v386 = vpop.permute.xlu0 %385
    %387 = vrot.lane.b32.xlu0 %v269, 32
    %v388 = vpop.permute.xlu0 %387
    %389 = vrot.lane.b32.xlu0 %v273, 32
    %v390 = vpop.permute.xlu0 %389
    %391 = vrot.lane.b32.xlu0 %v277, 32
    %v392 = vpop.permute.xlu0 %391
    %393 = vrot.lane.b32.xlu0 %v281, 32
    %v394 = vpop.permute.xlu0 %393
    %395 = vrot.lane.b32.xlu0 %v285, 32
    %v396 = vpop.permute.xlu0 %395
    %397 = vrot.lane.b32.xlu0 %v289, 32
    %v398 = vpop.permute.xlu0 %397
    %399 = vrot.lane.b32.xlu0 %v293, 32
    %v400 = vpop.permute.xlu0 %399
    %401 = vrot.lane.b32.xlu0 %v297, 32
    %v402 = vpop.permute.xlu0 %401
    %403 = vrot.lane.b32.xlu0 %v301, 32
    %v404 = vpop.permute.xlu0 %403
    %405 = vrot.lane.b32.xlu0 %v305, 32
    %v406 = vpop.permute.xlu0 %405
    %407 = vrot.lane.b32.xlu0 %v309, 32
    %v408 = vpop.permute.xlu0 %407
    %vm409 = vcmp.lt.s32.totalorder %v359, 32
    %v410 = vsel %vm409, %v406, %v408
    %v411 = vsel %vm409, %v404, %v406
    %v412 = vsel %vm409, %v402, %v404
    %v413 = vsel %vm409, %v400, %v402
    %v414 = vsel %vm409, %v398, %v400
    %v415 = vsel %vm409, %v396, %v398
    %v416 = vsel %vm409, %v394, %v396
    %v417 = vsel %vm409, %v392, %v394
    %v418 = vsel %vm409, %v390, %v392
    %v419 = vsel %vm409, %v388, %v390
    %v420 = vsel %vm409, %v386, %v388
    %v421 = vsel %vm409, %v384, %v386
    %v422 = vsel %vm409, %v382, %v384
    %v423 = vsel %vm409, %v380, %v382
    %v424 = vsel %vm409, %v378, %v380
    %v425 = vsel %vm409, %v408, %v378
    %426 = vrot.lane.b32.xlu0 %v249, 31
    %v427 = vpop.permute.xlu0 %426
    %428 = vrot.lane.b32.xlu0 %v253, 31
    %v429 = vpop.permute.xlu0 %428
    %430 = vrot.lane.b32.xlu0 %v257, 31
    %v431 = vpop.permute.xlu0 %430
    %432 = vrot.lane.b32.xlu0 %v261, 31
    %v433 = vpop.permute.xlu0 %432
    %434 = vrot.lane.b32.xlu0 %v265, 31
    %v435 = vpop.permute.xlu0 %434
    %436 = vrot.lane.b32.xlu0 %v269, 31
    %v437 = vpop.permute.xlu0 %436
    %438 = vrot.lane.b32.xlu0 %v273, 31
    %v439 = vpop.permute.xlu0 %438
    %440 = vrot.lane.b32.xlu0 %v277, 31
    %v441 = vpop.permute.xlu0 %440
    %442 = vrot.lane.b32.xlu0 %v281, 31
    %v443 = vpop.permute.xlu0 %442
    %444 = vrot.lane.b32.xlu0 %v285, 31
    %v445 = vpop.permute.xlu0 %444
    %446 = vrot.lane.b32.xlu0 %v289, 31
    %v447 = vpop.permute.xlu0 %446
    %448 = vrot.lane.b32.xlu0 %v293, 31
    %v449 = vpop.permute.xlu0 %448
    %450 = vrot.lane.b32.xlu0 %v297, 31
    %v451 = vpop.permute.xlu0 %450
    %452 = vrot.lane.b32.xlu0 %v301, 31
    %v453 = vpop.permute.xlu0 %452
    %454 = vrot.lane.b32.xlu0 %v305, 31
    %v455 = vpop.permute.xlu0 %454
    %456 = vrot.lane.b32.xlu0 %v309, 31
    %v457 = vpop.permute.xlu0 %456
    %vm458 = vcmp.lt.s32.totalorder %v359, 31
    %v459 = vsel %vm458, %v455, %v457
    %v460 = vsel %vm458, %v453, %v455
    %v461 = vsel %vm458, %v451, %v453
    %v462 = vsel %vm458, %v449, %v451
    %v463 = vsel %vm458, %v447, %v449
    %v464 = vsel %vm458, %v445, %v447
    %v465 = vsel %vm458, %v443, %v445
    %v466 = vsel %vm458, %v441, %v443
    %v467 = vsel %vm458, %v439, %v441
    %v468 = vsel %vm458, %v437, %v439
    %v469 = vsel %vm458, %v435, %v437
    %v470 = vsel %vm458, %v433, %v435
    %v471 = vsel %vm458, %v431, %v433
    %v472 = vsel %vm458, %v429, %v431
    %v473 = vsel %vm458, %v427, %v429
    %v474 = vsel %vm458, %v457, %v427
    %475 = vrot.lane.b32.xlu0 %v249, 1
    %v476 = vpop.permute.xlu0 %475
    %477 = vrot.lane.b32.xlu0 %v253, 1
    %v478 = vpop.permute.xlu0 %477
    %479 = vrot.lane.b32.xlu0 %v257, 1
    %v480 = vpop.permute.xlu0 %479
    %481 = vrot.lane.b32.xlu0 %v261, 1
    %v482 = vpop.permute.xlu0 %481
    %483 = vrot.lane.b32.xlu0 %v265, 1
    %v484 = vpop.permute.xlu0 %483
    %485 = vrot.lane.b32.xlu0 %v269, 1
    %v486 = vpop.permute.xlu0 %485
    %487 = vrot.lane.b32.xlu0 %v273, 1
    %v488 = vpop.permute.xlu0 %487
    %489 = vrot.lane.b32.xlu0 %v277, 1
    %v490 = vpop.permute.xlu0 %489
    %491 = vrot.lane.b32.xlu0 %v281, 1
    %v492 = vpop.permute.xlu0 %491
    %493 = vrot.lane.b32.xlu0 %v285, 1
    %v494 = vpop.permute.xlu0 %493
    %495 = vrot.lane.b32.xlu0 %v289, 1
    %v496 = vpop.permute.xlu0 %495
    %497 = vrot.lane.b32.xlu0 %v293, 1
    %v498 = vpop.permute.xlu0 %497
    %499 = vrot.lane.b32.xlu0 %v297, 1
    %v500 = vpop.permute.xlu0 %499
    %501 = vrot.lane.b32.xlu0 %v301, 1
    %v502 = vpop.permute.xlu0 %501
    %503 = vrot.lane.b32.xlu0 %v305, 1
    %v504 = vpop.permute.xlu0 %503
    %505 = vrot.lane.b32.xlu0 %v309, 1
    %v506 = vpop.permute.xlu0 %505
    %vm507 = vcmp.lt.s32.totalorder %v359, 1
    %v508 = vsel %vm507, %v504, %v506
    %v509 = vsel %vm507, %v502, %v504
    %v510 = vsel %vm507, %v500, %v502
    %v511 = vsel %vm507, %v498, %v500
    %v512 = vsel %vm507, %v496, %v498
    %v513 = vsel %vm507, %v494, %v496
    %v514 = vsel %vm507, %v492, %v494
    %v515 = vsel %vm507, %v490, %v492
    %v516 = vsel %vm507, %v488, %v490
    %v517 = vsel %vm507, %v486, %v488
    %v518 = vsel %vm507, %v484, %v486
    %v519 = vsel %vm507, %v482, %v484
    %v520 = vsel %vm507, %v480, %v482
    %v521 = vsel %vm507, %v478, %v480
    %v522 = vsel %vm507, %v476, %v478
    %v523 = vsel %vm507, %v506, %v476
    %524 = vrot.lane.b32.xlu0 %v249, 127
    %v525 = vpop.permute.xlu0 %524
    %526 = vrot.lane.b32.xlu0 %v253, 127
    %v527 = vpop.permute.xlu0 %526
    %528 = vrot.lane.b32.xlu0 %v257, 127
    %v529 = vpop.permute.xlu0 %528
    %530 = vrot.lane.b32.xlu0 %v261, 127
    %v531 = vpop.permute.xlu0 %530
    %532 = vrot.lane.b32.xlu0 %v265, 127
    %v533 = vpop.permute.xlu0 %532
    %534 = vrot.lane.b32.xlu0 %v269, 127
    %v535 = vpop.permute.xlu0 %534
    %536 = vrot.lane.b32.xlu0 %v273, 127
    %v537 = vpop.permute.xlu0 %536
    %538 = vrot.lane.b32.xlu0 %v277, 127
    %v539 = vpop.permute.xlu0 %538
    %540 = vrot.lane.b32.xlu0 %v281, 127
    %v541 = vpop.permute.xlu0 %540
    %542 = vrot.lane.b32.xlu0 %v285, 127
    %v543 = vpop.permute.xlu0 %542
    %544 = vrot.lane.b32.xlu0 %v289, 127
    %v545 = vpop.permute.xlu0 %544
    %546 = vrot.lane.b32.xlu0 %v293, 127
    %v547 = vpop.permute.xlu0 %546
    %548 = vrot.lane.b32.xlu0 %v297, 127
    %v549 = vpop.permute.xlu0 %548
    %550 = vrot.lane.b32.xlu0 %v301, 127
    %v551 = vpop.permute.xlu0 %550
    %552 = vrot.lane.b32.xlu0 %v305, 127
    %v553 = vpop.permute.xlu0 %552
    %554 = vrot.lane.b32.xlu0 %v309, 127
    %v555 = vpop.permute.xlu0 %554
    %vm556 = vcmp.lt.s32.totalorder %v359, 127
    %v557 = vsel %vm556, %v553, %v555
    %v558 = vsel %vm556, %v551, %v553
    %v559 = vsel %vm556, %v549, %v551
    %v560 = vsel %vm556, %v547, %v549
    %v561 = vsel %vm556, %v545, %v547
    %v562 = vsel %vm556, %v543, %v545
    %v563 = vsel %vm556, %v541, %v543
    %v564 = vsel %vm556, %v539, %v541
    %v565 = vsel %vm556, %v537, %v539
    %v566 = vsel %vm556, %v535, %v537
    %v567 = vsel %vm556, %v533, %v535
    %v568 = vsel %vm556, %v531, %v533
    %v569 = vsel %vm556, %v529, %v531
    %v570 = vsel %vm556, %v527, %v529
    %v571 = vsel %vm556, %v525, %v527
    %v572 = vsel %vm556, %v555, %v525
    %573 = vrot.lane.b32.xlu0 %v249, 97
    %v574 = vpop.permute.xlu0 %573
    %575 = vrot.lane.b32.xlu0 %v253, 97
    %v576 = vpop.permute.xlu0 %575
    %577 = vrot.lane.b32.xlu0 %v257, 97
    %v578 = vpop.permute.xlu0 %577
    %579 = vrot.lane.b32.xlu0 %v261, 97
    %v580 = vpop.permute.xlu0 %579
    %581 = vrot.lane.b32.xlu0 %v265, 97
    %v582 = vpop.permute.xlu0 %581
    %583 = vrot.lane.b32.xlu0 %v269, 97
    %v584 = vpop.permute.xlu0 %583
    %585 = vrot.lane.b32.xlu0 %v273, 97
    %v586 = vpop.permute.xlu0 %585
    %587 = vrot.lane.b32.xlu0 %v277, 97
    %v588 = vpop.permute.xlu0 %587
    %589 = vrot.lane.b32.xlu0 %v281, 97
    %v590 = vpop.permute.xlu0 %589
    %591 = vrot.lane.b32.xlu0 %v285, 97
    %v592 = vpop.permute.xlu0 %591
    %593 = vrot.lane.b32.xlu0 %v289, 97
    %v594 = vpop.permute.xlu0 %593
    %595 = vrot.lane.b32.xlu0 %v293, 97
    %v596 = vpop.permute.xlu0 %595
    %597 = vrot.lane.b32.xlu0 %v297, 97
    %v598 = vpop.permute.xlu0 %597
    %599 = vrot.lane.b32.xlu0 %v301, 97
    %v600 = vpop.permute.xlu0 %599
    %601 = vrot.lane.b32.xlu0 %v305, 97
    %v602 = vpop.permute.xlu0 %601
    %603 = vrot.lane.b32.xlu0 %v309, 97
    %v604 = vpop.permute.xlu0 %603
    %vm605 = vcmp.lt.s32.totalorder %v359, 97
    %v606 = vsel %vm605, %v602, %v604
    %v607 = vsel %vm605, %v600, %v602
    %v608 = vsel %vm605, %v598, %v600
    %v609 = vsel %vm605, %v596, %v598
    %v610 = vsel %vm605, %v594, %v596
    %v611 = vsel %vm605, %v592, %v594
    %v612 = vsel %vm605, %v590, %v592
    %v613 = vsel %vm605, %v588, %v590
    %v614 = vsel %vm605, %v586, %v588
    %v615 = vsel %vm605, %v584, %v586
    %v616 = vsel %vm605, %v582, %v584
    %v617 = vsel %vm605, %v580, %v582
    %v618 = vsel %vm605, %v578, %v580
    %v619 = vsel %vm605, %v576, %v578
    %v620 = vsel %vm605, %v574, %v576
    %v621 = vsel %vm605, %v604, %v574
    %622 = vrot.lane.b32.xlu0 %v249, 96
    %v623 = vpop.permute.xlu0 %622
    %624 = vrot.lane.b32.xlu0 %v253, 96
    %v625 = vpop.permute.xlu0 %624
    %626 = vrot.lane.b32.xlu0 %v257, 96
    %v627 = vpop.permute.xlu0 %626
    %628 = vrot.lane.b32.xlu0 %v261, 96
    %v629 = vpop.permute.xlu0 %628
    %630 = vrot.lane.b32.xlu0 %v265, 96
    %v631 = vpop.permute.xlu0 %630
    %632 = vrot.lane.b32.xlu0 %v269, 96
    %v633 = vpop.permute.xlu0 %632
    %634 = vrot.lane.b32.xlu0 %v273, 96
    %v635 = vpop.permute.xlu0 %634
    %636 = vrot.lane.b32.xlu0 %v277, 96
    %v637 = vpop.permute.xlu0 %636
    %638 = vrot.lane.b32.xlu0 %v281, 96
    %v639 = vpop.permute.xlu0 %638
    %640 = vrot.lane.b32.xlu0 %v285, 96
    %v641 = vpop.permute.xlu0 %640
    %642 = vrot.lane.b32.xlu0 %v289, 96
    %v643 = vpop.permute.xlu0 %642
    %644 = vrot.lane.b32.xlu0 %v293, 96
    %v645 = vpop.permute.xlu0 %644
    %646 = vrot.lane.b32.xlu0 %v297, 96
    %v647 = vpop.permute.xlu0 %646
    %648 = vrot.lane.b32.xlu0 %v301, 96
    %v649 = vpop.permute.xlu0 %648
    %650 = vrot.lane.b32.xlu0 %v305, 96
    %v651 = vpop.permute.xlu0 %650
    %652 = vrot.lane.b32.xlu0 %v309, 96
    %v653 = vpop.permute.xlu0 %652
    %vm654 = vcmp.lt.s32.totalorder %v359, 96
    %v655 = vsel %vm654, %v651, %v653
    %v656 = vsel %vm654, %v649, %v651
    %v657 = vsel %vm654, %v647, %v649
    %v658 = vsel %vm654, %v645, %v647
    %v659 = vsel %vm654, %v643, %v645
    %v660 = vsel %vm654, %v641, %v643
    %v661 = vsel %vm654, %v639, %v641
    %v662 = vsel %vm654, %v637, %v639
    %v663 = vsel %vm654, %v635, %v637
    %v664 = vsel %vm654, %v633, %v635
    %v665 = vsel %vm654, %v631, %v633
    %v666 = vsel %vm654, %v629, %v631
    %v667 = vsel %vm654, %v627, %v629
    %v668 = vsel %vm654, %v625, %v627
    %v669 = vsel %vm654, %v623, %v625
    %v670 = vsel %vm654, %v653, %v623
    %671 = vrot.lane.b32.xlu0 %v249, 95
    %v672 = vpop.permute.xlu0 %671
    %673 = vrot.lane.b32.xlu0 %v253, 95
    %v674 = vpop.permute.xlu0 %673
    %675 = vrot.lane.b32.xlu0 %v257, 95
    %v676 = vpop.permute.xlu0 %675
    %677 = vrot.lane.b32.xlu0 %v261, 95
    %v678 = vpop.permute.xlu0 %677
    %679 = vrot.lane.b32.xlu0 %v265, 95
    %v680 = vpop.permute.xlu0 %679
    %681 = vrot.lane.b32.xlu0 %v269, 95
    %v682 = vpop.permute.xlu0 %681
    %683 = vrot.lane.b32.xlu0 %v273, 95
    %v684 = vpop.permute.xlu0 %683
    %685 = vrot.lane.b32.xlu0 %v277, 95
    %v686 = vpop.permute.xlu0 %685
    %687 = vrot.lane.b32.xlu0 %v281, 95
    %v688 = vpop.permute.xlu0 %687
    %689 = vrot.lane.b32.xlu0 %v285, 95
    %v690 = vpop.permute.xlu0 %689
    %691 = vrot.lane.b32.xlu0 %v289, 95
    %v692 = vpop.permute.xlu0 %691
    %693 = vrot.lane.b32.xlu0 %v293, 95
    %v694 = vpop.permute.xlu0 %693
    %695 = vrot.lane.b32.xlu0 %v297, 95
    %v696 = vpop.permute.xlu0 %695
    %697 = vrot.lane.b32.xlu0 %v301, 95
    %v698 = vpop.permute.xlu0 %697
    %699 = vrot.lane.b32.xlu0 %v305, 95
    %v700 = vpop.permute.xlu0 %699
    %701 = vrot.lane.b32.xlu0 %v309, 95
    %v702 = vpop.permute.xlu0 %701
    %vm703 = vcmp.lt.s32.totalorder %v359, 95
    %v704 = vsel %vm703, %v700, %v702
    %v705 = vsel %vm703, %v698, %v700
    %v706 = vsel %vm703, %v696, %v698
    %v707 = vsel %vm703, %v694, %v696
    %v708 = vsel %vm703, %v692, %v694
    %v709 = vsel %vm703, %v690, %v692
    %v710 = vsel %vm703, %v688, %v690
    %v711 = vsel %vm703, %v686, %v688
    %v712 = vsel %vm703, %v684, %v686
    %v713 = vsel %vm703, %v682, %v684
    %v714 = vsel %vm703, %v680, %v682
    %v715 = vsel %vm703, %v678, %v680
    %v716 = vsel %vm703, %v676, %v678
    %v717 = vsel %vm703, %v674, %v676
    %v718 = vsel %vm703, %v672, %v674
    %v719 = vsel %vm703, %v702, %v672
    %v736 = vrot.slane %v425, 7
    %v737 = vrot.slane %v424, 7
    %v738 = vrot.slane %v423, 7
    %v739 = vrot.slane %v422, 7
    %v740 = vrot.slane %v421, 7
    %v741 = vrot.slane %v420, 7
    %v742 = vrot.slane %v419, 7
    %v743 = vrot.slane %v418, 7
    %v744 = vrot.slane %v417, 7
    %v745 = vrot.slane %v416, 7
    %v746 = vrot.slane %v415, 7
    %v747 = vrot.slane %v414, 7
    %v748 = vrot.slane %v413, 7
    %v749 = vrot.slane %v412, 7
    %v750 = vrot.slane %v411, 7
    %v751 = vrot.slane %v410, 7
    %v784 = vrot.slane %v474, 6
    %v785 = vrot.slane %v473, 6
    %v786 = vrot.slane %v472, 6
    %v787 = vrot.slane %v471, 6
    %v788 = vrot.slane %v470, 6
    %v789 = vrot.slane %v469, 6
    %v790 = vrot.slane %v468, 6
    %v791 = vrot.slane %v467, 6
    %v792 = vrot.slane %v466, 6
    %v793 = vrot.slane %v465, 6
    %v794 = vrot.slane %v464, 6
    %v795 = vrot.slane %v463, 6
    %v796 = vrot.slane %v462, 6
    %v797 = vrot.slane %v461, 6
    %v798 = vrot.slane %v460, 6
    %v799 = vrot.slane %v459, 6
    %v832 = vrot.slane %v523, 5
    %v833 = vrot.slane %v522, 5
    %v834 = vrot.slane %v521, 5
    %v835 = vrot.slane %v520, 5
    %v836 = vrot.slane %v519, 5
    %v837 = vrot.slane %v518, 5
    %v838 = vrot.slane %v517, 5
    %v839 = vrot.slane %v516, 5
    %v840 = vrot.slane %v515, 5
    %v841 = vrot.slane %v514, 5
    %v842 = vrot.slane %v513, 5
    %v843 = vrot.slane %v512, 5
    %v844 = vrot.slane %v511, 5
    %v845 = vrot.slane %v510, 5
    %v846 = vrot.slane %v509, 5
    %v847 = vrot.slane %v508, 5
    %v880 = vrot.slane %v571, 3
    %v881 = vrot.slane %v570, 3
    %v882 = vrot.slane %v569, 3
    %v883 = vrot.slane %v568, 3
    %v884 = vrot.slane %v567, 3
    %v885 = vrot.slane %v566, 3
    %v886 = vrot.slane %v565, 3
    %v887 = vrot.slane %v564, 3
    %v888 = vrot.slane %v563, 3
    %v889 = vrot.slane %v562, 3
    %v890 = vrot.slane %v561, 3
    %v891 = vrot.slane %v560, 3
    %v892 = vrot.slane %v559, 3
    %v893 = vrot.slane %v558, 3
    %v894 = vrot.slane %v557, 3
    %v895 = vrot.slane %v572, 3
    %v928 = vrot.slane %v620, 2
    %v929 = vrot.slane %v619, 2
    %v930 = vrot.slane %v618, 2
    %v931 = vrot.slane %v617, 2
    %v932 = vrot.slane %v616, 2
    %v933 = vrot.slane %v615, 2
    %v934 = vrot.slane %v614, 2
    %v935 = vrot.slane %v613, 2
    %v936 = vrot.slane %v612, 2
    %v937 = vrot.slane %v611, 2
    %v938 = vrot.slane %v610, 2
    %v939 = vrot.slane %v609, 2
    %v940 = vrot.slane %v608, 2
    %v941 = vrot.slane %v607, 2
    %v942 = vrot.slane %v606, 2
    %v943 = vrot.slane %v621, 2
    %v976 = vrot.slane %v669, 1
    %v977 = vrot.slane %v668, 1
    %v978 = vrot.slane %v667, 1
    %v979 = vrot.slane %v666, 1
    %v980 = vrot.slane %v665, 1
    %v981 = vrot.slane %v664, 1
    %v982 = vrot.slane %v663, 1
    %v983 = vrot.slane %v662, 1
    %v984 = vrot.slane %v661, 1
    %v985 = vrot.slane %v660, 1
    %v986 = vrot.slane %v659, 1
    %v987 = vrot.slane %v658, 1
    %v988 = vrot.slane %v657, 1
    %v989 = vrot.slane %v656, 1
    %v990 = vrot.slane %v655, 1
    %v991 = vrot.slane %v670, 1
    %vm1008 = vcmask 1040384
    %v1009 = vsel %vm1008, %v376, %v736
    %v1010 = vsel %vm1008, %v375, %v737
    %v1011 = vsel %vm1008, %v374, %v738
    %v1012 = vsel %vm1008, %v373, %v739
    %v1013 = vsel %vm1008, %v372, %v740
    %v1014 = vsel %vm1008, %v371, %v741
    %v1015 = vsel %vm1008, %v370, %v742
    %v1016 = vsel %vm1008, %v369, %v743
    %v1017 = vsel %vm1008, %v368, %v744
    %v1018 = vsel %vm1008, %v367, %v745
    %v1019 = vsel %vm1008, %v366, %v746
    %v1020 = vsel %vm1008, %v365, %v747
    %v1021 = vsel %vm1008, %v364, %v748
    %v1022 = vsel %vm1008, %v363, %v749
    %v1023 = vsel %vm1008, %v362, %v750
    %v1024 = vsel %vm1008, %v361, %v751
    %vm1025 = vcmask 1041408
    %v1026 = vsel %vm1025, %v1009, %v784
    %v1027 = vsel %vm1025, %v1010, %v785
    %v1028 = vsel %vm1025, %v1011, %v786
    %v1029 = vsel %vm1025, %v1012, %v787
    %v1030 = vsel %vm1025, %v1013, %v788
    %v1031 = vsel %vm1025, %v1014, %v789
    %v1032 = vsel %vm1025, %v1015, %v790
    %v1033 = vsel %vm1025, %v1016, %v791
    %v1034 = vsel %vm1025, %v1017, %v792
    %v1035 = vsel %vm1025, %v1018, %v793
    %v1036 = vsel %vm1025, %v1019, %v794
    %v1037 = vsel %vm1025, %v1020, %v795
    %v1038 = vsel %vm1025, %v1021, %v796
    %v1039 = vsel %vm1025, %v1022, %v797
    %v1040 = vsel %vm1025, %v1023, %v798
    %v1041 = vsel %vm1025, %v1024, %v799
    %vm1042 = vcmask 1042432
    %v1043 = vsel %vm1042, %v1026, %v832
    %v1044 = vsel %vm1042, %v1027, %v833
    %v1045 = vsel %vm1042, %v1028, %v834
    %v1046 = vsel %vm1042, %v1029, %v835
    %v1047 = vsel %vm1042, %v1030, %v836
    %v1048 = vsel %vm1042, %v1031, %v837
    %v1049 = vsel %vm1042, %v1032, %v838
    %v1050 = vsel %vm1042, %v1033, %v839
    %v1051 = vsel %vm1042, %v1034, %v840
    %v1052 = vsel %vm1042, %v1035, %v841
    %v1053 = vsel %vm1042, %v1036, %v842
    %v1054 = vsel %vm1042, %v1037, %v843
    %v1055 = vsel %vm1042, %v1038, %v844
    %v1056 = vsel %vm1042, %v1039, %v845
    %v1057 = vsel %vm1042, %v1040, %v846
    %v1058 = vsel %vm1042, %v1041, %v847
    %vm1059 = vcmask 1043456
    %v1060 = vsel %vm1059, %v1043, %v249
    %v1061 = vsel %vm1059, %v1044, %v253
    %v1062 = vsel %vm1059, %v1045, %v257
    %v1063 = vsel %vm1059, %v1046, %v261
    %v1064 = vsel %vm1059, %v1047, %v265
    %v1065 = vsel %vm1059, %v1048, %v269
    %v1066 = vsel %vm1059, %v1049, %v273
    %v1067 = vsel %vm1059, %v1050, %v277
    %v1068 = vsel %vm1059, %v1051, %v281
    %v1069 = vsel %vm1059, %v1052, %v285
    %v1070 = vsel %vm1059, %v1053, %v289
    %v1071 = vsel %vm1059, %v1054, %v293
    %v1072 = vsel %vm1059, %v1055, %v297
    %v1073 = vsel %vm1059, %v1056, %v301
    %v1074 = vsel %vm1059, %v1057, %v305
    %v1075 = vsel %vm1059, %v1058, %v309
    %vm1076 = vcmask 1044480
    %v1077 = vsel %vm1076, %v1060, %v880
    %v1078 = vsel %vm1076, %v1061, %v881
    %v1079 = vsel %vm1076, %v1062, %v882
    %v1080 = vsel %vm1076, %v1063, %v883
    %v1081 = vsel %vm1076, %v1064, %v884
    %v1082 = vsel %vm1076, %v1065, %v885
    %v1083 = vsel %vm1076, %v1066, %v886
    %v1084 = vsel %vm1076, %v1067, %v887
    %v1085 = vsel %vm1076, %v1068, %v888
    %v1086 = vsel %vm1076, %v1069, %v889
    %v1087 = vsel %vm1076, %v1070, %v890
    %v1088 = vsel %vm1076, %v1071, %v891
    %v1089 = vsel %vm1076, %v1072, %v892
    %v1090 = vsel %vm1076, %v1073, %v893
    %v1091 = vsel %vm1076, %v1074, %v894
    %v1092 = vsel %vm1076, %v1075, %v895
    %vm1093 = vcmask 1045504
    %v1094 = vsel %vm1093, %v1077, %v928
    %v1095 = vsel %vm1093, %v1078, %v929
    %v1096 = vsel %vm1093, %v1079, %v930
    %v1097 = vsel %vm1093, %v1080, %v931
    %v1098 = vsel %vm1093, %v1081, %v932
    %v1099 = vsel %vm1093, %v1082, %v933
    %v1100 = vsel %vm1093, %v1083, %v934
    %v1101 = vsel %vm1093, %v1084, %v935
    %v1102 = vsel %vm1093, %v1085, %v936
    %v1103 = vsel %vm1093, %v1086, %v937
    %v1104 = vsel %vm1093, %v1087, %v938
    %v1105 = vsel %vm1093, %v1088, %v939
    %v1106 = vsel %vm1093, %v1089, %v940
    %v1107 = vsel %vm1093, %v1090, %v941
    %v1108 = vsel %vm1093, %v1091, %v942
    %v1109 = vsel %vm1093, %v1092, %v943
    %vm1110 = vcmask 1046528
    %v1111 = vsel %vm1110, %v1094, %v976
    %v1112 = vsel %vm1110, %v1095, %v977
    %v1113 = vsel %vm1110, %v1096, %v978
    %v1114 = vsel %vm1110, %v1097, %v979
    %v1115 = vsel %vm1110, %v1098, %v980
    %v1116 = vsel %vm1110, %v1099, %v981
    %v1117 = vsel %vm1110, %v1100, %v982
    %v1118 = vsel %vm1110, %v1101, %v983
    %v1119 = vsel %vm1110, %v1102, %v984
    %v1120 = vsel %vm1110, %v1103, %v985
    %v1121 = vsel %vm1110, %v1104, %v986
    %v1122 = vsel %vm1110, %v1105, %v987
    %v1123 = vsel %vm1110, %v1106, %v988
    %v1124 = vsel %vm1110, %v1107, %v989
    %v1125 = vsel %vm1110, %v1108, %v990
    %v1126 = vsel %vm1110, %v1109, %v991
    %v1127 = vld [vmem:[%s1] sm:$0xf]
    %v1128 = vld [vmem:[%s1 + $0x4] sm:$0xf]
    %v1129 = vld [vmem:[%s1 + $0x8] sm:$0xf]
    %v1130 = vld [vmem:[%s1 + $0xc] sm:$0xf]
    %v1131 = vpack.c.bf16 %v718, %v1111
    %v1132 = vpack.c.bf16 %v717, %v1112
    %v1133 = vpack.c.bf16 %v716, %v1113
    %v1134 = vpack.c.bf16 %v715, %v1114
    %v1135 = vpack.c.bf16 %v714, %v1115
    %v1136 = vpack.c.bf16 %v713, %v1116
    %v1137 = vpack.c.bf16 %v712, %v1117
    %v1138 = vpack.c.bf16 %v711, %v1118
    %v1139 = vpack.c.bf16 %v710, %v1119
    %v1140 = vpack.c.bf16 %v709, %v1120
    %v1141 = vpack.c.bf16 %v708, %v1121
    %v1142 = vpack.c.bf16 %v707, %v1122
    %v1143 = vpack.c.bf16 %v706, %v1123
    %v1144 = vpack.c.bf16 %v705, %v1124
    %v1145 = vpack.c.bf16 %v704, %v1125
    %v1146 = vpack.c.bf16 %v719, %v1126
    %v1151 = vunpack.c.l.b16 %v1127
    %v1152 = vunpack.c.l.b16 %v1128
    %v1153 = vunpack.c.l.b16 %v1129
    %v1154 = vunpack.c.l.b16 %v1130
    %v1155 = vpack.c.b16 %v1152, %v1151
    %v1156 = vpack.c.b16 %v1154, %v1153
    %vm1157 = vcmask 72704
    %v1159 = vsel %vm1157, %v1155, 0
    %v1162 = vsel %vm1157, %v1156, 0
    %v1164 = vsel %vm1059, 4294967295, 65535
    %v1165 = vsel %vm1076, %v1164, 0
    %v1167 = vand.u32 %v1131, %v1165
    %v1170 = vand.u32 %v1132, %v1165
    %v1173 = vand.u32 %v1133, %v1165
    %v1176 = vand.u32 %v1134, %v1165
    %v1179 = vand.u32 %v1135, %v1165
    %v1182 = vand.u32 %v1136, %v1165
    %v1185 = vand.u32 %v1137, %v1165
    %v1188 = vand.u32 %v1138, %v1165
    %v1191 = vand.u32 %v1139, %v1165
    %v1194 = vand.u32 %v1140, %v1165
    %v1197 = vand.u32 %v1141, %v1165
    %v1200 = vand.u32 %v1142, %v1165
    %v1203 = vand.u32 %v1143, %v1165
    %v1206 = vand.u32 %v1144, %v1165
    %v1209 = vand.u32 %v1145, %v1165
    %v1212 = vand.u32 %v1146, %v1165
    %1214 = vmatprep.subr.bf16.mxu0 %v1170
    %1215 = vmatpush1.bf16.msra.mxu0 %v1167
    %1216 = vmatprep.subr.bf16.mxu0 0
    %1217 = vmatpush1.bf16.msra.mxu0 0
    %1218 = vmatprep.subr.bf16.mxu0 0
    %1219 = vmatpush1.bf16.msra.mxu0 0
    %1220 = vmatprep.subr.bf16.mxu0 0
    %1221 = vmatpush1.bf16.msra.mxu0 0
    %1222 = vmatprep.subr.bf16.mxu0 0
    %1223 = vmatpush1.bf16.msra.mxu0 0
    %1224 = vmatprep.subr.bf16.mxu0 0
    %1225 = vmatpush1.bf16.msra.mxu0 0
    %1226 = vmatprep.subr.bf16.mxu0 0
    %1227 = vmatpush1.bf16.msra.mxu0 0
    %1228 = vmatprep.subr.bf16.mxu0 0
    %1229 = vmatpush1.bf16.msra.mxu0 0
    %1230 = vmatprep.subr.bf16.mxu0 0
    %1231 = vmatpush1.bf16.msra.mxu0 0
    %1232 = vmatprep.subr.bf16.mxu0 0
    %1233 = vmatpush1.bf16.msra.mxu0 0
    %1234 = vmatprep.subr.bf16.mxu0 0
    %1235 = vmatpush1.bf16.msra.mxu0 0
    %1236 = vmatprep.subr.bf16.mxu0 0
    %1237 = vmatpush1.bf16.msra.mxu0 0
    %1238 = vmatprep.subr.bf16.mxu0 0
    %1239 = vmatpush1.bf16.msra.mxu0 0
    %1240 = vmatprep.subr.bf16.mxu0 0
    %1241 = vmatpush1.bf16.msra.mxu0 0
    %1242 = vmatprep.subr.bf16.mxu0 0
    %1243 = vmatpush1.bf16.msra.mxu0 0
    %1244 = vmatprep.subr.bf16.mxu0 0
    %1245 = vmatpush1.bf16.msra.mxu0 0
    %1246 = vmatprep.mubr.bf16.mxu0 0
    %1247 = vmatmul.mubr.bf16.gmra.mrb[0].mxu0 %v1159
    %v1248 = vpop.f32.mrb[0].mxu0
    %v1249 = vadd.f32 0.0, %v1248
    %v1250 = vpop.f32.mrb[0].mxu0
    %v1251 = vadd.f32 0.0, %v1250
    %v1252 = vpop.f32.mrb[0].mxu0
    %v1253 = vadd.f32 0.0, %v1252
    %v1254 = vpop.f32.mrb[0].mxu0
    %v1255 = vadd.f32 0.0, %v1254
    %1256 = vmatprep.mubr.bf16.mxu0 0
    %1257 = vmatmul.mubr.bf16.gmra.mrb[0].mxu0 %v1162
    %v1258 = vpop.f32.mrb[0].mxu0
    %v1259 = vadd.f32 0.0, %v1258
    %v1260 = vpop.f32.mrb[0].mxu0
    %v1261 = vadd.f32 0.0, %v1260
    %v1262 = vpop.f32.mrb[0].mxu0
    %v1263 = vadd.f32 0.0, %v1262
    %v1264 = vpop.f32.mrb[0].mxu0
    %v1265 = vadd.f32 0.0, %v1264
    %1266 = vdwg.mxu0
    %1267 = vmatprep.subr.bf16.mxu0 %v1176
    %1268 = vmatpush1.bf16.msra.mxu0 %v1173
    %1269 = vmatprep.subr.bf16.mxu0 0
    %1270 = vmatpush1.bf16.msra.mxu0 0
    %1271 = vmatprep.subr.bf16.mxu0 0
    %1272 = vmatpush1.bf16.msra.mxu0 0
    %1273 = vmatprep.subr.bf16.mxu0 0
    %1274 = vmatpush1.bf16.msra.mxu0 0
    %1275 = vmatprep.subr.bf16.mxu0 0
    %1276 = vmatpush1.bf16.msra.mxu0 0
    %1277 = vmatprep.subr.bf16.mxu0 0
    %1278 = vmatpush1.bf16.msra.mxu0 0
    %1279 = vmatprep.subr.bf16.mxu0 0
    %1280 = vmatpush1.bf16.msra.mxu0 0
    %1281 = vmatprep.subr.bf16.mxu0 0
    %1282 = vmatpush1.bf16.msra.mxu0 0
    %1283 = vmatprep.subr.bf16.mxu0 0
    %1284 = vmatpush1.bf16.msra.mxu0 0
    %1285 = vmatprep.subr.bf16.mxu0 0
    %1286 = vmatpush1.bf16.msra.mxu0 0
    %1287 = vmatprep.subr.bf16.mxu0 0
    %1288 = vmatpush1.bf16.msra.mxu0 0
    %1289 = vmatprep.subr.bf16.mxu0 0
    %1290 = vmatpush1.bf16.msra.mxu0 0
    %1291 = vmatprep.subr.bf16.mxu0 0
    %1292 = vmatpush1.bf16.msra.mxu0 0
    %1293 = vmatprep.subr.bf16.mxu0 0
    %1294 = vmatpush1.bf16.msra.mxu0 0
    %1295 = vmatprep.subr.bf16.mxu0 0
    %1296 = vmatpush1.bf16.msra.mxu0 0
    %1297 = vmatprep.subr.bf16.mxu0 0
    %1298 = vmatpush1.bf16.msra.mxu0 0
    %1299 = vmatprep.mubr.bf16.mxu0 0
    %1300 = vmatmul.mubr.bf16.gmra.mrb[0].mxu0 %v1159
    %v1301 = vpop.f32.mrb[0].mxu0
    %v1302 = vadd.f32 0.0, %v1301
    %v1303 = vpop.f32.mrb[0].mxu0
    %v1304 = vadd.f32 0.0, %v1303
    %v1305 = vpop.f32.mrb[0].mxu0
    %v1306 = vadd.f32 0.0, %v1305
    %v1307 = vpop.f32.mrb[0].mxu0
    %v1308 = vadd.f32 0.0, %v1307
    %1309 = vmatprep.mubr.bf16.mxu0 0
    %1310 = vmatmul.mubr.bf16.gmra.mrb[0].mxu0 %v1162
    %v1311 = vpop.f32.mrb[0].mxu0
    %v1312 = vadd.f32 0.0, %v1311
    %v1313 = vpop.f32.mrb[0].mxu0
    %v1314 = vadd.f32 0.0, %v1313
    %v1315 = vpop.f32.mrb[0].mxu0
    %v1316 = vadd.f32 0.0, %v1315
    %v1317 = vpop.f32.mrb[0].mxu0
    %v1318 = vadd.f32 0.0, %v1317
    %1319 = vdwg.mxu0
    %1320 = vmatprep.subr.bf16.mxu0 %v1182
    %1321 = vmatpush1.bf16.msra.mxu0 %v1179
    %1322 = vmatprep.subr.bf16.mxu0 0
    %1323 = vmatpush1.bf16.msra.mxu0 0
    %1324 = vmatprep.subr.bf16.mxu0 0
    %1325 = vmatpush1.bf16.msra.mxu0 0
    %1326 = vmatprep.subr.bf16.mxu0 0
    %1327 = vmatpush1.bf16.msra.mxu0 0
    %1328 = vmatprep.subr.bf16.mxu0 0
    %1329 = vmatpush1.bf16.msra.mxu0 0
    %1330 = vmatprep.subr.bf16.mxu0 0
    %1331 = vmatpush1.bf16.msra.mxu0 0
    %1332 = vmatprep.subr.bf16.mxu0 0
    %1333 = vmatpush1.bf16.msra.mxu0 0
    %1334 = vmatprep.subr.bf16.mxu0 0
    %1335 = vmatpush1.bf16.msra.mxu0 0
    %1336 = vmatprep.subr.bf16.mxu0 0
    %1337 = vmatpush1.bf16.msra.mxu0 0
    %1338 = vmatprep.subr.bf16.mxu0 0
    %1339 = vmatpush1.bf16.msra.mxu0 0
    %1340 = vmatprep.subr.bf16.mxu0 0
    %1341 = vmatpush1.bf16.msra.mxu0 0
    %1342 = vmatprep.subr.bf16.mxu0 0
    %1343 = vmatpush1.bf16.msra.mxu0 0
    %1344 = vmatprep.subr.bf16.mxu0 0
    %1345 = vmatpush1.bf16.msra.mxu0 0
    %1346 = vmatprep.subr.bf16.mxu0 0
    %1347 = vmatpush1.bf16.msra.mxu0 0
    %1348 = vmatprep.subr.bf16.mxu0 0
    %1349 = vmatpush1.bf16.msra.mxu0 0
    %1350 = vmatprep.subr.bf16.mxu0 0
    %1351 = vmatpush1.bf16.msra.mxu0 0
    %1352 = vmatprep.mubr.bf16.mxu0 0
    %1353 = vmatmul.mubr.bf16.gmra.mrb[0].mxu0 %v1159
    %v1354 = vpop.f32.mrb[0].mxu0
    %v1355 = vadd.f32 0.0, %v1354
    %v1356 = vpop.f32.mrb[0].mxu0
    %v1357 = vadd.f32 0.0, %v1356
    %v1358 = vpop.f32.mrb[0].mxu0
    %v1359 = vadd.f32 0.0, %v1358
    %v1360 = vpop.f32.mrb[0].mxu0
    %v1361 = vadd.f32 0.0, %v1360
    %1362 = vmatprep.mubr.bf16.mxu0 0
    %1363 = vmatmul.mubr.bf16.gmra.mrb[0].mxu0 %v1162
    %v1364 = vpop.f32.mrb[0].mxu0
    %v1365 = vadd.f32 0.0, %v1364
    %v1366 = vpop.f32.mrb[0].mxu0
    %v1367 = vadd.f32 0.0, %v1366
    %v1368 = vpop.f32.mrb[0].mxu0
    %v1369 = vadd.f32 0.0, %v1368
    %v1370 = vpop.f32.mrb[0].mxu0
    %v1371 = vadd.f32 0.0, %v1370
    %1372 = vdwg.mxu0
    %1373 = vmatprep.subr.bf16.mxu0 %v1188
    %1374 = vmatpush1.bf16.msra.mxu0 %v1185
    %1375 = vmatprep.subr.bf16.mxu0 0
    %1376 = vmatpush1.bf16.msra.mxu0 0
    %1377 = vmatprep.subr.bf16.mxu0 0
    %1378 = vmatpush1.bf16.msra.mxu0 0
    %1379 = vmatprep.subr.bf16.mxu0 0
    %1380 = vmatpush1.bf16.msra.mxu0 0
    %1381 = vmatprep.subr.bf16.mxu0 0
    %1382 = vmatpush1.bf16.msra.mxu0 0
    %1383 = vmatprep.subr.bf16.mxu0 0
    %1384 = vmatpush1.bf16.msra.mxu0 0
    %1385 = vmatprep.subr.bf16.mxu0 0
    %1386 = vmatpush1.bf16.msra.mxu0 0
    %1387 = vmatprep.subr.bf16.mxu0 0
    %1388 = vmatpush1.bf16.msra.mxu0 0
    %1389 = vmatprep.subr.bf16.mxu0 0
    %1390 = vmatpush1.bf16.msra.mxu0 0
    %1391 = vmatprep.subr.bf16.mxu0 0
    %1392 = vmatpush1.bf16.msra.mxu0 0
    %1393 = vmatprep.subr.bf16.mxu0 0
    %1394 = vmatpush1.bf16.msra.mxu0 0
    %1395 = vmatprep.subr.bf16.mxu0 0
    %1396 = vmatpush1.bf16.msra.mxu0 0
    %1397 = vmatprep.subr.bf16.mxu0 0
    %1398 = vmatpush1.bf16.msra.mxu0 0
    %1399 = vmatprep.subr.bf16.mxu0 0
    %1400 = vmatpush1.bf16.msra.mxu0 0
    %1401 = vmatprep.subr.bf16.mxu0 0
    %1402 = vmatpush1.bf16.msra.mxu0 0
    %1403 = vmatprep.subr.bf16.mxu0 0
    %1404 = vmatpush1.bf16.msra.mxu0 0
    %1405 = vmatprep.mubr.bf16.mxu0 0
    %1406 = vmatmul.mubr.bf16.gmra.mrb[0].mxu0 %v1159
    %v1407 = vpop.f32.mrb[0].mxu0
    %v1408 = vadd.f32 0.0, %v1407
    %v1409 = vpop.f32.mrb[0].mxu0
    %v1410 = vadd.f32 0.0, %v1409
    %v1411 = vpop.f32.mrb[0].mxu0
    %v1412 = vadd.f32 0.0, %v1411
    %v1413 = vpop.f32.mrb[0].mxu0
    %v1414 = vadd.f32 0.0, %v1413
    %1415 = vmatprep.mubr.bf16.mxu0 0
    %1416 = vmatmul.mubr.bf16.gmra.mrb[0].mxu0 %v1162
    %v1417 = vpop.f32.mrb[0].mxu0
    %v1418 = vadd.f32 0.0, %v1417
    %v1419 = vpop.f32.mrb[0].mxu0
    %v1420 = vadd.f32 0.0, %v1419
    %v1421 = vpop.f32.mrb[0].mxu0
    %v1422 = vadd.f32 0.0, %v1421
    %v1423 = vpop.f32.mrb[0].mxu0
    %v1424 = vadd.f32 0.0, %v1423
    %1425 = vdwg.mxu0
    %1426 = vmatprep.subr.bf16.mxu0 %v1194
    %1427 = vmatpush1.bf16.msra.mxu0 %v1191
    %1428 = vmatprep.subr.bf16.mxu0 0
    %1429 = vmatpush1.bf16.msra.mxu0 0
    %1430 = vmatprep.subr.bf16.mxu0 0
    %1431 = vmatpush1.bf16.msra.mxu0 0
    %1432 = vmatprep.subr.bf16.mxu0 0
    %1433 = vmatpush1.bf16.msra.mxu0 0
    %1434 = vmatprep.subr.bf16.mxu0 0
    %1435 = vmatpush1.bf16.msra.mxu0 0
    %1436 = vmatprep.subr.bf16.mxu0 0
    %1437 = vmatpush1.bf16.msra.mxu0 0
    %1438 = vmatprep.subr.bf16.mxu0 0
    %1439 = vmatpush1.bf16.msra.mxu0 0
    %1440 = vmatprep.subr.bf16.mxu0 0
    %1441 = vmatpush1.bf16.msra.mxu0 0
    %1442 = vmatprep.subr.bf16.mxu0 0
    %1443 = vmatpush1.bf16.msra.mxu0 0
    %1444 = vmatprep.subr.bf16.mxu0 0
    %1445 = vmatpush1.bf16.msra.mxu0 0
    %1446 = vmatprep.subr.bf16.mxu0 0
    %1447 = vmatpush1.bf16.msra.mxu0 0
    %1448 = vmatprep.subr.bf16.mxu0 0
    %1449 = vmatpush1.bf16.msra.mxu0 0
    %1450 = vmatprep.subr.bf16.mxu0 0
    %1451 = vmatpush1.bf16.msra.mxu0 0
    %1452 = vmatprep.subr.bf16.mxu0 0
    %1453 = vmatpush1.bf16.msra.mxu0 0
    %1454 = vmatprep.subr.bf16.mxu0 0
    %1455 = vmatpush1.bf16.msra.mxu0 0
    %1456 = vmatprep.subr.bf16.mxu0 0
    %1457 = vmatpush1.bf16.msra.mxu0 0
    %1458 = vmatprep.mubr.bf16.mxu0 0
    %1459 = vmatmul.mubr.bf16.gmra.mrb[0].mxu0 %v1159
    %v1460 = vpop.f32.mrb[0].mxu0
    %v1461 = vadd.f32 0.0, %v1460
    %v1462 = vpop.f32.mrb[0].mxu0
    %v1463 = vadd.f32 0.0, %v1462
    %v1464 = vpop.f32.mrb[0].mxu0
    %v1465 = vadd.f32 0.0, %v1464
    %v1466 = vpop.f32.mrb[0].mxu0
    %v1467 = vadd.f32 0.0, %v1466
    %1468 = vmatprep.mubr.bf16.mxu0 0
    %1469 = vmatmul.mubr.bf16.gmra.mrb[0].mxu0 %v1162
    %v1470 = vpop.f32.mrb[0].mxu0
    %v1471 = vadd.f32 0.0, %v1470
    %v1472 = vpop.f32.mrb[0].mxu0
    %v1473 = vadd.f32 0.0, %v1472
    %v1474 = vpop.f32.mrb[0].mxu0
    %v1475 = vadd.f32 0.0, %v1474
    %v1476 = vpop.f32.mrb[0].mxu0
    %v1477 = vadd.f32 0.0, %v1476
    %1478 = vdwg.mxu0
    %1479 = vmatprep.subr.bf16.mxu0 %v1200
    %1480 = vmatpush1.bf16.msra.mxu0 %v1197
    %1481 = vmatprep.subr.bf16.mxu0 0
    %1482 = vmatpush1.bf16.msra.mxu0 0
    %1483 = vmatprep.subr.bf16.mxu0 0
    %1484 = vmatpush1.bf16.msra.mxu0 0
    %1485 = vmatprep.subr.bf16.mxu0 0
    %1486 = vmatpush1.bf16.msra.mxu0 0
    %1487 = vmatprep.subr.bf16.mxu0 0
    %1488 = vmatpush1.bf16.msra.mxu0 0
    %1489 = vmatprep.subr.bf16.mxu0 0
    %1490 = vmatpush1.bf16.msra.mxu0 0
    %1491 = vmatprep.subr.bf16.mxu0 0
    %1492 = vmatpush1.bf16.msra.mxu0 0
    %1493 = vmatprep.subr.bf16.mxu0 0
    %1494 = vmatpush1.bf16.msra.mxu0 0
    %1495 = vmatprep.subr.bf16.mxu0 0
    %1496 = vmatpush1.bf16.msra.mxu0 0
    %1497 = vmatprep.subr.bf16.mxu0 0
    %1498 = vmatpush1.bf16.msra.mxu0 0
    %1499 = vmatprep.subr.bf16.mxu0 0
    %1500 = vmatpush1.bf16.msra.mxu0 0
    %1501 = vmatprep.subr.bf16.mxu0 0
    %1502 = vmatpush1.bf16.msra.mxu0 0
    %1503 = vmatprep.subr.bf16.mxu0 0
    %1504 = vmatpush1.bf16.msra.mxu0 0
    %1505 = vmatprep.subr.bf16.mxu0 0
    %1506 = vmatpush1.bf16.msra.mxu0 0
    %1507 = vmatprep.subr.bf16.mxu0 0
    %1508 = vmatpush1.bf16.msra.mxu0 0
    %1509 = vmatprep.subr.bf16.mxu0 0
    %1510 = vmatpush1.bf16.msra.mxu0 0
    %1511 = vmatprep.mubr.bf16.mxu0 0
    %1512 = vmatmul.mubr.bf16.gmra.mrb[0].mxu0 %v1159
    %v1513 = vpop.f32.mrb[0].mxu0
    %v1514 = vadd.f32 0.0, %v1513
    %v1515 = vpop.f32.mrb[0].mxu0
    %v1516 = vadd.f32 0.0, %v1515
    %v1517 = vpop.f32.mrb[0].mxu0
    %v1518 = vadd.f32 0.0, %v1517
    %v1519 = vpop.f32.mrb[0].mxu0
    %v1520 = vadd.f32 0.0, %v1519
    %1521 = vmatprep.mubr.bf16.mxu0 0
    %1522 = vmatmul.mubr.bf16.gmra.mrb[0].mxu0 %v1162
    %v1523 = vpop.f32.mrb[0].mxu0
    %v1524 = vadd.f32 0.0, %v1523
    %v1525 = vpop.f32.mrb[0].mxu0
    %v1526 = vadd.f32 0.0, %v1525
    %v1527 = vpop.f32.mrb[0].mxu0
    %v1528 = vadd.f32 0.0, %v1527
    %v1529 = vpop.f32.mrb[0].mxu0
    %v1530 = vadd.f32 0.0, %v1529
    %1531 = vdwg.mxu0
    %1532 = vmatprep.subr.bf16.mxu0 %v1206
    %1533 = vmatpush1.bf16.msra.mxu0 %v1203
    %1534 = vmatprep.subr.bf16.mxu0 0
    %1535 = vmatpush1.bf16.msra.mxu0 0
    %1536 = vmatprep.subr.bf16.mxu0 0
    %1537 = vmatpush1.bf16.msra.mxu0 0
    %1538 = vmatprep.subr.bf16.mxu0 0
    %1539 = vmatpush1.bf16.msra.mxu0 0
    %1540 = vmatprep.subr.bf16.mxu0 0
    %1541 = vmatpush1.bf16.msra.mxu0 0
    %1542 = vmatprep.subr.bf16.mxu0 0
    %1543 = vmatpush1.bf16.msra.mxu0 0
    %1544 = vmatprep.subr.bf16.mxu0 0
    %1545 = vmatpush1.bf16.msra.mxu0 0
    %1546 = vmatprep.subr.bf16.mxu0 0
    %1547 = vmatpush1.bf16.msra.mxu0 0
    %1548 = vmatprep.subr.bf16.mxu0 0
    %1549 = vmatpush1.bf16.msra.mxu0 0
    %1550 = vmatprep.subr.bf16.mxu0 0
    %1551 = vmatpush1.bf16.msra.mxu0 0
    %1552 = vmatprep.subr.bf16.mxu0 0
    %1553 = vmatpush1.bf16.msra.mxu0 0
    %1554 = vmatprep.subr.bf16.mxu0 0
    %1555 = vmatpush1.bf16.msra.mxu0 0
    %1556 = vmatprep.subr.bf16.mxu0 0
    %1557 = vmatpush1.bf16.msra.mxu0 0
    %1558 = vmatprep.subr.bf16.mxu0 0
    %1559 = vmatpush1.bf16.msra.mxu0 0
    %1560 = vmatprep.subr.bf16.mxu0 0
    %1561 = vmatpush1.bf16.msra.mxu0 0
    %1562 = vmatprep.subr.bf16.mxu0 0
    %1563 = vmatpush1.bf16.msra.mxu0 0
    %1564 = vmatprep.mubr.bf16.mxu0 0
    %1565 = vmatmul.mubr.bf16.gmra.mrb[0].mxu0 %v1159
    %v1566 = vpop.f32.mrb[0].mxu0
    %v1567 = vadd.f32 0.0, %v1566
    %v1568 = vpop.f32.mrb[0].mxu0
    %v1569 = vadd.f32 0.0, %v1568
    %v1570 = vpop.f32.mrb[0].mxu0
    %v1571 = vadd.f32 0.0, %v1570
    %v1572 = vpop.f32.mrb[0].mxu0
    %v1573 = vadd.f32 0.0, %v1572
    %1574 = vmatprep.mubr.bf16.mxu0 0
    %1575 = vmatmul.mubr.bf16.gmra.mrb[0].mxu0 %v1162
    %v1576 = vpop.f32.mrb[0].mxu0
    %v1577 = vadd.f32 0.0, %v1576
    %v1578 = vpop.f32.mrb[0].mxu0
    %v1579 = vadd.f32 0.0, %v1578
    %v1580 = vpop.f32.mrb[0].mxu0
    %v1581 = vadd.f32 0.0, %v1580
    %v1582 = vpop.f32.mrb[0].mxu0
    %v1583 = vadd.f32 0.0, %v1582
    %1584 = vdwg.mxu0
    %1585 = vmatprep.subr.bf16.mxu0 %v1212
    %1586 = vmatpush1.bf16.msra.mxu0 %v1209
    %1587 = vmatprep.subr.bf16.mxu0 0
    %1588 = vmatpush1.bf16.msra.mxu0 0
    %1589 = vmatprep.subr.bf16.mxu0 0
    %1590 = vmatpush1.bf16.msra.mxu0 0
    %1591 = vmatprep.subr.bf16.mxu0 0
    %1592 = vmatpush1.bf16.msra.mxu0 0
    %1593 = vmatprep.subr.bf16.mxu0 0
    %1594 = vmatpush1.bf16.msra.mxu0 0
    %1595 = vmatprep.subr.bf16.mxu0 0
    %1596 = vmatpush1.bf16.msra.mxu0 0
    %1597 = vmatprep.subr.bf16.mxu0 0
    %1598 = vmatpush1.bf16.msra.mxu0 0
    %1599 = vmatprep.subr.bf16.mxu0 0
    %1600 = vmatpush1.bf16.msra.mxu0 0
    %1601 = vmatprep.subr.bf16.mxu0 0
    %1602 = vmatpush1.bf16.msra.mxu0 0
    %1603 = vmatprep.subr.bf16.mxu0 0
    %1604 = vmatpush1.bf16.msra.mxu0 0
    %1605 = vmatprep.subr.bf16.mxu0 0
    %1606 = vmatpush1.bf16.msra.mxu0 0
    %1607 = vmatprep.subr.bf16.mxu0 0
    %1608 = vmatpush1.bf16.msra.mxu0 0
    %1609 = vmatprep.subr.bf16.mxu0 0
    %1610 = vmatpush1.bf16.msra.mxu0 0
    %1611 = vmatprep.subr.bf16.mxu0 0
    %1612 = vmatpush1.bf16.msra.mxu0 0
    %1613 = vmatprep.subr.bf16.mxu0 0
    %1614 = vmatpush1.bf16.msra.mxu0 0
    %1615 = vmatprep.subr.bf16.mxu0 0
    %1616 = vmatpush1.bf16.msra.mxu0 0
    %1617 = vmatprep.mubr.bf16.mxu0 0
    %1618 = vmatmul.mubr.bf16.gmra.mrb[0].mxu0 %v1159
    %v1619 = vpop.f32.mrb[0].mxu0
    %v1620 = vadd.f32 0.0, %v1619
    %v1621 = vpop.f32.mrb[0].mxu0
    %v1622 = vadd.f32 0.0, %v1621
    %v1623 = vpop.f32.mrb[0].mxu0
    %v1624 = vadd.f32 0.0, %v1623
    %v1625 = vpop.f32.mrb[0].mxu0
    %v1626 = vadd.f32 0.0, %v1625
    %1627 = vmatprep.mubr.bf16.mxu0 0
    %1628 = vmatmul.mubr.bf16.gmra.mrb[0].mxu0 %v1162
    %v1629 = vpop.f32.mrb[0].mxu0
    %v1630 = vadd.f32 0.0, %v1629
    %v1631 = vpop.f32.mrb[0].mxu0
    %v1632 = vadd.f32 0.0, %v1631
    %v1633 = vpop.f32.mrb[0].mxu0
    %v1634 = vadd.f32 0.0, %v1633
    %v1635 = vpop.f32.mrb[0].mxu0
    %v1636 = vadd.f32 0.0, %v1635
    %1637 = vdwg.mxu0
    %v1638 = vld [vmem:[%s2] sm:$0xff]
    %v1639 = vld [vmem:[%s2 + $0x8] sm:$0xff]
    %v1640 = vld [vmem:[%s2 + $0x10] sm:$0xff]
    %v1641 = vld [vmem:[%s2 + $0x18] sm:$0xff]
    %1643 = vset.pattern.permute.xlu0 0
    %1644 = vperm.xlu0 %1643, %v1638
    %v1645 = vpop.permute.xlu0 %1644
    %1648 = vset.pattern.permute.xlu0 0
    %1649 = vperm.xlu0 %1648, %v1639
    %v1650 = vpop.permute.xlu0 %1649
    %1653 = vset.pattern.permute.xlu0 0
    %1654 = vperm.xlu0 %1653, %v1640
    %v1655 = vpop.permute.xlu0 %1654
    %1658 = vset.pattern.permute.xlu0 0
    %1659 = vperm.xlu0 %1658, %v1641
    %v1660 = vpop.permute.xlu0 %1659
    %v1662 = vmul.f32 %v1249, %v1645
    %v1663 = vmul.f32 %v1251, %v1645
    %v1664 = vmul.f32 %v1302, %v1645
    %v1665 = vmul.f32 %v1304, %v1645
    %v1666 = vmul.f32 %v1355, %v1645
    %v1667 = vmul.f32 %v1357, %v1645
    %v1668 = vmul.f32 %v1408, %v1645
    %v1669 = vmul.f32 %v1410, %v1645
    %v1670 = vmul.f32 %v1461, %v1645
    %v1671 = vmul.f32 %v1463, %v1645
    %v1672 = vmul.f32 %v1514, %v1645
    %v1673 = vmul.f32 %v1516, %v1645
    %v1674 = vmul.f32 %v1567, %v1645
    %v1675 = vmul.f32 %v1569, %v1645
    %v1676 = vmul.f32 %v1620, %v1645
    %v1677 = vmul.f32 %v1622, %v1645
    %v1678 = vmul.f32 %v1253, %v1650
    %v1679 = vmul.f32 %v1255, %v1650
    %v1680 = vmul.f32 %v1306, %v1650
    %v1681 = vmul.f32 %v1308, %v1650
    %v1682 = vmul.f32 %v1359, %v1650
    %v1683 = vmul.f32 %v1361, %v1650
    %v1684 = vmul.f32 %v1412, %v1650
    %v1685 = vmul.f32 %v1414, %v1650
    %v1686 = vmul.f32 %v1465, %v1650
    %v1687 = vmul.f32 %v1467, %v1650
    %v1688 = vmul.f32 %v1518, %v1650
    %v1689 = vmul.f32 %v1520, %v1650
    %v1690 = vmul.f32 %v1571, %v1650
    %v1691 = vmul.f32 %v1573, %v1650
    %v1692 = vmul.f32 %v1624, %v1650
    %v1693 = vmul.f32 %v1626, %v1650
    %v1694 = vmul.f32 %v1259, %v1655
    %v1695 = vmul.f32 %v1261, %v1655
    %v1696 = vmul.f32 %v1312, %v1655
    %v1697 = vmul.f32 %v1314, %v1655
    %v1698 = vmul.f32 %v1365, %v1655
    %v1699 = vmul.f32 %v1367, %v1655
    %v1700 = vmul.f32 %v1418, %v1655
    %v1701 = vmul.f32 %v1420, %v1655
    %v1702 = vmul.f32 %v1471, %v1655
    %v1703 = vmul.f32 %v1473, %v1655
    %v1704 = vmul.f32 %v1524, %v1655
    %v1705 = vmul.f32 %v1526, %v1655
    %v1706 = vmul.f32 %v1577, %v1655
    %v1707 = vmul.f32 %v1579, %v1655
    %v1708 = vmul.f32 %v1630, %v1655
    %v1709 = vmul.f32 %v1632, %v1655
    %v1710 = vmul.f32 %v1263, %v1660
    %v1711 = vmul.f32 %v1265, %v1660
    %v1712 = vmul.f32 %v1316, %v1660
    %v1713 = vmul.f32 %v1318, %v1660
    %v1714 = vmul.f32 %v1369, %v1660
    %v1715 = vmul.f32 %v1371, %v1660
    %v1716 = vmul.f32 %v1422, %v1660
    %v1717 = vmul.f32 %v1424, %v1660
    %v1718 = vmul.f32 %v1475, %v1660
    %v1719 = vmul.f32 %v1477, %v1660
    %v1720 = vmul.f32 %v1528, %v1660
    %v1721 = vmul.f32 %v1530, %v1660
    %v1722 = vmul.f32 %v1581, %v1660
    %v1723 = vmul.f32 %v1583, %v1660
    %v1724 = vmul.f32 %v1634, %v1660
    %v1725 = vmul.f32 %v1636, %v1660
    %v1726 = vld [vmem:[%s3] sm:$0xff]
    %v1727 = vld [vmem:[%s3 + $0x8] sm:$0xff]
    %v1728 = vld [vmem:[%s3 + $0x10] sm:$0xff]
    %v1729 = vld [vmem:[%s3 + $0x18] sm:$0xff]
    %1731 = vset.pattern.permute.xlu0 0
    %1732 = vperm.xlu0 %1731, %v1726
    %v1733 = vpop.permute.xlu0 %1732
    %1736 = vset.pattern.permute.xlu0 0
    %1737 = vperm.xlu0 %1736, %v1727
    %v1738 = vpop.permute.xlu0 %1737
    %1741 = vset.pattern.permute.xlu0 0
    %1742 = vperm.xlu0 %1741, %v1728
    %v1743 = vpop.permute.xlu0 %1742
    %1746 = vset.pattern.permute.xlu0 0
    %1747 = vperm.xlu0 %1746, %v1729
    %v1748 = vpop.permute.xlu0 %1747
    %v1750 = vadd.f32 %v1662, %v1733
    %v1751 = vadd.f32 %v1663, %v1733
    %v1752 = vadd.f32 %v1664, %v1733
    %v1753 = vadd.f32 %v1665, %v1733
    %v1754 = vadd.f32 %v1666, %v1733
    %v1755 = vadd.f32 %v1667, %v1733
    %v1756 = vadd.f32 %v1668, %v1733
    %v1757 = vadd.f32 %v1669, %v1733
    %v1758 = vadd.f32 %v1670, %v1733
    %v1759 = vadd.f32 %v1671, %v1733
    %v1760 = vadd.f32 %v1672, %v1733
    %v1761 = vadd.f32 %v1673, %v1733
    %v1762 = vadd.f32 %v1674, %v1733
    %v1763 = vadd.f32 %v1675, %v1733
    %v1764 = vadd.f32 %v1676, %v1733
    %v1765 = vadd.f32 %v1677, %v1733
    %v1766 = vadd.f32 %v1678, %v1738
    %v1767 = vadd.f32 %v1679, %v1738
    %v1768 = vadd.f32 %v1680, %v1738
    %v1769 = vadd.f32 %v1681, %v1738
    %v1770 = vadd.f32 %v1682, %v1738
    %v1771 = vadd.f32 %v1683, %v1738
    %v1772 = vadd.f32 %v1684, %v1738
    %v1773 = vadd.f32 %v1685, %v1738
    %v1774 = vadd.f32 %v1686, %v1738
    %v1775 = vadd.f32 %v1687, %v1738
    %v1776 = vadd.f32 %v1688, %v1738
    %v1777 = vadd.f32 %v1689, %v1738
    %v1778 = vadd.f32 %v1690, %v1738
    %v1779 = vadd.f32 %v1691, %v1738
    %v1780 = vadd.f32 %v1692, %v1738
    %v1781 = vadd.f32 %v1693, %v1738
    %v1782 = vadd.f32 %v1694, %v1743
    %v1783 = vadd.f32 %v1695, %v1743
    %v1784 = vadd.f32 %v1696, %v1743
    %v1785 = vadd.f32 %v1697, %v1743
    %v1786 = vadd.f32 %v1698, %v1743
    %v1787 = vadd.f32 %v1699, %v1743
    %v1788 = vadd.f32 %v1700, %v1743
    %v1789 = vadd.f32 %v1701, %v1743
    %v1790 = vadd.f32 %v1702, %v1743
    %v1791 = vadd.f32 %v1703, %v1743
    %v1792 = vadd.f32 %v1704, %v1743
    %v1793 = vadd.f32 %v1705, %v1743
    %v1794 = vadd.f32 %v1706, %v1743
    %v1795 = vadd.f32 %v1707, %v1743
    %v1796 = vadd.f32 %v1708, %v1743
    %v1797 = vadd.f32 %v1709, %v1743
    %v1798 = vadd.f32 %v1710, %v1748
    %v1799 = vadd.f32 %v1711, %v1748
    %v1800 = vadd.f32 %v1712, %v1748
    %v1801 = vadd.f32 %v1713, %v1748
    %v1802 = vadd.f32 %v1714, %v1748
    %v1803 = vadd.f32 %v1715, %v1748
    %v1804 = vadd.f32 %v1716, %v1748
    %v1805 = vadd.f32 %v1717, %v1748
    %v1806 = vadd.f32 %v1718, %v1748
    %v1807 = vadd.f32 %v1719, %v1748
    %v1808 = vadd.f32 %v1720, %v1748
    %v1809 = vadd.f32 %v1721, %v1748
    %v1810 = vadd.f32 %v1722, %v1748
    %v1811 = vadd.f32 %v1723, %v1748
    %v1812 = vadd.f32 %v1724, %v1748
    %v1813 = vadd.f32 %v1725, %v1748
    %v1814 = vmax.f32 %v1750, 0.0
    %v1815 = vmax.f32 %v1751, 0.0
    %v1816 = vmax.f32 %v1752, 0.0
    %v1817 = vmax.f32 %v1753, 0.0
    %v1818 = vmax.f32 %v1754, 0.0
    %v1819 = vmax.f32 %v1755, 0.0
    %v1820 = vmax.f32 %v1756, 0.0
    %v1821 = vmax.f32 %v1757, 0.0
    %v1822 = vmax.f32 %v1758, 0.0
    %v1823 = vmax.f32 %v1759, 0.0
    %v1824 = vmax.f32 %v1760, 0.0
    %v1825 = vmax.f32 %v1761, 0.0
    %v1826 = vmax.f32 %v1762, 0.0
    %v1827 = vmax.f32 %v1763, 0.0
    %v1828 = vmax.f32 %v1764, 0.0
    %v1829 = vmax.f32 %v1765, 0.0
    %v1830 = vmax.f32 %v1766, 0.0
    %v1831 = vmax.f32 %v1767, 0.0
    %v1832 = vmax.f32 %v1768, 0.0
    %v1833 = vmax.f32 %v1769, 0.0
    %v1834 = vmax.f32 %v1770, 0.0
    %v1835 = vmax.f32 %v1771, 0.0
    %v1836 = vmax.f32 %v1772, 0.0
    %v1837 = vmax.f32 %v1773, 0.0
    %v1838 = vmax.f32 %v1774, 0.0
    %v1839 = vmax.f32 %v1775, 0.0
    %v1840 = vmax.f32 %v1776, 0.0
    %v1841 = vmax.f32 %v1777, 0.0
    %v1842 = vmax.f32 %v1778, 0.0
    %v1843 = vmax.f32 %v1779, 0.0
    %v1844 = vmax.f32 %v1780, 0.0
    %v1845 = vmax.f32 %v1781, 0.0
    %v1846 = vmax.f32 %v1782, 0.0
    %v1847 = vmax.f32 %v1783, 0.0
    %v1848 = vmax.f32 %v1784, 0.0
    %v1849 = vmax.f32 %v1785, 0.0
    %v1850 = vmax.f32 %v1786, 0.0
    %v1851 = vmax.f32 %v1787, 0.0
    %v1852 = vmax.f32 %v1788, 0.0
    %v1853 = vmax.f32 %v1789, 0.0
    %v1854 = vmax.f32 %v1790, 0.0
    %v1855 = vmax.f32 %v1791, 0.0
    %v1856 = vmax.f32 %v1792, 0.0
    %v1857 = vmax.f32 %v1793, 0.0
    %v1858 = vmax.f32 %v1794, 0.0
    %v1859 = vmax.f32 %v1795, 0.0
    %v1860 = vmax.f32 %v1796, 0.0
    %v1861 = vmax.f32 %v1797, 0.0
    %v1862 = vmax.f32 %v1798, 0.0
    %v1863 = vmax.f32 %v1799, 0.0
    %v1864 = vmax.f32 %v1800, 0.0
    %v1865 = vmax.f32 %v1801, 0.0
    %v1866 = vmax.f32 %v1802, 0.0
    %v1867 = vmax.f32 %v1803, 0.0
    %v1868 = vmax.f32 %v1804, 0.0
    %v1869 = vmax.f32 %v1805, 0.0
    %v1870 = vmax.f32 %v1806, 0.0
    %v1871 = vmax.f32 %v1807, 0.0
    %v1872 = vmax.f32 %v1808, 0.0
    %v1873 = vmax.f32 %v1809, 0.0
    %v1874 = vmax.f32 %v1810, 0.0
    %v1875 = vmax.f32 %v1811, 0.0
    %v1876 = vmax.f32 %v1812, 0.0
    %v1877 = vmax.f32 %v1813, 0.0
    %1878 = vrot.lane.b32.xlu0 %v1814, 127
    %v1879 = vpop.permute.xlu0 %1878
    %1880 = vrot.lane.b32.xlu0 %v1830, 127
    %v1881 = vpop.permute.xlu0 %1880
    %1882 = vrot.lane.b32.xlu0 %v1846, 127
    %v1883 = vpop.permute.xlu0 %1882
    %1884 = vrot.lane.b32.xlu0 %v1862, 127
    %v1885 = vpop.permute.xlu0 %1884
    %1886 = vrot.lane.b32.xlu0 %v1815, 127
    %v1887 = vpop.permute.xlu0 %1886
    %1888 = vrot.lane.b32.xlu0 %v1831, 127
    %v1889 = vpop.permute.xlu0 %1888
    %1890 = vrot.lane.b32.xlu0 %v1847, 127
    %v1891 = vpop.permute.xlu0 %1890
    %1892 = vrot.lane.b32.xlu0 %v1863, 127
    %v1893 = vpop.permute.xlu0 %1892
    %1894 = vrot.lane.b32.xlu0 %v1816, 127
    %v1895 = vpop.permute.xlu0 %1894
    %1896 = vrot.lane.b32.xlu0 %v1832, 127
    %v1897 = vpop.permute.xlu0 %1896
    %1898 = vrot.lane.b32.xlu0 %v1848, 127
    %v1899 = vpop.permute.xlu0 %1898
    %1900 = vrot.lane.b32.xlu0 %v1864, 127
    %v1901 = vpop.permute.xlu0 %1900
    %1902 = vrot.lane.b32.xlu0 %v1817, 127
    %v1903 = vpop.permute.xlu0 %1902
    %1904 = vrot.lane.b32.xlu0 %v1833, 127
    %v1905 = vpop.permute.xlu0 %1904
    %1906 = vrot.lane.b32.xlu0 %v1849, 127
    %v1907 = vpop.permute.xlu0 %1906
    %1908 = vrot.lane.b32.xlu0 %v1865, 127
    %v1909 = vpop.permute.xlu0 %1908
    %1910 = vrot.lane.b32.xlu0 %v1818, 127
    %v1911 = vpop.permute.xlu0 %1910
    %1912 = vrot.lane.b32.xlu0 %v1834, 127
    %v1913 = vpop.permute.xlu0 %1912
    %1914 = vrot.lane.b32.xlu0 %v1850, 127
    %v1915 = vpop.permute.xlu0 %1914
    %1916 = vrot.lane.b32.xlu0 %v1866, 127
    %v1917 = vpop.permute.xlu0 %1916
    %1918 = vrot.lane.b32.xlu0 %v1819, 127
    %v1919 = vpop.permute.xlu0 %1918
    %1920 = vrot.lane.b32.xlu0 %v1835, 127
    %v1921 = vpop.permute.xlu0 %1920
    %1922 = vrot.lane.b32.xlu0 %v1851, 127
    %v1923 = vpop.permute.xlu0 %1922
    %1924 = vrot.lane.b32.xlu0 %v1867, 127
    %v1925 = vpop.permute.xlu0 %1924
    %1926 = vrot.lane.b32.xlu0 %v1820, 127
    %v1927 = vpop.permute.xlu0 %1926
    %1928 = vrot.lane.b32.xlu0 %v1836, 127
    %v1929 = vpop.permute.xlu0 %1928
    %1930 = vrot.lane.b32.xlu0 %v1852, 127
    %v1931 = vpop.permute.xlu0 %1930
    %1932 = vrot.lane.b32.xlu0 %v1868, 127
    %v1933 = vpop.permute.xlu0 %1932
    %1934 = vrot.lane.b32.xlu0 %v1821, 127
    %v1935 = vpop.permute.xlu0 %1934
    %1936 = vrot.lane.b32.xlu0 %v1837, 127
    %v1937 = vpop.permute.xlu0 %1936
    %1938 = vrot.lane.b32.xlu0 %v1853, 127
    %v1939 = vpop.permute.xlu0 %1938
    %1940 = vrot.lane.b32.xlu0 %v1869, 127
    %v1941 = vpop.permute.xlu0 %1940
    %1942 = vrot.lane.b32.xlu0 %v1822, 127
    %v1943 = vpop.permute.xlu0 %1942
    %1944 = vrot.lane.b32.xlu0 %v1838, 127
    %v1945 = vpop.permute.xlu0 %1944
    %1946 = vrot.lane.b32.xlu0 %v1854, 127
    %v1947 = vpop.permute.xlu0 %1946
    %1948 = vrot.lane.b32.xlu0 %v1870, 127
    %v1949 = vpop.permute.xlu0 %1948
    %1950 = vrot.lane.b32.xlu0 %v1823, 127
    %v1951 = vpop.permute.xlu0 %1950
    %1952 = vrot.lane.b32.xlu0 %v1839, 127
    %v1953 = vpop.permute.xlu0 %1952
    %1954 = vrot.lane.b32.xlu0 %v1855, 127
    %v1955 = vpop.permute.xlu0 %1954
    %1956 = vrot.lane.b32.xlu0 %v1871, 127
    %v1957 = vpop.permute.xlu0 %1956
    %1958 = vrot.lane.b32.xlu0 %v1824, 127
    %v1959 = vpop.permute.xlu0 %1958
    %1960 = vrot.lane.b32.xlu0 %v1840, 127
    %v1961 = vpop.permute.xlu0 %1960
    %1962 = vrot.lane.b32.xlu0 %v1856, 127
    %v1963 = vpop.permute.xlu0 %1962
    %1964 = vrot.lane.b32.xlu0 %v1872, 127
    %v1965 = vpop.permute.xlu0 %1964
    %1966 = vrot.lane.b32.xlu0 %v1825, 127
    %v1967 = vpop.permute.xlu0 %1966
    %1968 = vrot.lane.b32.xlu0 %v1841, 127
    %v1969 = vpop.permute.xlu0 %1968
    %1970 = vrot.lane.b32.xlu0 %v1857, 127
    %v1971 = vpop.permute.xlu0 %1970
    %1972 = vrot.lane.b32.xlu0 %v1873, 127
    %v1973 = vpop.permute.xlu0 %1972
    %1974 = vrot.lane.b32.xlu0 %v1826, 127
    %v1975 = vpop.permute.xlu0 %1974
    %1976 = vrot.lane.b32.xlu0 %v1842, 127
    %v1977 = vpop.permute.xlu0 %1976
    %1978 = vrot.lane.b32.xlu0 %v1858, 127
    %v1979 = vpop.permute.xlu0 %1978
    %1980 = vrot.lane.b32.xlu0 %v1874, 127
    %v1981 = vpop.permute.xlu0 %1980
    %1982 = vrot.lane.b32.xlu0 %v1827, 127
    %v1983 = vpop.permute.xlu0 %1982
    %1984 = vrot.lane.b32.xlu0 %v1843, 127
    %v1985 = vpop.permute.xlu0 %1984
    %1986 = vrot.lane.b32.xlu0 %v1859, 127
    %v1987 = vpop.permute.xlu0 %1986
    %1988 = vrot.lane.b32.xlu0 %v1875, 127
    %v1989 = vpop.permute.xlu0 %1988
    %1990 = vrot.lane.b32.xlu0 %v1828, 127
    %v1991 = vpop.permute.xlu0 %1990
    %1992 = vrot.lane.b32.xlu0 %v1844, 127
    %v1993 = vpop.permute.xlu0 %1992
    %1994 = vrot.lane.b32.xlu0 %v1860, 127
    %v1995 = vpop.permute.xlu0 %1994
    %1996 = vrot.lane.b32.xlu0 %v1876, 127
    %v1997 = vpop.permute.xlu0 %1996
    %1998 = vrot.lane.b32.xlu0 %v1829, 127
    %v1999 = vpop.permute.xlu0 %1998
    %2000 = vrot.lane.b32.xlu0 %v1845, 127
    %v2001 = vpop.permute.xlu0 %2000
    %2002 = vrot.lane.b32.xlu0 %v1861, 127
    %v2003 = vpop.permute.xlu0 %2002
    %2004 = vrot.lane.b32.xlu0 %v1877, 127
    %v2005 = vpop.permute.xlu0 %2004
    %v2006 = vsel %vm556, %v1991, %v1999
    %v2007 = vsel %vm556, %v1993, %v2001
    %v2008 = vsel %vm556, %v1995, %v2003
    %v2009 = vsel %vm556, %v1997, %v2005
    %v2010 = vsel %vm556, %v1983, %v1991
    %v2011 = vsel %vm556, %v1985, %v1993
    %v2012 = vsel %vm556, %v1987, %v1995
    %v2013 = vsel %vm556, %v1989, %v1997
    %v2014 = vsel %vm556, %v1975, %v1983
    %v2015 = vsel %vm556, %v1977, %v1985
    %v2016 = vsel %vm556, %v1979, %v1987
    %v2017 = vsel %vm556, %v1981, %v1989
    %v2018 = vsel %vm556, %v1967, %v1975
    %v2019 = vsel %vm556, %v1969, %v1977
    %v2020 = vsel %vm556, %v1971, %v1979
    %v2021 = vsel %vm556, %v1973, %v1981
    %v2022 = vsel %vm556, %v1959, %v1967
    %v2023 = vsel %vm556, %v1961, %v1969
    %v2024 = vsel %vm556, %v1963, %v1971
    %v2025 = vsel %vm556, %v1965, %v1973
    %v2026 = vsel %vm556, %v1951, %v1959
    %v2027 = vsel %vm556, %v1953, %v1961
    %v2028 = vsel %vm556, %v1955, %v1963
    %v2029 = vsel %vm556, %v1957, %v1965
    %v2030 = vsel %vm556, %v1943, %v1951
    %v2031 = vsel %vm556, %v1945, %v1953
    %v2032 = vsel %vm556, %v1947, %v1955
    %v2033 = vsel %vm556, %v1949, %v1957
    %v2034 = vsel %vm556, %v1935, %v1943
    %v2035 = vsel %vm556, %v1937, %v1945
    %v2036 = vsel %vm556, %v1939, %v1947
    %v2037 = vsel %vm556, %v1941, %v1949
    %v2038 = vsel %vm556, %v1927, %v1935
    %v2039 = vsel %vm556, %v1929, %v1937
    %v2040 = vsel %vm556, %v1931, %v1939
    %v2041 = vsel %vm556, %v1933, %v1941
    %v2042 = vsel %vm556, %v1919, %v1927
    %v2043 = vsel %vm556, %v1921, %v1929
    %v2044 = vsel %vm556, %v1923, %v1931
    %v2045 = vsel %vm556, %v1925, %v1933
    %v2046 = vsel %vm556, %v1911, %v1919
    %v2047 = vsel %vm556, %v1913, %v1921
    %v2048 = vsel %vm556, %v1915, %v1923
    %v2049 = vsel %vm556, %v1917, %v1925
    %v2050 = vsel %vm556, %v1903, %v1911
    %v2051 = vsel %vm556, %v1905, %v1913
    %v2052 = vsel %vm556, %v1907, %v1915
    %v2053 = vsel %vm556, %v1909, %v1917
    %v2054 = vsel %vm556, %v1895, %v1903
    %v2055 = vsel %vm556, %v1897, %v1905
    %v2056 = vsel %vm556, %v1899, %v1907
    %v2057 = vsel %vm556, %v1901, %v1909
    %v2058 = vsel %vm556, %v1887, %v1895
    %v2059 = vsel %vm556, %v1889, %v1897
    %v2060 = vsel %vm556, %v1891, %v1899
    %v2061 = vsel %vm556, %v1893, %v1901
    %v2062 = vsel %vm556, %v1879, %v1887
    %v2063 = vsel %vm556, %v1881, %v1889
    %v2064 = vsel %vm556, %v1883, %v1891
    %v2065 = vsel %vm556, %v1885, %v1893
    %v2066 = vsel %vm556, %v1999, %v1879
    %v2067 = vsel %vm556, %v2001, %v1881
    %v2068 = vsel %vm556, %v2003, %v1883
    %v2069 = vsel %vm556, %v2005, %v1885
    %v2070 = vmax.f32 %v1814, %v2062
    %v2071 = vmax.f32 %v1815, %v2058
    %v2072 = vmax.f32 %v1816, %v2054
    %v2073 = vmax.f32 %v1817, %v2050
    %v2074 = vmax.f32 %v1818, %v2046
    %v2075 = vmax.f32 %v1819, %v2042
    %v2076 = vmax.f32 %v1820, %v2038
    %v2077 = vmax.f32 %v1821, %v2034
    %v2078 = vmax.f32 %v1822, %v2030
    %v2079 = vmax.f32 %v1823, %v2026
    %v2080 = vmax.f32 %v1824, %v2022
    %v2081 = vmax.f32 %v1825, %v2018
    %v2082 = vmax.f32 %v1826, %v2014
    %v2083 = vmax.f32 %v1827, %v2010
    %v2084 = vmax.f32 %v1828, %v2006
    %v2085 = vmax.f32 %v1829, %v2066
    %v2086 = vmax.f32 %v1830, %v2063
    %v2087 = vmax.f32 %v1831, %v2059
    %v2088 = vmax.f32 %v1832, %v2055
    %v2089 = vmax.f32 %v1833, %v2051
    %v2090 = vmax.f32 %v1834, %v2047
    %v2091 = vmax.f32 %v1835, %v2043
    %v2092 = vmax.f32 %v1836, %v2039
    %v2093 = vmax.f32 %v1837, %v2035
    %v2094 = vmax.f32 %v1838, %v2031
    %v2095 = vmax.f32 %v1839, %v2027
    %v2096 = vmax.f32 %v1840, %v2023
    %v2097 = vmax.f32 %v1841, %v2019
    %v2098 = vmax.f32 %v1842, %v2015
    %v2099 = vmax.f32 %v1843, %v2011
    %v2100 = vmax.f32 %v1844, %v2007
    %v2101 = vmax.f32 %v1845, %v2067
    %v2102 = vmax.f32 %v1846, %v2064
    %v2103 = vmax.f32 %v1847, %v2060
    %v2104 = vmax.f32 %v1848, %v2056
    %v2105 = vmax.f32 %v1849, %v2052
    %v2106 = vmax.f32 %v1850, %v2048
    %v2107 = vmax.f32 %v1851, %v2044
    %v2108 = vmax.f32 %v1852, %v2040
    %v2109 = vmax.f32 %v1853, %v2036
    %v2110 = vmax.f32 %v1854, %v2032
    %v2111 = vmax.f32 %v1855, %v2028
    %v2112 = vmax.f32 %v1856, %v2024
    %v2113 = vmax.f32 %v1857, %v2020
    %v2114 = vmax.f32 %v1858, %v2016
    %v2115 = vmax.f32 %v1859, %v2012
    %v2116 = vmax.f32 %v1860, %v2008
    %v2117 = vmax.f32 %v1861, %v2068
    %v2118 = vmax.f32 %v1862, %v2065
    %v2119 = vmax.f32 %v1863, %v2061
    %v2120 = vmax.f32 %v1864, %v2057
    %v2121 = vmax.f32 %v1865, %v2053
    %v2122 = vmax.f32 %v1866, %v2049
    %v2123 = vmax.f32 %v1867, %v2045
    %v2124 = vmax.f32 %v1868, %v2041
    %v2125 = vmax.f32 %v1869, %v2037
    %v2126 = vmax.f32 %v1870, %v2033
    %v2127 = vmax.f32 %v1871, %v2029
    %v2128 = vmax.f32 %v1872, %v2025
    %v2129 = vmax.f32 %v1873, %v2021
    %v2130 = vmax.f32 %v1874, %v2017
    %v2131 = vmax.f32 %v1875, %v2013
    %v2132 = vmax.f32 %v1876, %v2009
    %v2133 = vmax.f32 %v1877, %v2069
    %2134 = vrot.lane.b32.xlu0 %v1814, 96
    %v2135 = vpop.permute.xlu0 %2134
    %2136 = vrot.lane.b32.xlu0 %v1830, 96
    %v2137 = vpop.permute.xlu0 %2136
    %2138 = vrot.lane.b32.xlu0 %v1846, 96
    %v2139 = vpop.permute.xlu0 %2138
    %2140 = vrot.lane.b32.xlu0 %v1862, 96
    %v2141 = vpop.permute.xlu0 %2140
    %2142 = vrot.lane.b32.xlu0 %v1815, 96
    %v2143 = vpop.permute.xlu0 %2142
    %2144 = vrot.lane.b32.xlu0 %v1831, 96
    %v2145 = vpop.permute.xlu0 %2144
    %2146 = vrot.lane.b32.xlu0 %v1847, 96
    %v2147 = vpop.permute.xlu0 %2146
    %2148 = vrot.lane.b32.xlu0 %v1863, 96
    %v2149 = vpop.permute.xlu0 %2148
    %2150 = vrot.lane.b32.xlu0 %v1816, 96
    %v2151 = vpop.permute.xlu0 %2150
    %2152 = vrot.lane.b32.xlu0 %v1832, 96
    %v2153 = vpop.permute.xlu0 %2152
    %2154 = vrot.lane.b32.xlu0 %v1848, 96
    %v2155 = vpop.permute.xlu0 %2154
    %2156 = vrot.lane.b32.xlu0 %v1864, 96
    %v2157 = vpop.permute.xlu0 %2156
    %2158 = vrot.lane.b32.xlu0 %v1817, 96
    %v2159 = vpop.permute.xlu0 %2158
    %2160 = vrot.lane.b32.xlu0 %v1833, 96
    %v2161 = vpop.permute.xlu0 %2160
    %2162 = vrot.lane.b32.xlu0 %v1849, 96
    %v2163 = vpop.permute.xlu0 %2162
    %2164 = vrot.lane.b32.xlu0 %v1865, 96
    %v2165 = vpop.permute.xlu0 %2164
    %2166 = vrot.lane.b32.xlu0 %v1818, 96
    %v2167 = vpop.permute.xlu0 %2166
    %2168 = vrot.lane.b32.xlu0 %v1834, 96
    %v2169 = vpop.permute.xlu0 %2168
    %2170 = vrot.lane.b32.xlu0 %v1850, 96
    %v2171 = vpop.permute.xlu0 %2170
    %2172 = vrot.lane.b32.xlu0 %v1866, 96
    %v2173 = vpop.permute.xlu0 %2172
    %2174 = vrot.lane.b32.xlu0 %v1819, 96
    %v2175 = vpop.permute.xlu0 %2174
    %2176 = vrot.lane.b32.xlu0 %v1835, 96
    %v2177 = vpop.permute.xlu0 %2176
    %2178 = vrot.lane.b32.xlu0 %v1851, 96
    %v2179 = vpop.permute.xlu0 %2178
    %2180 = vrot.lane.b32.xlu0 %v1867, 96
    %v2181 = vpop.permute.xlu0 %2180
    %2182 = vrot.lane.b32.xlu0 %v1820, 96
    %v2183 = vpop.permute.xlu0 %2182
    %2184 = vrot.lane.b32.xlu0 %v1836, 96
    %v2185 = vpop.permute.xlu0 %2184
    %2186 = vrot.lane.b32.xlu0 %v1852, 96
    %v2187 = vpop.permute.xlu0 %2186
    %2188 = vrot.lane.b32.xlu0 %v1868, 96
    %v2189 = vpop.permute.xlu0 %2188
    %2190 = vrot.lane.b32.xlu0 %v1821, 96
    %v2191 = vpop.permute.xlu0 %2190
    %2192 = vrot.lane.b32.xlu0 %v1837, 96
    %v2193 = vpop.permute.xlu0 %2192
    %2194 = vrot.lane.b32.xlu0 %v1853, 96
    %v2195 = vpop.permute.xlu0 %2194
    %2196 = vrot.lane.b32.xlu0 %v1869, 96
    %v2197 = vpop.permute.xlu0 %2196
    %2198 = vrot.lane.b32.xlu0 %v1822, 96
    %v2199 = vpop.permute.xlu0 %2198
    %2200 = vrot.lane.b32.xlu0 %v1838, 96
    %v2201 = vpop.permute.xlu0 %2200
    %2202 = vrot.lane.b32.xlu0 %v1854, 96
    %v2203 = vpop.permute.xlu0 %2202
    %2204 = vrot.lane.b32.xlu0 %v1870, 96
    %v2205 = vpop.permute.xlu0 %2204
    %2206 = vrot.lane.b32.xlu0 %v1823, 96
    %v2207 = vpop.permute.xlu0 %2206
    %2208 = vrot.lane.b32.xlu0 %v1839, 96
    %v2209 = vpop.permute.xlu0 %2208
    %2210 = vrot.lane.b32.xlu0 %v1855, 96
    %v2211 = vpop.permute.xlu0 %2210
    %2212 = vrot.lane.b32.xlu0 %v1871, 96
    %v2213 = vpop.permute.xlu0 %2212
    %2214 = vrot.lane.b32.xlu0 %v1824, 96
    %v2215 = vpop.permute.xlu0 %2214
    %2216 = vrot.lane.b32.xlu0 %v1840, 96
    %v2217 = vpop.permute.xlu0 %2216
    %2218 = vrot.lane.b32.xlu0 %v1856, 96
    %v2219 = vpop.permute.xlu0 %2218
    %2220 = vrot.lane.b32.xlu0 %v1872, 96
    %v2221 = vpop.permute.xlu0 %2220
    %2222 = vrot.lane.b32.xlu0 %v1825, 96
    %v2223 = vpop.permute.xlu0 %2222
    %2224 = vrot.lane.b32.xlu0 %v1841, 96
    %v2225 = vpop.permute.xlu0 %2224
    %2226 = vrot.lane.b32.xlu0 %v1857, 96
    %v2227 = vpop.permute.xlu0 %2226
    %2228 = vrot.lane.b32.xlu0 %v1873, 96
    %v2229 = vpop.permute.xlu0 %2228
    %2230 = vrot.lane.b32.xlu0 %v1826, 96
    %v2231 = vpop.permute.xlu0 %2230
    %2232 = vrot.lane.b32.xlu0 %v1842, 96
    %v2233 = vpop.permute.xlu0 %2232
    %2234 = vrot.lane.b32.xlu0 %v1858, 96
    %v2235 = vpop.permute.xlu0 %2234
    %2236 = vrot.lane.b32.xlu0 %v1874, 96
    %v2237 = vpop.permute.xlu0 %2236
    %2238 = vrot.lane.b32.xlu0 %v1827, 96
    %v2239 = vpop.permute.xlu0 %2238
    %2240 = vrot.lane.b32.xlu0 %v1843, 96
    %v2241 = vpop.permute.xlu0 %2240
    %2242 = vrot.lane.b32.xlu0 %v1859, 96
    %v2243 = vpop.permute.xlu0 %2242
    %2244 = vrot.lane.b32.xlu0 %v1875, 96
    %v2245 = vpop.permute.xlu0 %2244
    %2246 = vrot.lane.b32.xlu0 %v1828, 96
    %v2247 = vpop.permute.xlu0 %2246
    %2248 = vrot.lane.b32.xlu0 %v1844, 96
    %v2249 = vpop.permute.xlu0 %2248
    %2250 = vrot.lane.b32.xlu0 %v1860, 96
    %v2251 = vpop.permute.xlu0 %2250
    %2252 = vrot.lane.b32.xlu0 %v1876, 96
    %v2253 = vpop.permute.xlu0 %2252
    %2254 = vrot.lane.b32.xlu0 %v1829, 96
    %v2255 = vpop.permute.xlu0 %2254
    %2256 = vrot.lane.b32.xlu0 %v1845, 96
    %v2257 = vpop.permute.xlu0 %2256
    %2258 = vrot.lane.b32.xlu0 %v1861, 96
    %v2259 = vpop.permute.xlu0 %2258
    %2260 = vrot.lane.b32.xlu0 %v1877, 96
    %v2261 = vpop.permute.xlu0 %2260
    %v2262 = vsel %vm654, %v2247, %v2255
    %v2263 = vsel %vm654, %v2249, %v2257
    %v2264 = vsel %vm654, %v2251, %v2259
    %v2265 = vsel %vm654, %v2253, %v2261
    %v2266 = vsel %vm654, %v2239, %v2247
    %v2267 = vsel %vm654, %v2241, %v2249
    %v2268 = vsel %vm654, %v2243, %v2251
    %v2269 = vsel %vm654, %v2245, %v2253
    %v2270 = vsel %vm654, %v2231, %v2239
    %v2271 = vsel %vm654, %v2233, %v2241
    %v2272 = vsel %vm654, %v2235, %v2243
    %v2273 = vsel %vm654, %v2237, %v2245
    %v2274 = vsel %vm654, %v2223, %v2231
    %v2275 = vsel %vm654, %v2225, %v2233
    %v2276 = vsel %vm654, %v2227, %v2235
    %v2277 = vsel %vm654, %v2229, %v2237
    %v2278 = vsel %vm654, %v2215, %v2223
    %v2279 = vsel %vm654, %v2217, %v2225
    %v2280 = vsel %vm654, %v2219, %v2227
    %v2281 = vsel %vm654, %v2221, %v2229
    %v2282 = vsel %vm654, %v2207, %v2215
    %v2283 = vsel %vm654, %v2209, %v2217
    %v2284 = vsel %vm654, %v2211, %v2219
    %v2285 = vsel %vm654, %v2213, %v2221
    %v2286 = vsel %vm654, %v2199, %v2207
    %v2287 = vsel %vm654, %v2201, %v2209
    %v2288 = vsel %vm654, %v2203, %v2211
    %v2289 = vsel %vm654, %v2205, %v2213
    %v2290 = vsel %vm654, %v2191, %v2199
    %v2291 = vsel %vm654, %v2193, %v2201
    %v2292 = vsel %vm654, %v2195, %v2203
    %v2293 = vsel %vm654, %v2197, %v2205
    %v2294 = vsel %vm654, %v2183, %v2191
    %v2295 = vsel %vm654, %v2185, %v2193
    %v2296 = vsel %vm654, %v2187, %v2195
    %v2297 = vsel %vm654, %v2189, %v2197
    %v2298 = vsel %vm654, %v2175, %v2183
    %v2299 = vsel %vm654, %v2177, %v2185
    %v2300 = vsel %vm654, %v2179, %v2187
    %v2301 = vsel %vm654, %v2181, %v2189
    %v2302 = vsel %vm654, %v2167, %v2175
    %v2303 = vsel %vm654, %v2169, %v2177
    %v2304 = vsel %vm654, %v2171, %v2179
    %v2305 = vsel %vm654, %v2173, %v2181
    %v2306 = vsel %vm654, %v2159, %v2167
    %v2307 = vsel %vm654, %v2161, %v2169
    %v2308 = vsel %vm654, %v2163, %v2171
    %v2309 = vsel %vm654, %v2165, %v2173
    %v2310 = vsel %vm654, %v2151, %v2159
    %v2311 = vsel %vm654, %v2153, %v2161
    %v2312 = vsel %vm654, %v2155, %v2163
    %v2313 = vsel %vm654, %v2157, %v2165
    %v2314 = vsel %vm654, %v2143, %v2151
    %v2315 = vsel %vm654, %v2145, %v2153
    %v2316 = vsel %vm654, %v2147, %v2155
    %v2317 = vsel %vm654, %v2149, %v2157
    %v2318 = vsel %vm654, %v2135, %v2143
    %v2319 = vsel %vm654, %v2137, %v2145
    %v2320 = vsel %vm654, %v2139, %v2147
    %v2321 = vsel %vm654, %v2141, %v2149
    %v2322 = vsel %vm654, %v2255, %v2135
    %v2323 = vsel %vm654, %v2257, %v2137
    %v2324 = vsel %vm654, %v2259, %v2139
    %v2325 = vsel %vm654, %v2261, %v2141
    %2326 = vrot.lane.b32.xlu0 %v1814, 95
    %v2327 = vpop.permute.xlu0 %2326
    %2328 = vrot.lane.b32.xlu0 %v1830, 95
    %v2329 = vpop.permute.xlu0 %2328
    %2330 = vrot.lane.b32.xlu0 %v1846, 95
    %v2331 = vpop.permute.xlu0 %2330
    %2332 = vrot.lane.b32.xlu0 %v1862, 95
    %v2333 = vpop.permute.xlu0 %2332
    %2334 = vrot.lane.b32.xlu0 %v1815, 95
    %v2335 = vpop.permute.xlu0 %2334
    %2336 = vrot.lane.b32.xlu0 %v1831, 95
    %v2337 = vpop.permute.xlu0 %2336
    %2338 = vrot.lane.b32.xlu0 %v1847, 95
    %v2339 = vpop.permute.xlu0 %2338
    %2340 = vrot.lane.b32.xlu0 %v1863, 95
    %v2341 = vpop.permute.xlu0 %2340
    %2342 = vrot.lane.b32.xlu0 %v1816, 95
    %v2343 = vpop.permute.xlu0 %2342
    %2344 = vrot.lane.b32.xlu0 %v1832, 95
    %v2345 = vpop.permute.xlu0 %2344
    %2346 = vrot.lane.b32.xlu0 %v1848, 95
    %v2347 = vpop.permute.xlu0 %2346
    %2348 = vrot.lane.b32.xlu0 %v1864, 95
    %v2349 = vpop.permute.xlu0 %2348
    %2350 = vrot.lane.b32.xlu0 %v1817, 95
    %v2351 = vpop.permute.xlu0 %2350
    %2352 = vrot.lane.b32.xlu0 %v1833, 95
    %v2353 = vpop.permute.xlu0 %2352
    %2354 = vrot.lane.b32.xlu0 %v1849, 95
    %v2355 = vpop.permute.xlu0 %2354
    %2356 = vrot.lane.b32.xlu0 %v1865, 95
    %v2357 = vpop.permute.xlu0 %2356
    %2358 = vrot.lane.b32.xlu0 %v1818, 95
    %v2359 = vpop.permute.xlu0 %2358
    %2360 = vrot.lane.b32.xlu0 %v1834, 95
    %v2361 = vpop.permute.xlu0 %2360
    %2362 = vrot.lane.b32.xlu0 %v1850, 95
    %v2363 = vpop.permute.xlu0 %2362
    %2364 = vrot.lane.b32.xlu0 %v1866, 95
    %v2365 = vpop.permute.xlu0 %2364
    %2366 = vrot.lane.b32.xlu0 %v1819, 95
    %v2367 = vpop.permute.xlu0 %2366
    %2368 = vrot.lane.b32.xlu0 %v1835, 95
    %v2369 = vpop.permute.xlu0 %2368
    %2370 = vrot.lane.b32.xlu0 %v1851, 95
    %v2371 = vpop.permute.xlu0 %2370
    %2372 = vrot.lane.b32.xlu0 %v1867, 95
    %v2373 = vpop.permute.xlu0 %2372
    %2374 = vrot.lane.b32.xlu0 %v1820, 95
    %v2375 = vpop.permute.xlu0 %2374
    %2376 = vrot.lane.b32.xlu0 %v1836, 95
    %v2377 = vpop.permute.xlu0 %2376
    %2378 = vrot.lane.b32.xlu0 %v1852, 95
    %v2379 = vpop.permute.xlu0 %2378
    %2380 = vrot.lane.b32.xlu0 %v1868, 95
    %v2381 = vpop.permute.xlu0 %2380
    %2382 = vrot.lane.b32.xlu0 %v1821, 95
    %v2383 = vpop.permute.xlu0 %2382
    %2384 = vrot.lane.b32.xlu0 %v1837, 95
    %v2385 = vpop.permute.xlu0 %2384
    %2386 = vrot.lane.b32.xlu0 %v1853, 95
    %v2387 = vpop.permute.xlu0 %2386
    %2388 = vrot.lane.b32.xlu0 %v1869, 95
    %v2389 = vpop.permute.xlu0 %2388
    %2390 = vrot.lane.b32.xlu0 %v1822, 95
    %v2391 = vpop.permute.xlu0 %2390
    %2392 = vrot.lane.b32.xlu0 %v1838, 95
    %v2393 = vpop.permute.xlu0 %2392
    %2394 = vrot.lane.b32.xlu0 %v1854, 95
    %v2395 = vpop.permute.xlu0 %2394
    %2396 = vrot.lane.b32.xlu0 %v1870, 95
    %v2397 = vpop.permute.xlu0 %2396
    %2398 = vrot.lane.b32.xlu0 %v1823, 95
    %v2399 = vpop.permute.xlu0 %2398
    %2400 = vrot.lane.b32.xlu0 %v1839, 95
    %v2401 = vpop.permute.xlu0 %2400
    %2402 = vrot.lane.b32.xlu0 %v1855, 95
    %v2403 = vpop.permute.xlu0 %2402
    %2404 = vrot.lane.b32.xlu0 %v1871, 95
    %v2405 = vpop.permute.xlu0 %2404
    %2406 = vrot.lane.b32.xlu0 %v1824, 95
    %v2407 = vpop.permute.xlu0 %2406
    %2408 = vrot.lane.b32.xlu0 %v1840, 95
    %v2409 = vpop.permute.xlu0 %2408
    %2410 = vrot.lane.b32.xlu0 %v1856, 95
    %v2411 = vpop.permute.xlu0 %2410
    %2412 = vrot.lane.b32.xlu0 %v1872, 95
    %v2413 = vpop.permute.xlu0 %2412
    %2414 = vrot.lane.b32.xlu0 %v1825, 95
    %v2415 = vpop.permute.xlu0 %2414
    %2416 = vrot.lane.b32.xlu0 %v1841, 95
    %v2417 = vpop.permute.xlu0 %2416
    %2418 = vrot.lane.b32.xlu0 %v1857, 95
    %v2419 = vpop.permute.xlu0 %2418
    %2420 = vrot.lane.b32.xlu0 %v1873, 95
    %v2421 = vpop.permute.xlu0 %2420
    %2422 = vrot.lane.b32.xlu0 %v1826, 95
    %v2423 = vpop.permute.xlu0 %2422
    %2424 = vrot.lane.b32.xlu0 %v1842, 95
    %v2425 = vpop.permute.xlu0 %2424
    %2426 = vrot.lane.b32.xlu0 %v1858, 95
    %v2427 = vpop.permute.xlu0 %2426
    %2428 = vrot.lane.b32.xlu0 %v1874, 95
    %v2429 = vpop.permute.xlu0 %2428
    %2430 = vrot.lane.b32.xlu0 %v1827, 95
    %v2431 = vpop.permute.xlu0 %2430
    %2432 = vrot.lane.b32.xlu0 %v1843, 95
    %v2433 = vpop.permute.xlu0 %2432
    %2434 = vrot.lane.b32.xlu0 %v1859, 95
    %v2435 = vpop.permute.xlu0 %2434
    %2436 = vrot.lane.b32.xlu0 %v1875, 95
    %v2437 = vpop.permute.xlu0 %2436
    %2438 = vrot.lane.b32.xlu0 %v1828, 95
    %v2439 = vpop.permute.xlu0 %2438
    %2440 = vrot.lane.b32.xlu0 %v1844, 95
    %v2441 = vpop.permute.xlu0 %2440
    %2442 = vrot.lane.b32.xlu0 %v1860, 95
    %v2443 = vpop.permute.xlu0 %2442
    %2444 = vrot.lane.b32.xlu0 %v1876, 95
    %v2445 = vpop.permute.xlu0 %2444
    %2446 = vrot.lane.b32.xlu0 %v1829, 95
    %v2447 = vpop.permute.xlu0 %2446
    %2448 = vrot.lane.b32.xlu0 %v1845, 95
    %v2449 = vpop.permute.xlu0 %2448
    %2450 = vrot.lane.b32.xlu0 %v1861, 95
    %v2451 = vpop.permute.xlu0 %2450
    %2452 = vrot.lane.b32.xlu0 %v1877, 95
    %v2453 = vpop.permute.xlu0 %2452
    %v2454 = vsel %vm703, %v2439, %v2447
    %v2455 = vsel %vm703, %v2441, %v2449
    %v2456 = vsel %vm703, %v2443, %v2451
    %v2457 = vsel %vm703, %v2445, %v2453
    %v2458 = vsel %vm703, %v2431, %v2439
    %v2459 = vsel %vm703, %v2433, %v2441
    %v2460 = vsel %vm703, %v2435, %v2443
    %v2461 = vsel %vm703, %v2437, %v2445
    %v2462 = vsel %vm703, %v2423, %v2431
    %v2463 = vsel %vm703, %v2425, %v2433
    %v2464 = vsel %vm703, %v2427, %v2435
    %v2465 = vsel %vm703, %v2429, %v2437
    %v2466 = vsel %vm703, %v2415, %v2423
    %v2467 = vsel %vm703, %v2417, %v2425
    %v2468 = vsel %vm703, %v2419, %v2427
    %v2469 = vsel %vm703, %v2421, %v2429
    %v2470 = vsel %vm703, %v2407, %v2415
    %v2471 = vsel %vm703, %v2409, %v2417
    %v2472 = vsel %vm703, %v2411, %v2419
    %v2473 = vsel %vm703, %v2413, %v2421
    %v2474 = vsel %vm703, %v2399, %v2407
    %v2475 = vsel %vm703, %v2401, %v2409
    %v2476 = vsel %vm703, %v2403, %v2411
    %v2477 = vsel %vm703, %v2405, %v2413
    %v2478 = vsel %vm703, %v2391, %v2399
    %v2479 = vsel %vm703, %v2393, %v2401
    %v2480 = vsel %vm703, %v2395, %v2403
    %v2481 = vsel %vm703, %v2397, %v2405
    %v2482 = vsel %vm703, %v2383, %v2391
    %v2483 = vsel %vm703, %v2385, %v2393
    %v2484 = vsel %vm703, %v2387, %v2395
    %v2485 = vsel %vm703, %v2389, %v2397
    %v2486 = vsel %vm703, %v2375, %v2383
    %v2487 = vsel %vm703, %v2377, %v2385
    %v2488 = vsel %vm703, %v2379, %v2387
    %v2489 = vsel %vm703, %v2381, %v2389
    %v2490 = vsel %vm703, %v2367, %v2375
    %v2491 = vsel %vm703, %v2369, %v2377
    %v2492 = vsel %vm703, %v2371, %v2379
    %v2493 = vsel %vm703, %v2373, %v2381
    %v2494 = vsel %vm703, %v2359, %v2367
    %v2495 = vsel %vm703, %v2361, %v2369
    %v2496 = vsel %vm703, %v2363, %v2371
    %v2497 = vsel %vm703, %v2365, %v2373
    %v2498 = vsel %vm703, %v2351, %v2359
    %v2499 = vsel %vm703, %v2353, %v2361
    %v2500 = vsel %vm703, %v2355, %v2363
    %v2501 = vsel %vm703, %v2357, %v2365
    %v2502 = vsel %vm703, %v2343, %v2351
    %v2503 = vsel %vm703, %v2345, %v2353
    %v2504 = vsel %vm703, %v2347, %v2355
    %v2505 = vsel %vm703, %v2349, %v2357
    %v2506 = vsel %vm703, %v2335, %v2343
    %v2507 = vsel %vm703, %v2337, %v2345
    %v2508 = vsel %vm703, %v2339, %v2347
    %v2509 = vsel %vm703, %v2341, %v2349
    %v2510 = vsel %vm703, %v2327, %v2335
    %v2511 = vsel %vm703, %v2329, %v2337
    %v2512 = vsel %vm703, %v2331, %v2339
    %v2513 = vsel %vm703, %v2333, %v2341
    %v2514 = vsel %vm703, %v2447, %v2327
    %v2515 = vsel %vm703, %v2449, %v2329
    %v2516 = vsel %vm703, %v2451, %v2331
    %v2517 = vsel %vm703, %v2453, %v2333
    %v2518 = vmax.f32 %v2318, %v2510
    %v2519 = vmax.f32 %v2314, %v2506
    %v2520 = vmax.f32 %v2310, %v2502
    %v2521 = vmax.f32 %v2306, %v2498
    %v2522 = vmax.f32 %v2302, %v2494
    %v2523 = vmax.f32 %v2298, %v2490
    %v2524 = vmax.f32 %v2294, %v2486
    %v2525 = vmax.f32 %v2290, %v2482
    %v2526 = vmax.f32 %v2286, %v2478
    %v2527 = vmax.f32 %v2282, %v2474
    %v2528 = vmax.f32 %v2278, %v2470
    %v2529 = vmax.f32 %v2274, %v2466
    %v2530 = vmax.f32 %v2270, %v2462
    %v2531 = vmax.f32 %v2266, %v2458
    %v2532 = vmax.f32 %v2262, %v2454
    %v2533 = vmax.f32 %v2322, %v2514
    %v2534 = vmax.f32 %v2319, %v2511
    %v2535 = vmax.f32 %v2315, %v2507
    %v2536 = vmax.f32 %v2311, %v2503
    %v2537 = vmax.f32 %v2307, %v2499
    %v2538 = vmax.f32 %v2303, %v2495
    %v2539 = vmax.f32 %v2299, %v2491
    %v2540 = vmax.f32 %v2295, %v2487
    %v2541 = vmax.f32 %v2291, %v2483
    %v2542 = vmax.f32 %v2287, %v2479
    %v2543 = vmax.f32 %v2283, %v2475
    %v2544 = vmax.f32 %v2279, %v2471
    %v2545 = vmax.f32 %v2275, %v2467
    %v2546 = vmax.f32 %v2271, %v2463
    %v2547 = vmax.f32 %v2267, %v2459
    %v2548 = vmax.f32 %v2263, %v2455
    %v2549 = vmax.f32 %v2323, %v2515
    %v2550 = vmax.f32 %v2320, %v2512
    %v2551 = vmax.f32 %v2316, %v2508
    %v2552 = vmax.f32 %v2312, %v2504
    %v2553 = vmax.f32 %v2308, %v2500
    %v2554 = vmax.f32 %v2304, %v2496
    %v2555 = vmax.f32 %v2300, %v2492
    %v2556 = vmax.f32 %v2296, %v2488
    %v2557 = vmax.f32 %v2292, %v2484
    %v2558 = vmax.f32 %v2288, %v2480
    %v2559 = vmax.f32 %v2284, %v2476
    %v2560 = vmax.f32 %v2280, %v2472
    %v2561 = vmax.f32 %v2276, %v2468
    %v2562 = vmax.f32 %v2272, %v2464
    %v2563 = vmax.f32 %v2268, %v2460
    %v2564 = vmax.f32 %v2264, %v2456
    %v2565 = vmax.f32 %v2324, %v2516
    %v2566 = vmax.f32 %v2321, %v2513
    %v2567 = vmax.f32 %v2317, %v2509
    %v2568 = vmax.f32 %v2313, %v2505
    %v2569 = vmax.f32 %v2309, %v2501
    %v2570 = vmax.f32 %v2305, %v2497
    %v2571 = vmax.f32 %v2301, %v2493
    %v2572 = vmax.f32 %v2297, %v2489
    %v2573 = vmax.f32 %v2293, %v2485
    %v2574 = vmax.f32 %v2289, %v2481
    %v2575 = vmax.f32 %v2285, %v2477
    %v2576 = vmax.f32 %v2281, %v2473
    %v2577 = vmax.f32 %v2277, %v2469
    %v2578 = vmax.f32 %v2273, %v2465
    %v2579 = vmax.f32 %v2269, %v2461
    %v2580 = vmax.f32 %v2265, %v2457
    %v2581 = vmax.f32 %v2325, %v2517
    %v2582 = vmax.f32 %v2070, %v2518
    %v2583 = vmax.f32 %v2071, %v2519
    %v2584 = vmax.f32 %v2072, %v2520
    %v2585 = vmax.f32 %v2073, %v2521
    %v2586 = vmax.f32 %v2074, %v2522
    %v2587 = vmax.f32 %v2075, %v2523
    %v2588 = vmax.f32 %v2076, %v2524
    %v2589 = vmax.f32 %v2077, %v2525
    %v2590 = vmax.f32 %v2078, %v2526
    %v2591 = vmax.f32 %v2079, %v2527
    %v2592 = vmax.f32 %v2080, %v2528
    %v2593 = vmax.f32 %v2081, %v2529
    %v2594 = vmax.f32 %v2082, %v2530
    %v2595 = vmax.f32 %v2083, %v2531
    %v2596 = vmax.f32 %v2084, %v2532
    %v2597 = vmax.f32 %v2085, %v2533
    %v2598 = vmax.f32 %v2086, %v2534
    %v2599 = vmax.f32 %v2087, %v2535
    %v2600 = vmax.f32 %v2088, %v2536
    %v2601 = vmax.f32 %v2089, %v2537
    %v2602 = vmax.f32 %v2090, %v2538
    %v2603 = vmax.f32 %v2091, %v2539
    %v2604 = vmax.f32 %v2092, %v2540
    %v2605 = vmax.f32 %v2093, %v2541
    %v2606 = vmax.f32 %v2094, %v2542
    %v2607 = vmax.f32 %v2095, %v2543
    %v2608 = vmax.f32 %v2096, %v2544
    %v2609 = vmax.f32 %v2097, %v2545
    %v2610 = vmax.f32 %v2098, %v2546
    %v2611 = vmax.f32 %v2099, %v2547
    %v2612 = vmax.f32 %v2100, %v2548
    %v2613 = vmax.f32 %v2101, %v2549
    %v2614 = vmax.f32 %v2102, %v2550
    %v2615 = vmax.f32 %v2103, %v2551
    %v2616 = vmax.f32 %v2104, %v2552
    %v2617 = vmax.f32 %v2105, %v2553
    %v2618 = vmax.f32 %v2106, %v2554
    %v2619 = vmax.f32 %v2107, %v2555
    %v2620 = vmax.f32 %v2108, %v2556
    %v2621 = vmax.f32 %v2109, %v2557
    %v2622 = vmax.f32 %v2110, %v2558
    %v2623 = vmax.f32 %v2111, %v2559
    %v2624 = vmax.f32 %v2112, %v2560
    %v2625 = vmax.f32 %v2113, %v2561
    %v2626 = vmax.f32 %v2114, %v2562
    %v2627 = vmax.f32 %v2115, %v2563
    %v2628 = vmax.f32 %v2116, %v2564
    %v2629 = vmax.f32 %v2117, %v2565
    %v2630 = vmax.f32 %v2118, %v2566
    %v2631 = vmax.f32 %v2119, %v2567
    %v2632 = vmax.f32 %v2120, %v2568
    %v2633 = vmax.f32 %v2121, %v2569
    %v2634 = vmax.f32 %v2122, %v2570
    %v2635 = vmax.f32 %v2123, %v2571
    %v2636 = vmax.f32 %v2124, %v2572
    %v2637 = vmax.f32 %v2125, %v2573
    %v2638 = vmax.f32 %v2126, %v2574
    %v2639 = vmax.f32 %v2127, %v2575
    %v2640 = vmax.f32 %v2128, %v2576
    %v2641 = vmax.f32 %v2129, %v2577
    %v2642 = vmax.f32 %v2130, %v2578
    %v2643 = vmax.f32 %v2131, %v2579
    %v2644 = vmax.f32 %v2132, %v2580
    %v2645 = vmax.f32 %v2133, %v2581
    %s2646 = smul.u32 4, 128
    %s2647 = smul.u32 %s2646, 2
    %s2648 = sshll.u32 %s2647, 4
    %2649 = dma.done [#allocation6], %s2648
    %v2650 = vpack.c.bf16 %v2598, %v2582
    %v2651 = vpack.c.bf16 %v2599, %v2583
    %v2652 = vpack.c.bf16 %v2600, %v2584
    %v2653 = vpack.c.bf16 %v2601, %v2585
    %v2654 = vpack.c.bf16 %v2602, %v2586
    %v2655 = vpack.c.bf16 %v2603, %v2587
    %v2656 = vpack.c.bf16 %v2604, %v2588
    %v2657 = vpack.c.bf16 %v2605, %v2589
    %v2658 = vpack.c.bf16 %v2606, %v2590
    %v2659 = vpack.c.bf16 %v2607, %v2591
    %v2660 = vpack.c.bf16 %v2608, %v2592
    %v2661 = vpack.c.bf16 %v2609, %v2593
    %v2662 = vpack.c.bf16 %v2610, %v2594
    %v2663 = vpack.c.bf16 %v2611, %v2595
    %v2664 = vpack.c.bf16 %v2612, %v2596
    %v2665 = vpack.c.bf16 %v2613, %v2597
    %v2666 = vpack.c.bf16 %v2630, %v2614
    %v2667 = vpack.c.bf16 %v2631, %v2615
    %v2668 = vpack.c.bf16 %v2632, %v2616
    %v2669 = vpack.c.bf16 %v2633, %v2617
    %v2670 = vpack.c.bf16 %v2634, %v2618
    %v2671 = vpack.c.bf16 %v2635, %v2619
    %v2672 = vpack.c.bf16 %v2636, %v2620
    %v2673 = vpack.c.bf16 %v2637, %v2621
    %v2674 = vpack.c.bf16 %v2638, %v2622
    %v2675 = vpack.c.bf16 %v2639, %v2623
    %v2676 = vpack.c.bf16 %v2640, %v2624
    %v2677 = vpack.c.bf16 %v2641, %v2625
    %v2678 = vpack.c.bf16 %v2642, %v2626
    %v2679 = vpack.c.bf16 %v2643, %v2627
    %v2680 = vpack.c.bf16 %v2644, %v2628
    %v2681 = vpack.c.bf16 %v2645, %v2629
    %v2682 = vld [vmem:[#allocation2] sm:$0xff]
    %v2683 = vld [vmem:[#allocation2 + $0x8] sm:$0xff]
    %v2684 = vld [vmem:[#allocation2 + $0x10] sm:$0xff]
    %v2685 = vld [vmem:[#allocation2 + $0x18] sm:$0xff]
    %v2686 = vld [vmem:[#allocation2 + $0x20] sm:$0xff]
    %v2687 = vld [vmem:[#allocation2 + $0x28] sm:$0xff]
    %v2688 = vld [vmem:[#allocation2 + $0x30] sm:$0xff]
    %v2689 = vld [vmem:[#allocation2 + $0x38] sm:$0xff]
    %v2690 = vld [vmem:[#allocation2 + $0x40] sm:$0xff]
    %v2691 = vld [vmem:[#allocation2 + $0x48] sm:$0xff]
    %v2692 = vld [vmem:[#allocation2 + $0x50] sm:$0xff]
    %v2693 = vld [vmem:[#allocation2 + $0x58] sm:$0xff]
    %v2694 = vld [vmem:[#allocation2 + $0x60] sm:$0xff]
    %v2695 = vld [vmem:[#allocation2 + $0x68] sm:$0xff]
    %v2696 = vld [vmem:[#allocation2 + $0x70] sm:$0xff]
    %v2697 = vld [vmem:[#allocation2 + $0x78] sm:$0xff]
    %v2698 = vld [vmem:[#allocation2 + $0x80] sm:$0xff]
    %v2699 = vld [vmem:[#allocation2 + $0x88] sm:$0xff]
    %v2700 = vld [vmem:[#allocation2 + $0x90] sm:$0xff]
    %v2701 = vld [vmem:[#allocation2 + $0x98] sm:$0xff]
    %v2702 = vld [vmem:[#allocation2 + $0xa0] sm:$0xff]
    %v2703 = vld [vmem:[#allocation2 + $0xa8] sm:$0xff]
    %v2704 = vld [vmem:[#allocation2 + $0xb0] sm:$0xff]
    %v2705 = vld [vmem:[#allocation2 + $0xb8] sm:$0xff]
    %v2706 = vld [vmem:[#allocation2 + $0xc0] sm:$0xff]
    %v2707 = vld [vmem:[#allocation2 + $0xc8] sm:$0xff]
    %v2708 = vld [vmem:[#allocation2 + $0xd0] sm:$0xff]
    %v2709 = vld [vmem:[#allocation2 + $0xd8] sm:$0xff]
    %v2710 = vld [vmem:[#allocation2 + $0xe0] sm:$0xff]
    %v2711 = vld [vmem:[#allocation2 + $0xe8] sm:$0xff]
    %v2712 = vld [vmem:[#allocation2 + $0xf0] sm:$0xff]
    %v2713 = vld [vmem:[#allocation2 + $0xf8] sm:$0xff]
    %v2714 = vld [vmem:[#allocation2 + $0x100] sm:$0xff]
    %v2715 = vld [vmem:[#allocation2 + $0x108] sm:$0xff]
    %v2716 = vld [vmem:[#allocation2 + $0x110] sm:$0xff]
    %v2717 = vld [vmem:[#allocation2 + $0x118] sm:$0xff]
    %v2718 = vld [vmem:[#allocation2 + $0x120] sm:$0xff]
    %v2719 = vld [vmem:[#allocation2 + $0x128] sm:$0xff]
    %v2720 = vld [vmem:[#allocation2 + $0x130] sm:$0xff]
    %v2721 = vld [vmem:[#allocation2 + $0x138] sm:$0xff]
    %v2722 = vld [vmem:[#allocation2 + $0x140] sm:$0xff]
    %v2723 = vld [vmem:[#allocation2 + $0x148] sm:$0xff]
    %v2724 = vld [vmem:[#allocation2 + $0x150] sm:$0xff]
    %v2725 = vld [vmem:[#allocation2 + $0x158] sm:$0xff]
    %v2726 = vld [vmem:[#allocation2 + $0x160] sm:$0xff]
    %v2727 = vld [vmem:[#allocation2 + $0x168] sm:$0xff]
    %v2728 = vld [vmem:[#allocation2 + $0x170] sm:$0xff]
    %v2729 = vld [vmem:[#allocation2 + $0x178] sm:$0xff]
    %v2730 = vld [vmem:[#allocation2 + $0x180] sm:$0xff]
    %v2731 = vld [vmem:[#allocation2 + $0x188] sm:$0xff]
    %v2732 = vld [vmem:[#allocation2 + $0x190] sm:$0xff]
    %v2733 = vld [vmem:[#allocation2 + $0x198] sm:$0xff]
    %v2734 = vld [vmem:[#allocation2 + $0x1a0] sm:$0xff]
    %v2735 = vld [vmem:[#allocation2 + $0x1a8] sm:$0xff]
    %v2736 = vld [vmem:[#allocation2 + $0x1b0] sm:$0xff]
    %v2737 = vld [vmem:[#allocation2 + $0x1b8] sm:$0xff]
    %v2738 = vld [vmem:[#allocation2 + $0x1c0] sm:$0xff]
    %v2739 = vld [vmem:[#allocation2 + $0x1c8] sm:$0xff]
    %v2740 = vld [vmem:[#allocation2 + $0x1d0] sm:$0xff]
    %v2741 = vld [vmem:[#allocation2 + $0x1d8] sm:$0xff]
    %v2742 = vld [vmem:[#allocation2 + $0x1e0] sm:$0xff]
    %v2743 = vld [vmem:[#allocation2 + $0x1e8] sm:$0xff]
    %v2744 = vld [vmem:[#allocation2 + $0x1f0] sm:$0xff]
    %v2745 = vld [vmem:[#allocation2 + $0x1f8] sm:$0xff]
    %v2746 = vld [vmem:[#allocation2 + $0x200] sm:$0xff]
    %v2747 = vld [vmem:[#allocation2 + $0x208] sm:$0xff]
    %v2748 = vld [vmem:[#allocation2 + $0x210] sm:$0xff]
    %v2749 = vld [vmem:[#allocation2 + $0x218] sm:$0xff]
    %v2750 = vld [vmem:[#allocation2 + $0x220] sm:$0xff]
    %v2751 = vld [vmem:[#allocation2 + $0x228] sm:$0xff]
    %v2752 = vld [vmem:[#allocation2 + $0x230] sm:$0xff]
    %v2753 = vld [vmem:[#allocation2 + $0x238] sm:$0xff]
    %v2754 = vld [vmem:[#allocation2 + $0x240] sm:$0xff]
    %v2755 = vld [vmem:[#allocation2 + $0x248] sm:$0xff]
    %v2756 = vld [vmem:[#allocation2 + $0x250] sm:$0xff]
    %v2757 = vld [vmem:[#allocation2 + $0x258] sm:$0xff]
    %v2758 = vld [vmem:[#allocation2 + $0x260] sm:$0xff]
    %v2759 = vld [vmem:[#allocation2 + $0x268] sm:$0xff]
    %v2760 = vld [vmem:[#allocation2 + $0x270] sm:$0xff]
    %v2761 = vld [vmem:[#allocation2 + $0x278] sm:$0xff]
    %v2762 = vld [vmem:[#allocation2 + $0x280] sm:$0xff]
    %v2763 = vld [vmem:[#allocation2 + $0x288] sm:$0xff]
    %v2764 = vld [vmem:[#allocation2 + $0x290] sm:$0xff]
    %v2765 = vld [vmem:[#allocation2 + $0x298] sm:$0xff]
    %v2766 = vld [vmem:[#allocation2 + $0x2a0] sm:$0xff]
    %v2767 = vld [vmem:[#allocation2 + $0x2a8] sm:$0xff]
    %v2768 = vld [vmem:[#allocation2 + $0x2b0] sm:$0xff]
    %v2769 = vld [vmem:[#allocation2 + $0x2b8] sm:$0xff]
    %v2770 = vld [vmem:[#allocation2 + $0x2c0] sm:$0xff]
    %v2771 = vld [vmem:[#allocation2 + $0x2c8] sm:$0xff]
    %v2772 = vld [vmem:[#allocation2 + $0x2d0] sm:$0xff]
    %v2773 = vld [vmem:[#allocation2 + $0x2d8] sm:$0xff]
    %v2774 = vld [vmem:[#allocation2 + $0x2e0] sm:$0xff]
    %v2775 = vld [vmem:[#allocation2 + $0x2e8] sm:$0xff]
    %v2776 = vld [vmem:[#allocation2 + $0x2f0] sm:$0xff]
    %v2777 = vld [vmem:[#allocation2 + $0x2f8] sm:$0xff]
    %v2778 = vld [vmem:[#allocation2 + $0x300] sm:$0xff]
    %v2779 = vld [vmem:[#allocation2 + $0x308] sm:$0xff]
    %v2780 = vld [vmem:[#allocation2 + $0x310] sm:$0xff]
    %v2781 = vld [vmem:[#allocation2 + $0x318] sm:$0xff]
    %v2782 = vld [vmem:[#allocation2 + $0x320] sm:$0xff]
    %v2783 = vld [vmem:[#allocation2 + $0x328] sm:$0xff]
    %v2784 = vld [vmem:[#allocation2 + $0x330] sm:$0xff]
    %v2785 = vld [vmem:[#allocation2 + $0x338] sm:$0xff]
    %v2786 = vld [vmem:[#allocation2 + $0x340] sm:$0xff]
    %v2787 = vld [vmem:[#allocation2 + $0x348] sm:$0xff]
    %v2788 = vld [vmem:[#allocation2 + $0x350] sm:$0xff]
    %v2789 = vld [vmem:[#allocation2 + $0x358] sm:$0xff]
    %v2790 = vld [vmem:[#allocation2 + $0x360] sm:$0xff]
    %v2791 = vld [vmem:[#allocation2 + $0x368] sm:$0xff]
    %v2792 = vld [vmem:[#allocation2 + $0x370] sm:$0xff]
    %v2793 = vld [vmem:[#allocation2 + $0x378] sm:$0xff]
    %v2794 = vld [vmem:[#allocation2 + $0x380] sm:$0xff]
    %v2795 = vld [vmem:[#allocation2 + $0x388] sm:$0xff]
    %v2796 = vld [vmem:[#allocation2 + $0x390] sm:$0xff]
    %v2797 = vld [vmem:[#allocation2 + $0x398] sm:$0xff]
    %v2798 = vld [vmem:[#allocation2 + $0x3a0] sm:$0xff]
    %v2799 = vld [vmem:[#allocation2 + $0x3a8] sm:$0xff]
    %v2800 = vld [vmem:[#allocation2 + $0x3b0] sm:$0xff]
    %v2801 = vld [vmem:[#allocation2 + $0x3b8] sm:$0xff]
    %v2802 = vld [vmem:[#allocation2 + $0x3c0] sm:$0xff]
    %v2803 = vld [vmem:[#allocation2 + $0x3c8] sm:$0xff]
    %v2804 = vld [vmem:[#allocation2 + $0x3d0] sm:$0xff]
    %v2805 = vld [vmem:[#allocation2 + $0x3d8] sm:$0xff]
    %v2806 = vld [vmem:[#allocation2 + $0x3e0] sm:$0xff]
    %v2807 = vld [vmem:[#allocation2 + $0x3e8] sm:$0xff]
    %v2808 = vld [vmem:[#allocation2 + $0x3f0] sm:$0xff]
    %v2809 = vld [vmem:[#allocation2 + $0x3f8] sm:$0xff]
    %2810 = vmatprep.subr.bf16.mxu0 %v2683
    %2811 = vmatpush1.bf16.msra.mxu0 %v2682
    %2812 = vmatprep.subr.bf16.mxu0 %v2685
    %2813 = vmatpush1.bf16.msra.mxu0 %v2684
    %2814 = vmatprep.subr.bf16.mxu0 %v2687
    %2815 = vmatpush1.bf16.msra.mxu0 %v2686
    %2816 = vmatprep.subr.bf16.mxu0 %v2689
    %2817 = vmatpush1.bf16.msra.mxu0 %v2688
    %2818 = vmatprep.subr.bf16.mxu0 %v2691
    %2819 = vmatpush1.bf16.msra.mxu0 %v2690
    %2820 = vmatprep.subr.bf16.mxu0 %v2693
    %2821 = vmatpush1.bf16.msra.mxu0 %v2692
    %2822 = vmatprep.subr.bf16.mxu0 %v2695
    %2823 = vmatpush1.bf16.msra.mxu0 %v2694
    %2824 = vmatprep.subr.bf16.mxu0 %v2697
    %2825 = vmatpush1.bf16.msra.mxu0 %v2696
    %2826 = vmatprep.subr.bf16.mxu0 %v2699
    %2827 = vmatpush1.bf16.msra.mxu0 %v2698
    %2828 = vmatprep.subr.bf16.mxu0 %v2701
    %2829 = vmatpush1.bf16.msra.mxu0 %v2700
    %2830 = vmatprep.subr.bf16.mxu0 %v2703
    %2831 = vmatpush1.bf16.msra.mxu0 %v2702
    %2832 = vmatprep.subr.bf16.mxu0 %v2705
    %2833 = vmatpush1.bf16.msra.mxu0 %v2704
    %2834 = vmatprep.subr.bf16.mxu0 %v2707
    %2835 = vmatpush1.bf16.msra.mxu0 %v2706
    %2836 = vmatprep.subr.bf16.mxu0 %v2709
    %2837 = vmatpush1.bf16.msra.mxu0 %v2708
    %2838 = vmatprep.subr.bf16.mxu0 %v2711
    %2839 = vmatpush1.bf16.msra.mxu0 %v2710
    %2840 = vmatprep.subr.bf16.mxu0 %v2713
    %2841 = vmatpush1.bf16.msra.mxu0 %v2712
    %2842 = vmatprep.mubr.bf16.mxu0 %v2651
    %2843 = vmatmul.mubr.bf16.gmra.mrb[0].mxu0 %v2650
    %v2844 = vpop.f32.mrb[0].mxu0
    %v2845 = vadd.f32 0.0, %v2844
    %v2846 = vpop.f32.mrb[0].mxu0
    %v2847 = vadd.f32 0.0, %v2846
    %v2848 = vpop.f32.mrb[0].mxu0
    %v2849 = vadd.f32 0.0, %v2848
    %v2850 = vpop.f32.mrb[0].mxu0
    %v2851 = vadd.f32 0.0, %v2850
    %2852 = vmatprep.mubr.bf16.mxu0 %v2667
    %2853 = vmatmul.mubr.bf16.gmra.mrb[0].mxu0 %v2666
    %v2854 = vpop.f32.mrb[0].mxu0
    %v2855 = vadd.f32 0.0, %v2854
    %v2856 = vpop.f32.mrb[0].mxu0
    %v2857 = vadd.f32 0.0, %v2856
    %v2858 = vpop.f32.mrb[0].mxu0
    %v2859 = vadd.f32 0.0, %v2858
    %v2860 = vpop.f32.mrb[0].mxu0
    %v2861 = vadd.f32 0.0, %v2860
    %2862 = vdwg.mxu0
    %2863 = vmatprep.subr.bf16.mxu0 %v2715
    %2864 = vmatpush1.bf16.msra.mxu0 %v2714
    %2865 = vmatprep.subr.bf16.mxu0 %v2717
    %2866 = vmatpush1.bf16.msra.mxu0 %v2716
    %2867 = vmatprep.subr.bf16.mxu0 %v2719
    %2868 = vmatpush1.bf16.msra.mxu0 %v2718
    %2869 = vmatprep.subr.bf16.mxu0 %v2721
    %2870 = vmatpush1.bf16.msra.mxu0 %v2720
    %2871 = vmatprep.subr.bf16.mxu0 %v2723
    %2872 = vmatpush1.bf16.msra.mxu0 %v2722
    %2873 = vmatprep.subr.bf16.mxu0 %v2725
    %2874 = vmatpush1.bf16.msra.mxu0 %v2724
    %2875 = vmatprep.subr.bf16.mxu0 %v2727
    %2876 = vmatpush1.bf16.msra.mxu0 %v2726
    %2877 = vmatprep.subr.bf16.mxu0 %v2729
    %2878 = vmatpush1.bf16.msra.mxu0 %v2728
    %2879 = vmatprep.subr.bf16.mxu0 %v2731
    %2880 = vmatpush1.bf16.msra.mxu0 %v2730
    %2881 = vmatprep.subr.bf16.mxu0 %v2733
    %2882 = vmatpush1.bf16.msra.mxu0 %v2732
    %2883 = vmatprep.subr.bf16.mxu0 %v2735
    %2884 = vmatpush1.bf16.msra.mxu0 %v2734
    %2885 = vmatprep.subr.bf16.mxu0 %v2737
    %2886 = vmatpush1.bf16.msra.mxu0 %v2736
    %2887 = vmatprep.subr.bf16.mxu0 %v2739
    %2888 = vmatpush1.bf16.msra.mxu0 %v2738
    %2889 = vmatprep.subr.bf16.mxu0 %v2741
    %2890 = vmatpush1.bf16.msra.mxu0 %v2740
    %2891 = vmatprep.subr.bf16.mxu0 %v2743
    %2892 = vmatpush1.bf16.msra.mxu0 %v2742
    %2893 = vmatprep.subr.bf16.mxu0 %v2745
    %2894 = vmatpush1.bf16.msra.mxu0 %v2744
    %2895 = vmatprep.mubr.bf16.mxu0 %v2653
    %2896 = vmatmul.mubr.bf16.gmra.mrb[0].mxu0 %v2652
    %v2897 = vpop.f32.mrb[0].mxu0
    %v2898 = vadd.f32 %v2845, %v2897
    %v2899 = vpop.f32.mrb[0].mxu0
    %v2900 = vadd.f32 %v2847, %v2899
    %v2901 = vpop.f32.mrb[0].mxu0
    %v2902 = vadd.f32 %v2849, %v2901
    %v2903 = vpop.f32.mrb[0].mxu0
    %v2904 = vadd.f32 %v2851, %v2903
    %2905 = vmatprep.mubr.bf16.mxu0 %v2669
    %2906 = vmatmul.mubr.bf16.gmra.mrb[0].mxu0 %v2668
    %v2907 = vpop.f32.mrb[0].mxu0
    %v2908 = vadd.f32 %v2855, %v2907
    %v2909 = vpop.f32.mrb[0].mxu0
    %v2910 = vadd.f32 %v2857, %v2909
    %v2911 = vpop.f32.mrb[0].mxu0
    %v2912 = vadd.f32 %v2859, %v2911
    %v2913 = vpop.f32.mrb[0].mxu0
    %v2914 = vadd.f32 %v2861, %v2913
    %2915 = vdwg.mxu0
    %2916 = vmatprep.subr.bf16.mxu0 %v2747
    %2917 = vmatpush1.bf16.msra.mxu0 %v2746
    %2918 = vmatprep.subr.bf16.mxu0 %v2749
    %2919 = vmatpush1.bf16.msra.mxu0 %v2748
    %2920 = vmatprep.subr.bf16.mxu0 %v2751
    %2921 = vmatpush1.bf16.msra.mxu0 %v2750
    %2922 = vmatprep.subr.bf16.mxu0 %v2753
    %2923 = vmatpush1.bf16.msra.mxu0 %v2752
    %2924 = vmatprep.subr.bf16.mxu0 %v2755
    %2925 = vmatpush1.bf16.msra.mxu0 %v2754
    %2926 = vmatprep.subr.bf16.mxu0 %v2757
    %2927 = vmatpush1.bf16.msra.mxu0 %v2756
    %2928 = vmatprep.subr.bf16.mxu0 %v2759
    %2929 = vmatpush1.bf16.msra.mxu0 %v2758
    %2930 = vmatprep.subr.bf16.mxu0 %v2761
    %2931 = vmatpush1.bf16.msra.mxu0 %v2760
    %2932 = vmatprep.subr.bf16.mxu0 %v2763
    %2933 = vmatpush1.bf16.msra.mxu0 %v2762
    %2934 = vmatprep.subr.bf16.mxu0 %v2765
    %2935 = vmatpush1.bf16.msra.mxu0 %v2764
    %2936 = vmatprep.subr.bf16.mxu0 %v2767
    %2937 = vmatpush1.bf16.msra.mxu0 %v2766
    %2938 = vmatprep.subr.bf16.mxu0 %v2769
    %2939 = vmatpush1.bf16.msra.mxu0 %v2768
    %2940 = vmatprep.subr.bf16.mxu0 %v2771
    %2941 = vmatpush1.bf16.msra.mxu0 %v2770
    %2942 = vmatprep.subr.bf16.mxu0 %v2773
    %2943 = vmatpush1.bf16.msra.mxu0 %v2772
    %2944 = vmatprep.subr.bf16.mxu0 %v2775
    %2945 = vmatpush1.bf16.msra.mxu0 %v2774
    %2946 = vmatprep.subr.bf16.mxu0 %v2777
    %2947 = vmatpush1.bf16.msra.mxu0 %v2776
    %2948 = vmatprep.mubr.bf16.mxu0 %v2655
    %2949 = vmatmul.mubr.bf16.gmra.mrb[0].mxu0 %v2654
    %v2950 = vpop.f32.mrb[0].mxu0
    %v2951 = vadd.f32 %v2898, %v2950
    %v2952 = vpop.f32.mrb[0].mxu0
    %v2953 = vadd.f32 %v2900, %v2952
    %v2954 = vpop.f32.mrb[0].mxu0
    %v2955 = vadd.f32 %v2902, %v2954
    %v2956 = vpop.f32.mrb[0].mxu0
    %v2957 = vadd.f32 %v2904, %v2956
    %2958 = vmatprep.mubr.bf16.mxu0 %v2671
    %2959 = vmatmul.mubr.bf16.gmra.mrb[0].mxu0 %v2670
    %v2960 = vpop.f32.mrb[0].mxu0
    %v2961 = vadd.f32 %v2908, %v2960
    %v2962 = vpop.f32.mrb[0].mxu0
    %v2963 = vadd.f32 %v2910, %v2962
    %v2964 = vpop.f32.mrb[0].mxu0
    %v2965 = vadd.f32 %v2912, %v2964
    %v2966 = vpop.f32.mrb[0].mxu0
    %v2967 = vadd.f32 %v2914, %v2966
    %2968 = vdwg.mxu0
    %2969 = vmatprep.subr.bf16.mxu0 %v2779
    %2970 = vmatpush1.bf16.msra.mxu0 %v2778
    %2971 = vmatprep.subr.bf16.mxu0 %v2781
    %2972 = vmatpush1.bf16.msra.mxu0 %v2780
    %2973 = vmatprep.subr.bf16.mxu0 %v2783
    %2974 = vmatpush1.bf16.msra.mxu0 %v2782
    %2975 = vmatprep.subr.bf16.mxu0 %v2785
    %2976 = vmatpush1.bf16.msra.mxu0 %v2784
    %2977 = vmatprep.subr.bf16.mxu0 %v2787
    %2978 = vmatpush1.bf16.msra.mxu0 %v2786
    %2979 = vmatprep.subr.bf16.mxu0 %v2789
    %2980 = vmatpush1.bf16.msra.mxu0 %v2788
    %2981 = vmatprep.subr.bf16.mxu0 %v2791
    %2982 = vmatpush1.bf16.msra.mxu0 %v2790
    %2983 = vmatprep.subr.bf16.mxu0 %v2793
    %2984 = vmatpush1.bf16.msra.mxu0 %v2792
    %2985 = vmatprep.subr.bf16.mxu0 %v2795
    %2986 = vmatpush1.bf16.msra.mxu0 %v2794
    %2987 = vmatprep.subr.bf16.mxu0 %v2797
    %2988 = vmatpush1.bf16.msra.mxu0 %v2796
    %2989 = vmatprep.subr.bf16.mxu0 %v2799
    %2990 = vmatpush1.bf16.msra.mxu0 %v2798
    %2991 = vmatprep.subr.bf16.mxu0 %v2801
    %2992 = vmatpush1.bf16.msra.mxu0 %v2800
    %2993 = vmatprep.subr.bf16.mxu0 %v2803
    %2994 = vmatpush1.bf16.msra.mxu0 %v2802
    %2995 = vmatprep.subr.bf16.mxu0 %v2805
    %2996 = vmatpush1.bf16.msra.mxu0 %v2804
    %2997 = vmatprep.subr.bf16.mxu0 %v2807
    %2998 = vmatpush1.bf16.msra.mxu0 %v2806
    %2999 = vmatprep.subr.bf16.mxu0 %v2809
    %3000 = vmatpush1.bf16.msra.mxu0 %v2808
    %3001 = vmatprep.mubr.bf16.mxu0 %v2657
    %3002 = vmatmul.mubr.bf16.gmra.mrb[0].mxu0 %v2656
    %v3003 = vpop.f32.mrb[0].mxu0
    %v3004 = vadd.f32 %v2951, %v3003
    %v3005 = vpop.f32.mrb[0].mxu0
    %v3006 = vadd.f32 %v2953, %v3005
    %v3007 = vpop.f32.mrb[0].mxu0
    %v3008 = vadd.f32 %v2955, %v3007
    %v3009 = vpop.f32.mrb[0].mxu0
    %v3010 = vadd.f32 %v2957, %v3009
    %3011 = vmatprep.mubr.bf16.mxu0 %v2673
    %3012 = vmatmul.mubr.bf16.gmra.mrb[0].mxu0 %v2672
    %v3013 = vpop.f32.mrb[0].mxu0
    %v3014 = vadd.f32 %v2961, %v3013
    %v3015 = vpop.f32.mrb[0].mxu0
    %v3016 = vadd.f32 %v2963, %v3015
    %v3017 = vpop.f32.mrb[0].mxu0
    %v3018 = vadd.f32 %v2965, %v3017
    %v3019 = vpop.f32.mrb[0].mxu0
    %v3020 = vadd.f32 %v2967, %v3019
    %3021 = vdwg.mxu0
    %3022 = vmatprep.subr.bf16.mxu0 %v2683
    %3023 = vmatpush1.bf16.msra.mxu0 %v2682
    %3024 = vmatprep.subr.bf16.mxu0 %v2685
    %3025 = vmatpush1.bf16.msra.mxu0 %v2684
    %3026 = vmatprep.subr.bf16.mxu0 %v2687
    %3027 = vmatpush1.bf16.msra.mxu0 %v2686
    %3028 = vmatprep.subr.bf16.mxu0 %v2689
    %3029 = vmatpush1.bf16.msra.mxu0 %v2688
    %3030 = vmatprep.subr.bf16.mxu0 %v2691
    %3031 = vmatpush1.bf16.msra.mxu0 %v2690
    %3032 = vmatprep.subr.bf16.mxu0 %v2693
    %3033 = vmatpush1.bf16.msra.mxu0 %v2692
    %3034 = vmatprep.subr.bf16.mxu0 %v2695
    %3035 = vmatpush1.bf16.msra.mxu0 %v2694
    %3036 = vmatprep.subr.bf16.mxu0 %v2697
    %3037 = vmatpush1.bf16.msra.mxu0 %v2696
    %3038 = vmatprep.subr.bf16.mxu0 %v2699
    %3039 = vmatpush1.bf16.msra.mxu0 %v2698
    %3040 = vmatprep.subr.bf16.mxu0 %v2701
    %3041 = vmatpush1.bf16.msra.mxu0 %v2700
    %3042 = vmatprep.subr.bf16.mxu0 %v2703
    %3043 = vmatpush1.bf16.msra.mxu0 %v2702
    %3044 = vmatprep.subr.bf16.mxu0 %v2705
    %3045 = vmatpush1.bf16.msra.mxu0 %v2704
    %3046 = vmatprep.subr.bf16.mxu0 %v2707
    %3047 = vmatpush1.bf16.msra.mxu0 %v2706
    %3048 = vmatprep.subr.bf16.mxu0 %v2709
    %3049 = vmatpush1.bf16.msra.mxu0 %v2708
    %3050 = vmatprep.subr.bf16.mxu0 %v2711
    %3051 = vmatpush1.bf16.msra.mxu0 %v2710
    %3052 = vmatprep.subr.bf16.mxu0 %v2713
    %3053 = vmatpush1.bf16.msra.mxu0 %v2712
    %3054 = vmatprep.mubr.bf16.mxu0 %v2659
    %3055 = vmatmul.mubr.bf16.gmra.mrb[0].mxu0 %v2658
    %v3056 = vpop.f32.mrb[0].mxu0
    %v3057 = vadd.f32 0.0, %v3056
    %v3058 = vpop.f32.mrb[0].mxu0
    %v3059 = vadd.f32 0.0, %v3058
    %v3060 = vpop.f32.mrb[0].mxu0
    %v3061 = vadd.f32 0.0, %v3060
    %v3062 = vpop.f32.mrb[0].mxu0
    %v3063 = vadd.f32 0.0, %v3062
    %3064 = vmatprep.mubr.bf16.mxu0 %v2675
    %3065 = vmatmul.mubr.bf16.gmra.mrb[0].mxu0 %v2674
    %v3066 = vpop.f32.mrb[0].mxu0
    %v3067 = vadd.f32 0.0, %v3066
    %v3068 = vpop.f32.mrb[0].mxu0
    %v3069 = vadd.f32 0.0, %v3068
    %v3070 = vpop.f32.mrb[0].mxu0
    %v3071 = vadd.f32 0.0, %v3070
    %v3072 = vpop.f32.mrb[0].mxu0
    %v3073 = vadd.f32 0.0, %v3072
    %3074 = vdwg.mxu0
    %3075 = vmatprep.subr.bf16.mxu0 %v2715
    %3076 = vmatpush1.bf16.msra.mxu0 %v2714
    %3077 = vmatprep.subr.bf16.mxu0 %v2717
    %3078 = vmatpush1.bf16.msra.mxu0 %v2716
    %3079 = vmatprep.subr.bf16.mxu0 %v2719
    %3080 = vmatpush1.bf16.msra.mxu0 %v2718
    %3081 = vmatprep.subr.bf16.mxu0 %v2721
    %3082 = vmatpush1.bf16.msra.mxu0 %v2720
    %3083 = vmatprep.subr.bf16.mxu0 %v2723
    %3084 = vmatpush1.bf16.msra.mxu0 %v2722
    %3085 = vmatprep.subr.bf16.mxu0 %v2725
    %3086 = vmatpush1.bf16.msra.mxu0 %v2724
    %3087 = vmatprep.subr.bf16.mxu0 %v2727
    %3088 = vmatpush1.bf16.msra.mxu0 %v2726
    %3089 = vmatprep.subr.bf16.mxu0 %v2729
    %3090 = vmatpush1.bf16.msra.mxu0 %v2728
    %3091 = vmatprep.subr.bf16.mxu0 %v2731
    %3092 = vmatpush1.bf16.msra.mxu0 %v2730
    %3093 = vmatprep.subr.bf16.mxu0 %v2733
    %3094 = vmatpush1.bf16.msra.mxu0 %v2732
    %3095 = vmatprep.subr.bf16.mxu0 %v2735
    %3096 = vmatpush1.bf16.msra.mxu0 %v2734
    %3097 = vmatprep.subr.bf16.mxu0 %v2737
    %3098 = vmatpush1.bf16.msra.mxu0 %v2736
    %3099 = vmatprep.subr.bf16.mxu0 %v2739
    %3100 = vmatpush1.bf16.msra.mxu0 %v2738
    %3101 = vmatprep.subr.bf16.mxu0 %v2741
    %3102 = vmatpush1.bf16.msra.mxu0 %v2740
    %3103 = vmatprep.subr.bf16.mxu0 %v2743
    %3104 = vmatpush1.bf16.msra.mxu0 %v2742
    %3105 = vmatprep.subr.bf16.mxu0 %v2745
    %3106 = vmatpush1.bf16.msra.mxu0 %v2744
    %3107 = vmatprep.mubr.bf16.mxu0 %v2661
    %3108 = vmatmul.mubr.bf16.gmra.mrb[0].mxu0 %v2660
    %v3109 = vpop.f32.mrb[0].mxu0
    %v3110 = vadd.f32 %v3057, %v3109
    %v3111 = vpop.f32.mrb[0].mxu0
    %v3112 = vadd.f32 %v3059, %v3111
    %v3113 = vpop.f32.mrb[0].mxu0
    %v3114 = vadd.f32 %v3061, %v3113
    %v3115 = vpop.f32.mrb[0].mxu0
    %v3116 = vadd.f32 %v3063, %v3115
    %3117 = vmatprep.mubr.bf16.mxu0 %v2677
    %3118 = vmatmul.mubr.bf16.gmra.mrb[0].mxu0 %v2676
    %v3119 = vpop.f32.mrb[0].mxu0
    %v3120 = vadd.f32 %v3067, %v3119
    %v3121 = vpop.f32.mrb[0].mxu0
    %v3122 = vadd.f32 %v3069, %v3121
    %v3123 = vpop.f32.mrb[0].mxu0
    %v3124 = vadd.f32 %v3071, %v3123
    %v3125 = vpop.f32.mrb[0].mxu0
    %v3126 = vadd.f32 %v3073, %v3125
    %3127 = vdwg.mxu0
    %3128 = vmatprep.subr.bf16.mxu0 %v2747
    %3129 = vmatpush1.bf16.msra.mxu0 %v2746
    %3130 = vmatprep.subr.bf16.mxu0 %v2749
    %3131 = vmatpush1.bf16.msra.mxu0 %v2748
    %3132 = vmatprep.subr.bf16.mxu0 %v2751
    %3133 = vmatpush1.bf16.msra.mxu0 %v2750
    %3134 = vmatprep.subr.bf16.mxu0 %v2753
    %3135 = vmatpush1.bf16.msra.mxu0 %v2752
    %3136 = vmatprep.subr.bf16.mxu0 %v2755
    %3137 = vmatpush1.bf16.msra.mxu0 %v2754
    %3138 = vmatprep.subr.bf16.mxu0 %v2757
    %3139 = vmatpush1.bf16.msra.mxu0 %v2756
    %3140 = vmatprep.subr.bf16.mxu0 %v2759
    %3141 = vmatpush1.bf16.msra.mxu0 %v2758
    %3142 = vmatprep.subr.bf16.mxu0 %v2761
    %3143 = vmatpush1.bf16.msra.mxu0 %v2760
    %3144 = vmatprep.subr.bf16.mxu0 %v2763
    %3145 = vmatpush1.bf16.msra.mxu0 %v2762
    %3146 = vmatprep.subr.bf16.mxu0 %v2765
    %3147 = vmatpush1.bf16.msra.mxu0 %v2764
    %3148 = vmatprep.subr.bf16.mxu0 %v2767
    %3149 = vmatpush1.bf16.msra.mxu0 %v2766
    %3150 = vmatprep.subr.bf16.mxu0 %v2769
    %3151 = vmatpush1.bf16.msra.mxu0 %v2768
    %3152 = vmatprep.subr.bf16.mxu0 %v2771
    %3153 = vmatpush1.bf16.msra.mxu0 %v2770
    %3154 = vmatprep.subr.bf16.mxu0 %v2773
    %3155 = vmatpush1.bf16.msra.mxu0 %v2772
    %3156 = vmatprep.subr.bf16.mxu0 %v2775
    %3157 = vmatpush1.bf16.msra.mxu0 %v2774
    %3158 = vmatprep.subr.bf16.mxu0 %v2777
    %3159 = vmatpush1.bf16.msra.mxu0 %v2776
    %3160 = vmatprep.mubr.bf16.mxu0 %v2663
    %3161 = vmatmul.mubr.bf16.gmra.mrb[0].mxu0 %v2662
    %v3162 = vpop.f32.mrb[0].mxu0
    %v3163 = vadd.f32 %v3110, %v3162
    %v3164 = vpop.f32.mrb[0].mxu0
    %v3165 = vadd.f32 %v3112, %v3164
    %v3166 = vpop.f32.mrb[0].mxu0
    %v3167 = vadd.f32 %v3114, %v3166
    %v3168 = vpop.f32.mrb[0].mxu0
    %v3169 = vadd.f32 %v3116, %v3168
    %3170 = vmatprep.mubr.bf16.mxu0 %v2679
    %3171 = vmatmul.mubr.bf16.gmra.mrb[0].mxu0 %v2678
    %v3172 = vpop.f32.mrb[0].mxu0
    %v3173 = vadd.f32 %v3120, %v3172
    %v3174 = vpop.f32.mrb[0].mxu0
    %v3175 = vadd.f32 %v3122, %v3174
    %v3176 = vpop.f32.mrb[0].mxu0
    %v3177 = vadd.f32 %v3124, %v3176
    %v3178 = vpop.f32.mrb[0].mxu0
    %v3179 = vadd.f32 %v3126, %v3178
    %3180 = vdwg.mxu0
    %3181 = vmatprep.subr.bf16.mxu0 %v2779
    %3182 = vmatpush1.bf16.msra.mxu0 %v2778
    %3183 = vmatprep.subr.bf16.mxu0 %v2781
    %3184 = vmatpush1.bf16.msra.mxu0 %v2780
    %3185 = vmatprep.subr.bf16.mxu0 %v2783
    %3186 = vmatpush1.bf16.msra.mxu0 %v2782
    %3187 = vmatprep.subr.bf16.mxu0 %v2785
    %3188 = vmatpush1.bf16.msra.mxu0 %v2784
    %3189 = vmatprep.subr.bf16.mxu0 %v2787
    %3190 = vmatpush1.bf16.msra.mxu0 %v2786
    %3191 = vmatprep.subr.bf16.mxu0 %v2789
    %3192 = vmatpush1.bf16.msra.mxu0 %v2788
    %3193 = vmatprep.subr.bf16.mxu0 %v2791
    %3194 = vmatpush1.bf16.msra.mxu0 %v2790
    %3195 = vmatprep.subr.bf16.mxu0 %v2793
    %3196 = vmatpush1.bf16.msra.mxu0 %v2792
    %3197 = vmatprep.subr.bf16.mxu0 %v2795
    %3198 = vmatpush1.bf16.msra.mxu0 %v2794
    %3199 = vmatprep.subr.bf16.mxu0 %v2797
    %3200 = vmatpush1.bf16.msra.mxu0 %v2796
    %3201 = vmatprep.subr.bf16.mxu0 %v2799
    %3202 = vmatpush1.bf16.msra.mxu0 %v2798
    %3203 = vmatprep.subr.bf16.mxu0 %v2801
    %3204 = vmatpush1.bf16.msra.mxu0 %v2800
    %3205 = vmatprep.subr.bf16.mxu0 %v2803
    %3206 = vmatpush1.bf16.msra.mxu0 %v2802
    %3207 = vmatprep.subr.bf16.mxu0 %v2805
    %3208 = vmatpush1.bf16.msra.mxu0 %v2804
    %3209 = vmatprep.subr.bf16.mxu0 %v2807
    %3210 = vmatpush1.bf16.msra.mxu0 %v2806
    %3211 = vmatprep.subr.bf16.mxu0 %v2809
    %3212 = vmatpush1.bf16.msra.mxu0 %v2808
    %3213 = vmatprep.mubr.bf16.mxu0 %v2665
    %3214 = vmatmul.mubr.bf16.gmra.mrb[0].mxu0 %v2664
    %v3215 = vpop.f32.mrb[0].mxu0
    %v3216 = vadd.f32 %v3163, %v3215
    %v3217 = vpop.f32.mrb[0].mxu0
    %v3218 = vadd.f32 %v3165, %v3217
    %v3219 = vpop.f32.mrb[0].mxu0
    %v3220 = vadd.f32 %v3167, %v3219
    %v3221 = vpop.f32.mrb[0].mxu0
    %v3222 = vadd.f32 %v3169, %v3221
    %3223 = vmatprep.mubr.bf16.mxu0 %v2681
    %3224 = vmatmul.mubr.bf16.gmra.mrb[0].mxu0 %v2680
    %v3225 = vpop.f32.mrb[0].mxu0
    %v3226 = vadd.f32 %v3173, %v3225
    %v3227 = vpop.f32.mrb[0].mxu0
    %v3228 = vadd.f32 %v3175, %v3227
    %v3229 = vpop.f32.mrb[0].mxu0
    %v3230 = vadd.f32 %v3177, %v3229
    %v3231 = vpop.f32.mrb[0].mxu0
    %v3232 = vadd.f32 %v3179, %v3231
    %3233 = vdwg.mxu0
    %3234 = vrot.lane.b32.xlu0 %v3004, 17
    %v3235 = vpop.permute.xlu0 %3234
    %3236 = vrot.lane.b32.xlu0 %v3008, 17
    %v3237 = vpop.permute.xlu0 %3236
    %3238 = vrot.lane.b32.xlu0 %v3014, 17
    %v3239 = vpop.permute.xlu0 %3238
    %3240 = vrot.lane.b32.xlu0 %v3018, 17
    %v3241 = vpop.permute.xlu0 %3240
    %3242 = vrot.lane.b32.xlu0 %v3006, 17
    %v3243 = vpop.permute.xlu0 %3242
    %3244 = vrot.lane.b32.xlu0 %v3010, 17
    %v3245 = vpop.permute.xlu0 %3244
    %3246 = vrot.lane.b32.xlu0 %v3016, 17
    %v3247 = vpop.permute.xlu0 %3246
    %3248 = vrot.lane.b32.xlu0 %v3020, 17
    %v3249 = vpop.permute.xlu0 %3248
    %3250 = vrot.lane.b32.xlu0 %v3216, 17
    %v3251 = vpop.permute.xlu0 %3250
    %3252 = vrot.lane.b32.xlu0 %v3220, 17
    %v3253 = vpop.permute.xlu0 %3252
    %3254 = vrot.lane.b32.xlu0 %v3226, 17
    %v3255 = vpop.permute.xlu0 %3254
    %3256 = vrot.lane.b32.xlu0 %v3230, 17
    %v3257 = vpop.permute.xlu0 %3256
    %3258 = vrot.lane.b32.xlu0 %v3218, 17
    %v3259 = vpop.permute.xlu0 %3258
    %3260 = vrot.lane.b32.xlu0 %v3222, 17
    %v3261 = vpop.permute.xlu0 %3260
    %3262 = vrot.lane.b32.xlu0 %v3228, 17
    %v3263 = vpop.permute.xlu0 %3262
    %3264 = vrot.lane.b32.xlu0 %v3232, 17
    %v3265 = vpop.permute.xlu0 %3264
    %vm3266 = vcmp.lt.s32.totalorder %v359, 17
    %v3267 = vsel %vm3266, %v3251, %v3259
    %v3268 = vsel %vm3266, %v3253, %v3261
    %v3269 = vsel %vm3266, %v3255, %v3263
    %v3270 = vsel %vm3266, %v3257, %v3265
    %v3271 = vsel %vm3266, %v3243, %v3251
    %v3272 = vsel %vm3266, %v3245, %v3253
    %v3273 = vsel %vm3266, %v3247, %v3255
    %v3274 = vsel %vm3266, %v3249, %v3257
    %v3275 = vsel %vm3266, %v3235, %v3243
    %v3276 = vsel %vm3266, %v3237, %v3245
    %v3277 = vsel %vm3266, %v3239, %v3247
    %v3278 = vsel %vm3266, %v3241, %v3249
    %v3279 = vsel %vm3266, %v3259, %v3235
    %v3280 = vsel %vm3266, %v3261, %v3237
    %v3281 = vsel %vm3266, %v3263, %v3239
    %v3282 = vsel %vm3266, %v3265, %v3241
    %3283 = vrot.lane.b32.xlu0 %v3004, 16
    %v3284 = vpop.permute.xlu0 %3283
    %3285 = vrot.lane.b32.xlu0 %v3008, 16
    %v3286 = vpop.permute.xlu0 %3285
    %3287 = vrot.lane.b32.xlu0 %v3014, 16
    %v3288 = vpop.permute.xlu0 %3287
    %3289 = vrot.lane.b32.xlu0 %v3018, 16
    %v3290 = vpop.permute.xlu0 %3289
    %3291 = vrot.lane.b32.xlu0 %v3006, 16
    %v3292 = vpop.permute.xlu0 %3291
    %3293 = vrot.lane.b32.xlu0 %v3010, 16
    %v3294 = vpop.permute.xlu0 %3293
    %3295 = vrot.lane.b32.xlu0 %v3016, 16
    %v3296 = vpop.permute.xlu0 %3295
    %3297 = vrot.lane.b32.xlu0 %v3020, 16
    %v3298 = vpop.permute.xlu0 %3297
    %3299 = vrot.lane.b32.xlu0 %v3216, 16
    %v3300 = vpop.permute.xlu0 %3299
    %3301 = vrot.lane.b32.xlu0 %v3220, 16
    %v3302 = vpop.permute.xlu0 %3301
    %3303 = vrot.lane.b32.xlu0 %v3226, 16
    %v3304 = vpop.permute.xlu0 %3303
    %3305 = vrot.lane.b32.xlu0 %v3230, 16
    %v3306 = vpop.permute.xlu0 %3305
    %3307 = vrot.lane.b32.xlu0 %v3218, 16
    %v3308 = vpop.permute.xlu0 %3307
    %3309 = vrot.lane.b32.xlu0 %v3222, 16
    %v3310 = vpop.permute.xlu0 %3309
    %3311 = vrot.lane.b32.xlu0 %v3228, 16
    %v3312 = vpop.permute.xlu0 %3311
    %3313 = vrot.lane.b32.xlu0 %v3232, 16
    %v3314 = vpop.permute.xlu0 %3313
    %vm3315 = vcmp.lt.s32.totalorder %v359, 16
    %v3316 = vsel %vm3315, %v3300, %v3308
    %v3317 = vsel %vm3315, %v3302, %v3310
    %v3318 = vsel %vm3315, %v3304, %v3312
    %v3319 = vsel %vm3315, %v3306, %v3314
    %v3320 = vsel %vm3315, %v3292, %v3300
    %v3321 = vsel %vm3315, %v3294, %v3302
    %v3322 = vsel %vm3315, %v3296, %v3304
    %v3323 = vsel %vm3315, %v3298, %v3306
    %v3324 = vsel %vm3315, %v3284, %v3292
    %v3325 = vsel %vm3315, %v3286, %v3294
    %v3326 = vsel %vm3315, %v3288, %v3296
    %v3327 = vsel %vm3315, %v3290, %v3298
    %v3328 = vsel %vm3315, %v3308, %v3284
    %v3329 = vsel %vm3315, %v3310, %v3286
    %v3330 = vsel %vm3315, %v3312, %v3288
    %v3331 = vsel %vm3315, %v3314, %v3290
    %3332 = vrot.lane.b32.xlu0 %v3004, 15
    %v3333 = vpop.permute.xlu0 %3332
    %3334 = vrot.lane.b32.xlu0 %v3008, 15
    %v3335 = vpop.permute.xlu0 %3334
    %3336 = vrot.lane.b32.xlu0 %v3014, 15
    %v3337 = vpop.permute.xlu0 %3336
    %3338 = vrot.lane.b32.xlu0 %v3018, 15
    %v3339 = vpop.permute.xlu0 %3338
    %3340 = vrot.lane.b32.xlu0 %v3006, 15
    %v3341 = vpop.permute.xlu0 %3340
    %3342 = vrot.lane.b32.xlu0 %v3010, 15
    %v3343 = vpop.permute.xlu0 %3342
    %3344 = vrot.lane.b32.xlu0 %v3016, 15
    %v3345 = vpop.permute.xlu0 %3344
    %3346 = vrot.lane.b32.xlu0 %v3020, 15
    %v3347 = vpop.permute.xlu0 %3346
    %3348 = vrot.lane.b32.xlu0 %v3216, 15
    %v3349 = vpop.permute.xlu0 %3348
    %3350 = vrot.lane.b32.xlu0 %v3220, 15
    %v3351 = vpop.permute.xlu0 %3350
    %3352 = vrot.lane.b32.xlu0 %v3226, 15
    %v3353 = vpop.permute.xlu0 %3352
    %3354 = vrot.lane.b32.xlu0 %v3230, 15
    %v3355 = vpop.permute.xlu0 %3354
    %3356 = vrot.lane.b32.xlu0 %v3218, 15
    %v3357 = vpop.permute.xlu0 %3356
    %3358 = vrot.lane.b32.xlu0 %v3222, 15
    %v3359 = vpop.permute.xlu0 %3358
    %3360 = vrot.lane.b32.xlu0 %v3228, 15
    %v3361 = vpop.permute.xlu0 %3360
    %3362 = vrot.lane.b32.xlu0 %v3232, 15
    %v3363 = vpop.permute.xlu0 %3362
    %vm3364 = vcmp.lt.s32.totalorder %v359, 15
    %v3365 = vsel %vm3364, %v3349, %v3357
    %v3366 = vsel %vm3364, %v3351, %v3359
    %v3367 = vsel %vm3364, %v3353, %v3361
    %v3368 = vsel %vm3364, %v3355, %v3363
    %v3369 = vsel %vm3364, %v3341, %v3349
    %v3370 = vsel %vm3364, %v3343, %v3351
    %v3371 = vsel %vm3364, %v3345, %v3353
    %v3372 = vsel %vm3364, %v3347, %v3355
    %v3373 = vsel %vm3364, %v3333, %v3341
    %v3374 = vsel %vm3364, %v3335, %v3343
    %v3375 = vsel %vm3364, %v3337, %v3345
    %v3376 = vsel %vm3364, %v3339, %v3347
    %v3377 = vsel %vm3364, %v3357, %v3333
    %v3378 = vsel %vm3364, %v3359, %v3335
    %v3379 = vsel %vm3364, %v3361, %v3337
    %v3380 = vsel %vm3364, %v3363, %v3339
    %3381 = vrot.lane.b32.xlu0 %v3004, 1
    %v3382 = vpop.permute.xlu0 %3381
    %3383 = vrot.lane.b32.xlu0 %v3008, 1
    %v3384 = vpop.permute.xlu0 %3383
    %3385 = vrot.lane.b32.xlu0 %v3014, 1
    %v3386 = vpop.permute.xlu0 %3385
    %3387 = vrot.lane.b32.xlu0 %v3018, 1
    %v3388 = vpop.permute.xlu0 %3387
    %3389 = vrot.lane.b32.xlu0 %v3006, 1
    %v3390 = vpop.permute.xlu0 %3389
    %3391 = vrot.lane.b32.xlu0 %v3010, 1
    %v3392 = vpop.permute.xlu0 %3391
    %3393 = vrot.lane.b32.xlu0 %v3016, 1
    %v3394 = vpop.permute.xlu0 %3393
    %3395 = vrot.lane.b32.xlu0 %v3020, 1
    %v3396 = vpop.permute.xlu0 %3395
    %3397 = vrot.lane.b32.xlu0 %v3216, 1
    %v3398 = vpop.permute.xlu0 %3397
    %3399 = vrot.lane.b32.xlu0 %v3220, 1
    %v3400 = vpop.permute.xlu0 %3399
    %3401 = vrot.lane.b32.xlu0 %v3226, 1
    %v3402 = vpop.permute.xlu0 %3401
    %3403 = vrot.lane.b32.xlu0 %v3230, 1
    %v3404 = vpop.permute.xlu0 %3403
    %3405 = vrot.lane.b32.xlu0 %v3218, 1
    %v3406 = vpop.permute.xlu0 %3405
    %3407 = vrot.lane.b32.xlu0 %v3222, 1
    %v3408 = vpop.permute.xlu0 %3407
    %3409 = vrot.lane.b32.xlu0 %v3228, 1
    %v3410 = vpop.permute.xlu0 %3409
    %3411 = vrot.lane.b32.xlu0 %v3232, 1
    %v3412 = vpop.permute.xlu0 %3411
    %v3413 = vsel %vm507, %v3398, %v3406
    %v3414 = vsel %vm507, %v3400, %v3408
    %v3415 = vsel %vm507, %v3402, %v3410
    %v3416 = vsel %vm507, %v3404, %v3412
    %v3417 = vsel %vm507, %v3390, %v3398
    %v3418 = vsel %vm507, %v3392, %v3400
    %v3419 = vsel %vm507, %v3394, %v3402
    %v3420 = vsel %vm507, %v3396, %v3404
    %v3421 = vsel %vm507, %v3382, %v3390
    %v3422 = vsel %vm507, %v3384, %v3392
    %v3423 = vsel %vm507, %v3386, %v3394
    %v3424 = vsel %vm507, %v3388, %v3396
    %v3425 = vsel %vm507, %v3406, %v3382
    %v3426 = vsel %vm507, %v3408, %v3384
    %v3427 = vsel %vm507, %v3410, %v3386
    %v3428 = vsel %vm507, %v3412, %v3388
    %3429 = vrot.lane.b32.xlu0 %v3004, 127
    %v3430 = vpop.permute.xlu0 %3429
    %3431 = vrot.lane.b32.xlu0 %v3008, 127
    %v3432 = vpop.permute.xlu0 %3431
    %3433 = vrot.lane.b32.xlu0 %v3014, 127
    %v3434 = vpop.permute.xlu0 %3433
    %3435 = vrot.lane.b32.xlu0 %v3018, 127
    %v3436 = vpop.permute.xlu0 %3435
    %3437 = vrot.lane.b32.xlu0 %v3006, 127
    %v3438 = vpop.permute.xlu0 %3437
    %3439 = vrot.lane.b32.xlu0 %v3010, 127
    %v3440 = vpop.permute.xlu0 %3439
    %3441 = vrot.lane.b32.xlu0 %v3016, 127
    %v3442 = vpop.permute.xlu0 %3441
    %3443 = vrot.lane.b32.xlu0 %v3020, 127
    %v3444 = vpop.permute.xlu0 %3443
    %3445 = vrot.lane.b32.xlu0 %v3216, 127
    %v3446 = vpop.permute.xlu0 %3445
    %3447 = vrot.lane.b32.xlu0 %v3220, 127
    %v3448 = vpop.permute.xlu0 %3447
    %3449 = vrot.lane.b32.xlu0 %v3226, 127
    %v3450 = vpop.permute.xlu0 %3449
    %3451 = vrot.lane.b32.xlu0 %v3230, 127
    %v3452 = vpop.permute.xlu0 %3451
    %3453 = vrot.lane.b32.xlu0 %v3218, 127
    %v3454 = vpop.permute.xlu0 %3453
    %3455 = vrot.lane.b32.xlu0 %v3222, 127
    %v3456 = vpop.permute.xlu0 %3455
    %3457 = vrot.lane.b32.xlu0 %v3228, 127
    %v3458 = vpop.permute.xlu0 %3457
    %3459 = vrot.lane.b32.xlu0 %v3232, 127
    %v3460 = vpop.permute.xlu0 %3459
    %v3461 = vsel %vm556, %v3446, %v3454
    %v3462 = vsel %vm556, %v3448, %v3456
    %v3463 = vsel %vm556, %v3450, %v3458
    %v3464 = vsel %vm556, %v3452, %v3460
    %v3465 = vsel %vm556, %v3438, %v3446
    %v3466 = vsel %vm556, %v3440, %v3448
    %v3467 = vsel %vm556, %v3442, %v3450
    %v3468 = vsel %vm556, %v3444, %v3452
    %v3469 = vsel %vm556, %v3430, %v3438
    %v3470 = vsel %vm556, %v3432, %v3440
    %v3471 = vsel %vm556, %v3434, %v3442
    %v3472 = vsel %vm556, %v3436, %v3444
    %v3473 = vsel %vm556, %v3454, %v3430
    %v3474 = vsel %vm556, %v3456, %v3432
    %v3475 = vsel %vm556, %v3458, %v3434
    %v3476 = vsel %vm556, %v3460, %v3436
    %3477 = vrot.lane.b32.xlu0 %v3004, 113
    %v3478 = vpop.permute.xlu0 %3477
    %3479 = vrot.lane.b32.xlu0 %v3008, 113
    %v3480 = vpop.permute.xlu0 %3479
    %3481 = vrot.lane.b32.xlu0 %v3014, 113
    %v3482 = vpop.permute.xlu0 %3481
    %3483 = vrot.lane.b32.xlu0 %v3018, 113
    %v3484 = vpop.permute.xlu0 %3483
    %3485 = vrot.lane.b32.xlu0 %v3006, 113
    %v3486 = vpop.permute.xlu0 %3485
    %3487 = vrot.lane.b32.xlu0 %v3010, 113
    %v3488 = vpop.permute.xlu0 %3487
    %3489 = vrot.lane.b32.xlu0 %v3016, 113
    %v3490 = vpop.permute.xlu0 %3489
    %3491 = vrot.lane.b32.xlu0 %v3020, 113
    %v3492 = vpop.permute.xlu0 %3491
    %3493 = vrot.lane.b32.xlu0 %v3216, 113
    %v3494 = vpop.permute.xlu0 %3493
    %3495 = vrot.lane.b32.xlu0 %v3220, 113
    %v3496 = vpop.permute.xlu0 %3495
    %3497 = vrot.lane.b32.xlu0 %v3226, 113
    %v3498 = vpop.permute.xlu0 %3497
    %3499 = vrot.lane.b32.xlu0 %v3230, 113
    %v3500 = vpop.permute.xlu0 %3499
    %3501 = vrot.lane.b32.xlu0 %v3218, 113
    %v3502 = vpop.permute.xlu0 %3501
    %3503 = vrot.lane.b32.xlu0 %v3222, 113
    %v3504 = vpop.permute.xlu0 %3503
    %3505 = vrot.lane.b32.xlu0 %v3228, 113
    %v3506 = vpop.permute.xlu0 %3505
    %3507 = vrot.lane.b32.xlu0 %v3232, 113
    %v3508 = vpop.permute.xlu0 %3507
    %vm3509 = vcmp.lt.s32.totalorder %v359, 113
    %v3510 = vsel %vm3509, %v3494, %v3502
    %v3511 = vsel %vm3509, %v3496, %v3504
    %v3512 = vsel %vm3509, %v3498, %v3506
    %v3513 = vsel %vm3509, %v3500, %v3508
    %v3514 = vsel %vm3509, %v3486, %v3494
    %v3515 = vsel %vm3509, %v3488, %v3496
    %v3516 = vsel %vm3509, %v3490, %v3498
    %v3517 = vsel %vm3509, %v3492, %v3500
    %v3518 = vsel %vm3509, %v3478, %v3486
    %v3519 = vsel %vm3509, %v3480, %v3488
    %v3520 = vsel %vm3509, %v3482, %v3490
    %v3521 = vsel %vm3509, %v3484, %v3492
    %v3522 = vsel %vm3509, %v3502, %v3478
    %v3523 = vsel %vm3509, %v3504, %v3480
    %v3524 = vsel %vm3509, %v3506, %v3482
    %v3525 = vsel %vm3509, %v3508, %v3484
    %3526 = vrot.lane.b32.xlu0 %v3004, 112
    %v3527 = vpop.permute.xlu0 %3526
    %3528 = vrot.lane.b32.xlu0 %v3008, 112
    %v3529 = vpop.permute.xlu0 %3528
    %3530 = vrot.lane.b32.xlu0 %v3014, 112
    %v3531 = vpop.permute.xlu0 %3530
    %3532 = vrot.lane.b32.xlu0 %v3018, 112
    %v3533 = vpop.permute.xlu0 %3532
    %3534 = vrot.lane.b32.xlu0 %v3006, 112
    %v3535 = vpop.permute.xlu0 %3534
    %3536 = vrot.lane.b32.xlu0 %v3010, 112
    %v3537 = vpop.permute.xlu0 %3536
    %3538 = vrot.lane.b32.xlu0 %v3016, 112
    %v3539 = vpop.permute.xlu0 %3538
    %3540 = vrot.lane.b32.xlu0 %v3020, 112
    %v3541 = vpop.permute.xlu0 %3540
    %3542 = vrot.lane.b32.xlu0 %v3216, 112
    %v3543 = vpop.permute.xlu0 %3542
    %3544 = vrot.lane.b32.xlu0 %v3220, 112
    %v3545 = vpop.permute.xlu0 %3544
    %3546 = vrot.lane.b32.xlu0 %v3226, 112
    %v3547 = vpop.permute.xlu0 %3546
    %3548 = vrot.lane.b32.xlu0 %v3230, 112
    %v3549 = vpop.permute.xlu0 %3548
    %3550 = vrot.lane.b32.xlu0 %v3218, 112
    %v3551 = vpop.permute.xlu0 %3550
    %3552 = vrot.lane.b32.xlu0 %v3222, 112
    %v3553 = vpop.permute.xlu0 %3552
    %3554 = vrot.lane.b32.xlu0 %v3228, 112
    %v3555 = vpop.permute.xlu0 %3554
    %3556 = vrot.lane.b32.xlu0 %v3232, 112
    %v3557 = vpop.permute.xlu0 %3556
    %vm3558 = vcmp.lt.s32.totalorder %v359, 112
    %v3559 = vsel %vm3558, %v3543, %v3551
    %v3560 = vsel %vm3558, %v3545, %v3553
    %v3561 = vsel %vm3558, %v3547, %v3555
    %v3562 = vsel %vm3558, %v3549, %v3557
    %v3563 = vsel %vm3558, %v3535, %v3543
    %v3564 = vsel %vm3558, %v3537, %v3545
    %v3565 = vsel %vm3558, %v3539, %v3547
    %v3566 = vsel %vm3558, %v3541, %v3549
    %v3567 = vsel %vm3558, %v3527, %v3535
    %v3568 = vsel %vm3558, %v3529, %v3537
    %v3569 = vsel %vm3558, %v3531, %v3539
    %v3570 = vsel %vm3558, %v3533, %v3541
    %v3571 = vsel %vm3558, %v3551, %v3527
    %v3572 = vsel %vm3558, %v3553, %v3529
    %v3573 = vsel %vm3558, %v3555, %v3531
    %v3574 = vsel %vm3558, %v3557, %v3533
    %3575 = vrot.lane.b32.xlu0 %v3004, 111
    %v3576 = vpop.permute.xlu0 %3575
    %3577 = vrot.lane.b32.xlu0 %v3008, 111
    %v3578 = vpop.permute.xlu0 %3577
    %3579 = vrot.lane.b32.xlu0 %v3014, 111
    %v3580 = vpop.permute.xlu0 %3579
    %3581 = vrot.lane.b32.xlu0 %v3018, 111
    %v3582 = vpop.permute.xlu0 %3581
    %3583 = vrot.lane.b32.xlu0 %v3006, 111
    %v3584 = vpop.permute.xlu0 %3583
    %3585 = vrot.lane.b32.xlu0 %v3010, 111
    %v3586 = vpop.permute.xlu0 %3585
    %3587 = vrot.lane.b32.xlu0 %v3016, 111
    %v3588 = vpop.permute.xlu0 %3587
    %3589 = vrot.lane.b32.xlu0 %v3020, 111
    %v3590 = vpop.permute.xlu0 %3589
    %3591 = vrot.lane.b32.xlu0 %v3216, 111
    %v3592 = vpop.permute.xlu0 %3591
    %3593 = vrot.lane.b32.xlu0 %v3220, 111
    %v3594 = vpop.permute.xlu0 %3593
    %3595 = vrot.lane.b32.xlu0 %v3226, 111
    %v3596 = vpop.permute.xlu0 %3595
    %3597 = vrot.lane.b32.xlu0 %v3230, 111
    %v3598 = vpop.permute.xlu0 %3597
    %3599 = vrot.lane.b32.xlu0 %v3218, 111
    %v3600 = vpop.permute.xlu0 %3599
    %3601 = vrot.lane.b32.xlu0 %v3222, 111
    %v3602 = vpop.permute.xlu0 %3601
    %3603 = vrot.lane.b32.xlu0 %v3228, 111
    %v3604 = vpop.permute.xlu0 %3603
    %3605 = vrot.lane.b32.xlu0 %v3232, 111
    %v3606 = vpop.permute.xlu0 %3605
    %vm3607 = vcmp.lt.s32.totalorder %v359, 111
    %v3608 = vsel %vm3607, %v3592, %v3600
    %v3609 = vsel %vm3607, %v3594, %v3602
    %v3610 = vsel %vm3607, %v3596, %v3604
    %v3611 = vsel %vm3607, %v3598, %v3606
    %v3612 = vsel %vm3607, %v3584, %v3592
    %v3613 = vsel %vm3607, %v3586, %v3594
    %v3614 = vsel %vm3607, %v3588, %v3596
    %v3615 = vsel %vm3607, %v3590, %v3598
    %v3616 = vsel %vm3607, %v3576, %v3584
    %v3617 = vsel %vm3607, %v3578, %v3586
    %v3618 = vsel %vm3607, %v3580, %v3588
    %v3619 = vsel %vm3607, %v3582, %v3590
    %v3620 = vsel %vm3607, %v3600, %v3576
    %v3621 = vsel %vm3607, %v3602, %v3578
    %v3622 = vsel %vm3607, %v3604, %v3580
    %v3623 = vsel %vm3607, %v3606, %v3582
    %v3624 = vld [vmem:[#allocation7] sm:$0xff]
    %v3625 = vld [vmem:[#allocation7 + $0x8] sm:$0xf]
    %v3626 = vld [vmem:[#allocation7 + $0xc] sm:$0xff]
    %v3627 = vld [vmem:[#allocation7 + $0x14] sm:$0xf]
    %v3628 = vld [vmem:[#allocation7 + $0x18] sm:$0xff]
    %v3629 = vld [vmem:[#allocation7 + $0x20] sm:$0xf]
    %v3630 = vld [vmem:[#allocation7 + $0x24] sm:$0xff]
    %v3631 = vld [vmem:[#allocation7 + $0x2c] sm:$0xf]
    %v3632 = vld [vmem:[#allocation7 + $0x30] sm:$0xff]
    %v3633 = vld [vmem:[#allocation7 + $0x38] sm:$0xf]
    %v3634 = vld [vmem:[#allocation7 + $0x3c] sm:$0xff]
    %v3635 = vld [vmem:[#allocation7 + $0x44] sm:$0xf]
    %v3636 = vld [vmem:[#allocation7 + $0x48] sm:$0xff]
    %v3637 = vld [vmem:[#allocation7 + $0x50] sm:$0xf]
    %v3638 = vld [vmem:[#allocation7 + $0x54] sm:$0xff]
    %v3639 = vld [vmem:[#allocation7 + $0x5c] sm:$0xf]
    %v3640 = vpack.c.bf16 %v3280, %v3279
    %v3641 = vpack.c.bf16 %v3276, %v3275
    %v3642 = vpack.c.bf16 %v3272, %v3271
    %v3643 = vpack.c.bf16 %v3268, %v3267
    %v3644 = vpack.c.bf16 %v3282, %v3281
    %v3645 = vpack.c.bf16 %v3278, %v3277
    %v3646 = vpack.c.bf16 %v3274, %v3273
    %v3647 = vpack.c.bf16 %v3270, %v3269
    %v3648 = vpack.c.bf16 %v3329, %v3328
    %v3649 = vpack.c.bf16 %v3325, %v3324
    %v3650 = vpack.c.bf16 %v3321, %v3320
    %v3651 = vpack.c.bf16 %v3317, %v3316
    %v3652 = vpack.c.bf16 %v3331, %v3330
    %v3653 = vpack.c.bf16 %v3327, %v3326
    %v3654 = vpack.c.bf16 %v3323, %v3322
    %v3655 = vpack.c.bf16 %v3319, %v3318
    %v3656 = vpack.c.bf16 %v3378, %v3377
    %v3657 = vpack.c.bf16 %v3374, %v3373
    %v3658 = vpack.c.bf16 %v3370, %v3369
    %v3659 = vpack.c.bf16 %v3366, %v3365
    %v3660 = vpack.c.bf16 %v3380, %v3379
    %v3661 = vpack.c.bf16 %v3376, %v3375
    %v3662 = vpack.c.bf16 %v3372, %v3371
    %v3663 = vpack.c.bf16 %v3368, %v3367
    %v3664 = vpack.c.bf16 %v3426, %v3425
    %v3665 = vpack.c.bf16 %v3422, %v3421
    %v3666 = vpack.c.bf16 %v3418, %v3417
    %v3667 = vpack.c.bf16 %v3414, %v3413
    %v3668 = vpack.c.bf16 %v3428, %v3427
    %v3669 = vpack.c.bf16 %v3424, %v3423
    %v3670 = vpack.c.bf16 %v3420, %v3419
    %v3671 = vpack.c.bf16 %v3416, %v3415
    %v3672 = vpack.c.bf16 %v3008, %v3004
    %v3673 = vpack.c.bf16 %v3010, %v3006
    %v3674 = vpack.c.bf16 %v3220, %v3216
    %v3675 = vpack.c.bf16 %v3222, %v3218
    %v3676 = vpack.c.bf16 %v3018, %v3014
    %v3677 = vpack.c.bf16 %v3020, %v3016
    %v3678 = vpack.c.bf16 %v3230, %v3226
    %v3679 = vpack.c.bf16 %v3232, %v3228
    %v3680 = vpack.c.bf16 %v3470, %v3469
    %v3681 = vpack.c.bf16 %v3466, %v3465
    %v3682 = vpack.c.bf16 %v3462, %v3461
    %v3683 = vpack.c.bf16 %v3474, %v3473
    %v3684 = vpack.c.bf16 %v3472, %v3471
    %v3685 = vpack.c.bf16 %v3468, %v3467
    %v3686 = vpack.c.bf16 %v3464, %v3463
    %v3687 = vpack.c.bf16 %v3476, %v3475
    %v3688 = vpack.c.bf16 %v3519, %v3518
    %v3689 = vpack.c.bf16 %v3515, %v3514
    %v3690 = vpack.c.bf16 %v3511, %v3510
    %v3691 = vpack.c.bf16 %v3523, %v3522
    %v3692 = vpack.c.bf16 %v3521, %v3520
    %v3693 = vpack.c.bf16 %v3517, %v3516
    %v3694 = vpack.c.bf16 %v3513, %v3512
    %v3695 = vpack.c.bf16 %v3525, %v3524
    %v3696 = vpack.c.bf16 %v3568, %v3567
    %v3697 = vpack.c.bf16 %v3564, %v3563
    %v3698 = vpack.c.bf16 %v3560, %v3559
    %v3699 = vpack.c.bf16 %v3572, %v3571
    %v3700 = vpack.c.bf16 %v3570, %v3569
    %v3701 = vpack.c.bf16 %v3566, %v3565
    %v3702 = vpack.c.bf16 %v3562, %v3561
    %v3703 = vpack.c.bf16 %v3574, %v3573
    %v3704 = vpack.c.bf16 %v3617, %v3616
    %v3705 = vpack.c.bf16 %v3613, %v3612
    %v3706 = vpack.c.bf16 %v3609, %v3608
    %v3707 = vpack.c.bf16 %v3621, %v3620
    %v3708 = vpack.c.bf16 %v3619, %v3618
    %v3709 = vpack.c.bf16 %v3615, %v3614
    %v3710 = vpack.c.bf16 %v3611, %v3610
    %v3711 = vpack.c.bf16 %v3623, %v3622
    %v3728 = vunpack.c.l.b16 %v3624
    %v3729 = vunpack.c.h.b16 %v3624
    %v3730 = vunpack.c.l.b16 %v3625
    %v3731 = vunpack.c.l.b16 %v3626
    %v3732 = vunpack.c.h.b16 %v3626
    %v3733 = vunpack.c.l.b16 %v3627
    %v3734 = vunpack.c.l.b16 %v3628
    %v3735 = vunpack.c.h.b16 %v3628
    %v3736 = vunpack.c.l.b16 %v3629
    %v3737 = vunpack.c.l.b16 %v3630
    %v3738 = vunpack.c.h.b16 %v3630
    %v3739 = vunpack.c.l.b16 %v3631
    %v3740 = vunpack.c.l.b16 %v3632
    %v3741 = vunpack.c.h.b16 %v3632
    %v3742 = vunpack.c.l.b16 %v3633
    %v3743 = vunpack.c.l.b16 %v3634
    %v3744 = vunpack.c.h.b16 %v3634
    %v3745 = vunpack.c.l.b16 %v3635
    %v3746 = vunpack.c.l.b16 %v3636
    %v3747 = vunpack.c.h.b16 %v3636
    %v3748 = vunpack.c.l.b16 %v3637
    %v3749 = vunpack.c.l.b16 %v3638
    %v3750 = vunpack.c.h.b16 %v3638
    %v3751 = vunpack.c.l.b16 %v3639
    %v3752 = vpack.c.b16 %v3731, %v3728
    %v3753 = vpack.c.b16 %v3732, %v3729
    %v3754 = vpack.c.b16 %v3733, %v3730
    %v3755 = vpack.c.b16 %v3737, %v3734
    %v3756 = vpack.c.b16 %v3738, %v3735
    %v3757 = vpack.c.b16 %v3739, %v3736
    %v3758 = vpack.c.b16 %v3743, %v3740
    %v3759 = vpack.c.b16 %v3744, %v3741
    %v3760 = vpack.c.b16 %v3745, %v3742
    %v3761 = vpack.c.b16 %v3749, %v3746
    %v3762 = vpack.c.b16 %v3750, %v3747
    %v3763 = vpack.c.b16 %v3751, %v3748
    %vm3772 = vcmask 261120
    %v3774 = vsel %vm3772, %v3754, 0
    %v3777 = vsel %vm3772, %v3757, 0
    %v3780 = vsel %vm3772, %v3760, 0
    %v3783 = vsel %vm3772, %v3763, 0
    %3785 = vmatprep.subr.bf16.mxu0 %v3641
    %3786 = vmatpush1.bf16.msra.mxu0 %v3640
    %3787 = vmatprep.subr.bf16.mxu0 %v3645
    %3788 = vmatpush1.bf16.msra.mxu0 %v3644
    %3789 = vmatprep.subr.bf16.mxu0 %v3649
    %3790 = vmatpush1.bf16.msra.mxu0 %v3648
    %3791 = vmatprep.subr.bf16.mxu0 %v3653
    %3792 = vmatpush1.bf16.msra.mxu0 %v3652
    %3793 = vmatprep.subr.bf16.mxu0 %v3657
    %3794 = vmatpush1.bf16.msra.mxu0 %v3656
    %3795 = vmatprep.subr.bf16.mxu0 %v3661
    %3796 = vmatpush1.bf16.msra.mxu0 %v3660
    %3797 = vmatprep.subr.bf16.mxu0 %v3665
    %3798 = vmatpush1.bf16.msra.mxu0 %v3664
    %3799 = vmatprep.subr.bf16.mxu0 %v3669
    %3800 = vmatpush1.bf16.msra.mxu0 %v3668
    %3801 = vmatprep.subr.bf16.mxu0 %v3673
    %3802 = vmatpush1.bf16.msra.mxu0 %v3672
    %3803 = vmatprep.subr.bf16.mxu0 %v3677
    %3804 = vmatpush1.bf16.msra.mxu0 %v3676
    %3805 = vmatprep.subr.bf16.mxu0 %v3681
    %3806 = vmatpush1.bf16.msra.mxu0 %v3680
    %3807 = vmatprep.subr.bf16.mxu0 %v3685
    %3808 = vmatpush1.bf16.msra.mxu0 %v3684
    %3809 = vmatprep.subr.bf16.mxu0 %v3689
    %3810 = vmatpush1.bf16.msra.mxu0 %v3688
    %3811 = vmatprep.subr.bf16.mxu0 %v3693
    %3812 = vmatpush1.bf16.msra.mxu0 %v3692
    %3813 = vmatprep.subr.bf16.mxu0 %v3697
    %3814 = vmatpush1.bf16.msra.mxu0 %v3696
    %3815 = vmatprep.subr.bf16.mxu0 %v3701
    %3816 = vmatpush1.bf16.msra.mxu0 %v3700
    %3817 = vmatprep.mubr.bf16.mxu0 %v3753
    %3818 = vmatmul.mubr.bf16.gmra.mrb[0].mxu0 %v3752
    %v3819 = vpop.f32.mrb[0].mxu0
    %v3820 = vadd.f32 0.0, %v3819
    %v3821 = vpop.f32.mrb[0].mxu0
    %v3822 = vadd.f32 0.0, %v3821
    %v3823 = vpop.f32.mrb[0].mxu0
    %v3824 = vadd.f32 0.0, %v3823
    %v3825 = vpop.f32.mrb[0].mxu0
    %v3826 = vadd.f32 0.0, %v3825
    %3827 = vmatprep.mubr.bf16.mxu0 %v3756
    %3828 = vmatmul.mubr.bf16.gmra.mrb[0].mxu0 %v3755
    %v3829 = vpop.f32.mrb[0].mxu0
    %v3830 = vadd.f32 0.0, %v3829
    %v3831 = vpop.f32.mrb[0].mxu0
    %v3832 = vadd.f32 0.0, %v3831
    %v3833 = vpop.f32.mrb[0].mxu0
    %v3834 = vadd.f32 0.0, %v3833
    %v3835 = vpop.f32.mrb[0].mxu0
    %v3836 = vadd.f32 0.0, %v3835
    %3837 = vmatprep.mubr.bf16.mxu0 %v3759
    %3838 = vmatmul.mubr.bf16.gmra.mrb[0].mxu0 %v3758
    %v3839 = vpop.f32.mrb[0].mxu0
    %v3840 = vadd.f32 0.0, %v3839
    %v3841 = vpop.f32.mrb[0].mxu0
    %v3842 = vadd.f32 0.0, %v3841
    %v3843 = vpop.f32.mrb[0].mxu0
    %v3844 = vadd.f32 0.0, %v3843
    %v3845 = vpop.f32.mrb[0].mxu0
    %v3846 = vadd.f32 0.0, %v3845
    %3847 = vmatprep.mubr.bf16.mxu0 %v3762
    %3848 = vmatmul.mubr.bf16.gmra.mrb[0].mxu0 %v3761
    %v3849 = vpop.f32.mrb[0].mxu0
    %v3850 = vadd.f32 0.0, %v3849
    %v3851 = vpop.f32.mrb[0].mxu0
    %v3852 = vadd.f32 0.0, %v3851
    %v3853 = vpop.f32.mrb[0].mxu0
    %v3854 = vadd.f32 0.0, %v3853
    %v3855 = vpop.f32.mrb[0].mxu0
    %v3856 = vadd.f32 0.0, %v3855
    %3857 = vdwg.mxu0
    %3858 = vmatprep.subr.bf16.mxu0 %v3705
    %3859 = vmatpush1.bf16.msra.mxu0 %v3704
    %3860 = vmatprep.subr.bf16.mxu0 %v3709
    %3861 = vmatpush1.bf16.msra.mxu0 %v3708
    %3862 = vmatprep.subr.bf16.mxu0 0
    %3863 = vmatpush1.bf16.msra.mxu0 0
    %3864 = vmatprep.subr.bf16.mxu0 0
    %3865 = vmatpush1.bf16.msra.mxu0 0
    %3866 = vmatprep.subr.bf16.mxu0 0
    %3867 = vmatpush1.bf16.msra.mxu0 0
    %3868 = vmatprep.subr.bf16.mxu0 0
    %3869 = vmatpush1.bf16.msra.mxu0 0
    %3870 = vmatprep.subr.bf16.mxu0 0
    %3871 = vmatpush1.bf16.msra.mxu0 0
    %3872 = vmatprep.subr.bf16.mxu0 0
    %3873 = vmatpush1.bf16.msra.mxu0 0
    %3874 = vmatprep.subr.bf16.mxu0 0
    %3875 = vmatpush1.bf16.msra.mxu0 0
    %3876 = vmatprep.subr.bf16.mxu0 0
    %3877 = vmatpush1.bf16.msra.mxu0 0
    %3878 = vmatprep.subr.bf16.mxu0 0
    %3879 = vmatpush1.bf16.msra.mxu0 0
    %3880 = vmatprep.subr.bf16.mxu0 0
    %3881 = vmatpush1.bf16.msra.mxu0 0
    %3882 = vmatprep.subr.bf16.mxu0 0
    %3883 = vmatpush1.bf16.msra.mxu0 0
    %3884 = vmatprep.subr.bf16.mxu0 0
    %3885 = vmatpush1.bf16.msra.mxu0 0
    %3886 = vmatprep.subr.bf16.mxu0 0
    %3887 = vmatpush1.bf16.msra.mxu0 0
    %3888 = vmatprep.subr.bf16.mxu0 0
    %3889 = vmatpush1.bf16.msra.mxu0 0
    %3890 = vmatprep.mubr.bf16.mxu0 0
    %3891 = vmatmul.mubr.bf16.gmra.mrb[0].mxu0 %v3774
    %v3892 = vpop.f32.mrb[0].mxu0
    %v3893 = vadd.f32 %v3820, %v3892
    %v3894 = vpop.f32.mrb[0].mxu0
    %v3895 = vadd.f32 %v3822, %v3894
    %v3896 = vpop.f32.mrb[0].mxu0
    %v3897 = vadd.f32 %v3824, %v3896
    %v3898 = vpop.f32.mrb[0].mxu0
    %v3899 = vadd.f32 %v3826, %v3898
    %3900 = vmatprep.mubr.bf16.mxu0 0
    %3901 = vmatmul.mubr.bf16.gmra.mrb[0].mxu0 %v3777
    %v3902 = vpop.f32.mrb[0].mxu0
    %v3903 = vadd.f32 %v3830, %v3902
    %v3904 = vpop.f32.mrb[0].mxu0
    %v3905 = vadd.f32 %v3832, %v3904
    %v3906 = vpop.f32.mrb[0].mxu0
    %v3907 = vadd.f32 %v3834, %v3906
    %v3908 = vpop.f32.mrb[0].mxu0
    %v3909 = vadd.f32 %v3836, %v3908
    %3910 = vmatprep.mubr.bf16.mxu0 0
    %3911 = vmatmul.mubr.bf16.gmra.mrb[0].mxu0 %v3780
    %v3912 = vpop.f32.mrb[0].mxu0
    %v3913 = vadd.f32 %v3840, %v3912
    %v3914 = vpop.f32.mrb[0].mxu0
    %v3915 = vadd.f32 %v3842, %v3914
    %v3916 = vpop.f32.mrb[0].mxu0
    %v3917 = vadd.f32 %v3844, %v3916
    %v3918 = vpop.f32.mrb[0].mxu0
    %v3919 = vadd.f32 %v3846, %v3918
    %3920 = vmatprep.mubr.bf16.mxu0 0
    %3921 = vmatmul.mubr.bf16.gmra.mrb[0].mxu0 %v3783
    %v3922 = vpop.f32.mrb[0].mxu0
    %v3923 = vadd.f32 %v3850, %v3922
    %v3924 = vpop.f32.mrb[0].mxu0
    %v3925 = vadd.f32 %v3852, %v3924
    %v3926 = vpop.f32.mrb[0].mxu0
    %v3927 = vadd.f32 %v3854, %v3926
    %v3928 = vpop.f32.mrb[0].mxu0
    %v3929 = vadd.f32 %v3856, %v3928
    %3930 = vdwg.mxu0
    %3931 = vmatprep.subr.bf16.mxu0 %v3643
    %3932 = vmatpush1.bf16.msra.mxu0 %v3642
    %3933 = vmatprep.subr.bf16.mxu0 %v3647
    %3934 = vmatpush1.bf16.msra.mxu0 %v3646
    %3935 = vmatprep.subr.bf16.mxu0 %v3651
    %3936 = vmatpush1.bf16.msra.mxu0 %v3650
    %3937 = vmatprep.subr.bf16.mxu0 %v3655
    %3938 = vmatpush1.bf16.msra.mxu0 %v3654
    %3939 = vmatprep.subr.bf16.mxu0 %v3659
    %3940 = vmatpush1.bf16.msra.mxu0 %v3658
    %3941 = vmatprep.subr.bf16.mxu0 %v3663
    %3942 = vmatpush1.bf16.msra.mxu0 %v3662
    %3943 = vmatprep.subr.bf16.mxu0 %v3667
    %3944 = vmatpush1.bf16.msra.mxu0 %v3666
    %3945 = vmatprep.subr.bf16.mxu0 %v3671
    %3946 = vmatpush1.bf16.msra.mxu0 %v3670
    %3947 = vmatprep.subr.bf16.mxu0 %v3675
    %3948 = vmatpush1.bf16.msra.mxu0 %v3674
    %3949 = vmatprep.subr.bf16.mxu0 %v3679
    %3950 = vmatpush1.bf16.msra.mxu0 %v3678
    %3951 = vmatprep.subr.bf16.mxu0 %v3683
    %3952 = vmatpush1.bf16.msra.mxu0 %v3682
    %3953 = vmatprep.subr.bf16.mxu0 %v3687
    %3954 = vmatpush1.bf16.msra.mxu0 %v3686
    %3955 = vmatprep.subr.bf16.mxu0 %v3691
    %3956 = vmatpush1.bf16.msra.mxu0 %v3690
    %3957 = vmatprep.subr.bf16.mxu0 %v3695
    %3958 = vmatpush1.bf16.msra.mxu0 %v3694
    %3959 = vmatprep.subr.bf16.mxu0 %v3699
    %3960 = vmatpush1.bf16.msra.mxu0 %v3698
    %3961 = vmatprep.subr.bf16.mxu0 %v3703
    %3962 = vmatpush1.bf16.msra.mxu0 %v3702
    %3963 = vmatprep.mubr.bf16.mxu0 %v3753
    %3964 = vmatmul.mubr.bf16.gmra.mrb[0].mxu0 %v3752
    %v3965 = vpop.f32.mrb[0].mxu0
    %v3966 = vadd.f32 0.0, %v3965
    %v3967 = vpop.f32.mrb[0].mxu0
    %v3968 = vadd.f32 0.0, %v3967
    %v3969 = vpop.f32.mrb[0].mxu0
    %v3970 = vadd.f32 0.0, %v3969
    %v3971 = vpop.f32.mrb[0].mxu0
    %v3972 = vadd.f32 0.0, %v3971
    %3973 = vmatprep.mubr.bf16.mxu0 %v3756
    %3974 = vmatmul.mubr.bf16.gmra.mrb[0].mxu0 %v3755
    %v3975 = vpop.f32.mrb[0].mxu0
    %v3976 = vadd.f32 0.0, %v3975
    %v3977 = vpop.f32.mrb[0].mxu0
    %v3978 = vadd.f32 0.0, %v3977
    %v3979 = vpop.f32.mrb[0].mxu0
    %v3980 = vadd.f32 0.0, %v3979
    %v3981 = vpop.f32.mrb[0].mxu0
    %v3982 = vadd.f32 0.0, %v3981
    %3983 = vmatprep.mubr.bf16.mxu0 %v3759
    %3984 = vmatmul.mubr.bf16.gmra.mrb[0].mxu0 %v3758
    %v3985 = vpop.f32.mrb[0].mxu0
    %v3986 = vadd.f32 0.0, %v3985
    %v3987 = vpop.f32.mrb[0].mxu0
    %v3988 = vadd.f32 0.0, %v3987
    %v3989 = vpop.f32.mrb[0].mxu0
    %v3990 = vadd.f32 0.0, %v3989
    %v3991 = vpop.f32.mrb[0].mxu0
    %v3992 = vadd.f32 0.0, %v3991
    %3993 = vmatprep.mubr.bf16.mxu0 %v3762
    %3994 = vmatmul.mubr.bf16.gmra.mrb[0].mxu0 %v3761
    %v3995 = vpop.f32.mrb[0].mxu0
    %v3996 = vadd.f32 0.0, %v3995
    %v3997 = vpop.f32.mrb[0].mxu0
    %v3998 = vadd.f32 0.0, %v3997
    %v3999 = vpop.f32.mrb[0].mxu0
    %v4000 = vadd.f32 0.0, %v3999
    %v4001 = vpop.f32.mrb[0].mxu0
    %v4002 = vadd.f32 0.0, %v4001
    %4003 = vdwg.mxu0
    %4004 = vmatprep.subr.bf16.mxu0 %v3707
    %4005 = vmatpush1.bf16.msra.mxu0 %v3706
    %4006 = vmatprep.subr.bf16.mxu0 %v3711
    %4007 = vmatpush1.bf16.msra.mxu0 %v3710
    %4008 = vmatprep.subr.bf16.mxu0 0
    %4009 = vmatpush1.bf16.msra.mxu0 0
    %4010 = vmatprep.subr.bf16.mxu0 0
    %4011 = vmatpush1.bf16.msra.mxu0 0
    %4012 = vmatprep.subr.bf16.mxu0 0
    %4013 = vmatpush1.bf16.msra.mxu0 0
    %4014 = vmatprep.subr.bf16.mxu0 0
    %4015 = vmatpush1.bf16.msra.mxu0 0
    %4016 = vmatprep.subr.bf16.mxu0 0
    %4017 = vmatpush1.bf16.msra.mxu0 0
    %4018 = vmatprep.subr.bf16.mxu0 0
    %4019 = vmatpush1.bf16.msra.mxu0 0
    %4020 = vmatprep.subr.bf16.mxu0 0
    %4021 = vmatpush1.bf16.msra.mxu0 0
    %4022 = vmatprep.subr.bf16.mxu0 0
    %4023 = vmatpush1.bf16.msra.mxu0 0
    %4024 = vmatprep.subr.bf16.mxu0 0
    %4025 = vmatpush1.bf16.msra.mxu0 0
    %4026 = vmatprep.subr.bf16.mxu0 0
    %4027 = vmatpush1.bf16.msra.mxu0 0
    %4028 = vmatprep.subr.bf16.mxu0 0
    %4029 = vmatpush1.bf16.msra.mxu0 0
    %4030 = vmatprep.subr.bf16.mxu0 0
    %4031 = vmatpush1.bf16.msra.mxu0 0
    %4032 = vmatprep.subr.bf16.mxu0 0
    %4033 = vmatpush1.bf16.msra.mxu0 0
    %4034 = vmatprep.subr.bf16.mxu0 0
    %4035 = vmatpush1.bf16.msra.mxu0 0
    %4036 = vmatprep.mubr.bf16.mxu0 0
    %4037 = vmatmul.mubr.bf16.gmra.mrb[0].mxu0 %v3774
    %v4038 = vpop.f32.mrb[0].mxu0
    %v4039 = vadd.f32 %v3966, %v4038
    %v4040 = vpop.f32.mrb[0].mxu0
    %v4041 = vadd.f32 %v3968, %v4040
    %v4042 = vpop.f32.mrb[0].mxu0
    %v4043 = vadd.f32 %v3970, %v4042
    %v4044 = vpop.f32.mrb[0].mxu0
    %v4045 = vadd.f32 %v3972, %v4044
    %4046 = vmatprep.mubr.bf16.mxu0 0
    %4047 = vmatmul.mubr.bf16.gmra.mrb[0].mxu0 %v3777
    %v4048 = vpop.f32.mrb[0].mxu0
    %v4049 = vadd.f32 %v3976, %v4048
    %v4050 = vpop.f32.mrb[0].mxu0
    %v4051 = vadd.f32 %v3978, %v4050
    %v4052 = vpop.f32.mrb[0].mxu0
    %v4053 = vadd.f32 %v3980, %v4052
    %v4054 = vpop.f32.mrb[0].mxu0
    %v4055 = vadd.f32 %v3982, %v4054
    %4056 = vmatprep.mubr.bf16.mxu0 0
    %4057 = vmatmul.mubr.bf16.gmra.mrb[0].mxu0 %v3780
    %v4058 = vpop.f32.mrb[0].mxu0
    %v4059 = vadd.f32 %v3986, %v4058
    %v4060 = vpop.f32.mrb[0].mxu0
    %v4061 = vadd.f32 %v3988, %v4060
    %v4062 = vpop.f32.mrb[0].mxu0
    %v4063 = vadd.f32 %v3990, %v4062
    %v4064 = vpop.f32.mrb[0].mxu0
    %v4065 = vadd.f32 %v3992, %v4064
    %4066 = vmatprep.mubr.bf16.mxu0 0
    %4067 = vmatmul.mubr.bf16.gmra.mrb[0].mxu0 %v3783
    %v4068 = vpop.f32.mrb[0].mxu0
    %v4069 = vadd.f32 %v3996, %v4068
    %v4070 = vpop.f32.mrb[0].mxu0
    %v4071 = vadd.f32 %v3998, %v4070
    %v4072 = vpop.f32.mrb[0].mxu0
    %v4073 = vadd.f32 %v4000, %v4072
    %v4074 = vpop.f32.mrb[0].mxu0
    %v4075 = vadd.f32 %v4002, %v4074
    %4076 = vdwg.mxu0
    %v4077 = vld [vmem:[%s5] sm:$0xff]
    %v4078 = vld [vmem:[%s5 + $0x8] sm:$0xff]
    %v4079 = vld [vmem:[%s5 + $0x10] sm:$0xff]
    %v4080 = vld [vmem:[%s5 + $0x18] sm:$0xff]
    %v4081 = vld [vmem:[%s5 + $0x20] sm:$0xff]
    %v4082 = vld [vmem:[%s5 + $0x28] sm:$0xff]
    %v4083 = vld [vmem:[%s5 + $0x30] sm:$0xff]
    %v4084 = vld [vmem:[%s5 + $0x38] sm:$0xff]
    %4086 = vset.pattern.permute.xlu0 0
    %4087 = vperm.xlu0 %4086, %v4077
    %v4088 = vpop.permute.xlu0 %4087
    %4091 = vset.pattern.permute.xlu0 0
    %4092 = vperm.xlu0 %4091, %v4078
    %v4093 = vpop.permute.xlu0 %4092
    %4096 = vset.pattern.permute.xlu0 0
    %4097 = vperm.xlu0 %4096, %v4079
    %v4098 = vpop.permute.xlu0 %4097
    %4101 = vset.pattern.permute.xlu0 0
    %4102 = vperm.xlu0 %4101, %v4080
    %v4103 = vpop.permute.xlu0 %4102
    %4106 = vset.pattern.permute.xlu0 0
    %4107 = vperm.xlu0 %4106, %v4081
    %v4108 = vpop.permute.xlu0 %4107
    %4111 = vset.pattern.permute.xlu0 0
    %4112 = vperm.xlu0 %4111, %v4082
    %v4113 = vpop.permute.xlu0 %4112
    %4116 = vset.pattern.permute.xlu0 0
    %4117 = vperm.xlu0 %4116, %v4083
    %v4118 = vpop.permute.xlu0 %4117
    %4121 = vset.pattern.permute.xlu0 0
    %4122 = vperm.xlu0 %4121, %v4084
    %v4123 = vpop.permute.xlu0 %4122
    %v4125 = vmul.f32 %v3893, %v4088
    %v4126 = vmul.f32 %v3895, %v4088
    %v4127 = vmul.f32 %v4039, %v4088
    %v4128 = vmul.f32 %v4041, %v4088
    %v4129 = vmul.f32 %v3897, %v4093
    %v4130 = vmul.f32 %v3899, %v4093
    %v4131 = vmul.f32 %v4043, %v4093
    %v4132 = vmul.f32 %v4045, %v4093
    %v4133 = vmul.f32 %v3903, %v4098
    %v4134 = vmul.f32 %v3905, %v4098
    %v4135 = vmul.f32 %v4049, %v4098
    %v4136 = vmul.f32 %v4051, %v4098
    %v4137 = vmul.f32 %v3907, %v4103
    %v4138 = vmul.f32 %v3909, %v4103
    %v4139 = vmul.f32 %v4053, %v4103
    %v4140 = vmul.f32 %v4055, %v4103
    %v4141 = vmul.f32 %v3913, %v4108
    %v4142 = vmul.f32 %v3915, %v4108
    %v4143 = vmul.f32 %v4059, %v4108
    %v4144 = vmul.f32 %v4061, %v4108
    %v4145 = vmul.f32 %v3917, %v4113
    %v4146 = vmul.f32 %v3919, %v4113
    %v4147 = vmul.f32 %v4063, %v4113
    %v4148 = vmul.f32 %v4065, %v4113
    %v4149 = vmul.f32 %v3923, %v4118
    %v4150 = vmul.f32 %v3925, %v4118
    %v4151 = vmul.f32 %v4069, %v4118
    %v4152 = vmul.f32 %v4071, %v4118
    %v4153 = vmul.f32 %v3927, %v4123
    %v4154 = vmul.f32 %v3929, %v4123
    %v4155 = vmul.f32 %v4073, %v4123
    %v4156 = vmul.f32 %v4075, %v4123
    %v4157 = vld [vmem:[%s6] sm:$0xff]
    %v4158 = vld [vmem:[%s6 + $0x8] sm:$0xff]
    %v4159 = vld [vmem:[%s6 + $0x10] sm:$0xff]
    %v4160 = vld [vmem:[%s6 + $0x18] sm:$0xff]
    %v4161 = vld [vmem:[%s6 + $0x20] sm:$0xff]
    %v4162 = vld [vmem:[%s6 + $0x28] sm:$0xff]
    %v4163 = vld [vmem:[%s6 + $0x30] sm:$0xff]
    %v4164 = vld [vmem:[%s6 + $0x38] sm:$0xff]
    %4166 = vset.pattern.permute.xlu0 0
    %4167 = vperm.xlu0 %4166, %v4157
    %v4168 = vpop.permute.xlu0 %4167
    %4171 = vset.pattern.permute.xlu0 0
    %4172 = vperm.xlu0 %4171, %v4158
    %v4173 = vpop.permute.xlu0 %4172
    %4176 = vset.pattern.permute.xlu0 0
    %4177 = vperm.xlu0 %4176, %v4159
    %v4178 = vpop.permute.xlu0 %4177
    %4181 = vset.pattern.permute.xlu0 0
    %4182 = vperm.xlu0 %4181, %v4160
    %v4183 = vpop.permute.xlu0 %4182
    %4186 = vset.pattern.permute.xlu0 0
    %4187 = vperm.xlu0 %4186, %v4161
    %v4188 = vpop.permute.xlu0 %4187
    %4191 = vset.pattern.permute.xlu0 0
    %4192 = vperm.xlu0 %4191, %v4162
    %v4193 = vpop.permute.xlu0 %4192
    %4196 = vset.pattern.permute.xlu0 0
    %4197 = vperm.xlu0 %4196, %v4163
    %v4198 = vpop.permute.xlu0 %4197
    %4201 = vset.pattern.permute.xlu0 0
    %4202 = vperm.xlu0 %4201, %v4164
    %v4203 = vpop.permute.xlu0 %4202
    %v4205 = vadd.f32 %v4125, %v4168
    %v4206 = vadd.f32 %v4126, %v4168
    %v4207 = vadd.f32 %v4127, %v4168
    %v4208 = vadd.f32 %v4128, %v4168
    %v4209 = vadd.f32 %v4129, %v4173
    %v4210 = vadd.f32 %v4130, %v4173
    %v4211 = vadd.f32 %v4131, %v4173
    %v4212 = vadd.f32 %v4132, %v4173
    %v4213 = vadd.f32 %v4133, %v4178
    %v4214 = vadd.f32 %v4134, %v4178
    %v4215 = vadd.f32 %v4135, %v4178
    %v4216 = vadd.f32 %v4136, %v4178
    %v4217 = vadd.f32 %v4137, %v4183
    %v4218 = vadd.f32 %v4138, %v4183
    %v4219 = vadd.f32 %v4139, %v4183
    %v4220 = vadd.f32 %v4140, %v4183
    %v4221 = vadd.f32 %v4141, %v4188
    %v4222 = vadd.f32 %v4142, %v4188
    %v4223 = vadd.f32 %v4143, %v4188
    %v4224 = vadd.f32 %v4144, %v4188
    %v4225 = vadd.f32 %v4145, %v4193
    %v4226 = vadd.f32 %v4146, %v4193
    %v4227 = vadd.f32 %v4147, %v4193
    %v4228 = vadd.f32 %v4148, %v4193
    %v4229 = vadd.f32 %v4149, %v4198
    %v4230 = vadd.f32 %v4150, %v4198
    %v4231 = vadd.f32 %v4151, %v4198
    %v4232 = vadd.f32 %v4152, %v4198
    %v4233 = vadd.f32 %v4153, %v4203
    %v4234 = vadd.f32 %v4154, %v4203
    %v4235 = vadd.f32 %v4155, %v4203
    %v4236 = vadd.f32 %v4156, %v4203
    %v4237 = vmax.f32 %v4205, 0.0
    %v4238 = vmax.f32 %v4206, 0.0
    %v4239 = vmax.f32 %v4207, 0.0
    %v4240 = vmax.f32 %v4208, 0.0
    %v4241 = vmax.f32 %v4209, 0.0
    %v4242 = vmax.f32 %v4210, 0.0
    %v4243 = vmax.f32 %v4211, 0.0
    %v4244 = vmax.f32 %v4212, 0.0
    %v4245 = vmax.f32 %v4213, 0.0
    %v4246 = vmax.f32 %v4214, 0.0
    %v4247 = vmax.f32 %v4215, 0.0
    %v4248 = vmax.f32 %v4216, 0.0
    %v4249 = vmax.f32 %v4217, 0.0
    %v4250 = vmax.f32 %v4218, 0.0
    %v4251 = vmax.f32 %v4219, 0.0
    %v4252 = vmax.f32 %v4220, 0.0
    %v4253 = vmax.f32 %v4221, 0.0
    %v4254 = vmax.f32 %v4222, 0.0
    %v4255 = vmax.f32 %v4223, 0.0
    %v4256 = vmax.f32 %v4224, 0.0
    %v4257 = vmax.f32 %v4225, 0.0
    %v4258 = vmax.f32 %v4226, 0.0
    %v4259 = vmax.f32 %v4227, 0.0
    %v4260 = vmax.f32 %v4228, 0.0
    %v4261 = vmax.f32 %v4229, 0.0
    %v4262 = vmax.f32 %v4230, 0.0
    %v4263 = vmax.f32 %v4231, 0.0
    %v4264 = vmax.f32 %v4232, 0.0
    %v4265 = vmax.f32 %v4233, 0.0
    %v4266 = vmax.f32 %v4234, 0.0
    %v4267 = vmax.f32 %v4235, 0.0
    %v4268 = vmax.f32 %v4236, 0.0
    %4269 = vrot.lane.b32.xlu0 %v4237, 127
    %v4270 = vpop.permute.xlu0 %4269
    %4271 = vrot.lane.b32.xlu0 %v4241, 127
    %v4272 = vpop.permute.xlu0 %4271
    %4273 = vrot.lane.b32.xlu0 %v4245, 127
    %v4274 = vpop.permute.xlu0 %4273
    %4275 = vrot.lane.b32.xlu0 %v4249, 127
    %v4276 = vpop.permute.xlu0 %4275
    %4277 = vrot.lane.b32.xlu0 %v4253, 127
    %v4278 = vpop.permute.xlu0 %4277
    %4279 = vrot.lane.b32.xlu0 %v4257, 127
    %v4280 = vpop.permute.xlu0 %4279
    %4281 = vrot.lane.b32.xlu0 %v4261, 127
    %v4282 = vpop.permute.xlu0 %4281
    %4283 = vrot.lane.b32.xlu0 %v4265, 127
    %v4284 = vpop.permute.xlu0 %4283
    %4285 = vrot.lane.b32.xlu0 %v4238, 127
    %v4286 = vpop.permute.xlu0 %4285
    %4287 = vrot.lane.b32.xlu0 %v4242, 127
    %v4288 = vpop.permute.xlu0 %4287
    %4289 = vrot.lane.b32.xlu0 %v4246, 127
    %v4290 = vpop.permute.xlu0 %4289
    %4291 = vrot.lane.b32.xlu0 %v4250, 127
    %v4292 = vpop.permute.xlu0 %4291
    %4293 = vrot.lane.b32.xlu0 %v4254, 127
    %v4294 = vpop.permute.xlu0 %4293
    %4295 = vrot.lane.b32.xlu0 %v4258, 127
    %v4296 = vpop.permute.xlu0 %4295
    %4297 = vrot.lane.b32.xlu0 %v4262, 127
    %v4298 = vpop.permute.xlu0 %4297
    %4299 = vrot.lane.b32.xlu0 %v4266, 127
    %v4300 = vpop.permute.xlu0 %4299
    %4301 = vrot.lane.b32.xlu0 %v4239, 127
    %v4302 = vpop.permute.xlu0 %4301
    %4303 = vrot.lane.b32.xlu0 %v4243, 127
    %v4304 = vpop.permute.xlu0 %4303
    %4305 = vrot.lane.b32.xlu0 %v4247, 127
    %v4306 = vpop.permute.xlu0 %4305
    %4307 = vrot.lane.b32.xlu0 %v4251, 127
    %v4308 = vpop.permute.xlu0 %4307
    %4309 = vrot.lane.b32.xlu0 %v4255, 127
    %v4310 = vpop.permute.xlu0 %4309
    %4311 = vrot.lane.b32.xlu0 %v4259, 127
    %v4312 = vpop.permute.xlu0 %4311
    %4313 = vrot.lane.b32.xlu0 %v4263, 127
    %v4314 = vpop.permute.xlu0 %4313
    %4315 = vrot.lane.b32.xlu0 %v4267, 127
    %v4316 = vpop.permute.xlu0 %4315
    %4317 = vrot.lane.b32.xlu0 %v4240, 127
    %v4318 = vpop.permute.xlu0 %4317
    %4319 = vrot.lane.b32.xlu0 %v4244, 127
    %v4320 = vpop.permute.xlu0 %4319
    %4321 = vrot.lane.b32.xlu0 %v4248, 127
    %v4322 = vpop.permute.xlu0 %4321
    %4323 = vrot.lane.b32.xlu0 %v4252, 127
    %v4324 = vpop.permute.xlu0 %4323
    %4325 = vrot.lane.b32.xlu0 %v4256, 127
    %v4326 = vpop.permute.xlu0 %4325
    %4327 = vrot.lane.b32.xlu0 %v4260, 127
    %v4328 = vpop.permute.xlu0 %4327
    %4329 = vrot.lane.b32.xlu0 %v4264, 127
    %v4330 = vpop.permute.xlu0 %4329
    %4331 = vrot.lane.b32.xlu0 %v4268, 127
    %v4332 = vpop.permute.xlu0 %4331
    %v4333 = vsel %vm556, %v4302, %v4318
    %v4334 = vsel %vm556, %v4304, %v4320
    %v4335 = vsel %vm556, %v4306, %v4322
    %v4336 = vsel %vm556, %v4308, %v4324
    %v4337 = vsel %vm556, %v4310, %v4326
    %v4338 = vsel %vm556, %v4312, %v4328
    %v4339 = vsel %vm556, %v4314, %v4330
    %v4340 = vsel %vm556, %v4316, %v4332
    %v4341 = vsel %vm556, %v4286, %v4302
    %v4342 = vsel %vm556, %v4288, %v4304
    %v4343 = vsel %vm556, %v4290, %v4306
    %v4344 = vsel %vm556, %v4292, %v4308
    %v4345 = vsel %vm556, %v4294, %v4310
    %v4346 = vsel %vm556, %v4296, %v4312
    %v4347 = vsel %vm556, %v4298, %v4314
    %v4348 = vsel %vm556, %v4300, %v4316
    %v4349 = vsel %vm556, %v4270, %v4286
    %v4350 = vsel %vm556, %v4272, %v4288
    %v4351 = vsel %vm556, %v4274, %v4290
    %v4352 = vsel %vm556, %v4276, %v4292
    %v4353 = vsel %vm556, %v4278, %v4294
    %v4354 = vsel %vm556, %v4280, %v4296
    %v4355 = vsel %vm556, %v4282, %v4298
    %v4356 = vsel %vm556, %v4284, %v4300
    %v4357 = vsel %vm556, %v4318, %v4270
    %v4358 = vsel %vm556, %v4320, %v4272
    %v4359 = vsel %vm556, %v4322, %v4274
    %v4360 = vsel %vm556, %v4324, %v4276
    %v4361 = vsel %vm556, %v4326, %v4278
    %v4362 = vsel %vm556, %v4328, %v4280
    %v4363 = vsel %vm556, %v4330, %v4282
    %v4364 = vsel %vm556, %v4332, %v4284
    %v4365 = vmax.f32 %v4237, %v4349
    %v4366 = vmax.f32 %v4238, %v4341
    %v4367 = vmax.f32 %v4239, %v4333
    %v4368 = vmax.f32 %v4240, %v4357
    %v4369 = vmax.f32 %v4241, %v4350
    %v4370 = vmax.f32 %v4242, %v4342
    %v4371 = vmax.f32 %v4243, %v4334
    %v4372 = vmax.f32 %v4244, %v4358
    %v4373 = vmax.f32 %v4245, %v4351
    %v4374 = vmax.f32 %v4246, %v4343
    %v4375 = vmax.f32 %v4247, %v4335
    %v4376 = vmax.f32 %v4248, %v4359
    %v4377 = vmax.f32 %v4249, %v4352
    %v4378 = vmax.f32 %v4250, %v4344
    %v4379 = vmax.f32 %v4251, %v4336
    %v4380 = vmax.f32 %v4252, %v4360
    %v4381 = vmax.f32 %v4253, %v4353
    %v4382 = vmax.f32 %v4254, %v4345
    %v4383 = vmax.f32 %v4255, %v4337
    %v4384 = vmax.f32 %v4256, %v4361
    %v4385 = vmax.f32 %v4257, %v4354
    %v4386 = vmax.f32 %v4258, %v4346
    %v4387 = vmax.f32 %v4259, %v4338
    %v4388 = vmax.f32 %v4260, %v4362
    %v4389 = vmax.f32 %v4261, %v4355
    %v4390 = vmax.f32 %v4262, %v4347
    %v4391 = vmax.f32 %v4263, %v4339
    %v4392 = vmax.f32 %v4264, %v4363
    %v4393 = vmax.f32 %v4265, %v4356
    %v4394 = vmax.f32 %v4266, %v4348
    %v4395 = vmax.f32 %v4267, %v4340
    %v4396 = vmax.f32 %v4268, %v4364
    %4397 = vrot.lane.b32.xlu0 %v4237, 112
    %v4398 = vpop.permute.xlu0 %4397
    %4399 = vrot.lane.b32.xlu0 %v4241, 112
    %v4400 = vpop.permute.xlu0 %4399
    %4401 = vrot.lane.b32.xlu0 %v4245, 112
    %v4402 = vpop.permute.xlu0 %4401
    %4403 = vrot.lane.b32.xlu0 %v4249, 112
    %v4404 = vpop.permute.xlu0 %4403
    %4405 = vrot.lane.b32.xlu0 %v4253, 112
    %v4406 = vpop.permute.xlu0 %4405
    %4407 = vrot.lane.b32.xlu0 %v4257, 112
    %v4408 = vpop.permute.xlu0 %4407
    %4409 = vrot.lane.b32.xlu0 %v4261, 112
    %v4410 = vpop.permute.xlu0 %4409
    %4411 = vrot.lane.b32.xlu0 %v4265, 112
    %v4412 = vpop.permute.xlu0 %4411
    %4413 = vrot.lane.b32.xlu0 %v4238, 112
    %v4414 = vpop.permute.xlu0 %4413
    %4415 = vrot.lane.b32.xlu0 %v4242, 112
    %v4416 = vpop.permute.xlu0 %4415
    %4417 = vrot.lane.b32.xlu0 %v4246, 112
    %v4418 = vpop.permute.xlu0 %4417
    %4419 = vrot.lane.b32.xlu0 %v4250, 112
    %v4420 = vpop.permute.xlu0 %4419
    %4421 = vrot.lane.b32.xlu0 %v4254, 112
    %v4422 = vpop.permute.xlu0 %4421
    %4423 = vrot.lane.b32.xlu0 %v4258, 112
    %v4424 = vpop.permute.xlu0 %4423
    %4425 = vrot.lane.b32.xlu0 %v4262, 112
    %v4426 = vpop.permute.xlu0 %4425
    %4427 = vrot.lane.b32.xlu0 %v4266, 112
    %v4428 = vpop.permute.xlu0 %4427
    %4429 = vrot.lane.b32.xlu0 %v4239, 112
    %v4430 = vpop.permute.xlu0 %4429
    %4431 = vrot.lane.b32.xlu0 %v4243, 112
    %v4432 = vpop.permute.xlu0 %4431
    %4433 = vrot.lane.b32.xlu0 %v4247, 112
    %v4434 = vpop.permute.xlu0 %4433
    %4435 = vrot.lane.b32.xlu0 %v4251, 112
    %v4436 = vpop.permute.xlu0 %4435
    %4437 = vrot.lane.b32.xlu0 %v4255, 112
    %v4438 = vpop.permute.xlu0 %4437
    %4439 = vrot.lane.b32.xlu0 %v4259, 112
    %v4440 = vpop.permute.xlu0 %4439
    %4441 = vrot.lane.b32.xlu0 %v4263, 112
    %v4442 = vpop.permute.xlu0 %4441
    %4443 = vrot.lane.b32.xlu0 %v4267, 112
    %v4444 = vpop.permute.xlu0 %4443
    %4445 = vrot.lane.b32.xlu0 %v4240, 112
    %v4446 = vpop.permute.xlu0 %4445
    %4447 = vrot.lane.b32.xlu0 %v4244, 112
    %v4448 = vpop.permute.xlu0 %4447
    %4449 = vrot.lane.b32.xlu0 %v4248, 112
    %v4450 = vpop.permute.xlu0 %4449
    %4451 = vrot.lane.b32.xlu0 %v4252, 112
    %v4452 = vpop.permute.xlu0 %4451
    %4453 = vrot.lane.b32.xlu0 %v4256, 112
    %v4454 = vpop.permute.xlu0 %4453
    %4455 = vrot.lane.b32.xlu0 %v4260, 112
    %v4456 = vpop.permute.xlu0 %4455
    %4457 = vrot.lane.b32.xlu0 %v4264, 112
    %v4458 = vpop.permute.xlu0 %4457
    %4459 = vrot.lane.b32.xlu0 %v4268, 112
    %v4460 = vpop.permute.xlu0 %4459
    %v4461 = vsel %vm3558, %v4430, %v4446
    %v4462 = vsel %vm3558, %v4432, %v4448
    %v4463 = vsel %vm3558, %v4434, %v4450
    %v4464 = vsel %vm3558, %v4436, %v4452
    %v4465 = vsel %vm3558, %v4438, %v4454
    %v4466 = vsel %vm3558, %v4440, %v4456
    %v4467 = vsel %vm3558, %v4442, %v4458
    %v4468 = vsel %vm3558, %v4444, %v4460
    %v4469 = vsel %vm3558, %v4414, %v4430
    %v4470 = vsel %vm3558, %v4416, %v4432
    %v4471 = vsel %vm3558, %v4418, %v4434
    %v4472 = vsel %vm3558, %v4420, %v4436
    %v4473 = vsel %vm3558, %v4422, %v4438
    %v4474 = vsel %vm3558, %v4424, %v4440
    %v4475 = vsel %vm3558, %v4426, %v4442
    %v4476 = vsel %vm3558, %v4428, %v4444
    %v4477 = vsel %vm3558, %v4398, %v4414
    %v4478 = vsel %vm3558, %v4400, %v4416
    %v4479 = vsel %vm3558, %v4402, %v4418
    %v4480 = vsel %vm3558, %v4404, %v4420
    %v4481 = vsel %vm3558, %v4406, %v4422
    %v4482 = vsel %vm3558, %v4408, %v4424
    %v4483 = vsel %vm3558, %v4410, %v4426
    %v4484 = vsel %vm3558, %v4412, %v4428
    %v4485 = vsel %vm3558, %v4446, %v4398
    %v4486 = vsel %vm3558, %v4448, %v4400
    %v4487 = vsel %vm3558, %v4450, %v4402
    %v4488 = vsel %vm3558, %v4452, %v4404
    %v4489 = vsel %vm3558, %v4454, %v4406
    %v4490 = vsel %vm3558, %v4456, %v4408
    %v4491 = vsel %vm3558, %v4458, %v4410
    %v4492 = vsel %vm3558, %v4460, %v4412
    %4493 = vrot.lane.b32.xlu0 %v4237, 111
    %v4494 = vpop.permute.xlu0 %4493
    %4495 = vrot.lane.b32.xlu0 %v4241, 111
    %v4496 = vpop.permute.xlu0 %4495
    %4497 = vrot.lane.b32.xlu0 %v4245, 111
    %v4498 = vpop.permute.xlu0 %4497
    %4499 = vrot.lane.b32.xlu0 %v4249, 111
    %v4500 = vpop.permute.xlu0 %4499
    %4501 = vrot.lane.b32.xlu0 %v4253, 111
    %v4502 = vpop.permute.xlu0 %4501
    %4503 = vrot.lane.b32.xlu0 %v4257, 111
    %v4504 = vpop.permute.xlu0 %4503
    %4505 = vrot.lane.b32.xlu0 %v4261, 111
    %v4506 = vpop.permute.xlu0 %4505
    %4507 = vrot.lane.b32.xlu0 %v4265, 111
    %v4508 = vpop.permute.xlu0 %4507
    %4509 = vrot.lane.b32.xlu0 %v4238, 111
    %v4510 = vpop.permute.xlu0 %4509
    %4511 = vrot.lane.b32.xlu0 %v4242, 111
    %v4512 = vpop.permute.xlu0 %4511
    %4513 = vrot.lane.b32.xlu0 %v4246, 111
    %v4514 = vpop.permute.xlu0 %4513
    %4515 = vrot.lane.b32.xlu0 %v4250, 111
    %v4516 = vpop.permute.xlu0 %4515
    %4517 = vrot.lane.b32.xlu0 %v4254, 111
    %v4518 = vpop.permute.xlu0 %4517
    %4519 = vrot.lane.b32.xlu0 %v4258, 111
    %v4520 = vpop.permute.xlu0 %4519
    %4521 = vrot.lane.b32.xlu0 %v4262, 111
    %v4522 = vpop.permute.xlu0 %4521
    %4523 = vrot.lane.b32.xlu0 %v4266, 111
    %v4524 = vpop.permute.xlu0 %4523
    %4525 = vrot.lane.b32.xlu0 %v4239, 111
    %v4526 = vpop.permute.xlu0 %4525
    %4527 = vrot.lane.b32.xlu0 %v4243, 111
    %v4528 = vpop.permute.xlu0 %4527
    %4529 = vrot.lane.b32.xlu0 %v4247, 111
    %v4530 = vpop.permute.xlu0 %4529
    %4531 = vrot.lane.b32.xlu0 %v4251, 111
    %v4532 = vpop.permute.xlu0 %4531
    %4533 = vrot.lane.b32.xlu0 %v4255, 111
    %v4534 = vpop.permute.xlu0 %4533
    %4535 = vrot.lane.b32.xlu0 %v4259, 111
    %v4536 = vpop.permute.xlu0 %4535
    %4537 = vrot.lane.b32.xlu0 %v4263, 111
    %v4538 = vpop.permute.xlu0 %4537
    %4539 = vrot.lane.b32.xlu0 %v4267, 111
    %v4540 = vpop.permute.xlu0 %4539
    %4541 = vrot.lane.b32.xlu0 %v4240, 111
    %v4542 = vpop.permute.xlu0 %4541
    %4543 = vrot.lane.b32.xlu0 %v4244, 111
    %v4544 = vpop.permute.xlu0 %4543
    %4545 = vrot.lane.b32.xlu0 %v4248, 111
    %v4546 = vpop.permute.xlu0 %4545
    %4547 = vrot.lane.b32.xlu0 %v4252, 111
    %v4548 = vpop.permute.xlu0 %4547
    %4549 = vrot.lane.b32.xlu0 %v4256, 111
    %v4550 = vpop.permute.xlu0 %4549
    %4551 = vrot.lane.b32.xlu0 %v4260, 111
    %v4552 = vpop.permute.xlu0 %4551
    %4553 = vrot.lane.b32.xlu0 %v4264, 111
    %v4554 = vpop.permute.xlu0 %4553
    %4555 = vrot.lane.b32.xlu0 %v4268, 111
    %v4556 = vpop.permute.xlu0 %4555
    %v4557 = vsel %vm3607, %v4526, %v4542
    %v4558 = vsel %vm3607, %v4528, %v4544
    %v4559 = vsel %vm3607, %v4530, %v4546
    %v4560 = vsel %vm3607, %v4532, %v4548
    %v4561 = vsel %vm3607, %v4534, %v4550
    %v4562 = vsel %vm3607, %v4536, %v4552
    %v4563 = vsel %vm3607, %v4538, %v4554
    %v4564 = vsel %vm3607, %v4540, %v4556
    %v4565 = vsel %vm3607, %v4510, %v4526
    %v4566 = vsel %vm3607, %v4512, %v4528
    %v4567 = vsel %vm3607, %v4514, %v4530
    %v4568 = vsel %vm3607, %v4516, %v4532
    %v4569 = vsel %vm3607, %v4518, %v4534
    %v4570 = vsel %vm3607, %v4520, %v4536
    %v4571 = vsel %vm3607, %v4522, %v4538
    %v4572 = vsel %vm3607, %v4524, %v4540
    %v4573 = vsel %vm3607, %v4494, %v4510
    %v4574 = vsel %vm3607, %v4496, %v4512
    %v4575 = vsel %vm3607, %v4498, %v4514
    %v4576 = vsel %vm3607, %v4500, %v4516
    %v4577 = vsel %vm3607, %v4502, %v4518
    %v4578 = vsel %vm3607, %v4504, %v4520
    %v4579 = vsel %vm3607, %v4506, %v4522
    %v4580 = vsel %vm3607, %v4508, %v4524
    %v4581 = vsel %vm3607, %v4542, %v4494
    %v4582 = vsel %vm3607, %v4544, %v4496
    %v4583 = vsel %vm3607, %v4546, %v4498
    %v4584 = vsel %vm3607, %v4548, %v4500
    %v4585 = vsel %vm3607, %v4550, %v4502
    %v4586 = vsel %vm3607, %v4552, %v4504
    %v4587 = vsel %vm3607, %v4554, %v4506
    %v4588 = vsel %vm3607, %v4556, %v4508
    %v4589 = vmax.f32 %v4477, %v4573
    %v4590 = vmax.f32 %v4469, %v4565
    %v4591 = vmax.f32 %v4461, %v4557
    %v4592 = vmax.f32 %v4485, %v4581
    %v4593 = vmax.f32 %v4478, %v4574
    %v4594 = vmax.f32 %v4470, %v4566
    %v4595 = vmax.f32 %v4462, %v4558
    %v4596 = vmax.f32 %v4486, %v4582
    %v4597 = vmax.f32 %v4479, %v4575
    %v4598 = vmax.f32 %v4471, %v4567
    %v4599 = vmax.f32 %v4463, %v4559
    %v4600 = vmax.f32 %v4487, %v4583
    %v4601 = vmax.f32 %v4480, %v4576
    %v4602 = vmax.f32 %v4472, %v4568
    %v4603 = vmax.f32 %v4464, %v4560
    %v4604 = vmax.f32 %v4488, %v4584
    %v4605 = vmax.f32 %v4481, %v4577
    %v4606 = vmax.f32 %v4473, %v4569
    %v4607 = vmax.f32 %v4465, %v4561
    %v4608 = vmax.f32 %v4489, %v4585
    %v4609 = vmax.f32 %v4482, %v4578
    %v4610 = vmax.f32 %v4474, %v4570
    %v4611 = vmax.f32 %v4466, %v4562
    %v4612 = vmax.f32 %v4490, %v4586
    %v4613 = vmax.f32 %v4483, %v4579
    %v4614 = vmax.f32 %v4475, %v4571
    %v4615 = vmax.f32 %v4467, %v4563
    %v4616 = vmax.f32 %v4491, %v4587
    %v4617 = vmax.f32 %v4484, %v4580
    %v4618 = vmax.f32 %v4476, %v4572
    %v4619 = vmax.f32 %v4468, %v4564
    %v4620 = vmax.f32 %v4492, %v4588
    %v4621 = vmax.f32 %v4365, %v4589
    %v4622 = vmax.f32 %v4366, %v4590
    %v4623 = vmax.f32 %v4367, %v4591
    %v4624 = vmax.f32 %v4368, %v4592
    %v4625 = vmax.f32 %v4369, %v4593
    %v4626 = vmax.f32 %v4370, %v4594
    %v4627 = vmax.f32 %v4371, %v4595
    %v4628 = vmax.f32 %v4372, %v4596
    %v4629 = vmax.f32 %v4373, %v4597
    %v4630 = vmax.f32 %v4374, %v4598
    %v4631 = vmax.f32 %v4375, %v4599
    %v4632 = vmax.f32 %v4376, %v4600
    %v4633 = vmax.f32 %v4377, %v4601
    %v4634 = vmax.f32 %v4378, %v4602
    %v4635 = vmax.f32 %v4379, %v4603
    %v4636 = vmax.f32 %v4380, %v4604
    %v4637 = vmax.f32 %v4381, %v4605
    %v4638 = vmax.f32 %v4382, %v4606
    %v4639 = vmax.f32 %v4383, %v4607
    %v4640 = vmax.f32 %v4384, %v4608
    %v4641 = vmax.f32 %v4385, %v4609
    %v4642 = vmax.f32 %v4386, %v4610
    %v4643 = vmax.f32 %v4387, %v4611
    %v4644 = vmax.f32 %v4388, %v4612
    %v4645 = vmax.f32 %v4389, %v4613
    %v4646 = vmax.f32 %v4390, %v4614
    %v4647 = vmax.f32 %v4391, %v4615
    %v4648 = vmax.f32 %v4392, %v4616
    %v4649 = vmax.f32 %v4393, %v4617
    %v4650 = vmax.f32 %v4394, %v4618
    %v4651 = vmax.f32 %v4395, %v4619
    %v4652 = vmax.f32 %v4396, %v4620
    %s4653 = smul.u32 4, 32
    %s4654 = smul.u32 %s4653, 2
    %s4655 = sshll.u32 %s4654, 4
    %4656 = dma.done %s137, %s4655
    %v4657 = vpack.c.bf16 %v4625, %v4621
    %v4658 = vpack.c.bf16 %v4626, %v4622
    %v4659 = vpack.c.bf16 %v4627, %v4623
    %v4660 = vpack.c.bf16 %v4628, %v4624
    %v4661 = vpack.c.bf16 %v4633, %v4629
    %v4662 = vpack.c.bf16 %v4634, %v4630
    %v4663 = vpack.c.bf16 %v4635, %v4631
    %v4664 = vpack.c.bf16 %v4636, %v4632
    %v4665 = vpack.c.bf16 %v4641, %v4637
    %v4666 = vpack.c.bf16 %v4642, %v4638
    %v4667 = vpack.c.bf16 %v4643, %v4639
    %v4668 = vpack.c.bf16 %v4644, %v4640
    %v4669 = vpack.c.bf16 %v4649, %v4645
    %v4670 = vpack.c.bf16 %v4650, %v4646
    %v4671 = vpack.c.bf16 %v4651, %v4647
    %v4672 = vpack.c.bf16 %v4652, %v4648
    %v4673 = vld [vmem:[#allocation3] sm:$0xff]
    %v4674 = vld [vmem:[#allocation3 + $0x8] sm:$0xff]
    %v4675 = vld [vmem:[#allocation3 + $0x10] sm:$0xff]
    %v4676 = vld [vmem:[#allocation3 + $0x18] sm:$0xff]
    %v4677 = vld [vmem:[#allocation3 + $0x20] sm:$0xff]
    %v4678 = vld [vmem:[#allocation3 + $0x28] sm:$0xff]
    %v4679 = vld [vmem:[#allocation3 + $0x30] sm:$0xff]
    %v4680 = vld [vmem:[#allocation3 + $0x38] sm:$0xff]
    %v4681 = vld [vmem:[#allocation3 + $0x40] sm:$0xff]
    %v4682 = vld [vmem:[#allocation3 + $0x48] sm:$0xff]
    %v4683 = vld [vmem:[#allocation3 + $0x50] sm:$0xff]
    %v4684 = vld [vmem:[#allocation3 + $0x58] sm:$0xff]
    %v4685 = vld [vmem:[#allocation3 + $0x60] sm:$0xff]
    %v4686 = vld [vmem:[#allocation3 + $0x68] sm:$0xff]
    %v4687 = vld [vmem:[#allocation3 + $0x70] sm:$0xff]
    %v4688 = vld [vmem:[#allocation3 + $0x78] sm:$0xff]
    %v4689 = vld [vmem:[#allocation3 + $0x80] sm:$0xff]
    %v4690 = vld [vmem:[#allocation3 + $0x88] sm:$0xff]
    %v4691 = vld [vmem:[#allocation3 + $0x90] sm:$0xff]
    %v4692 = vld [vmem:[#allocation3 + $0x98] sm:$0xff]
    %v4693 = vld [vmem:[#allocation3 + $0xa0] sm:$0xff]
    %v4694 = vld [vmem:[#allocation3 + $0xa8] sm:$0xff]
    %v4695 = vld [vmem:[#allocation3 + $0xb0] sm:$0xff]
    %v4696 = vld [vmem:[#allocation3 + $0xb8] sm:$0xff]
    %v4697 = vld [vmem:[#allocation3 + $0xc0] sm:$0xff]
    %v4698 = vld [vmem:[#allocation3 + $0xc8] sm:$0xff]
    %v4699 = vld [vmem:[#allocation3 + $0xd0] sm:$0xff]
    %v4700 = vld [vmem:[#allocation3 + $0xd8] sm:$0xff]
    %v4701 = vld [vmem:[#allocation3 + $0xe0] sm:$0xff]
    %v4702 = vld [vmem:[#allocation3 + $0xe8] sm:$0xff]
    %v4703 = vld [vmem:[#allocation3 + $0xf0] sm:$0xff]
    %v4704 = vld [vmem:[#allocation3 + $0xf8] sm:$0xff]
    %4705 = vmatprep.subr.bf16.mxu0 %v4674
    %4706 = vmatpush1.bf16.msra.mxu0 %v4673
    %4707 = vmatprep.subr.bf16.mxu0 %v4676
    %4708 = vmatpush1.bf16.msra.mxu0 %v4675
    %4709 = vmatprep.subr.bf16.mxu0 %v4678
    %4710 = vmatpush1.bf16.msra.mxu0 %v4677
    %4711 = vmatprep.subr.bf16.mxu0 %v4680
    %4712 = vmatpush1.bf16.msra.mxu0 %v4679
    %4713 = vmatprep.subr.bf16.mxu0 %v4682
    %4714 = vmatpush1.bf16.msra.mxu0 %v4681
    %4715 = vmatprep.subr.bf16.mxu0 %v4684
    %4716 = vmatpush1.bf16.msra.mxu0 %v4683
    %4717 = vmatprep.subr.bf16.mxu0 %v4686
    %4718 = vmatpush1.bf16.msra.mxu0 %v4685
    %4719 = vmatprep.subr.bf16.mxu0 %v4688
    %4720 = vmatpush1.bf16.msra.mxu0 %v4687
    %4721 = vmatprep.subr.bf16.mxu0 %v4690
    %4722 = vmatpush1.bf16.msra.mxu0 %v4689
    %4723 = vmatprep.subr.bf16.mxu0 %v4692
    %4724 = vmatpush1.bf16.msra.mxu0 %v4691
    %4725 = vmatprep.subr.bf16.mxu0 %v4694
    %4726 = vmatpush1.bf16.msra.mxu0 %v4693
    %4727 = vmatprep.subr.bf16.mxu0 %v4696
    %4728 = vmatpush1.bf16.msra.mxu0 %v4695
    %4729 = vmatprep.subr.bf16.mxu0 %v4698
    %4730 = vmatpush1.bf16.msra.mxu0 %v4697
    %4731 = vmatprep.subr.bf16.mxu0 %v4700
    %4732 = vmatpush1.bf16.msra.mxu0 %v4699
    %4733 = vmatprep.subr.bf16.mxu0 %v4702
    %4734 = vmatpush1.bf16.msra.mxu0 %v4701
    %4735 = vmatprep.subr.bf16.mxu0 %v4704
    %4736 = vmatpush1.bf16.msra.mxu0 %v4703
    %4737 = vmatprep.mubr.bf16.mxu0 %v4658
    %4738 = vmatmul.mubr.bf16.gmra.mrb[0].mxu0 %v4657
    %v4739 = vpop.f32.mrb[0].mxu0
    %v4740 = vadd.f32 0.0, %v4739
    %v4741 = vpop.f32.mrb[0].mxu0
    %v4742 = vadd.f32 0.0, %v4741
    %v4743 = vpop.f32.mrb[0].mxu0
    %v4744 = vadd.f32 0.0, %v4743
    %v4745 = vpop.f32.mrb[0].mxu0
    %v4746 = vadd.f32 0.0, %v4745
    %4747 = vmatprep.mubr.bf16.mxu0 %v4662
    %4748 = vmatmul.mubr.bf16.gmra.mrb[0].mxu0 %v4661
    %v4749 = vpop.f32.mrb[0].mxu0
    %v4750 = vadd.f32 0.0, %v4749
    %v4751 = vpop.f32.mrb[0].mxu0
    %v4752 = vadd.f32 0.0, %v4751
    %v4753 = vpop.f32.mrb[0].mxu0
    %v4754 = vadd.f32 0.0, %v4753
    %v4755 = vpop.f32.mrb[0].mxu0
    %v4756 = vadd.f32 0.0, %v4755
    %4757 = vmatprep.mubr.bf16.mxu0 %v4666
    %4758 = vmatmul.mubr.bf16.gmra.mrb[0].mxu0 %v4665
    %v4759 = vpop.f32.mrb[0].mxu0
    %v4760 = vadd.f32 0.0, %v4759
    %v4761 = vpop.f32.mrb[0].mxu0
    %v4762 = vadd.f32 0.0, %v4761
    %v4763 = vpop.f32.mrb[0].mxu0
    %v4764 = vadd.f32 0.0, %v4763
    %v4765 = vpop.f32.mrb[0].mxu0
    %v4766 = vadd.f32 0.0, %v4765
    %4767 = vmatprep.mubr.bf16.mxu0 %v4670
    %4768 = vmatmul.mubr.bf16.gmra.mrb[0].mxu0 %v4669
    %v4769 = vpop.f32.mrb[0].mxu0
    %v4770 = vadd.f32 0.0, %v4769
    %v4771 = vpop.f32.mrb[0].mxu0
    %v4772 = vadd.f32 0.0, %v4771
    %v4773 = vpop.f32.mrb[0].mxu0
    %v4774 = vadd.f32 0.0, %v4773
    %v4775 = vpop.f32.mrb[0].mxu0
    %v4776 = vadd.f32 0.0, %v4775
    %4777 = vdwg.mxu0
    %4778 = vmatprep.subr.bf16.mxu0 %v4674
    %4779 = vmatpush1.bf16.msra.mxu0 %v4673
    %4780 = vmatprep.subr.bf16.mxu0 %v4676
    %4781 = vmatpush1.bf16.msra.mxu0 %v4675
    %4782 = vmatprep.subr.bf16.mxu0 %v4678
    %4783 = vmatpush1.bf16.msra.mxu0 %v4677
    %4784 = vmatprep.subr.bf16.mxu0 %v4680
    %4785 = vmatpush1.bf16.msra.mxu0 %v4679
    %4786 = vmatprep.subr.bf16.mxu0 %v4682
    %4787 = vmatpush1.bf16.msra.mxu0 %v4681
    %4788 = vmatprep.subr.bf16.mxu0 %v4684
    %4789 = vmatpush1.bf16.msra.mxu0 %v4683
    %4790 = vmatprep.subr.bf16.mxu0 %v4686
    %4791 = vmatpush1.bf16.msra.mxu0 %v4685
    %4792 = vmatprep.subr.bf16.mxu0 %v4688
    %4793 = vmatpush1.bf16.msra.mxu0 %v4687
    %4794 = vmatprep.subr.bf16.mxu0 %v4690
    %4795 = vmatpush1.bf16.msra.mxu0 %v4689
    %4796 = vmatprep.subr.bf16.mxu0 %v4692
    %4797 = vmatpush1.bf16.msra.mxu0 %v4691
    %4798 = vmatprep.subr.bf16.mxu0 %v4694
    %4799 = vmatpush1.bf16.msra.mxu0 %v4693
    %4800 = vmatprep.subr.bf16.mxu0 %v4696
    %4801 = vmatpush1.bf16.msra.mxu0 %v4695
    %4802 = vmatprep.subr.bf16.mxu0 %v4698
    %4803 = vmatpush1.bf16.msra.mxu0 %v4697
    %4804 = vmatprep.subr.bf16.mxu0 %v4700
    %4805 = vmatpush1.bf16.msra.mxu0 %v4699
    %4806 = vmatprep.subr.bf16.mxu0 %v4702
    %4807 = vmatpush1.bf16.msra.mxu0 %v4701
    %4808 = vmatprep.subr.bf16.mxu0 %v4704
    %4809 = vmatpush1.bf16.msra.mxu0 %v4703
    %4810 = vmatprep.mubr.bf16.mxu0 %v4660
    %4811 = vmatmul.mubr.bf16.gmra.mrb[0].mxu0 %v4659
    %v4812 = vpop.f32.mrb[0].mxu0
    %v4813 = vadd.f32 0.0, %v4812
    %v4814 = vpop.f32.mrb[0].mxu0
    %v4815 = vadd.f32 0.0, %v4814
    %v4816 = vpop.f32.mrb[0].mxu0
    %v4817 = vadd.f32 0.0, %v4816
    %v4818 = vpop.f32.mrb[0].mxu0
    %v4819 = vadd.f32 0.0, %v4818
    %4820 = vmatprep.mubr.bf16.mxu0 %v4664
    %4821 = vmatmul.mubr.bf16.gmra.mrb[0].mxu0 %v4663
    %v4822 = vpop.f32.mrb[0].mxu0
    %v4823 = vadd.f32 0.0, %v4822
    %v4824 = vpop.f32.mrb[0].mxu0
    %v4825 = vadd.f32 0.0, %v4824
    %v4826 = vpop.f32.mrb[0].mxu0
    %v4827 = vadd.f32 0.0, %v4826
    %v4828 = vpop.f32.mrb[0].mxu0
    %v4829 = vadd.f32 0.0, %v4828
    %4830 = vmatprep.mubr.bf16.mxu0 %v4668
    %4831 = vmatmul.mubr.bf16.gmra.mrb[0].mxu0 %v4667
    %v4832 = vpop.f32.mrb[0].mxu0
    %v4833 = vadd.f32 0.0, %v4832
    %v4834 = vpop.f32.mrb[0].mxu0
    %v4835 = vadd.f32 0.0, %v4834
    %v4836 = vpop.f32.mrb[0].mxu0
    %v4837 = vadd.f32 0.0, %v4836
    %v4838 = vpop.f32.mrb[0].mxu0
    %v4839 = vadd.f32 0.0, %v4838
    %4840 = vmatprep.mubr.bf16.mxu0 %v4672
    %4841 = vmatmul.mubr.bf16.gmra.mrb[0].mxu0 %v4671
    %v4842 = vpop.f32.mrb[0].mxu0
    %v4843 = vadd.f32 0.0, %v4842
    %v4844 = vpop.f32.mrb[0].mxu0
    %v4845 = vadd.f32 0.0, %v4844
    %v4846 = vpop.f32.mrb[0].mxu0
    %v4847 = vadd.f32 0.0, %v4846
    %v4848 = vpop.f32.mrb[0].mxu0
    %v4849 = vadd.f32 0.0, %v4848
    %4850 = vdwg.mxu0
    %4851 = vrot.lane.b32.xlu0 %v4740, 17
    %v4852 = vpop.permute.xlu0 %4851
    %4853 = vrot.lane.b32.xlu0 %v4744, 17
    %v4854 = vpop.permute.xlu0 %4853
    %4855 = vrot.lane.b32.xlu0 %v4750, 17
    %v4856 = vpop.permute.xlu0 %4855
    %4857 = vrot.lane.b32.xlu0 %v4754, 17
    %v4858 = vpop.permute.xlu0 %4857
    %4859 = vrot.lane.b32.xlu0 %v4760, 17
    %v4860 = vpop.permute.xlu0 %4859
    %4861 = vrot.lane.b32.xlu0 %v4764, 17
    %v4862 = vpop.permute.xlu0 %4861
    %4863 = vrot.lane.b32.xlu0 %v4770, 17
    %v4864 = vpop.permute.xlu0 %4863
    %4865 = vrot.lane.b32.xlu0 %v4774, 17
    %v4866 = vpop.permute.xlu0 %4865
    %4867 = vrot.lane.b32.xlu0 %v4742, 17
    %v4868 = vpop.permute.xlu0 %4867
    %4869 = vrot.lane.b32.xlu0 %v4746, 17
    %v4870 = vpop.permute.xlu0 %4869
    %4871 = vrot.lane.b32.xlu0 %v4752, 17
    %v4872 = vpop.permute.xlu0 %4871
    %4873 = vrot.lane.b32.xlu0 %v4756, 17
    %v4874 = vpop.permute.xlu0 %4873
    %4875 = vrot.lane.b32.xlu0 %v4762, 17
    %v4876 = vpop.permute.xlu0 %4875
    %4877 = vrot.lane.b32.xlu0 %v4766, 17
    %v4878 = vpop.permute.xlu0 %4877
    %4879 = vrot.lane.b32.xlu0 %v4772, 17
    %v4880 = vpop.permute.xlu0 %4879
    %4881 = vrot.lane.b32.xlu0 %v4776, 17
    %v4882 = vpop.permute.xlu0 %4881
    %4883 = vrot.lane.b32.xlu0 %v4813, 17
    %v4884 = vpop.permute.xlu0 %4883
    %4885 = vrot.lane.b32.xlu0 %v4817, 17
    %v4886 = vpop.permute.xlu0 %4885
    %4887 = vrot.lane.b32.xlu0 %v4823, 17
    %v4888 = vpop.permute.xlu0 %4887
    %4889 = vrot.lane.b32.xlu0 %v4827, 17
    %v4890 = vpop.permute.xlu0 %4889
    %4891 = vrot.lane.b32.xlu0 %v4833, 17
    %v4892 = vpop.permute.xlu0 %4891
    %4893 = vrot.lane.b32.xlu0 %v4837, 17
    %v4894 = vpop.permute.xlu0 %4893
    %4895 = vrot.lane.b32.xlu0 %v4843, 17
    %v4896 = vpop.permute.xlu0 %4895
    %4897 = vrot.lane.b32.xlu0 %v4847, 17
    %v4898 = vpop.permute.xlu0 %4897
    %4899 = vrot.lane.b32.xlu0 %v4815, 17
    %v4900 = vpop.permute.xlu0 %4899
    %4901 = vrot.lane.b32.xlu0 %v4819, 17
    %v4902 = vpop.permute.xlu0 %4901
    %4903 = vrot.lane.b32.xlu0 %v4825, 17
    %v4904 = vpop.permute.xlu0 %4903
    %4905 = vrot.lane.b32.xlu0 %v4829, 17
    %v4906 = vpop.permute.xlu0 %4905
    %4907 = vrot.lane.b32.xlu0 %v4835, 17
    %v4908 = vpop.permute.xlu0 %4907
    %4909 = vrot.lane.b32.xlu0 %v4839, 17
    %v4910 = vpop.permute.xlu0 %4909
    %4911 = vrot.lane.b32.xlu0 %v4845, 17
    %v4912 = vpop.permute.xlu0 %4911
    %4913 = vrot.lane.b32.xlu0 %v4849, 17
    %v4914 = vpop.permute.xlu0 %4913
    %v4915 = vsel %vm3266, %v4884, %v4900
    %v4916 = vsel %vm3266, %v4886, %v4902
    %v4917 = vsel %vm3266, %v4888, %v4904
    %v4918 = vsel %vm3266, %v4890, %v4906
    %v4919 = vsel %vm3266, %v4892, %v4908
    %v4920 = vsel %vm3266, %v4894, %v4910
    %v4921 = vsel %vm3266, %v4896, %v4912
    %v4922 = vsel %vm3266, %v4898, %v4914
    %v4923 = vsel %vm3266, %v4868, %v4884
    %v4924 = vsel %vm3266, %v4870, %v4886
    %v4925 = vsel %vm3266, %v4872, %v4888
    %v4926 = vsel %vm3266, %v4874, %v4890
    %v4927 = vsel %vm3266, %v4876, %v4892
    %v4928 = vsel %vm3266, %v4878, %v4894
    %v4929 = vsel %vm3266, %v4880, %v4896
    %v4930 = vsel %vm3266, %v4882, %v4898
    %v4931 = vsel %vm3266, %v4852, %v4868
    %v4932 = vsel %vm3266, %v4854, %v4870
    %v4933 = vsel %vm3266, %v4856, %v4872
    %v4934 = vsel %vm3266, %v4858, %v4874
    %v4935 = vsel %vm3266, %v4860, %v4876
    %v4936 = vsel %vm3266, %v4862, %v4878
    %v4937 = vsel %vm3266, %v4864, %v4880
    %v4938 = vsel %vm3266, %v4866, %v4882
    %v4939 = vsel %vm3266, %v4900, %v4852
    %v4940 = vsel %vm3266, %v4902, %v4854
    %v4941 = vsel %vm3266, %v4904, %v4856
    %v4942 = vsel %vm3266, %v4906, %v4858
    %v4943 = vsel %vm3266, %v4908, %v4860
    %v4944 = vsel %vm3266, %v4910, %v4862
    %v4945 = vsel %vm3266, %v4912, %v4864
    %v4946 = vsel %vm3266, %v4914, %v4866
    %4947 = vrot.lane.b32.xlu0 %v4740, 16
    %v4948 = vpop.permute.xlu0 %4947
    %4949 = vrot.lane.b32.xlu0 %v4744, 16
    %v4950 = vpop.permute.xlu0 %4949
    %4951 = vrot.lane.b32.xlu0 %v4750, 16
    %v4952 = vpop.permute.xlu0 %4951
    %4953 = vrot.lane.b32.xlu0 %v4754, 16
    %v4954 = vpop.permute.xlu0 %4953
    %4955 = vrot.lane.b32.xlu0 %v4760, 16
    %v4956 = vpop.permute.xlu0 %4955
    %4957 = vrot.lane.b32.xlu0 %v4764, 16
    %v4958 = vpop.permute.xlu0 %4957
    %4959 = vrot.lane.b32.xlu0 %v4770, 16
    %v4960 = vpop.permute.xlu0 %4959
    %4961 = vrot.lane.b32.xlu0 %v4774, 16
    %v4962 = vpop.permute.xlu0 %4961
    %4963 = vrot.lane.b32.xlu0 %v4742, 16
    %v4964 = vpop.permute.xlu0 %4963
    %4965 = vrot.lane.b32.xlu0 %v4746, 16
    %v4966 = vpop.permute.xlu0 %4965
    %4967 = vrot.lane.b32.xlu0 %v4752, 16
    %v4968 = vpop.permute.xlu0 %4967
    %4969 = vrot.lane.b32.xlu0 %v4756, 16
    %v4970 = vpop.permute.xlu0 %4969
    %4971 = vrot.lane.b32.xlu0 %v4762, 16
    %v4972 = vpop.permute.xlu0 %4971
    %4973 = vrot.lane.b32.xlu0 %v4766, 16
    %v4974 = vpop.permute.xlu0 %4973
    %4975 = vrot.lane.b32.xlu0 %v4772, 16
    %v4976 = vpop.permute.xlu0 %4975
    %4977 = vrot.lane.b32.xlu0 %v4776, 16
    %v4978 = vpop.permute.xlu0 %4977
    %4979 = vrot.lane.b32.xlu0 %v4813, 16
    %v4980 = vpop.permute.xlu0 %4979
    %4981 = vrot.lane.b32.xlu0 %v4817, 16
    %v4982 = vpop.permute.xlu0 %4981
    %4983 = vrot.lane.b32.xlu0 %v4823, 16
    %v4984 = vpop.permute.xlu0 %4983
    %4985 = vrot.lane.b32.xlu0 %v4827, 16
    %v4986 = vpop.permute.xlu0 %4985
    %4987 = vrot.lane.b32.xlu0 %v4833, 16
    %v4988 = vpop.permute.xlu0 %4987
    %4989 = vrot.lane.b32.xlu0 %v4837, 16
    %v4990 = vpop.permute.xlu0 %4989
    %4991 = vrot.lane.b32.xlu0 %v4843, 16
    %v4992 = vpop.permute.xlu0 %4991
    %4993 = vrot.lane.b32.xlu0 %v4847, 16
    %v4994 = vpop.permute.xlu0 %4993
    %4995 = vrot.lane.b32.xlu0 %v4815, 16
    %v4996 = vpop.permute.xlu0 %4995
    %4997 = vrot.lane.b32.xlu0 %v4819, 16
    %v4998 = vpop.permute.xlu0 %4997
    %4999 = vrot.lane.b32.xlu0 %v4825, 16
    %v5000 = vpop.permute.xlu0 %4999
    %5001 = vrot.lane.b32.xlu0 %v4829, 16
    %v5002 = vpop.permute.xlu0 %5001
    %5003 = vrot.lane.b32.xlu0 %v4835, 16
    %v5004 = vpop.permute.xlu0 %5003
    %5005 = vrot.lane.b32.xlu0 %v4839, 16
    %v5006 = vpop.permute.xlu0 %5005
    %5007 = vrot.lane.b32.xlu0 %v4845, 16
    %v5008 = vpop.permute.xlu0 %5007
    %5009 = vrot.lane.b32.xlu0 %v4849, 16
    %v5010 = vpop.permute.xlu0 %5009
    %v5011 = vsel %vm3315, %v4980, %v4996
    %v5012 = vsel %vm3315, %v4982, %v4998
    %v5013 = vsel %vm3315, %v4984, %v5000
    %v5014 = vsel %vm3315, %v4986, %v5002
    %v5015 = vsel %vm3315, %v4988, %v5004
    %v5016 = vsel %vm3315, %v4990, %v5006
    %v5017 = vsel %vm3315, %v4992, %v5008
    %v5018 = vsel %vm3315, %v4994, %v5010
    %v5019 = vsel %vm3315, %v4964, %v4980
    %v5020 = vsel %vm3315, %v4966, %v4982
    %v5021 = vsel %vm3315, %v4968, %v4984
    %v5022 = vsel %vm3315, %v4970, %v4986
    %v5023 = vsel %vm3315, %v4972, %v4988
    %v5024 = vsel %vm3315, %v4974, %v4990
    %v5025 = vsel %vm3315, %v4976, %v4992
    %v5026 = vsel %vm3315, %v4978, %v4994
    %v5027 = vsel %vm3315, %v4948, %v4964
    %v5028 = vsel %vm3315, %v4950, %v4966
    %v5029 = vsel %vm3315, %v4952, %v4968
    %v5030 = vsel %vm3315, %v4954, %v4970
    %v5031 = vsel %vm3315, %v4956, %v4972
    %v5032 = vsel %vm3315, %v4958, %v4974
    %v5033 = vsel %vm3315, %v4960, %v4976
    %v5034 = vsel %vm3315, %v4962, %v4978
    %v5035 = vsel %vm3315, %v4996, %v4948
    %v5036 = vsel %vm3315, %v4998, %v4950
    %v5037 = vsel %vm3315, %v5000, %v4952
    %v5038 = vsel %vm3315, %v5002, %v4954
    %v5039 = vsel %vm3315, %v5004, %v4956
    %v5040 = vsel %vm3315, %v5006, %v4958
    %v5041 = vsel %vm3315, %v5008, %v4960
    %v5042 = vsel %vm3315, %v5010, %v4962
    %5043 = vrot.lane.b32.xlu0 %v4740, 15
    %v5044 = vpop.permute.xlu0 %5043
    %5045 = vrot.lane.b32.xlu0 %v4744, 15
    %v5046 = vpop.permute.xlu0 %5045
    %5047 = vrot.lane.b32.xlu0 %v4750, 15
    %v5048 = vpop.permute.xlu0 %5047
    %5049 = vrot.lane.b32.xlu0 %v4754, 15
    %v5050 = vpop.permute.xlu0 %5049
    %5051 = vrot.lane.b32.xlu0 %v4760, 15
    %v5052 = vpop.permute.xlu0 %5051
    %5053 = vrot.lane.b32.xlu0 %v4764, 15
    %v5054 = vpop.permute.xlu0 %5053
    %5055 = vrot.lane.b32.xlu0 %v4770, 15
    %v5056 = vpop.permute.xlu0 %5055
    %5057 = vrot.lane.b32.xlu0 %v4774, 15
    %v5058 = vpop.permute.xlu0 %5057
    %5059 = vrot.lane.b32.xlu0 %v4742, 15
    %v5060 = vpop.permute.xlu0 %5059
    %5061 = vrot.lane.b32.xlu0 %v4746, 15
    %v5062 = vpop.permute.xlu0 %5061
    %5063 = vrot.lane.b32.xlu0 %v4752, 15
    %v5064 = vpop.permute.xlu0 %5063
    %5065 = vrot.lane.b32.xlu0 %v4756, 15
    %v5066 = vpop.permute.xlu0 %5065
    %5067 = vrot.lane.b32.xlu0 %v4762, 15
    %v5068 = vpop.permute.xlu0 %5067
    %5069 = vrot.lane.b32.xlu0 %v4766, 15
    %v5070 = vpop.permute.xlu0 %5069
    %5071 = vrot.lane.b32.xlu0 %v4772, 15
    %v5072 = vpop.permute.xlu0 %5071
    %5073 = vrot.lane.b32.xlu0 %v4776, 15
    %v5074 = vpop.permute.xlu0 %5073
    %5075 = vrot.lane.b32.xlu0 %v4813, 15
    %v5076 = vpop.permute.xlu0 %5075
    %5077 = vrot.lane.b32.xlu0 %v4817, 15
    %v5078 = vpop.permute.xlu0 %5077
    %5079 = vrot.lane.b32.xlu0 %v4823, 15
    %v5080 = vpop.permute.xlu0 %5079
    %5081 = vrot.lane.b32.xlu0 %v4827, 15
    %v5082 = vpop.permute.xlu0 %5081
    %5083 = vrot.lane.b32.xlu0 %v4833, 15
    %v5084 = vpop.permute.xlu0 %5083
    %5085 = vrot.lane.b32.xlu0 %v4837, 15
    %v5086 = vpop.permute.xlu0 %5085
    %5087 = vrot.lane.b32.xlu0 %v4843, 15
    %v5088 = vpop.permute.xlu0 %5087
    %5089 = vrot.lane.b32.xlu0 %v4847, 15
    %v5090 = vpop.permute.xlu0 %5089
    %5091 = vrot.lane.b32.xlu0 %v4815, 15
    %v5092 = vpop.permute.xlu0 %5091
    %5093 = vrot.lane.b32.xlu0 %v4819, 15
    %v5094 = vpop.permute.xlu0 %5093
    %5095 = vrot.lane.b32.xlu0 %v4825, 15
    %v5096 = vpop.permute.xlu0 %5095
    %5097 = vrot.lane.b32.xlu0 %v4829, 15
    %v5098 = vpop.permute.xlu0 %5097
    %5099 = vrot.lane.b32.xlu0 %v4835, 15
    %v5100 = vpop.permute.xlu0 %5099
    %5101 = vrot.lane.b32.xlu0 %v4839, 15
    %v5102 = vpop.permute.xlu0 %5101
    %5103 = vrot.lane.b32.xlu0 %v4845, 15
    %v5104 = vpop.permute.xlu0 %5103
    %5105 = vrot.lane.b32.xlu0 %v4849, 15
    %v5106 = vpop.permute.xlu0 %5105
    %v5107 = vsel %vm3364, %v5076, %v5092
    %v5108 = vsel %vm3364, %v5078, %v5094
    %v5109 = vsel %vm3364, %v5080, %v5096
    %v5110 = vsel %vm3364, %v5082, %v5098
    %v5111 = vsel %vm3364, %v5084, %v5100
    %v5112 = vsel %vm3364, %v5086, %v5102
    %v5113 = vsel %vm3364, %v5088, %v5104
    %v5114 = vsel %vm3364, %v5090, %v5106
    %v5115 = vsel %vm3364, %v5060, %v5076
    %v5116 = vsel %vm3364, %v5062, %v5078
    %v5117 = vsel %vm3364, %v5064, %v5080
    %v5118 = vsel %vm3364, %v5066, %v5082
    %v5119 = vsel %vm3364, %v5068, %v5084
    %v5120 = vsel %vm3364, %v5070, %v5086
    %v5121 = vsel %vm3364, %v5072, %v5088
    %v5122 = vsel %vm3364, %v5074, %v5090
    %v5123 = vsel %vm3364, %v5044, %v5060
    %v5124 = vsel %vm3364, %v5046, %v5062
    %v5125 = vsel %vm3364, %v5048, %v5064
    %v5126 = vsel %vm3364, %v5050, %v5066
    %v5127 = vsel %vm3364, %v5052, %v5068
    %v5128 = vsel %vm3364, %v5054, %v5070
    %v5129 = vsel %vm3364, %v5056, %v5072
    %v5130 = vsel %vm3364, %v5058, %v5074
    %v5131 = vsel %vm3364, %v5092, %v5044
    %v5132 = vsel %vm3364, %v5094, %v5046
    %v5133 = vsel %vm3364, %v5096, %v5048
    %v5134 = vsel %vm3364, %v5098, %v5050
    %v5135 = vsel %vm3364, %v5100, %v5052
    %v5136 = vsel %vm3364, %v5102, %v5054
    %v5137 = vsel %vm3364, %v5104, %v5056
    %v5138 = vsel %vm3364, %v5106, %v5058
    %5139 = vrot.lane.b32.xlu0 %v4740, 1
    %v5140 = vpop.permute.xlu0 %5139
    %5141 = vrot.lane.b32.xlu0 %v4744, 1
    %v5142 = vpop.permute.xlu0 %5141
    %5143 = vrot.lane.b32.xlu0 %v4750, 1
    %v5144 = vpop.permute.xlu0 %5143
    %5145 = vrot.lane.b32.xlu0 %v4754, 1
    %v5146 = vpop.permute.xlu0 %5145
    %5147 = vrot.lane.b32.xlu0 %v4760, 1
    %v5148 = vpop.permute.xlu0 %5147
    %5149 = vrot.lane.b32.xlu0 %v4764, 1
    %v5150 = vpop.permute.xlu0 %5149
    %5151 = vrot.lane.b32.xlu0 %v4770, 1
    %v5152 = vpop.permute.xlu0 %5151
    %5153 = vrot.lane.b32.xlu0 %v4774, 1
    %v5154 = vpop.permute.xlu0 %5153
    %5155 = vrot.lane.b32.xlu0 %v4742, 1
    %v5156 = vpop.permute.xlu0 %5155
    %5157 = vrot.lane.b32.xlu0 %v4746, 1
    %v5158 = vpop.permute.xlu0 %5157
    %5159 = vrot.lane.b32.xlu0 %v4752, 1
    %v5160 = vpop.permute.xlu0 %5159
    %5161 = vrot.lane.b32.xlu0 %v4756, 1
    %v5162 = vpop.permute.xlu0 %5161
    %5163 = vrot.lane.b32.xlu0 %v4762, 1
    %v5164 = vpop.permute.xlu0 %5163
    %5165 = vrot.lane.b32.xlu0 %v4766, 1
    %v5166 = vpop.permute.xlu0 %5165
    %5167 = vrot.lane.b32.xlu0 %v4772, 1
    %v5168 = vpop.permute.xlu0 %5167
    %5169 = vrot.lane.b32.xlu0 %v4776, 1
    %v5170 = vpop.permute.xlu0 %5169
    %5171 = vrot.lane.b32.xlu0 %v4813, 1
    %v5172 = vpop.permute.xlu0 %5171
    %5173 = vrot.lane.b32.xlu0 %v4817, 1
    %v5174 = vpop.permute.xlu0 %5173
    %5175 = vrot.lane.b32.xlu0 %v4823, 1
    %v5176 = vpop.permute.xlu0 %5175
    %5177 = vrot.lane.b32.xlu0 %v4827, 1
    %v5178 = vpop.permute.xlu0 %5177
    %5179 = vrot.lane.b32.xlu0 %v4833, 1
    %v5180 = vpop.permute.xlu0 %5179
    %5181 = vrot.lane.b32.xlu0 %v4837, 1
    %v5182 = vpop.permute.xlu0 %5181
    %5183 = vrot.lane.b32.xlu0 %v4843, 1
    %v5184 = vpop.permute.xlu0 %5183
    %5185 = vrot.lane.b32.xlu0 %v4847, 1
    %v5186 = vpop.permute.xlu0 %5185
    %5187 = vrot.lane.b32.xlu0 %v4815, 1
    %v5188 = vpop.permute.xlu0 %5187
    %5189 = vrot.lane.b32.xlu0 %v4819, 1
    %v5190 = vpop.permute.xlu0 %5189
    %5191 = vrot.lane.b32.xlu0 %v4825, 1
    %v5192 = vpop.permute.xlu0 %5191
    %5193 = vrot.lane.b32.xlu0 %v4829, 1
    %v5194 = vpop.permute.xlu0 %5193
    %5195 = vrot.lane.b32.xlu0 %v4835, 1
    %v5196 = vpop.permute.xlu0 %5195
    %5197 = vrot.lane.b32.xlu0 %v4839, 1
    %v5198 = vpop.permute.xlu0 %5197
    %5199 = vrot.lane.b32.xlu0 %v4845, 1
    %v5200 = vpop.permute.xlu0 %5199
    %5201 = vrot.lane.b32.xlu0 %v4849, 1
    %v5202 = vpop.permute.xlu0 %5201
    %v5203 = vsel %vm507, %v5172, %v5188
    %v5204 = vsel %vm507, %v5174, %v5190
    %v5205 = vsel %vm507, %v5176, %v5192
    %v5206 = vsel %vm507, %v5178, %v5194
    %v5207 = vsel %vm507, %v5180, %v5196
    %v5208 = vsel %vm507, %v5182, %v5198
    %v5209 = vsel %vm507, %v5184, %v5200
    %v5210 = vsel %vm507, %v5186, %v5202
    %v5211 = vsel %vm507, %v5156, %v5172
    %v5212 = vsel %vm507, %v5158, %v5174
    %v5213 = vsel %vm507, %v5160, %v5176
    %v5214 = vsel %vm507, %v5162, %v5178
    %v5215 = vsel %vm507, %v5164, %v5180
    %v5216 = vsel %vm507, %v5166, %v5182
    %v5217 = vsel %vm507, %v5168, %v5184
    %v5218 = vsel %vm507, %v5170, %v5186
    %v5219 = vsel %vm507, %v5140, %v5156
    %v5220 = vsel %vm507, %v5142, %v5158
    %v5221 = vsel %vm507, %v5144, %v5160
    %v5222 = vsel %vm507, %v5146, %v5162
    %v5223 = vsel %vm507, %v5148, %v5164
    %v5224 = vsel %vm507, %v5150, %v5166
    %v5225 = vsel %vm507, %v5152, %v5168
    %v5226 = vsel %vm507, %v5154, %v5170
    %v5227 = vsel %vm507, %v5188, %v5140
    %v5228 = vsel %vm507, %v5190, %v5142
    %v5229 = vsel %vm507, %v5192, %v5144
    %v5230 = vsel %vm507, %v5194, %v5146
    %v5231 = vsel %vm507, %v5196, %v5148
    %v5232 = vsel %vm507, %v5198, %v5150
    %v5233 = vsel %vm507, %v5200, %v5152
    %v5234 = vsel %vm507, %v5202, %v5154
    %5235 = vrot.lane.b32.xlu0 %v4740, 127
    %v5236 = vpop.permute.xlu0 %5235
    %5237 = vrot.lane.b32.xlu0 %v4744, 127
    %v5238 = vpop.permute.xlu0 %5237
    %5239 = vrot.lane.b32.xlu0 %v4750, 127
    %v5240 = vpop.permute.xlu0 %5239
    %5241 = vrot.lane.b32.xlu0 %v4754, 127
    %v5242 = vpop.permute.xlu0 %5241
    %5243 = vrot.lane.b32.xlu0 %v4760, 127
    %v5244 = vpop.permute.xlu0 %5243
    %5245 = vrot.lane.b32.xlu0 %v4764, 127
    %v5246 = vpop.permute.xlu0 %5245
    %5247 = vrot.lane.b32.xlu0 %v4770, 127
    %v5248 = vpop.permute.xlu0 %5247
    %5249 = vrot.lane.b32.xlu0 %v4774, 127
    %v5250 = vpop.permute.xlu0 %5249
    %5251 = vrot.lane.b32.xlu0 %v4742, 127
    %v5252 = vpop.permute.xlu0 %5251
    %5253 = vrot.lane.b32.xlu0 %v4746, 127
    %v5254 = vpop.permute.xlu0 %5253
    %5255 = vrot.lane.b32.xlu0 %v4752, 127
    %v5256 = vpop.permute.xlu0 %5255
    %5257 = vrot.lane.b32.xlu0 %v4756, 127
    %v5258 = vpop.permute.xlu0 %5257
    %5259 = vrot.lane.b32.xlu0 %v4762, 127
    %v5260 = vpop.permute.xlu0 %5259
    %5261 = vrot.lane.b32.xlu0 %v4766, 127
    %v5262 = vpop.permute.xlu0 %5261
    %5263 = vrot.lane.b32.xlu0 %v4772, 127
    %v5264 = vpop.permute.xlu0 %5263
    %5265 = vrot.lane.b32.xlu0 %v4776, 127
    %v5266 = vpop.permute.xlu0 %5265
    %5267 = vrot.lane.b32.xlu0 %v4813, 127
    %v5268 = vpop.permute.xlu0 %5267
    %5269 = vrot.lane.b32.xlu0 %v4817, 127
    %v5270 = vpop.permute.xlu0 %5269
    %5271 = vrot.lane.b32.xlu0 %v4823, 127
    %v5272 = vpop.permute.xlu0 %5271
    %5273 = vrot.lane.b32.xlu0 %v4827, 127
    %v5274 = vpop.permute.xlu0 %5273
    %5275 = vrot.lane.b32.xlu0 %v4833, 127
    %v5276 = vpop.permute.xlu0 %5275
    %5277 = vrot.lane.b32.xlu0 %v4837, 127
    %v5278 = vpop.permute.xlu0 %5277
    %5279 = vrot.lane.b32.xlu0 %v4843, 127
    %v5280 = vpop.permute.xlu0 %5279
    %5281 = vrot.lane.b32.xlu0 %v4847, 127
    %v5282 = vpop.permute.xlu0 %5281
    %5283 = vrot.lane.b32.xlu0 %v4815, 127
    %v5284 = vpop.permute.xlu0 %5283
    %5285 = vrot.lane.b32.xlu0 %v4819, 127
    %v5286 = vpop.permute.xlu0 %5285
    %5287 = vrot.lane.b32.xlu0 %v4825, 127
    %v5288 = vpop.permute.xlu0 %5287
    %5289 = vrot.lane.b32.xlu0 %v4829, 127
    %v5290 = vpop.permute.xlu0 %5289
    %5291 = vrot.lane.b32.xlu0 %v4835, 127
    %v5292 = vpop.permute.xlu0 %5291
    %5293 = vrot.lane.b32.xlu0 %v4839, 127
    %v5294 = vpop.permute.xlu0 %5293
    %5295 = vrot.lane.b32.xlu0 %v4845, 127
    %v5296 = vpop.permute.xlu0 %5295
    %5297 = vrot.lane.b32.xlu0 %v4849, 127
    %v5298 = vpop.permute.xlu0 %5297
    %v5299 = vsel %vm556, %v5268, %v5284
    %v5300 = vsel %vm556, %v5270, %v5286
    %v5301 = vsel %vm556, %v5272, %v5288
    %v5302 = vsel %vm556, %v5274, %v5290
    %v5303 = vsel %vm556, %v5276, %v5292
    %v5304 = vsel %vm556, %v5278, %v5294
    %v5305 = vsel %vm556, %v5280, %v5296
    %v5306 = vsel %vm556, %v5282, %v5298
    %v5307 = vsel %vm556, %v5252, %v5268
    %v5308 = vsel %vm556, %v5254, %v5270
    %v5309 = vsel %vm556, %v5256, %v5272
    %v5310 = vsel %vm556, %v5258, %v5274
    %v5311 = vsel %vm556, %v5260, %v5276
    %v5312 = vsel %vm556, %v5262, %v5278
    %v5313 = vsel %vm556, %v5264, %v5280
    %v5314 = vsel %vm556, %v5266, %v5282
    %v5315 = vsel %vm556, %v5236, %v5252
    %v5316 = vsel %vm556, %v5238, %v5254
    %v5317 = vsel %vm556, %v5240, %v5256
    %v5318 = vsel %vm556, %v5242, %v5258
    %v5319 = vsel %vm556, %v5244, %v5260
    %v5320 = vsel %vm556, %v5246, %v5262
    %v5321 = vsel %vm556, %v5248, %v5264
    %v5322 = vsel %vm556, %v5250, %v5266
    %v5323 = vsel %vm556, %v5284, %v5236
    %v5324 = vsel %vm556, %v5286, %v5238
    %v5325 = vsel %vm556, %v5288, %v5240
    %v5326 = vsel %vm556, %v5290, %v5242
    %v5327 = vsel %vm556, %v5292, %v5244
    %v5328 = vsel %vm556, %v5294, %v5246
    %v5329 = vsel %vm556, %v5296, %v5248
    %v5330 = vsel %vm556, %v5298, %v5250
    %5331 = vrot.lane.b32.xlu0 %v4740, 113
    %v5332 = vpop.permute.xlu0 %5331
    %5333 = vrot.lane.b32.xlu0 %v4744, 113
    %v5334 = vpop.permute.xlu0 %5333
    %5335 = vrot.lane.b32.xlu0 %v4750, 113
    %v5336 = vpop.permute.xlu0 %5335
    %5337 = vrot.lane.b32.xlu0 %v4754, 113
    %v5338 = vpop.permute.xlu0 %5337
    %5339 = vrot.lane.b32.xlu0 %v4760, 113
    %v5340 = vpop.permute.xlu0 %5339
    %5341 = vrot.lane.b32.xlu0 %v4764, 113
    %v5342 = vpop.permute.xlu0 %5341
    %5343 = vrot.lane.b32.xlu0 %v4770, 113
    %v5344 = vpop.permute.xlu0 %5343
    %5345 = vrot.lane.b32.xlu0 %v4774, 113
    %v5346 = vpop.permute.xlu0 %5345
    %5347 = vrot.lane.b32.xlu0 %v4742, 113
    %v5348 = vpop.permute.xlu0 %5347
    %5349 = vrot.lane.b32.xlu0 %v4746, 113
    %v5350 = vpop.permute.xlu0 %5349
    %5351 = vrot.lane.b32.xlu0 %v4752, 113
    %v5352 = vpop.permute.xlu0 %5351
    %5353 = vrot.lane.b32.xlu0 %v4756, 113
    %v5354 = vpop.permute.xlu0 %5353
    %5355 = vrot.lane.b32.xlu0 %v4762, 113
    %v5356 = vpop.permute.xlu0 %5355
    %5357 = vrot.lane.b32.xlu0 %v4766, 113
    %v5358 = vpop.permute.xlu0 %5357
    %5359 = vrot.lane.b32.xlu0 %v4772, 113
    %v5360 = vpop.permute.xlu0 %5359
    %5361 = vrot.lane.b32.xlu0 %v4776, 113
    %v5362 = vpop.permute.xlu0 %5361
    %5363 = vrot.lane.b32.xlu0 %v4813, 113
    %v5364 = vpop.permute.xlu0 %5363
    %5365 = vrot.lane.b32.xlu0 %v4817, 113
    %v5366 = vpop.permute.xlu0 %5365
    %5367 = vrot.lane.b32.xlu0 %v4823, 113
    %v5368 = vpop.permute.xlu0 %5367
    %5369 = vrot.lane.b32.xlu0 %v4827, 113
    %v5370 = vpop.permute.xlu0 %5369
    %5371 = vrot.lane.b32.xlu0 %v4833, 113
    %v5372 = vpop.permute.xlu0 %5371
    %5373 = vrot.lane.b32.xlu0 %v4837, 113
    %v5374 = vpop.permute.xlu0 %5373
    %5375 = vrot.lane.b32.xlu0 %v4843, 113
    %v5376 = vpop.permute.xlu0 %5375
    %5377 = vrot.lane.b32.xlu0 %v4847, 113
    %v5378 = vpop.permute.xlu0 %5377
    %5379 = vrot.lane.b32.xlu0 %v4815, 113
    %v5380 = vpop.permute.xlu0 %5379
    %5381 = vrot.lane.b32.xlu0 %v4819, 113
    %v5382 = vpop.permute.xlu0 %5381
    %5383 = vrot.lane.b32.xlu0 %v4825, 113
    %v5384 = vpop.permute.xlu0 %5383
    %5385 = vrot.lane.b32.xlu0 %v4829, 113
    %v5386 = vpop.permute.xlu0 %5385
    %5387 = vrot.lane.b32.xlu0 %v4835, 113
    %v5388 = vpop.permute.xlu0 %5387
    %5389 = vrot.lane.b32.xlu0 %v4839, 113
    %v5390 = vpop.permute.xlu0 %5389
    %5391 = vrot.lane.b32.xlu0 %v4845, 113
    %v5392 = vpop.permute.xlu0 %5391
    %5393 = vrot.lane.b32.xlu0 %v4849, 113
    %v5394 = vpop.permute.xlu0 %5393
    %v5395 = vsel %vm3509, %v5364, %v5380
    %v5396 = vsel %vm3509, %v5366, %v5382
    %v5397 = vsel %vm3509, %v5368, %v5384
    %v5398 = vsel %vm3509, %v5370, %v5386
    %v5399 = vsel %vm3509, %v5372, %v5388
    %v5400 = vsel %vm3509, %v5374, %v5390
    %v5401 = vsel %vm3509, %v5376, %v5392
    %v5402 = vsel %vm3509, %v5378, %v5394
    %v5403 = vsel %vm3509, %v5348, %v5364
    %v5404 = vsel %vm3509, %v5350, %v5366
    %v5405 = vsel %vm3509, %v5352, %v5368
    %v5406 = vsel %vm3509, %v5354, %v5370
    %v5407 = vsel %vm3509, %v5356, %v5372
    %v5408 = vsel %vm3509, %v5358, %v5374
    %v5409 = vsel %vm3509, %v5360, %v5376
    %v5410 = vsel %vm3509, %v5362, %v5378
    %v5411 = vsel %vm3509, %v5332, %v5348
    %v5412 = vsel %vm3509, %v5334, %v5350
    %v5413 = vsel %vm3509, %v5336, %v5352
    %v5414 = vsel %vm3509, %v5338, %v5354
    %v5415 = vsel %vm3509, %v5340, %v5356
    %v5416 = vsel %vm3509, %v5342, %v5358
    %v5417 = vsel %vm3509, %v5344, %v5360
    %v5418 = vsel %vm3509, %v5346, %v5362
    %v5419 = vsel %vm3509, %v5380, %v5332
    %v5420 = vsel %vm3509, %v5382, %v5334
    %v5421 = vsel %vm3509, %v5384, %v5336
    %v5422 = vsel %vm3509, %v5386, %v5338
    %v5423 = vsel %vm3509, %v5388, %v5340
    %v5424 = vsel %vm3509, %v5390, %v5342
    %v5425 = vsel %vm3509, %v5392, %v5344
    %v5426 = vsel %vm3509, %v5394, %v5346
    %5427 = vrot.lane.b32.xlu0 %v4740, 112
    %v5428 = vpop.permute.xlu0 %5427
    %5429 = vrot.lane.b32.xlu0 %v4744, 112
    %v5430 = vpop.permute.xlu0 %5429
    %5431 = vrot.lane.b32.xlu0 %v4750, 112
    %v5432 = vpop.permute.xlu0 %5431
    %5433 = vrot.lane.b32.xlu0 %v4754, 112
    %v5434 = vpop.permute.xlu0 %5433
    %5435 = vrot.lane.b32.xlu0 %v4760, 112
    %v5436 = vpop.permute.xlu0 %5435
    %5437 = vrot.lane.b32.xlu0 %v4764, 112
    %v5438 = vpop.permute.xlu0 %5437
    %5439 = vrot.lane.b32.xlu0 %v4770, 112
    %v5440 = vpop.permute.xlu0 %5439
    %5441 = vrot.lane.b32.xlu0 %v4774, 112
    %v5442 = vpop.permute.xlu0 %5441
    %5443 = vrot.lane.b32.xlu0 %v4742, 112
    %v5444 = vpop.permute.xlu0 %5443
    %5445 = vrot.lane.b32.xlu0 %v4746, 112
    %v5446 = vpop.permute.xlu0 %5445
    %5447 = vrot.lane.b32.xlu0 %v4752, 112
    %v5448 = vpop.permute.xlu0 %5447
    %5449 = vrot.lane.b32.xlu0 %v4756, 112
    %v5450 = vpop.permute.xlu0 %5449
    %5451 = vrot.lane.b32.xlu0 %v4762, 112
    %v5452 = vpop.permute.xlu0 %5451
    %5453 = vrot.lane.b32.xlu0 %v4766, 112
    %v5454 = vpop.permute.xlu0 %5453
    %5455 = vrot.lane.b32.xlu0 %v4772, 112
    %v5456 = vpop.permute.xlu0 %5455
    %5457 = vrot.lane.b32.xlu0 %v4776, 112
    %v5458 = vpop.permute.xlu0 %5457
    %5459 = vrot.lane.b32.xlu0 %v4813, 112
    %v5460 = vpop.permute.xlu0 %5459
    %5461 = vrot.lane.b32.xlu0 %v4817, 112
    %v5462 = vpop.permute.xlu0 %5461
    %5463 = vrot.lane.b32.xlu0 %v4823, 112
    %v5464 = vpop.permute.xlu0 %5463
    %5465 = vrot.lane.b32.xlu0 %v4827, 112
    %v5466 = vpop.permute.xlu0 %5465
    %5467 = vrot.lane.b32.xlu0 %v4833, 112
    %v5468 = vpop.permute.xlu0 %5467
    %5469 = vrot.lane.b32.xlu0 %v4837, 112
    %v5470 = vpop.permute.xlu0 %5469
    %5471 = vrot.lane.b32.xlu0 %v4843, 112
    %v5472 = vpop.permute.xlu0 %5471
    %5473 = vrot.lane.b32.xlu0 %v4847, 112
    %v5474 = vpop.permute.xlu0 %5473
    %5475 = vrot.lane.b32.xlu0 %v4815, 112
    %v5476 = vpop.permute.xlu0 %5475
    %5477 = vrot.lane.b32.xlu0 %v4819, 112
    %v5478 = vpop.permute.xlu0 %5477
    %5479 = vrot.lane.b32.xlu0 %v4825, 112
    %v5480 = vpop.permute.xlu0 %5479
    %5481 = vrot.lane.b32.xlu0 %v4829, 112
    %v5482 = vpop.permute.xlu0 %5481
    %5483 = vrot.lane.b32.xlu0 %v4835, 112
    %v5484 = vpop.permute.xlu0 %5483
    %5485 = vrot.lane.b32.xlu0 %v4839, 112
    %v5486 = vpop.permute.xlu0 %5485
    %5487 = vrot.lane.b32.xlu0 %v4845, 112
    %v5488 = vpop.permute.xlu0 %5487
    %5489 = vrot.lane.b32.xlu0 %v4849, 112
    %v5490 = vpop.permute.xlu0 %5489
    %v5491 = vsel %vm3558, %v5460, %v5476
    %v5492 = vsel %vm3558, %v5462, %v5478
    %v5493 = vsel %vm3558, %v5464, %v5480
    %v5494 = vsel %vm3558, %v5466, %v5482
    %v5495 = vsel %vm3558, %v5468, %v5484
    %v5496 = vsel %vm3558, %v5470, %v5486
    %v5497 = vsel %vm3558, %v5472, %v5488
    %v5498 = vsel %vm3558, %v5474, %v5490
    %v5499 = vsel %vm3558, %v5444, %v5460
    %v5500 = vsel %vm3558, %v5446, %v5462
    %v5501 = vsel %vm3558, %v5448, %v5464
    %v5502 = vsel %vm3558, %v5450, %v5466
    %v5503 = vsel %vm3558, %v5452, %v5468
    %v5504 = vsel %vm3558, %v5454, %v5470
    %v5505 = vsel %vm3558, %v5456, %v5472
    %v5506 = vsel %vm3558, %v5458, %v5474
    %v5507 = vsel %vm3558, %v5428, %v5444
    %v5508 = vsel %vm3558, %v5430, %v5446
    %v5509 = vsel %vm3558, %v5432, %v5448
    %v5510 = vsel %vm3558, %v5434, %v5450
    %v5511 = vsel %vm3558, %v5436, %v5452
    %v5512 = vsel %vm3558, %v5438, %v5454
    %v5513 = vsel %vm3558, %v5440, %v5456
    %v5514 = vsel %vm3558, %v5442, %v5458
    %v5515 = vsel %vm3558, %v5476, %v5428
    %v5516 = vsel %vm3558, %v5478, %v5430
    %v5517 = vsel %vm3558, %v5480, %v5432
    %v5518 = vsel %vm3558, %v5482, %v5434
    %v5519 = vsel %vm3558, %v5484, %v5436
    %v5520 = vsel %vm3558, %v5486, %v5438
    %v5521 = vsel %vm3558, %v5488, %v5440
    %v5522 = vsel %vm3558, %v5490, %v5442
    %5523 = vrot.lane.b32.xlu0 %v4740, 111
    %v5524 = vpop.permute.xlu0 %5523
    %5525 = vrot.lane.b32.xlu0 %v4744, 111
    %v5526 = vpop.permute.xlu0 %5525
    %5527 = vrot.lane.b32.xlu0 %v4750, 111
    %v5528 = vpop.permute.xlu0 %5527
    %5529 = vrot.lane.b32.xlu0 %v4754, 111
    %v5530 = vpop.permute.xlu0 %5529
    %5531 = vrot.lane.b32.xlu0 %v4760, 111
    %v5532 = vpop.permute.xlu0 %5531
    %5533 = vrot.lane.b32.xlu0 %v4764, 111
    %v5534 = vpop.permute.xlu0 %5533
    %5535 = vrot.lane.b32.xlu0 %v4770, 111
    %v5536 = vpop.permute.xlu0 %5535
    %5537 = vrot.lane.b32.xlu0 %v4774, 111
    %v5538 = vpop.permute.xlu0 %5537
    %5539 = vrot.lane.b32.xlu0 %v4742, 111
    %v5540 = vpop.permute.xlu0 %5539
    %5541 = vrot.lane.b32.xlu0 %v4746, 111
    %v5542 = vpop.permute.xlu0 %5541
    %5543 = vrot.lane.b32.xlu0 %v4752, 111
    %v5544 = vpop.permute.xlu0 %5543
    %5545 = vrot.lane.b32.xlu0 %v4756, 111
    %v5546 = vpop.permute.xlu0 %5545
    %5547 = vrot.lane.b32.xlu0 %v4762, 111
    %v5548 = vpop.permute.xlu0 %5547
    %5549 = vrot.lane.b32.xlu0 %v4766, 111
    %v5550 = vpop.permute.xlu0 %5549
    %5551 = vrot.lane.b32.xlu0 %v4772, 111
    %v5552 = vpop.permute.xlu0 %5551
    %5553 = vrot.lane.b32.xlu0 %v4776, 111
    %v5554 = vpop.permute.xlu0 %5553
    %5555 = vrot.lane.b32.xlu0 %v4813, 111
    %v5556 = vpop.permute.xlu0 %5555
    %5557 = vrot.lane.b32.xlu0 %v4817, 111
    %v5558 = vpop.permute.xlu0 %5557
    %5559 = vrot.lane.b32.xlu0 %v4823, 111
    %v5560 = vpop.permute.xlu0 %5559
    %5561 = vrot.lane.b32.xlu0 %v4827, 111
    %v5562 = vpop.permute.xlu0 %5561
    %5563 = vrot.lane.b32.xlu0 %v4833, 111
    %v5564 = vpop.permute.xlu0 %5563
    %5565 = vrot.lane.b32.xlu0 %v4837, 111
    %v5566 = vpop.permute.xlu0 %5565
    %5567 = vrot.lane.b32.xlu0 %v4843, 111
    %v5568 = vpop.permute.xlu0 %5567
    %5569 = vrot.lane.b32.xlu0 %v4847, 111
    %v5570 = vpop.permute.xlu0 %5569
    %5571 = vrot.lane.b32.xlu0 %v4815, 111
    %v5572 = vpop.permute.xlu0 %5571
    %5573 = vrot.lane.b32.xlu0 %v4819, 111
    %v5574 = vpop.permute.xlu0 %5573
    %5575 = vrot.lane.b32.xlu0 %v4825, 111
    %v5576 = vpop.permute.xlu0 %5575
    %5577 = vrot.lane.b32.xlu0 %v4829, 111
    %v5578 = vpop.permute.xlu0 %5577
    %5579 = vrot.lane.b32.xlu0 %v4835, 111
    %v5580 = vpop.permute.xlu0 %5579
    %5581 = vrot.lane.b32.xlu0 %v4839, 111
    %v5582 = vpop.permute.xlu0 %5581
    %5583 = vrot.lane.b32.xlu0 %v4845, 111
    %v5584 = vpop.permute.xlu0 %5583
    %5585 = vrot.lane.b32.xlu0 %v4849, 111
    %v5586 = vpop.permute.xlu0 %5585
    %v5587 = vsel %vm3607, %v5556, %v5572
    %v5588 = vsel %vm3607, %v5558, %v5574
    %v5589 = vsel %vm3607, %v5560, %v5576
    %v5590 = vsel %vm3607, %v5562, %v5578
    %v5591 = vsel %vm3607, %v5564, %v5580
    %v5592 = vsel %vm3607, %v5566, %v5582
    %v5593 = vsel %vm3607, %v5568, %v5584
    %v5594 = vsel %vm3607, %v5570, %v5586
    %v5595 = vsel %vm3607, %v5540, %v5556
    %v5596 = vsel %vm3607, %v5542, %v5558
    %v5597 = vsel %vm3607, %v5544, %v5560
    %v5598 = vsel %vm3607, %v5546, %v5562
    %v5599 = vsel %vm3607, %v5548, %v5564
    %v5600 = vsel %vm3607, %v5550, %v5566
    %v5601 = vsel %vm3607, %v5552, %v5568
    %v5602 = vsel %vm3607, %v5554, %v5570
    %v5603 = vsel %vm3607, %v5524, %v5540
    %v5604 = vsel %vm3607, %v5526, %v5542
    %v5605 = vsel %vm3607, %v5528, %v5544
    %v5606 = vsel %vm3607, %v5530, %v5546
    %v5607 = vsel %vm3607, %v5532, %v5548
    %v5608 = vsel %vm3607, %v5534, %v5550
    %v5609 = vsel %vm3607, %v5536, %v5552
    %v5610 = vsel %vm3607, %v5538, %v5554
    %v5611 = vsel %vm3607, %v5572, %v5524
    %v5612 = vsel %vm3607, %v5574, %v5526
    %v5613 = vsel %vm3607, %v5576, %v5528
    %v5614 = vsel %vm3607, %v5578, %v5530
    %v5615 = vsel %vm3607, %v5580, %v5532
    %v5616 = vsel %vm3607, %v5582, %v5534
    %v5617 = vsel %vm3607, %v5584, %v5536
    %v5618 = vsel %vm3607, %v5586, %v5538
    %v5619 = vld [vmem:[%s7] sm:$0xff]
    %v5620 = vld [vmem:[%s7 + $0x8] sm:$0xff]
    %v5621 = vld [vmem:[%s7 + $0x10] sm:$0xf]
    %v5622 = vld [vmem:[%s7 + $0x14] sm:$0xff]
    %v5623 = vld [vmem:[%s7 + $0x1c] sm:$0xff]
    %v5624 = vld [vmem:[%s7 + $0x24] sm:$0xf]
    %v5625 = vld [vmem:[%s7 + $0x28] sm:$0xff]
    %v5626 = vld [vmem:[%s7 + $0x30] sm:$0xff]
    %v5627 = vld [vmem:[%s7 + $0x38] sm:$0xf]
    %v5628 = vld [vmem:[%s7 + $0x3c] sm:$0xff]
    %v5629 = vld [vmem:[%s7 + $0x44] sm:$0xff]
    %v5630 = vld [vmem:[%s7 + $0x4c] sm:$0xf]
    %v5631 = vld [vmem:[%s7 + $0x50] sm:$0xff]
    %v5632 = vld [vmem:[%s7 + $0x58] sm:$0xff]
    %v5633 = vld [vmem:[%s7 + $0x60] sm:$0xf]
    %v5634 = vld [vmem:[%s7 + $0x64] sm:$0xff]
    %v5635 = vld [vmem:[%s7 + $0x6c] sm:$0xff]
    %v5636 = vld [vmem:[%s7 + $0x74] sm:$0xf]
    %v5637 = vld [vmem:[%s7 + $0x78] sm:$0xff]
    %v5638 = vld [vmem:[%s7 + $0x80] sm:$0xff]
    %v5639 = vld [vmem:[%s7 + $0x88] sm:$0xf]
    %v5640 = vld [vmem:[%s7 + $0x8c] sm:$0xff]
    %v5641 = vld [vmem:[%s7 + $0x94] sm:$0xff]
    %v5642 = vld [vmem:[%s7 + $0x9c] sm:$0xf]
    %v5643 = vld [vmem:[%s7 + $0xa0] sm:$0xff]
    %v5644 = vld [vmem:[%s7 + $0xa8] sm:$0xff]
    %v5645 = vld [vmem:[%s7 + $0xb0] sm:$0xf]
    %v5646 = vld [vmem:[%s7 + $0xb4] sm:$0xff]
    %v5647 = vld [vmem:[%s7 + $0xbc] sm:$0xff]
    %v5648 = vld [vmem:[%s7 + $0xc4] sm:$0xf]
    %v5649 = vld [vmem:[%s7 + $0xc8] sm:$0xff]
    %v5650 = vld [vmem:[%s7 + $0xd0] sm:$0xff]
    %v5651 = vld [vmem:[%s7 + $0xd8] sm:$0xf]
    %v5652 = vld [vmem:[%s7 + $0xdc] sm:$0xff]
    %v5653 = vld [vmem:[%s7 + $0xe4] sm:$0xff]
    %v5654 = vld [vmem:[%s7 + $0xec] sm:$0xf]
    %v5655 = vld [vmem:[%s7 + $0xf0] sm:$0xff]
    %v5656 = vld [vmem:[%s7 + $0xf8] sm:$0xff]
    %v5657 = vld [vmem:[%s7 + $0x100] sm:$0xf]
    %v5658 = vld [vmem:[%s7 + $0x104] sm:$0xff]
    %v5659 = vld [vmem:[%s7 + $0x10c] sm:$0xff]
    %v5660 = vld [vmem:[%s7 + $0x114] sm:$0xf]
    %v5661 = vld [vmem:[%s7 + $0x118] sm:$0xff]
    %v5662 = vld [vmem:[%s7 + $0x120] sm:$0xff]
    %v5663 = vld [vmem:[%s7 + $0x128] sm:$0xf]
    %v5664 = vld [vmem:[%s7 + $0x12c] sm:$0xff]
    %v5665 = vld [vmem:[%s7 + $0x134] sm:$0xff]
    %v5666 = vld [vmem:[%s7 + $0x13c] sm:$0xf]
    %v5667 = vpack.c.bf16 %v4940, %v4939
    %v5668 = vpack.c.bf16 %v4932, %v4931
    %v5669 = vpack.c.bf16 %v4924, %v4923
    %v5670 = vpack.c.bf16 %v4916, %v4915
    %v5671 = vpack.c.bf16 %v4942, %v4941
    %v5672 = vpack.c.bf16 %v4934, %v4933
    %v5673 = vpack.c.bf16 %v4926, %v4925
    %v5674 = vpack.c.bf16 %v4918, %v4917
    %v5675 = vpack.c.bf16 %v4944, %v4943
    %v5676 = vpack.c.bf16 %v4936, %v4935
    %v5677 = vpack.c.bf16 %v4928, %v4927
    %v5678 = vpack.c.bf16 %v4920, %v4919
    %v5679 = vpack.c.bf16 %v4946, %v4945
    %v5680 = vpack.c.bf16 %v4938, %v4937
    %v5681 = vpack.c.bf16 %v4930, %v4929
    %v5682 = vpack.c.bf16 %v4922, %v4921
    %v5683 = vpack.c.bf16 %v5036, %v5035
    %v5684 = vpack.c.bf16 %v5028, %v5027
    %v5685 = vpack.c.bf16 %v5020, %v5019
    %v5686 = vpack.c.bf16 %v5012, %v5011
    %v5687 = vpack.c.bf16 %v5038, %v5037
    %v5688 = vpack.c.bf16 %v5030, %v5029
    %v5689 = vpack.c.bf16 %v5022, %v5021
    %v5690 = vpack.c.bf16 %v5014, %v5013
    %v5691 = vpack.c.bf16 %v5040, %v5039
    %v5692 = vpack.c.bf16 %v5032, %v5031
    %v5693 = vpack.c.bf16 %v5024, %v5023
    %v5694 = vpack.c.bf16 %v5016, %v5015
    %v5695 = vpack.c.bf16 %v5042, %v5041
    %v5696 = vpack.c.bf16 %v5034, %v5033
    %v5697 = vpack.c.bf16 %v5026, %v5025
    %v5698 = vpack.c.bf16 %v5018, %v5017
    %v5699 = vpack.c.bf16 %v5132, %v5131
    %v5700 = vpack.c.bf16 %v5124, %v5123
    %v5701 = vpack.c.bf16 %v5116, %v5115
    %v5702 = vpack.c.bf16 %v5108, %v5107
    %v5703 = vpack.c.bf16 %v5134, %v5133
    %v5704 = vpack.c.bf16 %v5126, %v5125
    %v5705 = vpack.c.bf16 %v5118, %v5117
    %v5706 = vpack.c.bf16 %v5110, %v5109
    %v5707 = vpack.c.bf16 %v5136, %v5135
    %v5708 = vpack.c.bf16 %v5128, %v5127
    %v5709 = vpack.c.bf16 %v5120, %v5119
    %v5710 = vpack.c.bf16 %v5112, %v5111
    %v5711 = vpack.c.bf16 %v5138, %v5137
    %v5712 = vpack.c.bf16 %v5130, %v5129
    %v5713 = vpack.c.bf16 %v5122, %v5121
    %v5714 = vpack.c.bf16 %v5114, %v5113
    %v5715 = vpack.c.bf16 %v5228, %v5227
    %v5716 = vpack.c.bf16 %v5220, %v5219
    %v5717 = vpack.c.bf16 %v5212, %v5211
    %v5718 = vpack.c.bf16 %v5204, %v5203
    %v5719 = vpack.c.bf16 %v5230, %v5229
    %v5720 = vpack.c.bf16 %v5222, %v5221
    %v5721 = vpack.c.bf16 %v5214, %v5213
    %v5722 = vpack.c.bf16 %v5206, %v5205
    %v5723 = vpack.c.bf16 %v5232, %v5231
    %v5724 = vpack.c.bf16 %v5224, %v5223
    %v5725 = vpack.c.bf16 %v5216, %v5215
    %v5726 = vpack.c.bf16 %v5208, %v5207
    %v5727 = vpack.c.bf16 %v5234, %v5233
    %v5728 = vpack.c.bf16 %v5226, %v5225
    %v5729 = vpack.c.bf16 %v5218, %v5217
    %v5730 = vpack.c.bf16 %v5210, %v5209
    %v5731 = vpack.c.bf16 %v4744, %v4740
    %v5732 = vpack.c.bf16 %v4746, %v4742
    %v5733 = vpack.c.bf16 %v4817, %v4813
    %v5734 = vpack.c.bf16 %v4819, %v4815
    %v5735 = vpack.c.bf16 %v4754, %v4750
    %v5736 = vpack.c.bf16 %v4756, %v4752
    %v5737 = vpack.c.bf16 %v4827, %v4823
    %v5738 = vpack.c.bf16 %v4829, %v4825
    %v5739 = vpack.c.bf16 %v4764, %v4760
    %v5740 = vpack.c.bf16 %v4766, %v4762
    %v5741 = vpack.c.bf16 %v4837, %v4833
    %v5742 = vpack.c.bf16 %v4839, %v4835
    %v5743 = vpack.c.bf16 %v4774, %v4770
    %v5744 = vpack.c.bf16 %v4776, %v4772
    %v5745 = vpack.c.bf16 %v4847, %v4843
    %v5746 = vpack.c.bf16 %v4849, %v4845
    %v5747 = vpack.c.bf16 %v5316, %v5315
    %v5748 = vpack.c.bf16 %v5308, %v5307
    %v5749 = vpack.c.bf16 %v5300, %v5299
    %v5750 = vpack.c.bf16 %v5324, %v5323
    %v5751 = vpack.c.bf16 %v5318, %v5317
    %v5752 = vpack.c.bf16 %v5310, %v5309
    %v5753 = vpack.c.bf16 %v5302, %v5301
    %v5754 = vpack.c.bf16 %v5326, %v5325
    %v5755 = vpack.c.bf16 %v5320, %v5319
    %v5756 = vpack.c.bf16 %v5312, %v5311
    %v5757 = vpack.c.bf16 %v5304, %v5303
    %v5758 = vpack.c.bf16 %v5328, %v5327
    %v5759 = vpack.c.bf16 %v5322, %v5321
    %v5760 = vpack.c.bf16 %v5314, %v5313
    %v5761 = vpack.c.bf16 %v5306, %v5305
    %v5762 = vpack.c.bf16 %v5330, %v5329
    %v5763 = vpack.c.bf16 %v5412, %v5411
    %v5764 = vpack.c.bf16 %v5404, %v5403
    %v5765 = vpack.c.bf16 %v5396, %v5395
    %v5766 = vpack.c.bf16 %v5420, %v5419
    %v5767 = vpack.c.bf16 %v5414, %v5413
    %v5768 = vpack.c.bf16 %v5406, %v5405
    %v5769 = vpack.c.bf16 %v5398, %v5397
    %v5770 = vpack.c.bf16 %v5422, %v5421
    %v5771 = vpack.c.bf16 %v5416, %v5415
    %v5772 = vpack.c.bf16 %v5408, %v5407
    %v5773 = vpack.c.bf16 %v5400, %v5399
    %v5774 = vpack.c.bf16 %v5424, %v5423
    %v5775 = vpack.c.bf16 %v5418, %v5417
    %v5776 = vpack.c.bf16 %v5410, %v5409
    %v5777 = vpack.c.bf16 %v5402, %v5401
    %v5778 = vpack.c.bf16 %v5426, %v5425
    %v5779 = vpack.c.bf16 %v5508, %v5507
    %v5780 = vpack.c.bf16 %v5500, %v5499
    %v5781 = vpack.c.bf16 %v5492, %v5491
    %v5782 = vpack.c.bf16 %v5516, %v5515
    %v5783 = vpack.c.bf16 %v5510, %v5509
    %v5784 = vpack.c.bf16 %v5502, %v5501
    %v5785 = vpack.c.bf16 %v5494, %v5493
    %v5786 = vpack.c.bf16 %v5518, %v5517
    %v5787 = vpack.c.bf16 %v5512, %v5511
    %v5788 = vpack.c.bf16 %v5504, %v5503
    %v5789 = vpack.c.bf16 %v5496, %v5495
    %v5790 = vpack.c.bf16 %v5520, %v5519
    %v5791 = vpack.c.bf16 %v5514, %v5513
    %v5792 = vpack.c.bf16 %v5506, %v5505
    %v5793 = vpack.c.bf16 %v5498, %v5497
    %v5794 = vpack.c.bf16 %v5522, %v5521
    %v5795 = vpack.c.bf16 %v5604, %v5603
    %v5796 = vpack.c.bf16 %v5596, %v5595
    %v5797 = vpack.c.bf16 %v5588, %v5587
    %v5798 = vpack.c.bf16 %v5612, %v5611
    %v5799 = vpack.c.bf16 %v5606, %v5605
    %v5800 = vpack.c.bf16 %v5598, %v5597
    %v5801 = vpack.c.bf16 %v5590, %v5589
    %v5802 = vpack.c.bf16 %v5614, %v5613
    %v5803 = vpack.c.bf16 %v5608, %v5607
    %v5804 = vpack.c.bf16 %v5600, %v5599
    %v5805 = vpack.c.bf16 %v5592, %v5591
    %v5806 = vpack.c.bf16 %v5616, %v5615
    %v5807 = vpack.c.bf16 %v5610, %v5609
    %v5808 = vpack.c.bf16 %v5602, %v5601
    %v5809 = vpack.c.bf16 %v5594, %v5593
    %v5810 = vpack.c.bf16 %v5618, %v5617
    %v5859 = vunpack.c.l.b16 %v5619
    %v5860 = vunpack.c.h.b16 %v5619
    %v5861 = vunpack.c.l.b16 %v5620
    %v5862 = vunpack.c.h.b16 %v5620
    %v5863 = vunpack.c.l.b16 %v5621
    %v5864 = vunpack.c.l.b16 %v5622
    %v5865 = vunpack.c.h.b16 %v5622
    %v5866 = vunpack.c.l.b16 %v5623
    %v5867 = vunpack.c.h.b16 %v5623
    %v5868 = vunpack.c.l.b16 %v5624
    %v5869 = vunpack.c.l.b16 %v5625
    %v5870 = vunpack.c.h.b16 %v5625
    %v5871 = vunpack.c.l.b16 %v5626
    %v5872 = vunpack.c.h.b16 %v5626
    %v5873 = vunpack.c.l.b16 %v5627
    %v5874 = vunpack.c.l.b16 %v5628
    %v5875 = vunpack.c.h.b16 %v5628
    %v5876 = vunpack.c.l.b16 %v5629
    %v5877 = vunpack.c.h.b16 %v5629
    %v5878 = vunpack.c.l.b16 %v5630
    %v5879 = vunpack.c.l.b16 %v5631
    %v5880 = vunpack.c.h.b16 %v5631
    %v5881 = vunpack.c.l.b16 %v5632
    %v5882 = vunpack.c.h.b16 %v5632
    %v5883 = vunpack.c.l.b16 %v5633
    %v5884 = vunpack.c.l.b16 %v5634
    %v5885 = vunpack.c.h.b16 %v5634
    %v5886 = vunpack.c.l.b16 %v5635
    %v5887 = vunpack.c.h.b16 %v5635
    %v5888 = vunpack.c.l.b16 %v5636
    %v5889 = vunpack.c.l.b16 %v5637
    %v5890 = vunpack.c.h.b16 %v5637
    %v5891 = vunpack.c.l.b16 %v5638
    %v5892 = vunpack.c.h.b16 %v5638
    %v5893 = vunpack.c.l.b16 %v5639
    %v5894 = vunpack.c.l.b16 %v5640
    %v5895 = vunpack.c.h.b16 %v5640
    %v5896 = vunpack.c.l.b16 %v5641
    %v5897 = vunpack.c.h.b16 %v5641
    %v5898 = vunpack.c.l.b16 %v5642
    %v5899 = vunpack.c.l.b16 %v5643
    %v5900 = vunpack.c.h.b16 %v5643
    %v5901 = vunpack.c.l.b16 %v5644
    %v5902 = vunpack.c.h.b16 %v5644
    %v5903 = vunpack.c.l.b16 %v5645
    %v5904 = vunpack.c.l.b16 %v5646
    %v5905 = vunpack.c.h.b16 %v5646
    %v5906 = vunpack.c.l.b16 %v5647
    %v5907 = vunpack.c.h.b16 %v5647
    %v5908 = vunpack.c.l.b16 %v5648
    %v5909 = vunpack.c.l.b16 %v5649
    %v5910 = vunpack.c.h.b16 %v5649
    %v5911 = vunpack.c.l.b16 %v5650
    %v5912 = vunpack.c.h.b16 %v5650
    %v5913 = vunpack.c.l.b16 %v5651
    %v5914 = vunpack.c.l.b16 %v5652
    %v5915 = vunpack.c.h.b16 %v5652
    %v5916 = vunpack.c.l.b16 %v5653
    %v5917 = vunpack.c.h.b16 %v5653
    %v5918 = vunpack.c.l.b16 %v5654
    %v5919 = vunpack.c.l.b16 %v5655
    %v5920 = vunpack.c.h.b16 %v5655
    %v5921 = vunpack.c.l.b16 %v5656
    %v5922 = vunpack.c.h.b16 %v5656
    %v5923 = vunpack.c.l.b16 %v5657
    %v5924 = vunpack.c.l.b16 %v5658
    %v5925 = vunpack.c.h.b16 %v5658
    %v5926 = vunpack.c.l.b16 %v5659
    %v5927 = vunpack.c.h.b16 %v5659
    %v5928 = vunpack.c.l.b16 %v5660
    %v5929 = vunpack.c.l.b16 %v5661
    %v5930 = vunpack.c.h.b16 %v5661
    %v5931 = vunpack.c.l.b16 %v5662
    %v5932 = vunpack.c.h.b16 %v5662
    %v5933 = vunpack.c.l.b16 %v5663
    %v5934 = vunpack.c.l.b16 %v5664
    %v5935 = vunpack.c.h.b16 %v5664
    %v5936 = vunpack.c.l.b16 %v5665
    %v5937 = vunpack.c.h.b16 %v5665
    %v5938 = vunpack.c.l.b16 %v5666
    %v5939 = vpack.c.b16 %v5864, %v5859
    %v5940 = vpack.c.b16 %v5865, %v5860
    %v5941 = vpack.c.b16 %v5866, %v5861
    %v5942 = vpack.c.b16 %v5867, %v5862
    %v5943 = vpack.c.b16 %v5868, %v5863
    %v5944 = vpack.c.b16 %v5874, %v5869
    %v5945 = vpack.c.b16 %v5875, %v5870
    %v5946 = vpack.c.b16 %v5876, %v5871
    %v5947 = vpack.c.b16 %v5877, %v5872
    %v5948 = vpack.c.b16 %v5878, %v5873
    %v5949 = vpack.c.b16 %v5884, %v5879
    %v5950 = vpack.c.b16 %v5885, %v5880
    %v5951 = vpack.c.b16 %v5886, %v5881
    %v5952 = vpack.c.b16 %v5887, %v5882
    %v5953 = vpack.c.b16 %v5888, %v5883
    %v5954 = vpack.c.b16 %v5894, %v5889
    %v5955 = vpack.c.b16 %v5895, %v5890
    %v5956 = vpack.c.b16 %v5896, %v5891
    %v5957 = vpack.c.b16 %v5897, %v5892
    %v5958 = vpack.c.b16 %v5898, %v5893
    %v5959 = vpack.c.b16 %v5904, %v5899
    %v5960 = vpack.c.b16 %v5905, %v5900
    %v5961 = vpack.c.b16 %v5906, %v5901
    %v5962 = vpack.c.b16 %v5907, %v5902
    %v5963 = vpack.c.b16 %v5908, %v5903
    %v5964 = vpack.c.b16 %v5914, %v5909
    %v5965 = vpack.c.b16 %v5915, %v5910
    %v5966 = vpack.c.b16 %v5916, %v5911
    %v5967 = vpack.c.b16 %v5917, %v5912
    %v5968 = vpack.c.b16 %v5918, %v5913
    %v5969 = vpack.c.b16 %v5924, %v5919
    %v5970 = vpack.c.b16 %v5925, %v5920
    %v5971 = vpack.c.b16 %v5926, %v5921
    %v5972 = vpack.c.b16 %v5927, %v5922
    %v5973 = vpack.c.b16 %v5928, %v5923
    %v5974 = vpack.c.b16 %v5934, %v5929
    %v5975 = vpack.c.b16 %v5935, %v5930
    %v5976 = vpack.c.b16 %v5936, %v5931
    %v5977 = vpack.c.b16 %v5937, %v5932
    %v5978 = vpack.c.b16 %v5938, %v5933
    %vm6011 = vcmask 523264
    %v6013 = vsel %vm6011, %v5943, 0
    %v6016 = vsel %vm6011, %v5948, 0
    %v6019 = vsel %vm6011, %v5953, 0
    %v6022 = vsel %vm6011, %v5958, 0
    %v6025 = vsel %vm6011, %v5963, 0
    %v6028 = vsel %vm6011, %v5968, 0
    %v6031 = vsel %vm6011, %v5973, 0
    %v6034 = vsel %vm6011, %v5978, 0
    %6036 = vmatprep.subr.bf16.mxu0 %v5668
    %6037 = vmatpush1.bf16.msra.mxu0 %v5667
    %6038 = vmatprep.subr.bf16.mxu0 %v5672
    %6039 = vmatpush1.bf16.msra.mxu0 %v5671
    %6040 = vmatprep.subr.bf16.mxu0 %v5676
    %6041 = vmatpush1.bf16.msra.mxu0 %v5675
    %6042 = vmatprep.subr.bf16.mxu0 %v5680
    %6043 = vmatpush1.bf16.msra.mxu0 %v5679
    %6044 = vmatprep.subr.bf16.mxu0 %v5684
    %6045 = vmatpush1.bf16.msra.mxu0 %v5683
    %6046 = vmatprep.subr.bf16.mxu0 %v5688
    %6047 = vmatpush1.bf16.msra.mxu0 %v5687
    %6048 = vmatprep.subr.bf16.mxu0 %v5692
    %6049 = vmatpush1.bf16.msra.mxu0 %v5691
    %6050 = vmatprep.subr.bf16.mxu0 %v5696
    %6051 = vmatpush1.bf16.msra.mxu0 %v5695
    %6052 = vmatprep.subr.bf16.mxu0 %v5700
    %6053 = vmatpush1.bf16.msra.mxu0 %v5699
    %6054 = vmatprep.subr.bf16.mxu0 %v5704
    %6055 = vmatpush1.bf16.msra.mxu0 %v5703
    %6056 = vmatprep.subr.bf16.mxu0 %v5708
    %6057 = vmatpush1.bf16.msra.mxu0 %v5707
    %6058 = vmatprep.subr.bf16.mxu0 %v5712
    %6059 = vmatpush1.bf16.msra.mxu0 %v5711
    %6060 = vmatprep.subr.bf16.mxu0 %v5716
    %6061 = vmatpush1.bf16.msra.mxu0 %v5715
    %6062 = vmatprep.subr.bf16.mxu0 %v5720
    %6063 = vmatpush1.bf16.msra.mxu0 %v5719
    %6064 = vmatprep.subr.bf16.mxu0 %v5724
    %6065 = vmatpush1.bf16.msra.mxu0 %v5723
    %6066 = vmatprep.subr.bf16.mxu0 %v5728
    %6067 = vmatpush1.bf16.msra.mxu0 %v5727
    %6068 = vmatprep.mubr.bf16.mxu0 %v5940
    %6069 = vmatmul.mubr.bf16.gmra.mrb[0].mxu0 %v5939
    %v6070 = vpop.f32.mrb[0].mxu0
    %v6071 = vadd.f32 0.0, %v6070
    %v6072 = vpop.f32.mrb[0].mxu0
    %v6073 = vadd.f32 0.0, %v6072
    %v6074 = vpop.f32.mrb[0].mxu0
    %v6075 = vadd.f32 0.0, %v6074
    %v6076 = vpop.f32.mrb[0].mxu0
    %v6077 = vadd.f32 0.0, %v6076
    %6078 = vmatprep.mubr.bf16.mxu0 %v5945
    %6079 = vmatmul.mubr.bf16.gmra.mrb[0].mxu0 %v5944
    %v6080 = vpop.f32.mrb[0].mxu0
    %v6081 = vadd.f32 0.0, %v6080
    %v6082 = vpop.f32.mrb[0].mxu0
    %v6083 = vadd.f32 0.0, %v6082
    %v6084 = vpop.f32.mrb[0].mxu0
    %v6085 = vadd.f32 0.0, %v6084
    %v6086 = vpop.f32.mrb[0].mxu0
    %v6087 = vadd.f32 0.0, %v6086
    %6088 = vmatprep.mubr.bf16.mxu0 %v5950
    %6089 = vmatmul.mubr.bf16.gmra.mrb[0].mxu0 %v5949
    %v6090 = vpop.f32.mrb[0].mxu0
    %v6091 = vadd.f32 0.0, %v6090
    %v6092 = vpop.f32.mrb[0].mxu0
    %v6093 = vadd.f32 0.0, %v6092
    %v6094 = vpop.f32.mrb[0].mxu0
    %v6095 = vadd.f32 0.0, %v6094
    %v6096 = vpop.f32.mrb[0].mxu0
    %v6097 = vadd.f32 0.0, %v6096
    %6098 = vmatprep.mubr.bf16.mxu0 %v5955
    %6099 = vmatmul.mubr.bf16.gmra.mrb[0].mxu0 %v5954
    %v6100 = vpop.f32.mrb[0].mxu0
    %v6101 = vadd.f32 0.0, %v6100
    %v6102 = vpop.f32.mrb[0].mxu0
    %v6103 = vadd.f32 0.0, %v6102
    %v6104 = vpop.f32.mrb[0].mxu0
    %v6105 = vadd.f32 0.0, %v6104
    %v6106 = vpop.f32.mrb[0].mxu0
    %v6107 = vadd.f32 0.0, %v6106
    %6108 = vmatprep.mubr.bf16.mxu0 %v5960
    %6109 = vmatmul.mubr.bf16.gmra.mrb[0].mxu0 %v5959
    %v6110 = vpop.f32.mrb[0].mxu0
    %v6111 = vadd.f32 0.0, %v6110
    %v6112 = vpop.f32.mrb[0].mxu0
    %v6113 = vadd.f32 0.0, %v6112
    %v6114 = vpop.f32.mrb[0].mxu0
    %v6115 = vadd.f32 0.0, %v6114
    %v6116 = vpop.f32.mrb[0].mxu0
    %v6117 = vadd.f32 0.0, %v6116
    %6118 = vmatprep.mubr.bf16.mxu0 %v5965
    %6119 = vmatmul.mubr.bf16.gmra.mrb[0].mxu0 %v5964
    %v6120 = vpop.f32.mrb[0].mxu0
    %v6121 = vadd.f32 0.0, %v6120
    %v6122 = vpop.f32.mrb[0].mxu0
    %v6123 = vadd.f32 0.0, %v6122
    %v6124 = vpop.f32.mrb[0].mxu0
    %v6125 = vadd.f32 0.0, %v6124
    %v6126 = vpop.f32.mrb[0].mxu0
    %v6127 = vadd.f32 0.0, %v6126
    %6128 = vmatprep.mubr.bf16.mxu0 %v5970
    %6129 = vmatmul.mubr.bf16.gmra.mrb[0].mxu0 %v5969
    %v6130 = vpop.f32.mrb[0].mxu0
    %v6131 = vadd.f32 0.0, %v6130
    %v6132 = vpop.f32.mrb[0].mxu0
    %v6133 = vadd.f32 0.0, %v6132
    %v6134 = vpop.f32.mrb[0].mxu0
    %v6135 = vadd.f32 0.0, %v6134
    %v6136 = vpop.f32.mrb[0].mxu0
    %v6137 = vadd.f32 0.0, %v6136
    %6138 = vmatprep.mubr.bf16.mxu0 %v5975
    %6139 = vmatmul.mubr.bf16.gmra.mrb[0].mxu0 %v5974
    %v6140 = vpop.f32.mrb[0].mxu0
    %v6141 = vadd.f32 0.0, %v6140
    %v6142 = vpop.f32.mrb[0].mxu0
    %v6143 = vadd.f32 0.0, %v6142
    %v6144 = vpop.f32.mrb[0].mxu0
    %v6145 = vadd.f32 0.0, %v6144
    %v6146 = vpop.f32.mrb[0].mxu0
    %v6147 = vadd.f32 0.0, %v6146
    %6148 = vdwg.mxu0
    %6149 = vmatprep.subr.bf16.mxu0 %v5732
    %6150 = vmatpush1.bf16.msra.mxu0 %v5731
    %6151 = vmatprep.subr.bf16.mxu0 %v5736
    %6152 = vmatpush1.bf16.msra.mxu0 %v5735
    %6153 = vmatprep.subr.bf16.mxu0 %v5740
    %6154 = vmatpush1.bf16.msra.mxu0 %v5739
    %6155 = vmatprep.subr.bf16.mxu0 %v5744
    %6156 = vmatpush1.bf16.msra.mxu0 %v5743
    %6157 = vmatprep.subr.bf16.mxu0 %v5748
    %6158 = vmatpush1.bf16.msra.mxu0 %v5747
    %6159 = vmatprep.subr.bf16.mxu0 %v5752
    %6160 = vmatpush1.bf16.msra.mxu0 %v5751
    %6161 = vmatprep.subr.bf16.mxu0 %v5756
    %6162 = vmatpush1.bf16.msra.mxu0 %v5755
    %6163 = vmatprep.subr.bf16.mxu0 %v5760
    %6164 = vmatpush1.bf16.msra.mxu0 %v5759
    %6165 = vmatprep.subr.bf16.mxu0 %v5764
    %6166 = vmatpush1.bf16.msra.mxu0 %v5763
    %6167 = vmatprep.subr.bf16.mxu0 %v5768
    %6168 = vmatpush1.bf16.msra.mxu0 %v5767
    %6169 = vmatprep.subr.bf16.mxu0 %v5772
    %6170 = vmatpush1.bf16.msra.mxu0 %v5771
    %6171 = vmatprep.subr.bf16.mxu0 %v5776
    %6172 = vmatpush1.bf16.msra.mxu0 %v5775
    %6173 = vmatprep.subr.bf16.mxu0 %v5780
    %6174 = vmatpush1.bf16.msra.mxu0 %v5779
    %6175 = vmatprep.subr.bf16.mxu0 %v5784
    %6176 = vmatpush1.bf16.msra.mxu0 %v5783
    %6177 = vmatprep.subr.bf16.mxu0 %v5788
    %6178 = vmatpush1.bf16.msra.mxu0 %v5787
    %6179 = vmatprep.subr.bf16.mxu0 %v5792
    %6180 = vmatpush1.bf16.msra.mxu0 %v5791
    %6181 = vmatprep.mubr.bf16.mxu0 %v5942
    %6182 = vmatmul.mubr.bf16.gmra.mrb[0].mxu0 %v5941
    %v6183 = vpop.f32.mrb[0].mxu0
    %v6184 = vadd.f32 %v6071, %v6183
    %v6185 = vpop.f32.mrb[0].mxu0
    %v6186 = vadd.f32 %v6073, %v6185
    %v6187 = vpop.f32.mrb[0].mxu0
    %v6188 = vadd.f32 %v6075, %v6187
    %v6189 = vpop.f32.mrb[0].mxu0
    %v6190 = vadd.f32 %v6077, %v6189
    %6191 = vmatprep.mubr.bf16.mxu0 %v5947
    %6192 = vmatmul.mubr.bf16.gmra.mrb[0].mxu0 %v5946
    %v6193 = vpop.f32.mrb[0].mxu0
    %v6194 = vadd.f32 %v6081, %v6193
    %v6195 = vpop.f32.mrb[0].mxu0
    %v6196 = vadd.f32 %v6083, %v6195
    %v6197 = vpop.f32.mrb[0].mxu0
    %v6198 = vadd.f32 %v6085, %v6197
    %v6199 = vpop.f32.mrb[0].mxu0
    %v6200 = vadd.f32 %v6087, %v6199
    %6201 = vmatprep.mubr.bf16.mxu0 %v5952
    %6202 = vmatmul.mubr.bf16.gmra.mrb[0].mxu0 %v5951
    %v6203 = vpop.f32.mrb[0].mxu0
    %v6204 = vadd.f32 %v6091, %v6203
    %v6205 = vpop.f32.mrb[0].mxu0
    %v6206 = vadd.f32 %v6093, %v6205
    %v6207 = vpop.f32.mrb[0].mxu0
    %v6208 = vadd.f32 %v6095, %v6207
    %v6209 = vpop.f32.mrb[0].mxu0
    %v6210 = vadd.f32 %v6097, %v6209
    %6211 = vmatprep.mubr.bf16.mxu0 %v5957
    %6212 = vmatmul.mubr.bf16.gmra.mrb[0].mxu0 %v5956
    %v6213 = vpop.f32.mrb[0].mxu0
    %v6214 = vadd.f32 %v6101, %v6213
    %v6215 = vpop.f32.mrb[0].mxu0
    %v6216 = vadd.f32 %v6103, %v6215
    %v6217 = vpop.f32.mrb[0].mxu0
    %v6218 = vadd.f32 %v6105, %v6217
    %v6219 = vpop.f32.mrb[0].mxu0
    %v6220 = vadd.f32 %v6107, %v6219
    %6221 = vmatprep.mubr.bf16.mxu0 %v5962
    %6222 = vmatmul.mubr.bf16.gmra.mrb[0].mxu0 %v5961
    %v6223 = vpop.f32.mrb[0].mxu0
    %v6224 = vadd.f32 %v6111, %v6223
    %v6225 = vpop.f32.mrb[0].mxu0
    %v6226 = vadd.f32 %v6113, %v6225
    %v6227 = vpop.f32.mrb[0].mxu0
    %v6228 = vadd.f32 %v6115, %v6227
    %v6229 = vpop.f32.mrb[0].mxu0
    %v6230 = vadd.f32 %v6117, %v6229
    %6231 = vmatprep.mubr.bf16.mxu0 %v5967
    %6232 = vmatmul.mubr.bf16.gmra.mrb[0].mxu0 %v5966
    %v6233 = vpop.f32.mrb[0].mxu0
    %v6234 = vadd.f32 %v6121, %v6233
    %v6235 = vpop.f32.mrb[0].mxu0
    %v6236 = vadd.f32 %v6123, %v6235
    %v6237 = vpop.f32.mrb[0].mxu0
    %v6238 = vadd.f32 %v6125, %v6237
    %v6239 = vpop.f32.mrb[0].mxu0
    %v6240 = vadd.f32 %v6127, %v6239
    %6241 = vmatprep.mubr.bf16.mxu0 %v5972
    %6242 = vmatmul.mubr.bf16.gmra.mrb[0].mxu0 %v5971
    %v6243 = vpop.f32.mrb[0].mxu0
    %v6244 = vadd.f32 %v6131, %v6243
    %v6245 = vpop.f32.mrb[0].mxu0
    %v6246 = vadd.f32 %v6133, %v6245
    %v6247 = vpop.f32.mrb[0].mxu0
    %v6248 = vadd.f32 %v6135, %v6247
    %v6249 = vpop.f32.mrb[0].mxu0
    %v6250 = vadd.f32 %v6137, %v6249
    %6251 = vmatprep.mubr.bf16.mxu0 %v5977
    %6252 = vmatmul.mubr.bf16.gmra.mrb[0].mxu0 %v5976
    %v6253 = vpop.f32.mrb[0].mxu0
    %v6254 = vadd.f32 %v6141, %v6253
    %v6255 = vpop.f32.mrb[0].mxu0
    %v6256 = vadd.f32 %v6143, %v6255
    %v6257 = vpop.f32.mrb[0].mxu0
    %v6258 = vadd.f32 %v6145, %v6257
    %v6259 = vpop.f32.mrb[0].mxu0
    %v6260 = vadd.f32 %v6147, %v6259
    %6261 = vdwg.mxu0
    %6262 = vmatprep.subr.bf16.mxu0 %v5796
    %6263 = vmatpush1.bf16.msra.mxu0 %v5795
    %6264 = vmatprep.subr.bf16.mxu0 %v5800
    %6265 = vmatpush1.bf16.msra.mxu0 %v5799
    %6266 = vmatprep.subr.bf16.mxu0 %v5804
    %6267 = vmatpush1.bf16.msra.mxu0 %v5803
    %6268 = vmatprep.subr.bf16.mxu0 %v5808
    %6269 = vmatpush1.bf16.msra.mxu0 %v5807
    %6270 = vmatprep.subr.bf16.mxu0 0
    %6271 = vmatpush1.bf16.msra.mxu0 0
    %6272 = vmatprep.subr.bf16.mxu0 0
    %6273 = vmatpush1.bf16.msra.mxu0 0
    %6274 = vmatprep.subr.bf16.mxu0 0
    %6275 = vmatpush1.bf16.msra.mxu0 0
    %6276 = vmatprep.subr.bf16.mxu0 0
    %6277 = vmatpush1.bf16.msra.mxu0 0
    %6278 = vmatprep.subr.bf16.mxu0 0
    %6279 = vmatpush1.bf16.msra.mxu0 0
    %6280 = vmatprep.subr.bf16.mxu0 0
    %6281 = vmatpush1.bf16.msra.mxu0 0
    %6282 = vmatprep.subr.bf16.mxu0 0
    %6283 = vmatpush1.bf16.msra.mxu0 0
    %6284 = vmatprep.subr.bf16.mxu0 0
    %6285 = vmatpush1.bf16.msra.mxu0 0
    %6286 = vmatprep.subr.bf16.mxu0 0
    %6287 = vmatpush1.bf16.msra.mxu0 0
    %6288 = vmatprep.subr.bf16.mxu0 0
    %6289 = vmatpush1.bf16.msra.mxu0 0
    %6290 = vmatprep.subr.bf16.mxu0 0
    %6291 = vmatpush1.bf16.msra.mxu0 0
    %6292 = vmatprep.subr.bf16.mxu0 0
    %6293 = vmatpush1.bf16.msra.mxu0 0
    %6294 = vmatprep.mubr.bf16.mxu0 0
    %6295 = vmatmul.mubr.bf16.gmra.mrb[0].mxu0 %v6013
    %v6296 = vpop.f32.mrb[0].mxu0
    %v6297 = vadd.f32 %v6184, %v6296
    %v6298 = vpop.f32.mrb[0].mxu0
    %v6299 = vadd.f32 %v6186, %v6298
    %v6300 = vpop.f32.mrb[0].mxu0
    %v6301 = vadd.f32 %v6188, %v6300
    %v6302 = vpop.f32.mrb[0].mxu0
    %v6303 = vadd.f32 %v6190, %v6302
    %6304 = vmatprep.mubr.bf16.mxu0 0
    %6305 = vmatmul.mubr.bf16.gmra.mrb[0].mxu0 %v6016
    %v6306 = vpop.f32.mrb[0].mxu0
    %v6307 = vadd.f32 %v6194, %v6306
    %v6308 = vpop.f32.mrb[0].mxu0
    %v6309 = vadd.f32 %v6196, %v6308
    %v6310 = vpop.f32.mrb[0].mxu0
    %v6311 = vadd.f32 %v6198, %v6310
    %v6312 = vpop.f32.mrb[0].mxu0
    %v6313 = vadd.f32 %v6200, %v6312
    %6314 = vmatprep.mubr.bf16.mxu0 0
    %6315 = vmatmul.mubr.bf16.gmra.mrb[0].mxu0 %v6019
    %v6316 = vpop.f32.mrb[0].mxu0
    %v6317 = vadd.f32 %v6204, %v6316
    %v6318 = vpop.f32.mrb[0].mxu0
    %v6319 = vadd.f32 %v6206, %v6318
    %v6320 = vpop.f32.mrb[0].mxu0
    %v6321 = vadd.f32 %v6208, %v6320
    %v6322 = vpop.f32.mrb[0].mxu0
    %v6323 = vadd.f32 %v6210, %v6322
    %6324 = vmatprep.mubr.bf16.mxu0 0
    %6325 = vmatmul.mubr.bf16.gmra.mrb[0].mxu0 %v6022
    %v6326 = vpop.f32.mrb[0].mxu0
    %v6327 = vadd.f32 %v6214, %v6326
    %v6328 = vpop.f32.mrb[0].mxu0
    %v6329 = vadd.f32 %v6216, %v6328
    %v6330 = vpop.f32.mrb[0].mxu0
    %v6331 = vadd.f32 %v6218, %v6330
    %v6332 = vpop.f32.mrb[0].mxu0
    %v6333 = vadd.f32 %v6220, %v6332
    %6334 = vmatprep.mubr.bf16.mxu0 0
    %6335 = vmatmul.mubr.bf16.gmra.mrb[0].mxu0 %v6025
    %v6336 = vpop.f32.mrb[0].mxu0
    %v6337 = vadd.f32 %v6224, %v6336
    %v6338 = vpop.f32.mrb[0].mxu0
    %v6339 = vadd.f32 %v6226, %v6338
    %v6340 = vpop.f32.mrb[0].mxu0
    %v6341 = vadd.f32 %v6228, %v6340
    %v6342 = vpop.f32.mrb[0].mxu0
    %v6343 = vadd.f32 %v6230, %v6342
    %6344 = vmatprep.mubr.bf16.mxu0 0
    %6345 = vmatmul.mubr.bf16.gmra.mrb[0].mxu0 %v6028
    %v6346 = vpop.f32.mrb[0].mxu0
    %v6347 = vadd.f32 %v6234, %v6346
    %v6348 = vpop.f32.mrb[0].mxu0
    %v6349 = vadd.f32 %v6236, %v6348
    %v6350 = vpop.f32.mrb[0].mxu0
    %v6351 = vadd.f32 %v6238, %v6350
    %v6352 = vpop.f32.mrb[0].mxu0
    %v6353 = vadd.f32 %v6240, %v6352
    %6354 = vmatprep.mubr.bf16.mxu0 0
    %6355 = vmatmul.mubr.bf16.gmra.mrb[0].mxu0 %v6031
    %v6356 = vpop.f32.mrb[0].mxu0
    %v6357 = vadd.f32 %v6244, %v6356
    %v6358 = vpop.f32.mrb[0].mxu0
    %v6359 = vadd.f32 %v6246, %v6358
    %v6360 = vpop.f32.mrb[0].mxu0
    %v6361 = vadd.f32 %v6248, %v6360
    %v6362 = vpop.f32.mrb[0].mxu0
    %v6363 = vadd.f32 %v6250, %v6362
    %6364 = vmatprep.mubr.bf16.mxu0 0
    %6365 = vmatmul.mubr.bf16.gmra.mrb[0].mxu0 %v6034
    %v6366 = vpop.f32.mrb[0].mxu0
    %v6367 = vadd.f32 %v6254, %v6366
    %v6368 = vpop.f32.mrb[0].mxu0
    %v6369 = vadd.f32 %v6256, %v6368
    %v6370 = vpop.f32.mrb[0].mxu0
    %v6371 = vadd.f32 %v6258, %v6370
    %v6372 = vpop.f32.mrb[0].mxu0
    %v6373 = vadd.f32 %v6260, %v6372
    %6374 = vdwg.mxu0
    %6375 = vmatprep.subr.bf16.mxu0 %v5670
    %6376 = vmatpush1.bf16.msra.mxu0 %v5669
    %6377 = vmatprep.subr.bf16.mxu0 %v5674
    %6378 = vmatpush1.bf16.msra.mxu0 %v5673
    %6379 = vmatprep.subr.bf16.mxu0 %v5678
    %6380 = vmatpush1.bf16.msra.mxu0 %v5677
    %6381 = vmatprep.subr.bf16.mxu0 %v5682
    %6382 = vmatpush1.bf16.msra.mxu0 %v5681
    %6383 = vmatprep.subr.bf16.mxu0 %v5686
    %6384 = vmatpush1.bf16.msra.mxu0 %v5685
    %6385 = vmatprep.subr.bf16.mxu0 %v5690
    %6386 = vmatpush1.bf16.msra.mxu0 %v5689
    %6387 = vmatprep.subr.bf16.mxu0 %v5694
    %6388 = vmatpush1.bf16.msra.mxu0 %v5693
    %6389 = vmatprep.subr.bf16.mxu0 %v5698
    %6390 = vmatpush1.bf16.msra.mxu0 %v5697
    %6391 = vmatprep.subr.bf16.mxu0 %v5702
    %6392 = vmatpush1.bf16.msra.mxu0 %v5701
    %6393 = vmatprep.subr.bf16.mxu0 %v5706
    %6394 = vmatpush1.bf16.msra.mxu0 %v5705
    %6395 = vmatprep.subr.bf16.mxu0 %v5710
    %6396 = vmatpush1.bf16.msra.mxu0 %v5709
    %6397 = vmatprep.subr.bf16.mxu0 %v5714
    %6398 = vmatpush1.bf16.msra.mxu0 %v5713
    %6399 = vmatprep.subr.bf16.mxu0 %v5718
    %6400 = vmatpush1.bf16.msra.mxu0 %v5717
    %6401 = vmatprep.subr.bf16.mxu0 %v5722
    %6402 = vmatpush1.bf16.msra.mxu0 %v5721
    %6403 = vmatprep.subr.bf16.mxu0 %v5726
    %6404 = vmatpush1.bf16.msra.mxu0 %v5725
    %6405 = vmatprep.subr.bf16.mxu0 %v5730
    %6406 = vmatpush1.bf16.msra.mxu0 %v5729
    %6407 = vmatprep.mubr.bf16.mxu0 %v5940
    %6408 = vmatmul.mubr.bf16.gmra.mrb[0].mxu0 %v5939
    %v6409 = vpop.f32.mrb[0].mxu0
    %v6410 = vadd.f32 0.0, %v6409
    %v6411 = vpop.f32.mrb[0].mxu0
    %v6412 = vadd.f32 0.0, %v6411
    %v6413 = vpop.f32.mrb[0].mxu0
    %v6414 = vadd.f32 0.0, %v6413
    %v6415 = vpop.f32.mrb[0].mxu0
    %v6416 = vadd.f32 0.0, %v6415
    %6417 = vmatprep.mubr.bf16.mxu0 %v5945
    %6418 = vmatmul.mubr.bf16.gmra.mrb[0].mxu0 %v5944
    %v6419 = vpop.f32.mrb[0].mxu0
    %v6420 = vadd.f32 0.0, %v6419
    %v6421 = vpop.f32.mrb[0].mxu0
    %v6422 = vadd.f32 0.0, %v6421
    %v6423 = vpop.f32.mrb[0].mxu0
    %v6424 = vadd.f32 0.0, %v6423
    %v6425 = vpop.f32.mrb[0].mxu0
    %v6426 = vadd.f32 0.0, %v6425
    %6427 = vmatprep.mubr.bf16.mxu0 %v5950
    %6428 = vmatmul.mubr.bf16.gmra.mrb[0].mxu0 %v5949
    %v6429 = vpop.f32.mrb[0].mxu0
    %v6430 = vadd.f32 0.0, %v6429
    %v6431 = vpop.f32.mrb[0].mxu0
    %v6432 = vadd.f32 0.0, %v6431
    %v6433 = vpop.f32.mrb[0].mxu0
    %v6434 = vadd.f32 0.0, %v6433
    %v6435 = vpop.f32.mrb[0].mxu0
    %v6436 = vadd.f32 0.0, %v6435
    %6437 = vmatprep.mubr.bf16.mxu0 %v5955
    %6438 = vmatmul.mubr.bf16.gmra.mrb[0].mxu0 %v5954
    %v6439 = vpop.f32.mrb[0].mxu0
    %v6440 = vadd.f32 0.0, %v6439
    %v6441 = vpop.f32.mrb[0].mxu0
    %v6442 = vadd.f32 0.0, %v6441
    %v6443 = vpop.f32.mrb[0].mxu0
    %v6444 = vadd.f32 0.0, %v6443
    %v6445 = vpop.f32.mrb[0].mxu0
    %v6446 = vadd.f32 0.0, %v6445
    %6447 = vmatprep.mubr.bf16.mxu0 %v5960
    %6448 = vmatmul.mubr.bf16.gmra.mrb[0].mxu0 %v5959
    %v6449 = vpop.f32.mrb[0].mxu0
    %v6450 = vadd.f32 0.0, %v6449
    %v6451 = vpop.f32.mrb[0].mxu0
    %v6452 = vadd.f32 0.0, %v6451
    %v6453 = vpop.f32.mrb[0].mxu0
    %v6454 = vadd.f32 0.0, %v6453
    %v6455 = vpop.f32.mrb[0].mxu0
    %v6456 = vadd.f32 0.0, %v6455
    %6457 = vmatprep.mubr.bf16.mxu0 %v5965
    %6458 = vmatmul.mubr.bf16.gmra.mrb[0].mxu0 %v5964
    %v6459 = vpop.f32.mrb[0].mxu0
    %v6460 = vadd.f32 0.0, %v6459
    %v6461 = vpop.f32.mrb[0].mxu0
    %v6462 = vadd.f32 0.0, %v6461
    %v6463 = vpop.f32.mrb[0].mxu0
    %v6464 = vadd.f32 0.0, %v6463
    %v6465 = vpop.f32.mrb[0].mxu0
    %v6466 = vadd.f32 0.0, %v6465
    %6467 = vmatprep.mubr.bf16.mxu0 %v5970
    %6468 = vmatmul.mubr.bf16.gmra.mrb[0].mxu0 %v5969
    %v6469 = vpop.f32.mrb[0].mxu0
    %v6470 = vadd.f32 0.0, %v6469
    %v6471 = vpop.f32.mrb[0].mxu0
    %v6472 = vadd.f32 0.0, %v6471
    %v6473 = vpop.f32.mrb[0].mxu0
    %v6474 = vadd.f32 0.0, %v6473
    %v6475 = vpop.f32.mrb[0].mxu0
    %v6476 = vadd.f32 0.0, %v6475
    %6477 = vmatprep.mubr.bf16.mxu0 %v5975
    %6478 = vmatmul.mubr.bf16.gmra.mrb[0].mxu0 %v5974
    %v6479 = vpop.f32.mrb[0].mxu0
    %v6480 = vadd.f32 0.0, %v6479
    %v6481 = vpop.f32.mrb[0].mxu0
    %v6482 = vadd.f32 0.0, %v6481
    %v6483 = vpop.f32.mrb[0].mxu0
    %v6484 = vadd.f32 0.0, %v6483
    %v6485 = vpop.f32.mrb[0].mxu0
    %v6486 = vadd.f32 0.0, %v6485
    %6487 = vdwg.mxu0
    %6488 = vmatprep.subr.bf16.mxu0 %v5734
    %6489 = vmatpush1.bf16.msra.mxu0 %v5733
    %6490 = vmatprep.subr.bf16.mxu0 %v5738
    %6491 = vmatpush1.bf16.msra.mxu0 %v5737
    %6492 = vmatprep.subr.bf16.mxu0 %v5742
    %6493 = vmatpush1.bf16.msra.mxu0 %v5741
    %6494 = vmatprep.subr.bf16.mxu0 %v5746
    %6495 = vmatpush1.bf16.msra.mxu0 %v5745
    %6496 = vmatprep.subr.bf16.mxu0 %v5750
    %6497 = vmatpush1.bf16.msra.mxu0 %v5749
    %6498 = vmatprep.subr.bf16.mxu0 %v5754
    %6499 = vmatpush1.bf16.msra.mxu0 %v5753
    %6500 = vmatprep.subr.bf16.mxu0 %v5758
    %6501 = vmatpush1.bf16.msra.mxu0 %v5757
    %6502 = vmatprep.subr.bf16.mxu0 %v5762
    %6503 = vmatpush1.bf16.msra.mxu0 %v5761
    %6504 = vmatprep.subr.bf16.mxu0 %v5766
    %6505 = vmatpush1.bf16.msra.mxu0 %v5765
    %6506 = vmatprep.subr.bf16.mxu0 %v5770
    %6507 = vmatpush1.bf16.msra.mxu0 %v5769
    %6508 = vmatprep.subr.bf16.mxu0 %v5774
    %6509 = vmatpush1.bf16.msra.mxu0 %v5773
    %6510 = vmatprep.subr.bf16.mxu0 %v5778
    %6511 = vmatpush1.bf16.msra.mxu0 %v5777
    %6512 = vmatprep.subr.bf16.mxu0 %v5782
    %6513 = vmatpush1.bf16.msra.mxu0 %v5781
    %6514 = vmatprep.subr.bf16.mxu0 %v5786
    %6515 = vmatpush1.bf16.msra.mxu0 %v5785
    %6516 = vmatprep.subr.bf16.mxu0 %v5790
    %6517 = vmatpush1.bf16.msra.mxu0 %v5789
    %6518 = vmatprep.subr.bf16.mxu0 %v5794
    %6519 = vmatpush1.bf16.msra.mxu0 %v5793
    %6520 = vmatprep.mubr.bf16.mxu0 %v5942
    %6521 = vmatmul.mubr.bf16.gmra.mrb[0].mxu0 %v5941
    %v6522 = vpop.f32.mrb[0].mxu0
    %v6523 = vadd.f32 %v6410, %v6522
    %v6524 = vpop.f32.mrb[0].mxu0
    %v6525 = vadd.f32 %v6412, %v6524
    %v6526 = vpop.f32.mrb[0].mxu0
    %v6527 = vadd.f32 %v6414, %v6526
    %v6528 = vpop.f32.mrb[0].mxu0
    %v6529 = vadd.f32 %v6416, %v6528
    %6530 = vmatprep.mubr.bf16.mxu0 %v5947
    %6531 = vmatmul.mubr.bf16.gmra.mrb[0].mxu0 %v5946
    %v6532 = vpop.f32.mrb[0].mxu0
    %v6533 = vadd.f32 %v6420, %v6532
    %v6534 = vpop.f32.mrb[0].mxu0
    %v6535 = vadd.f32 %v6422, %v6534
    %v6536 = vpop.f32.mrb[0].mxu0
    %v6537 = vadd.f32 %v6424, %v6536
    %v6538 = vpop.f32.mrb[0].mxu0
    %v6539 = vadd.f32 %v6426, %v6538
    %6540 = vmatprep.mubr.bf16.mxu0 %v5952
    %6541 = vmatmul.mubr.bf16.gmra.mrb[0].mxu0 %v5951
    %v6542 = vpop.f32.mrb[0].mxu0
    %v6543 = vadd.f32 %v6430, %v6542
    %v6544 = vpop.f32.mrb[0].mxu0
    %v6545 = vadd.f32 %v6432, %v6544
    %v6546 = vpop.f32.mrb[0].mxu0
    %v6547 = vadd.f32 %v6434, %v6546
    %v6548 = vpop.f32.mrb[0].mxu0
    %v6549 = vadd.f32 %v6436, %v6548
    %6550 = vmatprep.mubr.bf16.mxu0 %v5957
    %6551 = vmatmul.mubr.bf16.gmra.mrb[0].mxu0 %v5956
    %v6552 = vpop.f32.mrb[0].mxu0
    %v6553 = vadd.f32 %v6440, %v6552
    %v6554 = vpop.f32.mrb[0].mxu0
    %v6555 = vadd.f32 %v6442, %v6554
    %v6556 = vpop.f32.mrb[0].mxu0
    %v6557 = vadd.f32 %v6444, %v6556
    %v6558 = vpop.f32.mrb[0].mxu0
    %v6559 = vadd.f32 %v6446, %v6558
    %6560 = vmatprep.mubr.bf16.mxu0 %v5962
    %6561 = vmatmul.mubr.bf16.gmra.mrb[0].mxu0 %v5961
    %v6562 = vpop.f32.mrb[0].mxu0
    %v6563 = vadd.f32 %v6450, %v6562
    %v6564 = vpop.f32.mrb[0].mxu0
    %v6565 = vadd.f32 %v6452, %v6564
    %v6566 = vpop.f32.mrb[0].mxu0
    %v6567 = vadd.f32 %v6454, %v6566
    %v6568 = vpop.f32.mrb[0].mxu0
    %v6569 = vadd.f32 %v6456, %v6568
    %6570 = vmatprep.mubr.bf16.mxu0 %v5967
    %6571 = vmatmul.mubr.bf16.gmra.mrb[0].mxu0 %v5966
    %v6572 = vpop.f32.mrb[0].mxu0
    %v6573 = vadd.f32 %v6460, %v6572
    %v6574 = vpop.f32.mrb[0].mxu0
    %v6575 = vadd.f32 %v6462, %v6574
    %v6576 = vpop.f32.mrb[0].mxu0
    %v6577 = vadd.f32 %v6464, %v6576
    %v6578 = vpop.f32.mrb[0].mxu0
    %v6579 = vadd.f32 %v6466, %v6578
    %6580 = vmatprep.mubr.bf16.mxu0 %v5972
    %6581 = vmatmul.mubr.bf16.gmra.mrb[0].mxu0 %v5971
    %v6582 = vpop.f32.mrb[0].mxu0
    %v6583 = vadd.f32 %v6470, %v6582
    %v6584 = vpop.f32.mrb[0].mxu0
    %v6585 = vadd.f32 %v6472, %v6584
    %v6586 = vpop.f32.mrb[0].mxu0
    %v6587 = vadd.f32 %v6474, %v6586
    %v6588 = vpop.f32.mrb[0].mxu0
    %v6589 = vadd.f32 %v6476, %v6588
    %6590 = vmatprep.mubr.bf16.mxu0 %v5977
    %6591 = vmatmul.mubr.bf16.gmra.mrb[0].mxu0 %v5976
    %v6592 = vpop.f32.mrb[0].mxu0
    %v6593 = vadd.f32 %v6480, %v6592
    %v6594 = vpop.f32.mrb[0].mxu0
    %v6595 = vadd.f32 %v6482, %v6594
    %v6596 = vpop.f32.mrb[0].mxu0
    %v6597 = vadd.f32 %v6484, %v6596
    %v6598 = vpop.f32.mrb[0].mxu0
    %v6599 = vadd.f32 %v6486, %v6598
    %6600 = vdwg.mxu0
    %6601 = vmatprep.subr.bf16.mxu0 %v5798
    %6602 = vmatpush1.bf16.msra.mxu0 %v5797
    %6603 = vmatprep.subr.bf16.mxu0 %v5802
    %6604 = vmatpush1.bf16.msra.mxu0 %v5801
    %6605 = vmatprep.subr.bf16.mxu0 %v5806
    %6606 = vmatpush1.bf16.msra.mxu0 %v5805
    %6607 = vmatprep.subr.bf16.mxu0 %v5810
    %6608 = vmatpush1.bf16.msra.mxu0 %v5809
    %6609 = vmatprep.subr.bf16.mxu0 0
    %6610 = vmatpush1.bf16.msra.mxu0 0
    %6611 = vmatprep.subr.bf16.mxu0 0
    %6612 = vmatpush1.bf16.msra.mxu0 0
    %6613 = vmatprep.subr.bf16.mxu0 0
    %6614 = vmatpush1.bf16.msra.mxu0 0
    %6615 = vmatprep.subr.bf16.mxu0 0
    %6616 = vmatpush1.bf16.msra.mxu0 0
    %6617 = vmatprep.subr.bf16.mxu0 0
    %6618 = vmatpush1.bf16.msra.mxu0 0
    %6619 = vmatprep.subr.bf16.mxu0 0
    %6620 = vmatpush1.bf16.msra.mxu0 0
    %6621 = vmatprep.subr.bf16.mxu0 0
    %6622 = vmatpush1.bf16.msra.mxu0 0
    %6623 = vmatprep.subr.bf16.mxu0 0
    %6624 = vmatpush1.bf16.msra.mxu0 0
    %6625 = vmatprep.subr.bf16.mxu0 0
    %6626 = vmatpush1.bf16.msra.mxu0 0
    %6627 = vmatprep.subr.bf16.mxu0 0
    %6628 = vmatpush1.bf16.msra.mxu0 0
    %6629 = vmatprep.subr.bf16.mxu0 0
    %6630 = vmatpush1.bf16.msra.mxu0 0
    %6631 = vmatprep.subr.bf16.mxu0 0
    %6632 = vmatpush1.bf16.msra.mxu0 0
    %6633 = vmatprep.mubr.bf16.mxu0 0
    %6634 = vmatmul.mubr.bf16.gmra.mrb[0].mxu0 %v6013
    %v6635 = vpop.f32.mrb[0].mxu0
    %v6636 = vadd.f32 %v6523, %v6635
    %v6637 = vpop.f32.mrb[0].mxu0
    %v6638 = vadd.f32 %v6525, %v6637
    %v6639 = vpop.f32.mrb[0].mxu0
    %v6640 = vadd.f32 %v6527, %v6639
    %v6641 = vpop.f32.mrb[0].mxu0
    %v6642 = vadd.f32 %v6529, %v6641
    %6643 = vmatprep.mubr.bf16.mxu0 0
    %6644 = vmatmul.mubr.bf16.gmra.mrb[0].mxu0 %v6016
    %v6645 = vpop.f32.mrb[0].mxu0
    %v6646 = vadd.f32 %v6533, %v6645
    %v6647 = vpop.f32.mrb[0].mxu0
    %v6648 = vadd.f32 %v6535, %v6647
    %v6649 = vpop.f32.mrb[0].mxu0
    %v6650 = vadd.f32 %v6537, %v6649
    %v6651 = vpop.f32.mrb[0].mxu0
    %v6652 = vadd.f32 %v6539, %v6651
    %6653 = vmatprep.mubr.bf16.mxu0 0
    %6654 = vmatmul.mubr.bf16.gmra.mrb[0].mxu0 %v6019
    %v6655 = vpop.f32.mrb[0].mxu0
    %v6656 = vadd.f32 %v6543, %v6655
    %v6657 = vpop.f32.mrb[0].mxu0
    %v6658 = vadd.f32 %v6545, %v6657
    %v6659 = vpop.f32.mrb[0].mxu0
    %v6660 = vadd.f32 %v6547, %v6659
    %v6661 = vpop.f32.mrb[0].mxu0
    %v6662 = vadd.f32 %v6549, %v6661
    %6663 = vmatprep.mubr.bf16.mxu0 0
    %6664 = vmatmul.mubr.bf16.gmra.mrb[0].mxu0 %v6022
    %v6665 = vpop.f32.mrb[0].mxu0
    %v6666 = vadd.f32 %v6553, %v6665
    %v6667 = vpop.f32.mrb[0].mxu0
    %v6668 = vadd.f32 %v6555, %v6667
    %v6669 = vpop.f32.mrb[0].mxu0
    %v6670 = vadd.f32 %v6557, %v6669
    %v6671 = vpop.f32.mrb[0].mxu0
    %v6672 = vadd.f32 %v6559, %v6671
    %6673 = vmatprep.mubr.bf16.mxu0 0
    %6674 = vmatmul.mubr.bf16.gmra.mrb[0].mxu0 %v6025
    %v6675 = vpop.f32.mrb[0].mxu0
    %v6676 = vadd.f32 %v6563, %v6675
    %v6677 = vpop.f32.mrb[0].mxu0
    %v6678 = vadd.f32 %v6565, %v6677
    %v6679 = vpop.f32.mrb[0].mxu0
    %v6680 = vadd.f32 %v6567, %v6679
    %v6681 = vpop.f32.mrb[0].mxu0
    %v6682 = vadd.f32 %v6569, %v6681
    %6683 = vmatprep.mubr.bf16.mxu0 0
    %6684 = vmatmul.mubr.bf16.gmra.mrb[0].mxu0 %v6028
    %v6685 = vpop.f32.mrb[0].mxu0
    %v6686 = vadd.f32 %v6573, %v6685
    %v6687 = vpop.f32.mrb[0].mxu0
    %v6688 = vadd.f32 %v6575, %v6687
    %v6689 = vpop.f32.mrb[0].mxu0
    %v6690 = vadd.f32 %v6577, %v6689
    %v6691 = vpop.f32.mrb[0].mxu0
    %v6692 = vadd.f32 %v6579, %v6691
    %6693 = vmatprep.mubr.bf16.mxu0 0
    %6694 = vmatmul.mubr.bf16.gmra.mrb[0].mxu0 %v6031
    %v6695 = vpop.f32.mrb[0].mxu0
    %v6696 = vadd.f32 %v6583, %v6695
    %v6697 = vpop.f32.mrb[0].mxu0
    %v6698 = vadd.f32 %v6585, %v6697
    %v6699 = vpop.f32.mrb[0].mxu0
    %v6700 = vadd.f32 %v6587, %v6699
    %v6701 = vpop.f32.mrb[0].mxu0
    %v6702 = vadd.f32 %v6589, %v6701
    %6703 = vmatprep.mubr.bf16.mxu0 0
    %6704 = vmatmul.mubr.bf16.gmra.mrb[0].mxu0 %v6034
    %v6705 = vpop.f32.mrb[0].mxu0
    %v6706 = vadd.f32 %v6593, %v6705
    %v6707 = vpop.f32.mrb[0].mxu0
    %v6708 = vadd.f32 %v6595, %v6707
    %v6709 = vpop.f32.mrb[0].mxu0
    %v6710 = vadd.f32 %v6597, %v6709
    %v6711 = vpop.f32.mrb[0].mxu0
    %v6712 = vadd.f32 %v6599, %v6711
    %6713 = vdwg.mxu0
    %v6714 = vld [vmem:[%s8] sm:$0xff]
    %v6715 = vld [vmem:[%s8 + $0x8] sm:$0xff]
    %v6716 = vld [vmem:[%s8 + $0x10] sm:$0xff]
    %v6717 = vld [vmem:[%s8 + $0x18] sm:$0xff]
    %v6718 = vld [vmem:[%s8 + $0x20] sm:$0xff]
    %v6719 = vld [vmem:[%s8 + $0x28] sm:$0xff]
    %v6720 = vld [vmem:[%s8 + $0x30] sm:$0xff]
    %v6721 = vld [vmem:[%s8 + $0x38] sm:$0xff]
    %v6722 = vld [vmem:[%s8 + $0x40] sm:$0xff]
    %v6723 = vld [vmem:[%s8 + $0x48] sm:$0xff]
    %v6724 = vld [vmem:[%s8 + $0x50] sm:$0xff]
    %v6725 = vld [vmem:[%s8 + $0x58] sm:$0xff]
    %v6726 = vld [vmem:[%s8 + $0x60] sm:$0xff]
    %v6727 = vld [vmem:[%s8 + $0x68] sm:$0xff]
    %v6728 = vld [vmem:[%s8 + $0x70] sm:$0xff]
    %v6729 = vld [vmem:[%s8 + $0x78] sm:$0xff]
    %6731 = vset.pattern.permute.xlu0 0
    %6732 = vperm.xlu0 %6731, %v6714
    %v6733 = vpop.permute.xlu0 %6732
    %6736 = vset.pattern.permute.xlu0 0
    %6737 = vperm.xlu0 %6736, %v6715
    %v6738 = vpop.permute.xlu0 %6737
    %6741 = vset.pattern.permute.xlu0 0
    %6742 = vperm.xlu0 %6741, %v6716
    %v6743 = vpop.permute.xlu0 %6742
    %6746 = vset.pattern.permute.xlu0 0
    %6747 = vperm.xlu0 %6746, %v6717
    %v6748 = vpop.permute.xlu0 %6747
    %6751 = vset.pattern.permute.xlu0 0
    %6752 = vperm.xlu0 %6751, %v6718
    %v6753 = vpop.permute.xlu0 %6752
    %6756 = vset.pattern.permute.xlu0 0
    %6757 = vperm.xlu0 %6756, %v6719
    %v6758 = vpop.permute.xlu0 %6757
    %6761 = vset.pattern.permute.xlu0 0
    %6762 = vperm.xlu0 %6761, %v6720
    %v6763 = vpop.permute.xlu0 %6762
    %6766 = vset.pattern.permute.xlu0 0
    %6767 = vperm.xlu0 %6766, %v6721
    %v6768 = vpop.permute.xlu0 %6767
    %6771 = vset.pattern.permute.xlu0 0
    %6772 = vperm.xlu0 %6771, %v6722
    %v6773 = vpop.permute.xlu0 %6772
    %6776 = vset.pattern.permute.xlu0 0
    %6777 = vperm.xlu0 %6776, %v6723
    %v6778 = vpop.permute.xlu0 %6777
    %6781 = vset.pattern.permute.xlu0 0
    %6782 = vperm.xlu0 %6781, %v6724
    %v6783 = vpop.permute.xlu0 %6782
    %6786 = vset.pattern.permute.xlu0 0
    %6787 = vperm.xlu0 %6786, %v6725
    %v6788 = vpop.permute.xlu0 %6787
    %6791 = vset.pattern.permute.xlu0 0
    %6792 = vperm.xlu0 %6791, %v6726
    %v6793 = vpop.permute.xlu0 %6792
    %6796 = vset.pattern.permute.xlu0 0
    %6797 = vperm.xlu0 %6796, %v6727
    %v6798 = vpop.permute.xlu0 %6797
    %6801 = vset.pattern.permute.xlu0 0
    %6802 = vperm.xlu0 %6801, %v6728
    %v6803 = vpop.permute.xlu0 %6802
    %6806 = vset.pattern.permute.xlu0 0
    %6807 = vperm.xlu0 %6806, %v6729
    %v6808 = vpop.permute.xlu0 %6807
    %v6810 = vmul.f32 %v6297, %v6733
    %v6811 = vmul.f32 %v6299, %v6733
    %v6812 = vmul.f32 %v6636, %v6733
    %v6813 = vmul.f32 %v6638, %v6733
    %v6814 = vmul.f32 %v6301, %v6738
    %v6815 = vmul.f32 %v6303, %v6738
    %v6816 = vmul.f32 %v6640, %v6738
    %v6817 = vmul.f32 %v6642, %v6738
    %v6818 = vmul.f32 %v6307, %v6743
    %v6819 = vmul.f32 %v6309, %v6743
    %v6820 = vmul.f32 %v6646, %v6743
    %v6821 = vmul.f32 %v6648, %v6743
    %v6822 = vmul.f32 %v6311, %v6748
    %v6823 = vmul.f32 %v6313, %v6748
    %v6824 = vmul.f32 %v6650, %v6748
    %v6825 = vmul.f32 %v6652, %v6748
    %v6826 = vmul.f32 %v6317, %v6753
    %v6827 = vmul.f32 %v6319, %v6753
    %v6828 = vmul.f32 %v6656, %v6753
    %v6829 = vmul.f32 %v6658, %v6753
    %v6830 = vmul.f32 %v6321, %v6758
    %v6831 = vmul.f32 %v6323, %v6758
    %v6832 = vmul.f32 %v6660, %v6758
    %v6833 = vmul.f32 %v6662, %v6758
    %v6834 = vmul.f32 %v6327, %v6763
    %v6835 = vmul.f32 %v6329, %v6763
    %v6836 = vmul.f32 %v6666, %v6763
    %v6837 = vmul.f32 %v6668, %v6763
    %v6838 = vmul.f32 %v6331, %v6768
    %v6839 = vmul.f32 %v6333, %v6768
    %v6840 = vmul.f32 %v6670, %v6768
    %v6841 = vmul.f32 %v6672, %v6768
    %v6842 = vmul.f32 %v6337, %v6773
    %v6843 = vmul.f32 %v6339, %v6773
    %v6844 = vmul.f32 %v6676, %v6773
    %v6845 = vmul.f32 %v6678, %v6773
    %v6846 = vmul.f32 %v6341, %v6778
    %v6847 = vmul.f32 %v6343, %v6778
    %v6848 = vmul.f32 %v6680, %v6778
    %v6849 = vmul.f32 %v6682, %v6778
    %v6850 = vmul.f32 %v6347, %v6783
    %v6851 = vmul.f32 %v6349, %v6783
    %v6852 = vmul.f32 %v6686, %v6783
    %v6853 = vmul.f32 %v6688, %v6783
    %v6854 = vmul.f32 %v6351, %v6788
    %v6855 = vmul.f32 %v6353, %v6788
    %v6856 = vmul.f32 %v6690, %v6788
    %v6857 = vmul.f32 %v6692, %v6788
    %v6858 = vmul.f32 %v6357, %v6793
    %v6859 = vmul.f32 %v6359, %v6793
    %v6860 = vmul.f32 %v6696, %v6793
    %v6861 = vmul.f32 %v6698, %v6793
    %v6862 = vmul.f32 %v6361, %v6798
    %v6863 = vmul.f32 %v6363, %v6798
    %v6864 = vmul.f32 %v6700, %v6798
    %v6865 = vmul.f32 %v6702, %v6798
    %v6866 = vmul.f32 %v6367, %v6803
    %v6867 = vmul.f32 %v6369, %v6803
    %v6868 = vmul.f32 %v6706, %v6803
    %v6869 = vmul.f32 %v6708, %v6803
    %v6870 = vmul.f32 %v6371, %v6808
    %v6871 = vmul.f32 %v6373, %v6808
    %v6872 = vmul.f32 %v6710, %v6808
    %v6873 = vmul.f32 %v6712, %v6808
    %v6874 = vld [vmem:[%s9] sm:$0xff]
    %v6875 = vld [vmem:[%s9 + $0x8] sm:$0xff]
    %v6876 = vld [vmem:[%s9 + $0x10] sm:$0xff]
    %v6877 = vld [vmem:[%s9 + $0x18] sm:$0xff]
    %v6878 = vld [vmem:[%s9 + $0x20] sm:$0xff]
    %v6879 = vld [vmem:[%s9 + $0x28] sm:$0xff]
    %v6880 = vld [vmem:[%s9 + $0x30] sm:$0xff]
    %v6881 = vld [vmem:[%s9 + $0x38] sm:$0xff]
    %v6882 = vld [vmem:[%s9 + $0x40] sm:$0xff]
    %v6883 = vld [vmem:[%s9 + $0x48] sm:$0xff]
    %v6884 = vld [vmem:[%s9 + $0x50] sm:$0xff]
    %v6885 = vld [vmem:[%s9 + $0x58] sm:$0xff]
    %v6886 = vld [vmem:[%s9 + $0x60] sm:$0xff]
    %v6887 = vld [vmem:[%s9 + $0x68] sm:$0xff]
    %v6888 = vld [vmem:[%s9 + $0x70] sm:$0xff]
    %v6889 = vld [vmem:[%s9 + $0x78] sm:$0xff]
    %6891 = vset.pattern.permute.xlu0 0
    %6892 = vperm.xlu0 %6891, %v6874
    %v6893 = vpop.permute.xlu0 %6892
    %6896 = vset.pattern.permute.xlu0 0
    %6897 = vperm.xlu0 %6896, %v6875
    %v6898 = vpop.permute.xlu0 %6897
    %6901 = vset.pattern.permute.xlu0 0
    %6902 = vperm.xlu0 %6901, %v6876
    %v6903 = vpop.permute.xlu0 %6902
    %6906 = vset.pattern.permute.xlu0 0
    %6907 = vperm.xlu0 %6906, %v6877
    %v6908 = vpop.permute.xlu0 %6907
    %6911 = vset.pattern.permute.xlu0 0
    %6912 = vperm.xlu0 %6911, %v6878
    %v6913 = vpop.permute.xlu0 %6912
    %6916 = vset.pattern.permute.xlu0 0
    %6917 = vperm.xlu0 %6916, %v6879
    %v6918 = vpop.permute.xlu0 %6917
    %6921 = vset.pattern.permute.xlu0 0
    %6922 = vperm.xlu0 %6921, %v6880
    %v6923 = vpop.permute.xlu0 %6922
    %6926 = vset.pattern.permute.xlu0 0
    %6927 = vperm.xlu0 %6926, %v6881
    %v6928 = vpop.permute.xlu0 %6927
    %6931 = vset.pattern.permute.xlu0 0
    %6932 = vperm.xlu0 %6931, %v6882
    %v6933 = vpop.permute.xlu0 %6932
    %6936 = vset.pattern.permute.xlu0 0
    %6937 = vperm.xlu0 %6936, %v6883
    %v6938 = vpop.permute.xlu0 %6937
    %6941 = vset.pattern.permute.xlu0 0
    %6942 = vperm.xlu0 %6941, %v6884
    %v6943 = vpop.permute.xlu0 %6942
    %6946 = vset.pattern.permute.xlu0 0
    %6947 = vperm.xlu0 %6946, %v6885
    %v6948 = vpop.permute.xlu0 %6947
    %6951 = vset.pattern.permute.xlu0 0
    %6952 = vperm.xlu0 %6951, %v6886
    %v6953 = vpop.permute.xlu0 %6952
    %6956 = vset.pattern.permute.xlu0 0
    %6957 = vperm.xlu0 %6956, %v6887
    %v6958 = vpop.permute.xlu0 %6957
    %6961 = vset.pattern.permute.xlu0 0
    %6962 = vperm.xlu0 %6961, %v6888
    %v6963 = vpop.permute.xlu0 %6962
    %6966 = vset.pattern.permute.xlu0 0
    %6967 = vperm.xlu0 %6966, %v6889
    %v6968 = vpop.permute.xlu0 %6967
    %v6970 = vadd.f32 %v6810, %v6893
    %v6971 = vadd.f32 %v6811, %v6893
    %v6972 = vadd.f32 %v6812, %v6893
    %v6973 = vadd.f32 %v6813, %v6893
    %v6974 = vadd.f32 %v6814, %v6898
    %v6975 = vadd.f32 %v6815, %v6898
    %v6976 = vadd.f32 %v6816, %v6898
    %v6977 = vadd.f32 %v6817, %v6898
    %v6978 = vadd.f32 %v6818, %v6903
    %v6979 = vadd.f32 %v6819, %v6903
    %v6980 = vadd.f32 %v6820, %v6903
    %v6981 = vadd.f32 %v6821, %v6903
    %v6982 = vadd.f32 %v6822, %v6908
    %v6983 = vadd.f32 %v6823, %v6908
    %v6984 = vadd.f32 %v6824, %v6908
    %v6985 = vadd.f32 %v6825, %v6908
    %v6986 = vadd.f32 %v6826, %v6913
    %v6987 = vadd.f32 %v6827, %v6913
    %v6988 = vadd.f32 %v6828, %v6913
    %v6989 = vadd.f32 %v6829, %v6913
    %v6990 = vadd.f32 %v6830, %v6918
    %v6991 = vadd.f32 %v6831, %v6918
    %v6992 = vadd.f32 %v6832, %v6918
    %v6993 = vadd.f32 %v6833, %v6918
    %v6994 = vadd.f32 %v6834, %v6923
    %v6995 = vadd.f32 %v6835, %v6923
    %v6996 = vadd.f32 %v6836, %v6923
    %v6997 = vadd.f32 %v6837, %v6923
    %v6998 = vadd.f32 %v6838, %v6928
    %v6999 = vadd.f32 %v6839, %v6928
    %v7000 = vadd.f32 %v6840, %v6928
    %v7001 = vadd.f32 %v6841, %v6928
    %v7002 = vadd.f32 %v6842, %v6933
    %v7003 = vadd.f32 %v6843, %v6933
    %v7004 = vadd.f32 %v6844, %v6933
    %v7005 = vadd.f32 %v6845, %v6933
    %v7006 = vadd.f32 %v6846, %v6938
    %v7007 = vadd.f32 %v6847, %v6938
    %v7008 = vadd.f32 %v6848, %v6938
    %v7009 = vadd.f32 %v6849, %v6938
    %v7010 = vadd.f32 %v6850, %v6943
    %v7011 = vadd.f32 %v6851, %v6943
    %v7012 = vadd.f32 %v6852, %v6943
    %v7013 = vadd.f32 %v6853, %v6943
    %v7014 = vadd.f32 %v6854, %v6948
    %v7015 = vadd.f32 %v6855, %v6948
    %v7016 = vadd.f32 %v6856, %v6948
    %v7017 = vadd.f32 %v6857, %v6948
    %v7018 = vadd.f32 %v6858, %v6953
    %v7019 = vadd.f32 %v6859, %v6953
    %v7020 = vadd.f32 %v6860, %v6953
    %v7021 = vadd.f32 %v6861, %v6953
    %v7022 = vadd.f32 %v6862, %v6958
    %v7023 = vadd.f32 %v6863, %v6958
    %v7024 = vadd.f32 %v6864, %v6958
    %v7025 = vadd.f32 %v6865, %v6958
    %v7026 = vadd.f32 %v6866, %v6963
    %v7027 = vadd.f32 %v6867, %v6963
    %v7028 = vadd.f32 %v6868, %v6963
    %v7029 = vadd.f32 %v6869, %v6963
    %v7030 = vadd.f32 %v6870, %v6968
    %v7031 = vadd.f32 %v6871, %v6968
    %v7032 = vadd.f32 %v6872, %v6968
    %v7033 = vadd.f32 %v6873, %v6968
    %v7034 = vmax.f32 %v6970, 0.0
    %v7035 = vmax.f32 %v6971, 0.0
    %v7036 = vmax.f32 %v6972, 0.0
    %v7037 = vmax.f32 %v6973, 0.0
    %v7038 = vmax.f32 %v6974, 0.0
    %v7039 = vmax.f32 %v6975, 0.0
    %v7040 = vmax.f32 %v6976, 0.0
    %v7041 = vmax.f32 %v6977, 0.0
    %v7042 = vmax.f32 %v6978, 0.0
    %v7043 = vmax.f32 %v6979, 0.0
    %v7044 = vmax.f32 %v6980, 0.0
    %v7045 = vmax.f32 %v6981, 0.0
    %v7046 = vmax.f32 %v6982, 0.0
    %v7047 = vmax.f32 %v6983, 0.0
    %v7048 = vmax.f32 %v6984, 0.0
    %v7049 = vmax.f32 %v6985, 0.0
    %v7050 = vmax.f32 %v6986, 0.0
    %v7051 = vmax.f32 %v6987, 0.0
    %v7052 = vmax.f32 %v6988, 0.0
    %v7053 = vmax.f32 %v6989, 0.0
    %v7054 = vmax.f32 %v6990, 0.0
    %v7055 = vmax.f32 %v6991, 0.0
    %v7056 = vmax.f32 %v6992, 0.0
    %v7057 = vmax.f32 %v6993, 0.0
    %v7058 = vmax.f32 %v6994, 0.0
    %v7059 = vmax.f32 %v6995, 0.0
    %v7060 = vmax.f32 %v6996, 0.0
    %v7061 = vmax.f32 %v6997, 0.0
    %v7062 = vmax.f32 %v6998, 0.0
    %v7063 = vmax.f32 %v6999, 0.0
    %v7064 = vmax.f32 %v7000, 0.0
    %v7065 = vmax.f32 %v7001, 0.0
    %v7066 = vmax.f32 %v7002, 0.0
    %v7067 = vmax.f32 %v7003, 0.0
    %v7068 = vmax.f32 %v7004, 0.0
    %v7069 = vmax.f32 %v7005, 0.0
    %v7070 = vmax.f32 %v7006, 0.0
    %v7071 = vmax.f32 %v7007, 0.0
    %v7072 = vmax.f32 %v7008, 0.0
    %v7073 = vmax.f32 %v7009, 0.0
    %v7074 = vmax.f32 %v7010, 0.0
    %v7075 = vmax.f32 %v7011, 0.0
    %v7076 = vmax.f32 %v7012, 0.0
    %v7077 = vmax.f32 %v7013, 0.0
    %v7078 = vmax.f32 %v7014, 0.0
    %v7079 = vmax.f32 %v7015, 0.0
    %v7080 = vmax.f32 %v7016, 0.0
    %v7081 = vmax.f32 %v7017, 0.0
    %v7082 = vmax.f32 %v7018, 0.0
    %v7083 = vmax.f32 %v7019, 0.0
    %v7084 = vmax.f32 %v7020, 0.0
    %v7085 = vmax.f32 %v7021, 0.0
    %v7086 = vmax.f32 %v7022, 0.0
    %v7087 = vmax.f32 %v7023, 0.0
    %v7088 = vmax.f32 %v7024, 0.0
    %v7089 = vmax.f32 %v7025, 0.0
    %v7090 = vmax.f32 %v7026, 0.0
    %v7091 = vmax.f32 %v7027, 0.0
    %v7092 = vmax.f32 %v7028, 0.0
    %v7093 = vmax.f32 %v7029, 0.0
    %v7094 = vmax.f32 %v7030, 0.0
    %v7095 = vmax.f32 %v7031, 0.0
    %v7096 = vmax.f32 %v7032, 0.0
    %v7097 = vmax.f32 %v7033, 0.0
    %7098 = vrot.lane.b32.xlu0 %v7034, 127
    %v7099 = vpop.permute.xlu0 %7098
    %7100 = vrot.lane.b32.xlu0 %v7038, 127
    %v7101 = vpop.permute.xlu0 %7100
    %7102 = vrot.lane.b32.xlu0 %v7042, 127
    %v7103 = vpop.permute.xlu0 %7102
    %7104 = vrot.lane.b32.xlu0 %v7046, 127
    %v7105 = vpop.permute.xlu0 %7104
    %7106 = vrot.lane.b32.xlu0 %v7050, 127
    %v7107 = vpop.permute.xlu0 %7106
    %7108 = vrot.lane.b32.xlu0 %v7054, 127
    %v7109 = vpop.permute.xlu0 %7108
    %7110 = vrot.lane.b32.xlu0 %v7058, 127
    %v7111 = vpop.permute.xlu0 %7110
    %7112 = vrot.lane.b32.xlu0 %v7062, 127
    %v7113 = vpop.permute.xlu0 %7112
    %7114 = vrot.lane.b32.xlu0 %v7066, 127
    %v7115 = vpop.permute.xlu0 %7114
    %7116 = vrot.lane.b32.xlu0 %v7070, 127
    %v7117 = vpop.permute.xlu0 %7116
    %7118 = vrot.lane.b32.xlu0 %v7074, 127
    %v7119 = vpop.permute.xlu0 %7118
    %7120 = vrot.lane.b32.xlu0 %v7078, 127
    %v7121 = vpop.permute.xlu0 %7120
    %7122 = vrot.lane.b32.xlu0 %v7082, 127
    %v7123 = vpop.permute.xlu0 %7122
    %7124 = vrot.lane.b32.xlu0 %v7086, 127
    %v7125 = vpop.permute.xlu0 %7124
    %7126 = vrot.lane.b32.xlu0 %v7090, 127
    %v7127 = vpop.permute.xlu0 %7126
    %7128 = vrot.lane.b32.xlu0 %v7094, 127
    %v7129 = vpop.permute.xlu0 %7128
    %7130 = vrot.lane.b32.xlu0 %v7035, 127
    %v7131 = vpop.permute.xlu0 %7130
    %7132 = vrot.lane.b32.xlu0 %v7039, 127
    %v7133 = vpop.permute.xlu0 %7132
    %7134 = vrot.lane.b32.xlu0 %v7043, 127
    %v7135 = vpop.permute.xlu0 %7134
    %7136 = vrot.lane.b32.xlu0 %v7047, 127
    %v7137 = vpop.permute.xlu0 %7136
    %7138 = vrot.lane.b32.xlu0 %v7051, 127
    %v7139 = vpop.permute.xlu0 %7138
    %7140 = vrot.lane.b32.xlu0 %v7055, 127
    %v7141 = vpop.permute.xlu0 %7140
    %7142 = vrot.lane.b32.xlu0 %v7059, 127
    %v7143 = vpop.permute.xlu0 %7142
    %7144 = vrot.lane.b32.xlu0 %v7063, 127
    %v7145 = vpop.permute.xlu0 %7144
    %7146 = vrot.lane.b32.xlu0 %v7067, 127
    %v7147 = vpop.permute.xlu0 %7146
    %7148 = vrot.lane.b32.xlu0 %v7071, 127
    %v7149 = vpop.permute.xlu0 %7148
    %7150 = vrot.lane.b32.xlu0 %v7075, 127
    %v7151 = vpop.permute.xlu0 %7150
    %7152 = vrot.lane.b32.xlu0 %v7079, 127
    %v7153 = vpop.permute.xlu0 %7152
    %7154 = vrot.lane.b32.xlu0 %v7083, 127
    %v7155 = vpop.permute.xlu0 %7154
    %7156 = vrot.lane.b32.xlu0 %v7087, 127
    %v7157 = vpop.permute.xlu0 %7156
    %7158 = vrot.lane.b32.xlu0 %v7091, 127
    %v7159 = vpop.permute.xlu0 %7158
    %7160 = vrot.lane.b32.xlu0 %v7095, 127
    %v7161 = vpop.permute.xlu0 %7160
    %7162 = vrot.lane.b32.xlu0 %v7036, 127
    %v7163 = vpop.permute.xlu0 %7162
    %7164 = vrot.lane.b32.xlu0 %v7040, 127
    %v7165 = vpop.permute.xlu0 %7164
    %7166 = vrot.lane.b32.xlu0 %v7044, 127
    %v7167 = vpop.permute.xlu0 %7166
    %7168 = vrot.lane.b32.xlu0 %v7048, 127
    %v7169 = vpop.permute.xlu0 %7168
    %7170 = vrot.lane.b32.xlu0 %v7052, 127
    %v7171 = vpop.permute.xlu0 %7170
    %7172 = vrot.lane.b32.xlu0 %v7056, 127
    %v7173 = vpop.permute.xlu0 %7172
    %7174 = vrot.lane.b32.xlu0 %v7060, 127
    %v7175 = vpop.permute.xlu0 %7174
    %7176 = vrot.lane.b32.xlu0 %v7064, 127
    %v7177 = vpop.permute.xlu0 %7176
    %7178 = vrot.lane.b32.xlu0 %v7068, 127
    %v7179 = vpop.permute.xlu0 %7178
    %7180 = vrot.lane.b32.xlu0 %v7072, 127
    %v7181 = vpop.permute.xlu0 %7180
    %7182 = vrot.lane.b32.xlu0 %v7076, 127
    %v7183 = vpop.permute.xlu0 %7182
    %7184 = vrot.lane.b32.xlu0 %v7080, 127
    %v7185 = vpop.permute.xlu0 %7184
    %7186 = vrot.lane.b32.xlu0 %v7084, 127
    %v7187 = vpop.permute.xlu0 %7186
    %7188 = vrot.lane.b32.xlu0 %v7088, 127
    %v7189 = vpop.permute.xlu0 %7188
    %7190 = vrot.lane.b32.xlu0 %v7092, 127
    %v7191 = vpop.permute.xlu0 %7190
    %7192 = vrot.lane.b32.xlu0 %v7096, 127
    %v7193 = vpop.permute.xlu0 %7192
    %7194 = vrot.lane.b32.xlu0 %v7037, 127
    %v7195 = vpop.permute.xlu0 %7194
    %7196 = vrot.lane.b32.xlu0 %v7041, 127
    %v7197 = vpop.permute.xlu0 %7196
    %7198 = vrot.lane.b32.xlu0 %v7045, 127
    %v7199 = vpop.permute.xlu0 %7198
    %7200 = vrot.lane.b32.xlu0 %v7049, 127
    %v7201 = vpop.permute.xlu0 %7200
    %7202 = vrot.lane.b32.xlu0 %v7053, 127
    %v7203 = vpop.permute.xlu0 %7202
    %7204 = vrot.lane.b32.xlu0 %v7057, 127
    %v7205 = vpop.permute.xlu0 %7204
    %7206 = vrot.lane.b32.xlu0 %v7061, 127
    %v7207 = vpop.permute.xlu0 %7206
    %7208 = vrot.lane.b32.xlu0 %v7065, 127
    %v7209 = vpop.permute.xlu0 %7208
    %7210 = vrot.lane.b32.xlu0 %v7069, 127
    %v7211 = vpop.permute.xlu0 %7210
    %7212 = vrot.lane.b32.xlu0 %v7073, 127
    %v7213 = vpop.permute.xlu0 %7212
    %7214 = vrot.lane.b32.xlu0 %v7077, 127
    %v7215 = vpop.permute.xlu0 %7214
    %7216 = vrot.lane.b32.xlu0 %v7081, 127
    %v7217 = vpop.permute.xlu0 %7216
    %7218 = vrot.lane.b32.xlu0 %v7085, 127
    %v7219 = vpop.permute.xlu0 %7218
    %7220 = vrot.lane.b32.xlu0 %v7089, 127
    %v7221 = vpop.permute.xlu0 %7220
    %7222 = vrot.lane.b32.xlu0 %v7093, 127
    %v7223 = vpop.permute.xlu0 %7222
    %7224 = vrot.lane.b32.xlu0 %v7097, 127
    %v7225 = vpop.permute.xlu0 %7224
    %v7226 = vsel %vm556, %v7163, %v7195
    %v7227 = vsel %vm556, %v7165, %v7197
    %v7228 = vsel %vm556, %v7167, %v7199
    %v7229 = vsel %vm556, %v7169, %v7201
    %v7230 = vsel %vm556, %v7171, %v7203
    %v7231 = vsel %vm556, %v7173, %v7205
    %v7232 = vsel %vm556, %v7175, %v7207
    %v7233 = vsel %vm556, %v7177, %v7209
    %v7234 = vsel %vm556, %v7179, %v7211
    %v7235 = vsel %vm556, %v7181, %v7213
    %v7236 = vsel %vm556, %v7183, %v7215
    %v7237 = vsel %vm556, %v7185, %v7217
    %v7238 = vsel %vm556, %v7187, %v7219
    %v7239 = vsel %vm556, %v7189, %v7221
    %v7240 = vsel %vm556, %v7191, %v7223
    %v7241 = vsel %vm556, %v7193, %v7225
    %v7242 = vsel %vm556, %v7099, %v7131
    %v7243 = vsel %vm556, %v7101, %v7133
    %v7244 = vsel %vm556, %v7103, %v7135
    %v7245 = vsel %vm556, %v7105, %v7137
    %v7246 = vsel %vm556, %v7107, %v7139
    %v7247 = vsel %vm556, %v7109, %v7141
    %v7248 = vsel %vm556, %v7111, %v7143
    %v7249 = vsel %vm556, %v7113, %v7145
    %v7250 = vsel %vm556, %v7115, %v7147
    %v7251 = vsel %vm556, %v7117, %v7149
    %v7252 = vsel %vm556, %v7119, %v7151
    %v7253 = vsel %vm556, %v7121, %v7153
    %v7254 = vsel %vm556, %v7123, %v7155
    %v7255 = vsel %vm556, %v7125, %v7157
    %v7256 = vsel %vm556, %v7127, %v7159
    %v7257 = vsel %vm556, %v7129, %v7161
    %v7258 = vmax.f32 %v7034, %v7242
    %v7259 = vmax.f32 %v7036, %v7226
    %v7260 = vmax.f32 %v7038, %v7243
    %v7261 = vmax.f32 %v7040, %v7227
    %v7262 = vmax.f32 %v7042, %v7244
    %v7263 = vmax.f32 %v7044, %v7228
    %v7264 = vmax.f32 %v7046, %v7245
    %v7265 = vmax.f32 %v7048, %v7229
    %v7266 = vmax.f32 %v7050, %v7246
    %v7267 = vmax.f32 %v7052, %v7230
    %v7268 = vmax.f32 %v7054, %v7247
    %v7269 = vmax.f32 %v7056, %v7231
    %v7270 = vmax.f32 %v7058, %v7248
    %v7271 = vmax.f32 %v7060, %v7232
    %v7272 = vmax.f32 %v7062, %v7249
    %v7273 = vmax.f32 %v7064, %v7233
    %v7274 = vmax.f32 %v7066, %v7250
    %v7275 = vmax.f32 %v7068, %v7234
    %v7276 = vmax.f32 %v7070, %v7251
    %v7277 = vmax.f32 %v7072, %v7235
    %v7278 = vmax.f32 %v7074, %v7252
    %v7279 = vmax.f32 %v7076, %v7236
    %v7280 = vmax.f32 %v7078, %v7253
    %v7281 = vmax.f32 %v7080, %v7237
    %v7282 = vmax.f32 %v7082, %v7254
    %v7283 = vmax.f32 %v7084, %v7238
    %v7284 = vmax.f32 %v7086, %v7255
    %v7285 = vmax.f32 %v7088, %v7239
    %v7286 = vmax.f32 %v7090, %v7256
    %v7287 = vmax.f32 %v7092, %v7240
    %v7288 = vmax.f32 %v7094, %v7257
    %v7289 = vmax.f32 %v7096, %v7241
    %7290 = vrot.lane.b32.xlu0 %v7034, 112
    %v7291 = vpop.permute.xlu0 %7290
    %7292 = vrot.lane.b32.xlu0 %v7038, 112
    %v7293 = vpop.permute.xlu0 %7292
    %7294 = vrot.lane.b32.xlu0 %v7042, 112
    %v7295 = vpop.permute.xlu0 %7294
    %7296 = vrot.lane.b32.xlu0 %v7046, 112
    %v7297 = vpop.permute.xlu0 %7296
    %7298 = vrot.lane.b32.xlu0 %v7050, 112
    %v7299 = vpop.permute.xlu0 %7298
    %7300 = vrot.lane.b32.xlu0 %v7054, 112
    %v7301 = vpop.permute.xlu0 %7300
    %7302 = vrot.lane.b32.xlu0 %v7058, 112
    %v7303 = vpop.permute.xlu0 %7302
    %7304 = vrot.lane.b32.xlu0 %v7062, 112
    %v7305 = vpop.permute.xlu0 %7304
    %7306 = vrot.lane.b32.xlu0 %v7066, 112
    %v7307 = vpop.permute.xlu0 %7306
    %7308 = vrot.lane.b32.xlu0 %v7070, 112
    %v7309 = vpop.permute.xlu0 %7308
    %7310 = vrot.lane.b32.xlu0 %v7074, 112
    %v7311 = vpop.permute.xlu0 %7310
    %7312 = vrot.lane.b32.xlu0 %v7078, 112
    %v7313 = vpop.permute.xlu0 %7312
    %7314 = vrot.lane.b32.xlu0 %v7082, 112
    %v7315 = vpop.permute.xlu0 %7314
    %7316 = vrot.lane.b32.xlu0 %v7086, 112
    %v7317 = vpop.permute.xlu0 %7316
    %7318 = vrot.lane.b32.xlu0 %v7090, 112
    %v7319 = vpop.permute.xlu0 %7318
    %7320 = vrot.lane.b32.xlu0 %v7094, 112
    %v7321 = vpop.permute.xlu0 %7320
    %7322 = vrot.lane.b32.xlu0 %v7035, 112
    %v7323 = vpop.permute.xlu0 %7322
    %7324 = vrot.lane.b32.xlu0 %v7039, 112
    %v7325 = vpop.permute.xlu0 %7324
    %7326 = vrot.lane.b32.xlu0 %v7043, 112
    %v7327 = vpop.permute.xlu0 %7326
    %7328 = vrot.lane.b32.xlu0 %v7047, 112
    %v7329 = vpop.permute.xlu0 %7328
    %7330 = vrot.lane.b32.xlu0 %v7051, 112
    %v7331 = vpop.permute.xlu0 %7330
    %7332 = vrot.lane.b32.xlu0 %v7055, 112
    %v7333 = vpop.permute.xlu0 %7332
    %7334 = vrot.lane.b32.xlu0 %v7059, 112
    %v7335 = vpop.permute.xlu0 %7334
    %7336 = vrot.lane.b32.xlu0 %v7063, 112
    %v7337 = vpop.permute.xlu0 %7336
    %7338 = vrot.lane.b32.xlu0 %v7067, 112
    %v7339 = vpop.permute.xlu0 %7338
    %7340 = vrot.lane.b32.xlu0 %v7071, 112
    %v7341 = vpop.permute.xlu0 %7340
    %7342 = vrot.lane.b32.xlu0 %v7075, 112
    %v7343 = vpop.permute.xlu0 %7342
    %7344 = vrot.lane.b32.xlu0 %v7079, 112
    %v7345 = vpop.permute.xlu0 %7344
    %7346 = vrot.lane.b32.xlu0 %v7083, 112
    %v7347 = vpop.permute.xlu0 %7346
    %7348 = vrot.lane.b32.xlu0 %v7087, 112
    %v7349 = vpop.permute.xlu0 %7348
    %7350 = vrot.lane.b32.xlu0 %v7091, 112
    %v7351 = vpop.permute.xlu0 %7350
    %7352 = vrot.lane.b32.xlu0 %v7095, 112
    %v7353 = vpop.permute.xlu0 %7352
    %7354 = vrot.lane.b32.xlu0 %v7036, 112
    %v7355 = vpop.permute.xlu0 %7354
    %7356 = vrot.lane.b32.xlu0 %v7040, 112
    %v7357 = vpop.permute.xlu0 %7356
    %7358 = vrot.lane.b32.xlu0 %v7044, 112
    %v7359 = vpop.permute.xlu0 %7358
    %7360 = vrot.lane.b32.xlu0 %v7048, 112
    %v7361 = vpop.permute.xlu0 %7360
    %7362 = vrot.lane.b32.xlu0 %v7052, 112
    %v7363 = vpop.permute.xlu0 %7362
    %7364 = vrot.lane.b32.xlu0 %v7056, 112
    %v7365 = vpop.permute.xlu0 %7364
    %7366 = vrot.lane.b32.xlu0 %v7060, 112
    %v7367 = vpop.permute.xlu0 %7366
    %7368 = vrot.lane.b32.xlu0 %v7064, 112
    %v7369 = vpop.permute.xlu0 %7368
    %7370 = vrot.lane.b32.xlu0 %v7068, 112
    %v7371 = vpop.permute.xlu0 %7370
    %7372 = vrot.lane.b32.xlu0 %v7072, 112
    %v7373 = vpop.permute.xlu0 %7372
    %7374 = vrot.lane.b32.xlu0 %v7076, 112
    %v7375 = vpop.permute.xlu0 %7374
    %7376 = vrot.lane.b32.xlu0 %v7080, 112
    %v7377 = vpop.permute.xlu0 %7376
    %7378 = vrot.lane.b32.xlu0 %v7084, 112
    %v7379 = vpop.permute.xlu0 %7378
    %7380 = vrot.lane.b32.xlu0 %v7088, 112
    %v7381 = vpop.permute.xlu0 %7380
    %7382 = vrot.lane.b32.xlu0 %v7092, 112
    %v7383 = vpop.permute.xlu0 %7382
    %7384 = vrot.lane.b32.xlu0 %v7096, 112
    %v7385 = vpop.permute.xlu0 %7384
    %7386 = vrot.lane.b32.xlu0 %v7037, 112
    %v7387 = vpop.permute.xlu0 %7386
    %7388 = vrot.lane.b32.xlu0 %v7041, 112
    %v7389 = vpop.permute.xlu0 %7388
    %7390 = vrot.lane.b32.xlu0 %v7045, 112
    %v7391 = vpop.permute.xlu0 %7390
    %7392 = vrot.lane.b32.xlu0 %v7049, 112
    %v7393 = vpop.permute.xlu0 %7392
    %7394 = vrot.lane.b32.xlu0 %v7053, 112
    %v7395 = vpop.permute.xlu0 %7394
    %7396 = vrot.lane.b32.xlu0 %v7057, 112
    %v7397 = vpop.permute.xlu0 %7396
    %7398 = vrot.lane.b32.xlu0 %v7061, 112
    %v7399 = vpop.permute.xlu0 %7398
    %7400 = vrot.lane.b32.xlu0 %v7065, 112
    %v7401 = vpop.permute.xlu0 %7400
    %7402 = vrot.lane.b32.xlu0 %v7069, 112
    %v7403 = vpop.permute.xlu0 %7402
    %7404 = vrot.lane.b32.xlu0 %v7073, 112
    %v7405 = vpop.permute.xlu0 %7404
    %7406 = vrot.lane.b32.xlu0 %v7077, 112
    %v7407 = vpop.permute.xlu0 %7406
    %7408 = vrot.lane.b32.xlu0 %v7081, 112
    %v7409 = vpop.permute.xlu0 %7408
    %7410 = vrot.lane.b32.xlu0 %v7085, 112
    %v7411 = vpop.permute.xlu0 %7410
    %7412 = vrot.lane.b32.xlu0 %v7089, 112
    %v7413 = vpop.permute.xlu0 %7412
    %7414 = vrot.lane.b32.xlu0 %v7093, 112
    %v7415 = vpop.permute.xlu0 %7414
    %7416 = vrot.lane.b32.xlu0 %v7097, 112
    %v7417 = vpop.permute.xlu0 %7416
    %v7418 = vsel %vm3558, %v7355, %v7387
    %v7419 = vsel %vm3558, %v7357, %v7389
    %v7420 = vsel %vm3558, %v7359, %v7391
    %v7421 = vsel %vm3558, %v7361, %v7393
    %v7422 = vsel %vm3558, %v7363, %v7395
    %v7423 = vsel %vm3558, %v7365, %v7397
    %v7424 = vsel %vm3558, %v7367, %v7399
    %v7425 = vsel %vm3558, %v7369, %v7401
    %v7426 = vsel %vm3558, %v7371, %v7403
    %v7427 = vsel %vm3558, %v7373, %v7405
    %v7428 = vsel %vm3558, %v7375, %v7407
    %v7429 = vsel %vm3558, %v7377, %v7409
    %v7430 = vsel %vm3558, %v7379, %v7411
    %v7431 = vsel %vm3558, %v7381, %v7413
    %v7432 = vsel %vm3558, %v7383, %v7415
    %v7433 = vsel %vm3558, %v7385, %v7417
    %v7434 = vsel %vm3558, %v7291, %v7323
    %v7435 = vsel %vm3558, %v7293, %v7325
    %v7436 = vsel %vm3558, %v7295, %v7327
    %v7437 = vsel %vm3558, %v7297, %v7329
    %v7438 = vsel %vm3558, %v7299, %v7331
    %v7439 = vsel %vm3558, %v7301, %v7333
    %v7440 = vsel %vm3558, %v7303, %v7335
    %v7441 = vsel %vm3558, %v7305, %v7337
    %v7442 = vsel %vm3558, %v7307, %v7339
    %v7443 = vsel %vm3558, %v7309, %v7341
    %v7444 = vsel %vm3558, %v7311, %v7343
    %v7445 = vsel %vm3558, %v7313, %v7345
    %v7446 = vsel %vm3558, %v7315, %v7347
    %v7447 = vsel %vm3558, %v7317, %v7349
    %v7448 = vsel %vm3558, %v7319, %v7351
    %v7449 = vsel %vm3558, %v7321, %v7353
    %7450 = vrot.lane.b32.xlu0 %v7034, 111
    %v7451 = vpop.permute.xlu0 %7450
    %7452 = vrot.lane.b32.xlu0 %v7038, 111
    %v7453 = vpop.permute.xlu0 %7452
    %7454 = vrot.lane.b32.xlu0 %v7042, 111
    %v7455 = vpop.permute.xlu0 %7454
    %7456 = vrot.lane.b32.xlu0 %v7046, 111
    %v7457 = vpop.permute.xlu0 %7456
    %7458 = vrot.lane.b32.xlu0 %v7050, 111
    %v7459 = vpop.permute.xlu0 %7458
    %7460 = vrot.lane.b32.xlu0 %v7054, 111
    %v7461 = vpop.permute.xlu0 %7460
    %7462 = vrot.lane.b32.xlu0 %v7058, 111
    %v7463 = vpop.permute.xlu0 %7462
    %7464 = vrot.lane.b32.xlu0 %v7062, 111
    %v7465 = vpop.permute.xlu0 %7464
    %7466 = vrot.lane.b32.xlu0 %v7066, 111
    %v7467 = vpop.permute.xlu0 %7466
    %7468 = vrot.lane.b32.xlu0 %v7070, 111
    %v7469 = vpop.permute.xlu0 %7468
    %7470 = vrot.lane.b32.xlu0 %v7074, 111
    %v7471 = vpop.permute.xlu0 %7470
    %7472 = vrot.lane.b32.xlu0 %v7078, 111
    %v7473 = vpop.permute.xlu0 %7472
    %7474 = vrot.lane.b32.xlu0 %v7082, 111
    %v7475 = vpop.permute.xlu0 %7474
    %7476 = vrot.lane.b32.xlu0 %v7086, 111
    %v7477 = vpop.permute.xlu0 %7476
    %7478 = vrot.lane.b32.xlu0 %v7090, 111
    %v7479 = vpop.permute.xlu0 %7478
    %7480 = vrot.lane.b32.xlu0 %v7094, 111
    %v7481 = vpop.permute.xlu0 %7480
    %7482 = vrot.lane.b32.xlu0 %v7035, 111
    %v7483 = vpop.permute.xlu0 %7482
    %7484 = vrot.lane.b32.xlu0 %v7039, 111
    %v7485 = vpop.permute.xlu0 %7484
    %7486 = vrot.lane.b32.xlu0 %v7043, 111
    %v7487 = vpop.permute.xlu0 %7486
    %7488 = vrot.lane.b32.xlu0 %v7047, 111
    %v7489 = vpop.permute.xlu0 %7488
    %7490 = vrot.lane.b32.xlu0 %v7051, 111
    %v7491 = vpop.permute.xlu0 %7490
    %7492 = vrot.lane.b32.xlu0 %v7055, 111
    %v7493 = vpop.permute.xlu0 %7492
    %7494 = vrot.lane.b32.xlu0 %v7059, 111
    %v7495 = vpop.permute.xlu0 %7494
    %7496 = vrot.lane.b32.xlu0 %v7063, 111
    %v7497 = vpop.permute.xlu0 %7496
    %7498 = vrot.lane.b32.xlu0 %v7067, 111
    %v7499 = vpop.permute.xlu0 %7498
    %7500 = vrot.lane.b32.xlu0 %v7071, 111
    %v7501 = vpop.permute.xlu0 %7500
    %7502 = vrot.lane.b32.xlu0 %v7075, 111
    %v7503 = vpop.permute.xlu0 %7502
    %7504 = vrot.lane.b32.xlu0 %v7079, 111
    %v7505 = vpop.permute.xlu0 %7504
    %7506 = vrot.lane.b32.xlu0 %v7083, 111
    %v7507 = vpop.permute.xlu0 %7506
    %7508 = vrot.lane.b32.xlu0 %v7087, 111
    %v7509 = vpop.permute.xlu0 %7508
    %7510 = vrot.lane.b32.xlu0 %v7091, 111
    %v7511 = vpop.permute.xlu0 %7510
    %7512 = vrot.lane.b32.xlu0 %v7095, 111
    %v7513 = vpop.permute.xlu0 %7512
    %7514 = vrot.lane.b32.xlu0 %v7036, 111
    %v7515 = vpop.permute.xlu0 %7514
    %7516 = vrot.lane.b32.xlu0 %v7040, 111
    %v7517 = vpop.permute.xlu0 %7516
    %7518 = vrot.lane.b32.xlu0 %v7044, 111
    %v7519 = vpop.permute.xlu0 %7518
    %7520 = vrot.lane.b32.xlu0 %v7048, 111
    %v7521 = vpop.permute.xlu0 %7520
    %7522 = vrot.lane.b32.xlu0 %v7052, 111
    %v7523 = vpop.permute.xlu0 %7522
    %7524 = vrot.lane.b32.xlu0 %v7056, 111
    %v7525 = vpop.permute.xlu0 %7524
    %7526 = vrot.lane.b32.xlu0 %v7060, 111
    %v7527 = vpop.permute.xlu0 %7526
    %7528 = vrot.lane.b32.xlu0 %v7064, 111
    %v7529 = vpop.permute.xlu0 %7528
    %7530 = vrot.lane.b32.xlu0 %v7068, 111
    %v7531 = vpop.permute.xlu0 %7530
    %7532 = vrot.lane.b32.xlu0 %v7072, 111
    %v7533 = vpop.permute.xlu0 %7532
    %7534 = vrot.lane.b32.xlu0 %v7076, 111
    %v7535 = vpop.permute.xlu0 %7534
    %7536 = vrot.lane.b32.xlu0 %v7080, 111
    %v7537 = vpop.permute.xlu0 %7536
    %7538 = vrot.lane.b32.xlu0 %v7084, 111
    %v7539 = vpop.permute.xlu0 %7538
    %7540 = vrot.lane.b32.xlu0 %v7088, 111
    %v7541 = vpop.permute.xlu0 %7540
    %7542 = vrot.lane.b32.xlu0 %v7092, 111
    %v7543 = vpop.permute.xlu0 %7542
    %7544 = vrot.lane.b32.xlu0 %v7096, 111
    %v7545 = vpop.permute.xlu0 %7544
    %7546 = vrot.lane.b32.xlu0 %v7037, 111
    %v7547 = vpop.permute.xlu0 %7546
    %7548 = vrot.lane.b32.xlu0 %v7041, 111
    %v7549 = vpop.permute.xlu0 %7548
    %7550 = vrot.lane.b32.xlu0 %v7045, 111
    %v7551 = vpop.permute.xlu0 %7550
    %7552 = vrot.lane.b32.xlu0 %v7049, 111
    %v7553 = vpop.permute.xlu0 %7552
    %7554 = vrot.lane.b32.xlu0 %v7053, 111
    %v7555 = vpop.permute.xlu0 %7554
    %7556 = vrot.lane.b32.xlu0 %v7057, 111
    %v7557 = vpop.permute.xlu0 %7556
    %7558 = vrot.lane.b32.xlu0 %v7061, 111
    %v7559 = vpop.permute.xlu0 %7558
    %7560 = vrot.lane.b32.xlu0 %v7065, 111
    %v7561 = vpop.permute.xlu0 %7560
    %7562 = vrot.lane.b32.xlu0 %v7069, 111
    %v7563 = vpop.permute.xlu0 %7562
    %7564 = vrot.lane.b32.xlu0 %v7073, 111
    %v7565 = vpop.permute.xlu0 %7564
    %7566 = vrot.lane.b32.xlu0 %v7077, 111
    %v7567 = vpop.permute.xlu0 %7566
    %7568 = vrot.lane.b32.xlu0 %v7081, 111
    %v7569 = vpop.permute.xlu0 %7568
    %7570 = vrot.lane.b32.xlu0 %v7085, 111
    %v7571 = vpop.permute.xlu0 %7570
    %7572 = vrot.lane.b32.xlu0 %v7089, 111
    %v7573 = vpop.permute.xlu0 %7572
    %7574 = vrot.lane.b32.xlu0 %v7093, 111
    %v7575 = vpop.permute.xlu0 %7574
    %7576 = vrot.lane.b32.xlu0 %v7097, 111
    %v7577 = vpop.permute.xlu0 %7576
    %v7578 = vsel %vm3607, %v7515, %v7547
    %v7579 = vsel %vm3607, %v7517, %v7549
    %v7580 = vsel %vm3607, %v7519, %v7551
    %v7581 = vsel %vm3607, %v7521, %v7553
    %v7582 = vsel %vm3607, %v7523, %v7555
    %v7583 = vsel %vm3607, %v7525, %v7557
    %v7584 = vsel %vm3607, %v7527, %v7559
    %v7585 = vsel %vm3607, %v7529, %v7561
    %v7586 = vsel %vm3607, %v7531, %v7563
    %v7587 = vsel %vm3607, %v7533, %v7565
    %v7588 = vsel %vm3607, %v7535, %v7567
    %v7589 = vsel %vm3607, %v7537, %v7569
    %v7590 = vsel %vm3607, %v7539, %v7571
    %v7591 = vsel %vm3607, %v7541, %v7573
    %v7592 = vsel %vm3607, %v7543, %v7575
    %v7593 = vsel %vm3607, %v7545, %v7577
    %v7594 = vsel %vm3607, %v7451, %v7483
    %v7595 = vsel %vm3607, %v7453, %v7485
    %v7596 = vsel %vm3607, %v7455, %v7487
    %v7597 = vsel %vm3607, %v7457, %v7489
    %v7598 = vsel %vm3607, %v7459, %v7491
    %v7599 = vsel %vm3607, %v7461, %v7493
    %v7600 = vsel %vm3607, %v7463, %v7495
    %v7601 = vsel %vm3607, %v7465, %v7497
    %v7602 = vsel %vm3607, %v7467, %v7499
    %v7603 = vsel %vm3607, %v7469, %v7501
    %v7604 = vsel %vm3607, %v7471, %v7503
    %v7605 = vsel %vm3607, %v7473, %v7505
    %v7606 = vsel %vm3607, %v7475, %v7507
    %v7607 = vsel %vm3607, %v7477, %v7509
    %v7608 = vsel %vm3607, %v7479, %v7511
    %v7609 = vsel %vm3607, %v7481, %v7513
    %v7610 = vmax.f32 %v7434, %v7594
    %v7611 = vmax.f32 %v7418, %v7578
    %v7612 = vmax.f32 %v7435, %v7595
    %v7613 = vmax.f32 %v7419, %v7579
    %v7614 = vmax.f32 %v7436, %v7596
    %v7615 = vmax.f32 %v7420, %v7580
    %v7616 = vmax.f32 %v7437, %v7597
    %v7617 = vmax.f32 %v7421, %v7581
    %v7618 = vmax.f32 %v7438, %v7598
    %v7619 = vmax.f32 %v7422, %v7582
    %v7620 = vmax.f32 %v7439, %v7599
    %v7621 = vmax.f32 %v7423, %v7583
    %v7622 = vmax.f32 %v7440, %v7600
    %v7623 = vmax.f32 %v7424, %v7584
    %v7624 = vmax.f32 %v7441, %v7601
    %v7625 = vmax.f32 %v7425, %v7585
    %v7626 = vmax.f32 %v7442, %v7602
    %v7627 = vmax.f32 %v7426, %v7586
    %v7628 = vmax.f32 %v7443, %v7603
    %v7629 = vmax.f32 %v7427, %v7587
    %v7630 = vmax.f32 %v7444, %v7604
    %v7631 = vmax.f32 %v7428, %v7588
    %v7632 = vmax.f32 %v7445, %v7605
    %v7633 = vmax.f32 %v7429, %v7589
    %v7634 = vmax.f32 %v7446, %v7606
    %v7635 = vmax.f32 %v7430, %v7590
    %v7636 = vmax.f32 %v7447, %v7607
    %v7637 = vmax.f32 %v7431, %v7591
    %v7638 = vmax.f32 %v7448, %v7608
    %v7639 = vmax.f32 %v7432, %v7592
    %v7640 = vmax.f32 %v7449, %v7609
    %v7641 = vmax.f32 %v7433, %v7593
    %v7642 = vmax.f32 %v7258, %v7610
    %v7643 = vmax.f32 %v7259, %v7611
    %v7644 = vmax.f32 %v7260, %v7612
    %v7645 = vmax.f32 %v7261, %v7613
    %v7646 = vmax.f32 %v7262, %v7614
    %v7647 = vmax.f32 %v7263, %v7615
    %v7648 = vmax.f32 %v7264, %v7616
    %v7649 = vmax.f32 %v7265, %v7617
    %v7650 = vmax.f32 %v7266, %v7618
    %v7651 = vmax.f32 %v7267, %v7619
    %v7652 = vmax.f32 %v7268, %v7620
    %v7653 = vmax.f32 %v7269, %v7621
    %v7654 = vmax.f32 %v7270, %v7622
    %v7655 = vmax.f32 %v7271, %v7623
    %v7656 = vmax.f32 %v7272, %v7624
    %v7657 = vmax.f32 %v7273, %v7625
    %v7658 = vmax.f32 %v7274, %v7626
    %v7659 = vmax.f32 %v7275, %v7627
    %v7660 = vmax.f32 %v7276, %v7628
    %v7661 = vmax.f32 %v7277, %v7629
    %v7662 = vmax.f32 %v7278, %v7630
    %v7663 = vmax.f32 %v7279, %v7631
    %v7664 = vmax.f32 %v7280, %v7632
    %v7665 = vmax.f32 %v7281, %v7633
    %v7666 = vmax.f32 %v7282, %v7634
    %v7667 = vmax.f32 %v7283, %v7635
    %v7668 = vmax.f32 %v7284, %v7636
    %v7669 = vmax.f32 %v7285, %v7637
    %v7670 = vmax.f32 %v7286, %v7638
    %v7671 = vmax.f32 %v7287, %v7639
    %v7672 = vmax.f32 %v7288, %v7640
    %v7673 = vmax.f32 %v7289, %v7641
    %7674 = vxpose.xlu0.b32.start [1/16] %v7642, 128
    %7675 = vxpose.xlu0.b32.cont [2/16] %v7644, 128
    %7676 = vxpose.xlu0.b32.cont [3/16] %v7646, 128
    %7677 = vxpose.xlu0.b32.cont [4/16] %v7648, 128
    %7678 = vxpose.xlu0.b32.cont [5/16] %v7650, 128
    %7679 = vxpose.xlu0.b32.cont [6/16] %v7652, 128
    %7680 = vxpose.xlu0.b32.cont [7/16] %v7654, 128
    %7681 = vxpose.xlu0.b32.cont [8/16] %v7656, 128
    %7682 = vxpose.xlu0.b32.cont [9/16] %v7658, 128
    %7683 = vxpose.xlu0.b32.cont [10/16] %v7660, 128
    %7684 = vxpose.xlu0.b32.cont [11/16] %v7662, 128
    %7685 = vxpose.xlu0.b32.cont [12/16] %v7664, 128
    %7686 = vxpose.xlu0.b32.cont [13/16] %v7666, 128
    %7687 = vxpose.xlu0.b32.cont [14/16] %v7668, 128
    %7688 = vxpose.xlu0.b32.cont [15/16] %v7670, 128
    %7689 = vxpose.xlu0.b32.end [16/16] %v7672, 128
    %v7690 = vpop.trf.xlu0
    %v7691 = vpop.trf.xlu0
    %v7692 = vpop.trf.xlu0
    %v7693 = vpop.trf.xlu0
    %v7694 = vpop.trf.xlu0
    %v7695 = vpop.trf.xlu0
    %v7696 = vpop.trf.xlu0
    %v7697 = vpop.trf.xlu0
    %v7698 = vpop.trf.xlu0
    %v7699 = vpop.trf.xlu0
    %v7700 = vpop.trf.xlu0
    %v7701 = vpop.trf.xlu0
    %v7702 = vpop.trf.xlu0
    %v7703 = vpop.trf.xlu0
    %v7704 = vpop.trf.xlu0
    %v7705 = vpop.trf.xlu0
    %7706 = vxpose.xlu0.b32.start [1/16] %v7643, 128
    %7707 = vxpose.xlu0.b32.cont [2/16] %v7645, 128
    %7708 = vxpose.xlu0.b32.cont [3/16] %v7647, 128
    %7709 = vxpose.xlu0.b32.cont [4/16] %v7649, 128
    %7710 = vxpose.xlu0.b32.cont [5/16] %v7651, 128
    %7711 = vxpose.xlu0.b32.cont [6/16] %v7653, 128
    %7712 = vxpose.xlu0.b32.cont [7/16] %v7655, 128
    %7713 = vxpose.xlu0.b32.cont [8/16] %v7657, 128
    %7714 = vxpose.xlu0.b32.cont [9/16] %v7659, 128
    %7715 = vxpose.xlu0.b32.cont [10/16] %v7661, 128
    %7716 = vxpose.xlu0.b32.cont [11/16] %v7663, 128
    %7717 = vxpose.xlu0.b32.cont [12/16] %v7665, 128
    %7718 = vxpose.xlu0.b32.cont [13/16] %v7667, 128
    %7719 = vxpose.xlu0.b32.cont [14/16] %v7669, 128
    %7720 = vxpose.xlu0.b32.cont [15/16] %v7671, 128
    %7721 = vxpose.xlu0.b32.end [16/16] %v7673, 128
    %v7722 = vpop.trf.xlu0
    %v7723 = vpop.trf.xlu0
    %v7724 = vpop.trf.xlu0
    %v7725 = vpop.trf.xlu0
    %v7726 = vpop.trf.xlu0
    %v7727 = vpop.trf.xlu0
    %v7728 = vpop.trf.xlu0
    %v7729 = vpop.trf.xlu0
    %v7730 = vpop.trf.xlu0
    %v7731 = vpop.trf.xlu0
    %v7732 = vpop.trf.xlu0
    %v7733 = vpop.trf.xlu0
    %v7734 = vpop.trf.xlu0
    %v7735 = vpop.trf.xlu0
    %v7736 = vpop.trf.xlu0
    %v7737 = vpop.trf.xlu0
    %v7739 = vrot.slane %v7692, 2
    %v7740 = vrot.slane %v7692, 4
    %v7742 = vrot.slane %v7696, 2
    %v7743 = vrot.slane %v7696, 4
    %v7745 = vrot.slane %v7700, 2
    %v7746 = vrot.slane %v7700, 4
    %v7748 = vrot.slane %v7724, 2
    %v7750 = vrot.slane %v7724, 4
    %v7753 = vrot.slane %v7728, 2
    %v7755 = vrot.slane %v7728, 4
    %v7758 = vrot.slane %v7732, 2
    %v7760 = vrot.slane %v7732, 4
    %v7762 = vrot.slane %v7692, 1
    %v7763 = vrot.slane %v7739, 1
    %v7764 = vrot.slane %v7740, 1
    %v7765 = vrot.slane %v7696, 1
    %v7766 = vrot.slane %v7742, 1
    %v7767 = vrot.slane %v7743, 1
    %v7768 = vrot.slane %v7700, 1
    %v7769 = vrot.slane %v7745, 1
    %v7770 = vrot.slane %v7746, 1
    %v7780 = vsel %vm1008, %v7762, %v7724
    %v7781 = vsel %vm1008, %v7763, %v7748
    %v7782 = vsel %vm1008, %v7764, %v7750
    %v7783 = vsel %vm1008, %v7765, %v7728
    %v7784 = vsel %vm1008, %v7766, %v7753
    %v7785 = vsel %vm1008, %v7767, %v7755
    %v7786 = vsel %vm1008, %v7768, %v7732
    %v7787 = vsel %vm1008, %v7769, %v7758
    %v7788 = vsel %vm1008, %v7770, %v7760
    %v7789 = vpack.c.bf16 %v7780, %v7780
    %v7790 = vpack.c.bf16 %v7781, %v7781
    %v7791 = vpack.c.bf16 %v7782, %v7782
    %v7792 = vpack.c.bf16 %v7783, %v7783
    %v7793 = vpack.c.bf16 %v7784, %v7784
    %v7794 = vpack.c.bf16 %v7785, %v7785
    %v7795 = vpack.c.bf16 %v7786, %v7786
    %v7796 = vpack.c.bf16 %v7787, %v7787
    %v7797 = vpack.c.bf16 %v7788, %v7788
    %s7798 = smul.u32 4, 144
    %s7799 = smul.u32 %s7798, 8
    %s7800 = sshll.u32 %s7799, 4
    %7801 = dma.done %s172, %s7800
    %v7802 = vld [vmem:[#allocation4] sm:$0xff]
    %v7803 = vld [vmem:[#allocation4 + $0x8] sm:$0xff]
    %v7804 = vld [vmem:[#allocation4 + $0x10] sm:$0xff]
    %v7805 = vld [vmem:[#allocation4 + $0x18] sm:$0xff]
    %v7806 = vld [vmem:[#allocation4 + $0x20] sm:$0xff]
    %v7807 = vld [vmem:[#allocation4 + $0x28] sm:$0xff]
    %v7808 = vld [vmem:[#allocation4 + $0x30] sm:$0xff]
    %v7809 = vld [vmem:[#allocation4 + $0x38] sm:$0xff]
    %v7810 = vld [vmem:[#allocation4 + $0x40] sm:$0xff]
    %v7811 = vld [vmem:[#allocation4 + $0x48] sm:$0xff]
    %v7812 = vld [vmem:[#allocation4 + $0x50] sm:$0xff]
    %v7813 = vld [vmem:[#allocation4 + $0x58] sm:$0xff]
    %v7814 = vld [vmem:[#allocation4 + $0x60] sm:$0xff]
    %v7815 = vld [vmem:[#allocation4 + $0x68] sm:$0xff]
    %v7816 = vld [vmem:[#allocation4 + $0x70] sm:$0xff]
    %v7817 = vld [vmem:[#allocation4 + $0x78] sm:$0xff]
    %v7818 = vld [vmem:[#allocation4 + $0x80] sm:$0xff]
    %v7819 = vld [vmem:[#allocation4 + $0x88] sm:$0xff]
    %v7820 = vld [vmem:[#allocation4 + $0x90] sm:$0xff]
    %v7821 = vld [vmem:[#allocation4 + $0x98] sm:$0xff]
    %v7822 = vld [vmem:[#allocation4 + $0xa0] sm:$0xff]
    %v7823 = vld [vmem:[#allocation4 + $0xa8] sm:$0xff]
    %v7824 = vld [vmem:[#allocation4 + $0xb0] sm:$0xff]
    %v7825 = vld [vmem:[#allocation4 + $0xb8] sm:$0xff]
    %v7826 = vld [vmem:[#allocation4 + $0xc0] sm:$0xff]
    %v7827 = vld [vmem:[#allocation4 + $0xc8] sm:$0xff]
    %v7828 = vld [vmem:[#allocation4 + $0xd0] sm:$0xff]
    %v7829 = vld [vmem:[#allocation4 + $0xd8] sm:$0xff]
    %v7830 = vld [vmem:[#allocation4 + $0xe0] sm:$0xff]
    %v7831 = vld [vmem:[#allocation4 + $0xe8] sm:$0xff]
    %v7832 = vld [vmem:[#allocation4 + $0xf0] sm:$0xff]
    %v7833 = vld [vmem:[#allocation4 + $0xf8] sm:$0xff]
    %v7834 = vld [vmem:[#allocation4 + $0x100] sm:$0xff]
    %v7835 = vld [vmem:[#allocation4 + $0x108] sm:$0xff]
    %v7836 = vld [vmem:[#allocation4 + $0x110] sm:$0xff]
    %v7837 = vld [vmem:[#allocation4 + $0x118] sm:$0xff]
    %v7838 = vld [vmem:[#allocation4 + $0x120] sm:$0xff]
    %v7839 = vld [vmem:[#allocation4 + $0x128] sm:$0xff]
    %v7840 = vld [vmem:[#allocation4 + $0x130] sm:$0xff]
    %v7841 = vld [vmem:[#allocation4 + $0x138] sm:$0xff]
    %v7842 = vld [vmem:[#allocation4 + $0x140] sm:$0xff]
    %v7843 = vld [vmem:[#allocation4 + $0x148] sm:$0xff]
    %v7844 = vld [vmem:[#allocation4 + $0x150] sm:$0xff]
    %v7845 = vld [vmem:[#allocation4 + $0x158] sm:$0xff]
    %v7846 = vld [vmem:[#allocation4 + $0x160] sm:$0xff]
    %v7847 = vld [vmem:[#allocation4 + $0x168] sm:$0xff]
    %v7848 = vld [vmem:[#allocation4 + $0x170] sm:$0xff]
    %v7849 = vld [vmem:[#allocation4 + $0x178] sm:$0xff]
    %v7850 = vld [vmem:[#allocation4 + $0x180] sm:$0xff]
    %v7851 = vld [vmem:[#allocation4 + $0x188] sm:$0xff]
    %v7852 = vld [vmem:[#allocation4 + $0x190] sm:$0xff]
    %v7853 = vld [vmem:[#allocation4 + $0x198] sm:$0xff]
    %v7854 = vld [vmem:[#allocation4 + $0x1a0] sm:$0xff]
    %v7855 = vld [vmem:[#allocation4 + $0x1a8] sm:$0xff]
    %v7856 = vld [vmem:[#allocation4 + $0x1b0] sm:$0xff]
    %v7857 = vld [vmem:[#allocation4 + $0x1b8] sm:$0xff]
    %v7858 = vld [vmem:[#allocation4 + $0x1c0] sm:$0xff]
    %v7859 = vld [vmem:[#allocation4 + $0x1c8] sm:$0xff]
    %v7860 = vld [vmem:[#allocation4 + $0x1d0] sm:$0xff]
    %v7861 = vld [vmem:[#allocation4 + $0x1d8] sm:$0xff]
    %v7862 = vld [vmem:[#allocation4 + $0x1e0] sm:$0xff]
    %v7863 = vld [vmem:[#allocation4 + $0x1e8] sm:$0xff]
    %v7864 = vld [vmem:[#allocation4 + $0x1f0] sm:$0xff]
    %v7865 = vld [vmem:[#allocation4 + $0x1f8] sm:$0xff]
    %v7866 = vld [vmem:[#allocation4 + $0x200] sm:$0xff]
    %v7867 = vld [vmem:[#allocation4 + $0x208] sm:$0xff]
    %v7868 = vld [vmem:[#allocation4 + $0x210] sm:$0xff]
    %v7869 = vld [vmem:[#allocation4 + $0x218] sm:$0xff]
    %v7870 = vld [vmem:[#allocation4 + $0x220] sm:$0xff]
    %v7871 = vld [vmem:[#allocation4 + $0x228] sm:$0xff]
    %v7872 = vld [vmem:[#allocation4 + $0x230] sm:$0xff]
    %v7873 = vld [vmem:[#allocation4 + $0x238] sm:$0xff]
    %v7874 = vld [vmem:[#allocation4 + $0x240] sm:$0xff]
    %v7875 = vld [vmem:[#allocation4 + $0x248] sm:$0xff]
    %v7876 = vld [vmem:[#allocation4 + $0x250] sm:$0xff]
    %v7877 = vld [vmem:[#allocation4 + $0x258] sm:$0xff]
    %v7878 = vld [vmem:[#allocation4 + $0x260] sm:$0xff]
    %v7879 = vld [vmem:[#allocation4 + $0x268] sm:$0xff]
    %v7880 = vld [vmem:[#allocation4 + $0x270] sm:$0xff]
    %v7881 = vld [vmem:[#allocation4 + $0x278] sm:$0xff]
    %v7882 = vld [vmem:[#allocation4 + $0x280] sm:$0xff]
    %v7883 = vld [vmem:[#allocation4 + $0x288] sm:$0xff]
    %v7884 = vld [vmem:[#allocation4 + $0x290] sm:$0xff]
    %v7885 = vld [vmem:[#allocation4 + $0x298] sm:$0xff]
    %v7886 = vld [vmem:[#allocation4 + $0x2a0] sm:$0xff]
    %v7887 = vld [vmem:[#allocation4 + $0x2a8] sm:$0xff]
    %v7888 = vld [vmem:[#allocation4 + $0x2b0] sm:$0xff]
    %v7889 = vld [vmem:[#allocation4 + $0x2b8] sm:$0xff]
    %v7890 = vld [vmem:[#allocation4 + $0x2c0] sm:$0xff]
    %v7891 = vld [vmem:[#allocation4 + $0x2c8] sm:$0xff]
    %v7892 = vld [vmem:[#allocation4 + $0x2d0] sm:$0xff]
    %v7893 = vld [vmem:[#allocation4 + $0x2d8] sm:$0xff]
    %v7894 = vld [vmem:[#allocation4 + $0x2e0] sm:$0xff]
    %v7895 = vld [vmem:[#allocation4 + $0x2e8] sm:$0xff]
    %v7896 = vld [vmem:[#allocation4 + $0x2f0] sm:$0xff]
    %v7897 = vld [vmem:[#allocation4 + $0x2f8] sm:$0xff]
    %v7898 = vld [vmem:[#allocation4 + $0x300] sm:$0xff]
    %v7899 = vld [vmem:[#allocation4 + $0x308] sm:$0xff]
    %v7900 = vld [vmem:[#allocation4 + $0x310] sm:$0xff]
    %v7901 = vld [vmem:[#allocation4 + $0x318] sm:$0xff]
    %v7902 = vld [vmem:[#allocation4 + $0x320] sm:$0xff]
    %v7903 = vld [vmem:[#allocation4 + $0x328] sm:$0xff]
    %v7904 = vld [vmem:[#allocation4 + $0x330] sm:$0xff]
    %v7905 = vld [vmem:[#allocation4 + $0x338] sm:$0xff]
    %v7906 = vld [vmem:[#allocation4 + $0x340] sm:$0xff]
    %v7907 = vld [vmem:[#allocation4 + $0x348] sm:$0xff]
    %v7908 = vld [vmem:[#allocation4 + $0x350] sm:$0xff]
    %v7909 = vld [vmem:[#allocation4 + $0x358] sm:$0xff]
    %v7910 = vld [vmem:[#allocation4 + $0x360] sm:$0xff]
    %v7911 = vld [vmem:[#allocation4 + $0x368] sm:$0xff]
    %v7912 = vld [vmem:[#allocation4 + $0x370] sm:$0xff]
    %v7913 = vld [vmem:[#allocation4 + $0x378] sm:$0xff]
    %v7914 = vld [vmem:[#allocation4 + $0x380] sm:$0xff]
    %v7915 = vld [vmem:[#allocation4 + $0x388] sm:$0xff]
    %v7916 = vld [vmem:[#allocation4 + $0x390] sm:$0xff]
    %v7917 = vld [vmem:[#allocation4 + $0x398] sm:$0xff]
    %v7918 = vld [vmem:[#allocation4 + $0x3a0] sm:$0xff]
    %v7919 = vld [vmem:[#allocation4 + $0x3a8] sm:$0xff]
    %v7920 = vld [vmem:[#allocation4 + $0x3b0] sm:$0xff]
    %v7921 = vld [vmem:[#allocation4 + $0x3b8] sm:$0xff]
    %v7922 = vld [vmem:[#allocation4 + $0x3c0] sm:$0xff]
    %v7923 = vld [vmem:[#allocation4 + $0x3c8] sm:$0xff]
    %v7924 = vld [vmem:[#allocation4 + $0x3d0] sm:$0xff]
    %v7925 = vld [vmem:[#allocation4 + $0x3d8] sm:$0xff]
    %v7926 = vld [vmem:[#allocation4 + $0x3e0] sm:$0xff]
    %v7927 = vld [vmem:[#allocation4 + $0x3e8] sm:$0xff]
    %v7928 = vld [vmem:[#allocation4 + $0x3f0] sm:$0xff]
    %v7929 = vld [vmem:[#allocation4 + $0x3f8] sm:$0xff]
    %v7930 = vld [vmem:[#allocation4 + $0x400] sm:$0xff]
    %v7931 = vld [vmem:[#allocation4 + $0x408] sm:$0xff]
    %v7932 = vld [vmem:[#allocation4 + $0x410] sm:$0xff]
    %v7933 = vld [vmem:[#allocation4 + $0x418] sm:$0xff]
    %v7934 = vld [vmem:[#allocation4 + $0x420] sm:$0xff]
    %v7935 = vld [vmem:[#allocation4 + $0x428] sm:$0xff]
    %v7936 = vld [vmem:[#allocation4 + $0x430] sm:$0xff]
    %v7937 = vld [vmem:[#allocation4 + $0x438] sm:$0xff]
    %v7938 = vld [vmem:[#allocation4 + $0x440] sm:$0xff]
    %v7939 = vld [vmem:[#allocation4 + $0x448] sm:$0xff]
    %v7940 = vld [vmem:[#allocation4 + $0x450] sm:$0xff]
    %v7941 = vld [vmem:[#allocation4 + $0x458] sm:$0xff]
    %v7942 = vld [vmem:[#allocation4 + $0x460] sm:$0xff]
    %v7943 = vld [vmem:[#allocation4 + $0x468] sm:$0xff]
    %v7944 = vld [vmem:[#allocation4 + $0x470] sm:$0xff]
    %v7945 = vld [vmem:[#allocation4 + $0x478] sm:$0xff]
    %v7946 = vld [vmem:[#allocation4 + $0x480] sm:$0xff]
    %v7947 = vld [vmem:[#allocation4 + $0x488] sm:$0xff]
    %v7948 = vld [vmem:[#allocation4 + $0x490] sm:$0xff]
    %v7949 = vld [vmem:[#allocation4 + $0x498] sm:$0xff]
    %v7950 = vld [vmem:[#allocation4 + $0x4a0] sm:$0xff]
    %v7951 = vld [vmem:[#allocation4 + $0x4a8] sm:$0xff]
    %v7952 = vld [vmem:[#allocation4 + $0x4b0] sm:$0xff]
    %v7953 = vld [vmem:[#allocation4 + $0x4b8] sm:$0xff]
    %v7954 = vld [vmem:[#allocation4 + $0x4c0] sm:$0xff]
    %v7955 = vld [vmem:[#allocation4 + $0x4c8] sm:$0xff]
    %v7956 = vld [vmem:[#allocation4 + $0x4d0] sm:$0xff]
    %v7957 = vld [vmem:[#allocation4 + $0x4d8] sm:$0xff]
    %v7958 = vld [vmem:[#allocation4 + $0x4e0] sm:$0xff]
    %v7959 = vld [vmem:[#allocation4 + $0x4e8] sm:$0xff]
    %v7960 = vld [vmem:[#allocation4 + $0x4f0] sm:$0xff]
    %v7961 = vld [vmem:[#allocation4 + $0x4f8] sm:$0xff]
    %v7962 = vld [vmem:[#allocation4 + $0x500] sm:$0xff]
    %v7963 = vld [vmem:[#allocation4 + $0x508] sm:$0xff]
    %v7964 = vld [vmem:[#allocation4 + $0x510] sm:$0xff]
    %v7965 = vld [vmem:[#allocation4 + $0x518] sm:$0xff]
    %v7966 = vld [vmem:[#allocation4 + $0x520] sm:$0xff]
    %v7967 = vld [vmem:[#allocation4 + $0x528] sm:$0xff]
    %v7968 = vld [vmem:[#allocation4 + $0x530] sm:$0xff]
    %v7969 = vld [vmem:[#allocation4 + $0x538] sm:$0xff]
    %v7970 = vld [vmem:[#allocation4 + $0x540] sm:$0xff]
    %v7971 = vld [vmem:[#allocation4 + $0x548] sm:$0xff]
    %v7972 = vld [vmem:[#allocation4 + $0x550] sm:$0xff]
    %v7973 = vld [vmem:[#allocation4 + $0x558] sm:$0xff]
    %v7974 = vld [vmem:[#allocation4 + $0x560] sm:$0xff]
    %v7975 = vld [vmem:[#allocation4 + $0x568] sm:$0xff]
    %v7976 = vld [vmem:[#allocation4 + $0x570] sm:$0xff]
    %v7977 = vld [vmem:[#allocation4 + $0x578] sm:$0xff]
    %v7978 = vld [vmem:[#allocation4 + $0x580] sm:$0xff]
    %v7979 = vld [vmem:[#allocation4 + $0x588] sm:$0xff]
    %v7980 = vld [vmem:[#allocation4 + $0x590] sm:$0xff]
    %v7981 = vld [vmem:[#allocation4 + $0x598] sm:$0xff]
    %v7982 = vld [vmem:[#allocation4 + $0x5a0] sm:$0xff]
    %v7983 = vld [vmem:[#allocation4 + $0x5a8] sm:$0xff]
    %v7984 = vld [vmem:[#allocation4 + $0x5b0] sm:$0xff]
    %v7985 = vld [vmem:[#allocation4 + $0x5b8] sm:$0xff]
    %v7986 = vld [vmem:[#allocation4 + $0x5c0] sm:$0xff]
    %v7987 = vld [vmem:[#allocation4 + $0x5c8] sm:$0xff]
    %v7988 = vld [vmem:[#allocation4 + $0x5d0] sm:$0xff]
    %v7989 = vld [vmem:[#allocation4 + $0x5d8] sm:$0xff]
    %v7990 = vld [vmem:[#allocation4 + $0x5e0] sm:$0xff]
    %v7991 = vld [vmem:[#allocation4 + $0x5e8] sm:$0xff]
    %v7992 = vld [vmem:[#allocation4 + $0x5f0] sm:$0xff]
    %v7993 = vld [vmem:[#allocation4 + $0x5f8] sm:$0xff]
    %v7994 = vld [vmem:[#allocation4 + $0x600] sm:$0xff]
    %v7995 = vld [vmem:[#allocation4 + $0x608] sm:$0xff]
    %v7996 = vld [vmem:[#allocation4 + $0x610] sm:$0xff]
    %v7997 = vld [vmem:[#allocation4 + $0x618] sm:$0xff]
    %v7998 = vld [vmem:[#allocation4 + $0x620] sm:$0xff]
    %v7999 = vld [vmem:[#allocation4 + $0x628] sm:$0xff]
    %v8000 = vld [vmem:[#allocation4 + $0x630] sm:$0xff]
    %v8001 = vld [vmem:[#allocation4 + $0x638] sm:$0xff]
    %v8002 = vld [vmem:[#allocation4 + $0x640] sm:$0xff]
    %v8003 = vld [vmem:[#allocation4 + $0x648] sm:$0xff]
    %v8004 = vld [vmem:[#allocation4 + $0x650] sm:$0xff]
    %v8005 = vld [vmem:[#allocation4 + $0x658] sm:$0xff]
    %v8006 = vld [vmem:[#allocation4 + $0x660] sm:$0xff]
    %v8007 = vld [vmem:[#allocation4 + $0x668] sm:$0xff]
    %v8008 = vld [vmem:[#allocation4 + $0x670] sm:$0xff]
    %v8009 = vld [vmem:[#allocation4 + $0x678] sm:$0xff]
    %v8010 = vld [vmem:[#allocation4 + $0x680] sm:$0xff]
    %v8011 = vld [vmem:[#allocation4 + $0x688] sm:$0xff]
    %v8012 = vld [vmem:[#allocation4 + $0x690] sm:$0xff]
    %v8013 = vld [vmem:[#allocation4 + $0x698] sm:$0xff]
    %v8014 = vld [vmem:[#allocation4 + $0x6a0] sm:$0xff]
    %v8015 = vld [vmem:[#allocation4 + $0x6a8] sm:$0xff]
    %v8016 = vld [vmem:[#allocation4 + $0x6b0] sm:$0xff]
    %v8017 = vld [vmem:[#allocation4 + $0x6b8] sm:$0xff]
    %v8018 = vld [vmem:[#allocation4 + $0x6c0] sm:$0xff]
    %v8019 = vld [vmem:[#allocation4 + $0x6c8] sm:$0xff]
    %v8020 = vld [vmem:[#allocation4 + $0x6d0] sm:$0xff]
    %v8021 = vld [vmem:[#allocation4 + $0x6d8] sm:$0xff]
    %v8022 = vld [vmem:[#allocation4 + $0x6e0] sm:$0xff]
    %v8023 = vld [vmem:[#allocation4 + $0x6e8] sm:$0xff]
    %v8024 = vld [vmem:[#allocation4 + $0x6f0] sm:$0xff]
    %v8025 = vld [vmem:[#allocation4 + $0x6f8] sm:$0xff]
    %v8026 = vld [vmem:[#allocation4 + $0x700] sm:$0xff]
    %v8027 = vld [vmem:[#allocation4 + $0x708] sm:$0xff]
    %v8028 = vld [vmem:[#allocation4 + $0x710] sm:$0xff]
    %v8029 = vld [vmem:[#allocation4 + $0x718] sm:$0xff]
    %v8030 = vld [vmem:[#allocation4 + $0x720] sm:$0xff]
    %v8031 = vld [vmem:[#allocation4 + $0x728] sm:$0xff]
    %v8032 = vld [vmem:[#allocation4 + $0x730] sm:$0xff]
    %v8033 = vld [vmem:[#allocation4 + $0x738] sm:$0xff]
    %v8034 = vld [vmem:[#allocation4 + $0x740] sm:$0xff]
    %v8035 = vld [vmem:[#allocation4 + $0x748] sm:$0xff]
    %v8036 = vld [vmem:[#allocation4 + $0x750] sm:$0xff]
    %v8037 = vld [vmem:[#allocation4 + $0x758] sm:$0xff]
    %v8038 = vld [vmem:[#allocation4 + $0x760] sm:$0xff]
    %v8039 = vld [vmem:[#allocation4 + $0x768] sm:$0xff]
    %v8040 = vld [vmem:[#allocation4 + $0x770] sm:$0xff]
    %v8041 = vld [vmem:[#allocation4 + $0x778] sm:$0xff]
    %v8042 = vld [vmem:[#allocation4 + $0x780] sm:$0xff]
    %v8043 = vld [vmem:[#allocation4 + $0x788] sm:$0xff]
    %v8044 = vld [vmem:[#allocation4 + $0x790] sm:$0xff]
    %v8045 = vld [vmem:[#allocation4 + $0x798] sm:$0xff]
    %v8046 = vld [vmem:[#allocation4 + $0x7a0] sm:$0xff]
    %v8047 = vld [vmem:[#allocation4 + $0x7a8] sm:$0xff]
    %v8048 = vld [vmem:[#allocation4 + $0x7b0] sm:$0xff]
    %v8049 = vld [vmem:[#allocation4 + $0x7b8] sm:$0xff]
    %v8050 = vld [vmem:[#allocation4 + $0x7c0] sm:$0xff]
    %v8051 = vld [vmem:[#allocation4 + $0x7c8] sm:$0xff]
    %v8052 = vld [vmem:[#allocation4 + $0x7d0] sm:$0xff]
    %v8053 = vld [vmem:[#allocation4 + $0x7d8] sm:$0xff]
    %v8054 = vld [vmem:[#allocation4 + $0x7e0] sm:$0xff]
    %v8055 = vld [vmem:[#allocation4 + $0x7e8] sm:$0xff]
    %v8056 = vld [vmem:[#allocation4 + $0x7f0] sm:$0xff]
    %v8057 = vld [vmem:[#allocation4 + $0x7f8] sm:$0xff]
    %v8058 = vld [vmem:[#allocation4 + $0x800] sm:$0xff]
    %v8059 = vld [vmem:[#allocation4 + $0x808] sm:$0xff]
    %v8060 = vld [vmem:[#allocation4 + $0x810] sm:$0xff]
    %v8061 = vld [vmem:[#allocation4 + $0x818] sm:$0xff]
    %v8062 = vld [vmem:[#allocation4 + $0x820] sm:$0xff]
    %v8063 = vld [vmem:[#allocation4 + $0x828] sm:$0xff]
    %v8064 = vld [vmem:[#allocation4 + $0x830] sm:$0xff]
    %v8065 = vld [vmem:[#allocation4 + $0x838] sm:$0xff]
    %v8066 = vld [vmem:[#allocation4 + $0x840] sm:$0xff]
    %v8067 = vld [vmem:[#allocation4 + $0x848] sm:$0xff]
    %v8068 = vld [vmem:[#allocation4 + $0x850] sm:$0xff]
    %v8069 = vld [vmem:[#allocation4 + $0x858] sm:$0xff]
    %v8070 = vld [vmem:[#allocation4 + $0x860] sm:$0xff]
    %v8071 = vld [vmem:[#allocation4 + $0x868] sm:$0xff]
    %v8072 = vld [vmem:[#allocation4 + $0x870] sm:$0xff]
    %v8073 = vld [vmem:[#allocation4 + $0x878] sm:$0xff]
    %v8074 = vld [vmem:[#allocation4 + $0x880] sm:$0xff]
    %v8075 = vld [vmem:[#allocation4 + $0x888] sm:$0xff]
    %v8076 = vld [vmem:[#allocation4 + $0x890] sm:$0xff]
    %v8077 = vld [vmem:[#allocation4 + $0x898] sm:$0xff]
    %v8078 = vld [vmem:[#allocation4 + $0x8a0] sm:$0xff]
    %v8079 = vld [vmem:[#allocation4 + $0x8a8] sm:$0xff]
    %v8080 = vld [vmem:[#allocation4 + $0x8b0] sm:$0xff]
    %v8081 = vld [vmem:[#allocation4 + $0x8b8] sm:$0xff]
    %v8082 = vld [vmem:[#allocation4 + $0x8c0] sm:$0xff]
    %v8083 = vld [vmem:[#allocation4 + $0x8c8] sm:$0xff]
    %v8084 = vld [vmem:[#allocation4 + $0x8d0] sm:$0xff]
    %v8085 = vld [vmem:[#allocation4 + $0x8d8] sm:$0xff]
    %v8086 = vld [vmem:[#allocation4 + $0x8e0] sm:$0xff]
    %v8087 = vld [vmem:[#allocation4 + $0x8e8] sm:$0xff]
    %v8088 = vld [vmem:[#allocation4 + $0x8f0] sm:$0xff]
    %v8089 = vld [vmem:[#allocation4 + $0x8f8] sm:$0xff]
    %v8090 = vld [vmem:[#allocation4 + $0x900] sm:$0xff]
    %v8091 = vld [vmem:[#allocation4 + $0x908] sm:$0xff]
    %v8092 = vld [vmem:[#allocation4 + $0x910] sm:$0xff]
    %v8093 = vld [vmem:[#allocation4 + $0x918] sm:$0xff]
    %v8094 = vld [vmem:[#allocation4 + $0x920] sm:$0xff]
    %v8095 = vld [vmem:[#allocation4 + $0x928] sm:$0xff]
    %v8096 = vld [vmem:[#allocation4 + $0x930] sm:$0xff]
    %v8097 = vld [vmem:[#allocation4 + $0x938] sm:$0xff]
    %v8098 = vld [vmem:[#allocation4 + $0x940] sm:$0xff]
    %v8099 = vld [vmem:[#allocation4 + $0x948] sm:$0xff]
    %v8100 = vld [vmem:[#allocation4 + $0x950] sm:$0xff]
    %v8101 = vld [vmem:[#allocation4 + $0x958] sm:$0xff]
    %v8102 = vld [vmem:[#allocation4 + $0x960] sm:$0xff]
    %v8103 = vld [vmem:[#allocation4 + $0x968] sm:$0xff]
    %v8104 = vld [vmem:[#allocation4 + $0x970] sm:$0xff]
    %v8105 = vld [vmem:[#allocation4 + $0x978] sm:$0xff]
    %v8106 = vld [vmem:[#allocation4 + $0x980] sm:$0xff]
    %v8107 = vld [vmem:[#allocation4 + $0x988] sm:$0xff]
    %v8108 = vld [vmem:[#allocation4 + $0x990] sm:$0xff]
    %v8109 = vld [vmem:[#allocation4 + $0x998] sm:$0xff]
    %v8110 = vld [vmem:[#allocation4 + $0x9a0] sm:$0xff]
    %v8111 = vld [vmem:[#allocation4 + $0x9a8] sm:$0xff]
    %v8112 = vld [vmem:[#allocation4 + $0x9b0] sm:$0xff]
    %v8113 = vld [vmem:[#allocation4 + $0x9b8] sm:$0xff]
    %v8114 = vld [vmem:[#allocation4 + $0x9c0] sm:$0xff]
    %v8115 = vld [vmem:[#allocation4 + $0x9c8] sm:$0xff]
    %v8116 = vld [vmem:[#allocation4 + $0x9d0] sm:$0xff]
    %v8117 = vld [vmem:[#allocation4 + $0x9d8] sm:$0xff]
    %v8118 = vld [vmem:[#allocation4 + $0x9e0] sm:$0xff]
    %v8119 = vld [vmem:[#allocation4 + $0x9e8] sm:$0xff]
    %v8120 = vld [vmem:[#allocation4 + $0x9f0] sm:$0xff]
    %v8121 = vld [vmem:[#allocation4 + $0x9f8] sm:$0xff]
    %v8122 = vld [vmem:[#allocation4 + $0xa00] sm:$0xff]
    %v8123 = vld [vmem:[#allocation4 + $0xa08] sm:$0xff]
    %v8124 = vld [vmem:[#allocation4 + $0xa10] sm:$0xff]
    %v8125 = vld [vmem:[#allocation4 + $0xa18] sm:$0xff]
    %v8126 = vld [vmem:[#allocation4 + $0xa20] sm:$0xff]
    %v8127 = vld [vmem:[#allocation4 + $0xa28] sm:$0xff]
    %v8128 = vld [vmem:[#allocation4 + $0xa30] sm:$0xff]
    %v8129 = vld [vmem:[#allocation4 + $0xa38] sm:$0xff]
    %v8130 = vld [vmem:[#allocation4 + $0xa40] sm:$0xff]
    %v8131 = vld [vmem:[#allocation4 + $0xa48] sm:$0xff]
    %v8132 = vld [vmem:[#allocation4 + $0xa50] sm:$0xff]
    %v8133 = vld [vmem:[#allocation4 + $0xa58] sm:$0xff]
    %v8134 = vld [vmem:[#allocation4 + $0xa60] sm:$0xff]
    %v8135 = vld [vmem:[#allocation4 + $0xa68] sm:$0xff]
    %v8136 = vld [vmem:[#allocation4 + $0xa70] sm:$0xff]
    %v8137 = vld [vmem:[#allocation4 + $0xa78] sm:$0xff]
    %v8138 = vld [vmem:[#allocation4 + $0xa80] sm:$0xff]
    %v8139 = vld [vmem:[#allocation4 + $0xa88] sm:$0xff]
    %v8140 = vld [vmem:[#allocation4 + $0xa90] sm:$0xff]
    %v8141 = vld [vmem:[#allocation4 + $0xa98] sm:$0xff]
    %v8142 = vld [vmem:[#allocation4 + $0xaa0] sm:$0xff]
    %v8143 = vld [vmem:[#allocation4 + $0xaa8] sm:$0xff]
    %v8144 = vld [vmem:[#allocation4 + $0xab0] sm:$0xff]
    %v8145 = vld [vmem:[#allocation4 + $0xab8] sm:$0xff]
    %v8146 = vld [vmem:[#allocation4 + $0xac0] sm:$0xff]
    %v8147 = vld [vmem:[#allocation4 + $0xac8] sm:$0xff]
    %v8148 = vld [vmem:[#allocation4 + $0xad0] sm:$0xff]
    %v8149 = vld [vmem:[#allocation4 + $0xad8] sm:$0xff]
    %v8150 = vld [vmem:[#allocation4 + $0xae0] sm:$0xff]
    %v8151 = vld [vmem:[#allocation4 + $0xae8] sm:$0xff]
    %v8152 = vld [vmem:[#allocation4 + $0xaf0] sm:$0xff]
    %v8153 = vld [vmem:[#allocation4 + $0xaf8] sm:$0xff]
    %v8154 = vld [vmem:[#allocation4 + $0xb00] sm:$0xff]
    %v8155 = vld [vmem:[#allocation4 + $0xb08] sm:$0xff]
    %v8156 = vld [vmem:[#allocation4 + $0xb10] sm:$0xff]
    %v8157 = vld [vmem:[#allocation4 + $0xb18] sm:$0xff]
    %v8158 = vld [vmem:[#allocation4 + $0xb20] sm:$0xff]
    %v8159 = vld [vmem:[#allocation4 + $0xb28] sm:$0xff]
    %v8160 = vld [vmem:[#allocation4 + $0xb30] sm:$0xff]
    %v8161 = vld [vmem:[#allocation4 + $0xb38] sm:$0xff]
    %v8162 = vld [vmem:[#allocation4 + $0xb40] sm:$0xff]
    %v8163 = vld [vmem:[#allocation4 + $0xb48] sm:$0xff]
    %v8164 = vld [vmem:[#allocation4 + $0xb50] sm:$0xff]
    %v8165 = vld [vmem:[#allocation4 + $0xb58] sm:$0xff]
    %v8166 = vld [vmem:[#allocation4 + $0xb60] sm:$0xff]
    %v8167 = vld [vmem:[#allocation4 + $0xb68] sm:$0xff]
    %v8168 = vld [vmem:[#allocation4 + $0xb70] sm:$0xff]
    %v8169 = vld [vmem:[#allocation4 + $0xb78] sm:$0xff]
    %v8170 = vld [vmem:[#allocation4 + $0xb80] sm:$0xff]
    %v8171 = vld [vmem:[#allocation4 + $0xb88] sm:$0xff]
    %v8172 = vld [vmem:[#allocation4 + $0xb90] sm:$0xff]
    %v8173 = vld [vmem:[#allocation4 + $0xb98] sm:$0xff]
    %v8174 = vld [vmem:[#allocation4 + $0xba0] sm:$0xff]
    %v8175 = vld [vmem:[#allocation4 + $0xba8] sm:$0xff]
    %v8176 = vld [vmem:[#allocation4 + $0xbb0] sm:$0xff]
    %v8177 = vld [vmem:[#allocation4 + $0xbb8] sm:$0xff]
    %v8178 = vld [vmem:[#allocation4 + $0xbc0] sm:$0xff]
    %v8179 = vld [vmem:[#allocation4 + $0xbc8] sm:$0xff]
    %v8180 = vld [vmem:[#allocation4 + $0xbd0] sm:$0xff]
    %v8181 = vld [vmem:[#allocation4 + $0xbd8] sm:$0xff]
    %v8182 = vld [vmem:[#allocation4 + $0xbe0] sm:$0xff]
    %v8183 = vld [vmem:[#allocation4 + $0xbe8] sm:$0xff]
    %v8184 = vld [vmem:[#allocation4 + $0xbf0] sm:$0xff]
    %v8185 = vld [vmem:[#allocation4 + $0xbf8] sm:$0xff]
    %v8186 = vld [vmem:[#allocation4 + $0xc00] sm:$0xff]
    %v8187 = vld [vmem:[#allocation4 + $0xc08] sm:$0xff]
    %v8188 = vld [vmem:[#allocation4 + $0xc10] sm:$0xff]
    %v8189 = vld [vmem:[#allocation4 + $0xc18] sm:$0xff]
    %v8190 = vld [vmem:[#allocation4 + $0xc20] sm:$0xff]
    %v8191 = vld [vmem:[#allocation4 + $0xc28] sm:$0xff]
    %v8192 = vld [vmem:[#allocation4 + $0xc30] sm:$0xff]
    %v8193 = vld [vmem:[#allocation4 + $0xc38] sm:$0xff]
    %v8194 = vld [vmem:[#allocation4 + $0xc40] sm:$0xff]
    %v8195 = vld [vmem:[#allocation4 + $0xc48] sm:$0xff]
    %v8196 = vld [vmem:[#allocation4 + $0xc50] sm:$0xff]
    %v8197 = vld [vmem:[#allocation4 + $0xc58] sm:$0xff]
    %v8198 = vld [vmem:[#allocation4 + $0xc60] sm:$0xff]
    %v8199 = vld [vmem:[#allocation4 + $0xc68] sm:$0xff]
    %v8200 = vld [vmem:[#allocation4 + $0xc70] sm:$0xff]
    %v8201 = vld [vmem:[#allocation4 + $0xc78] sm:$0xff]
    %v8202 = vld [vmem:[#allocation4 + $0xc80] sm:$0xff]
    %v8203 = vld [vmem:[#allocation4 + $0xc88] sm:$0xff]
    %v8204 = vld [vmem:[#allocation4 + $0xc90] sm:$0xff]
    %v8205 = vld [vmem:[#allocation4 + $0xc98] sm:$0xff]
    %v8206 = vld [vmem:[#allocation4 + $0xca0] sm:$0xff]
    %v8207 = vld [vmem:[#allocation4 + $0xca8] sm:$0xff]
    %v8208 = vld [vmem:[#allocation4 + $0xcb0] sm:$0xff]
    %v8209 = vld [vmem:[#allocation4 + $0xcb8] sm:$0xff]
    %v8210 = vld [vmem:[#allocation4 + $0xcc0] sm:$0xff]
    %v8211 = vld [vmem:[#allocation4 + $0xcc8] sm:$0xff]
    %v8212 = vld [vmem:[#allocation4 + $0xcd0] sm:$0xff]
    %v8213 = vld [vmem:[#allocation4 + $0xcd8] sm:$0xff]
    %v8214 = vld [vmem:[#allocation4 + $0xce0] sm:$0xff]
    %v8215 = vld [vmem:[#allocation4 + $0xce8] sm:$0xff]
    %v8216 = vld [vmem:[#allocation4 + $0xcf0] sm:$0xff]
    %v8217 = vld [vmem:[#allocation4 + $0xcf8] sm:$0xff]
    %v8218 = vld [vmem:[#allocation4 + $0xd00] sm:$0xff]
    %v8219 = vld [vmem:[#allocation4 + $0xd08] sm:$0xff]
    %v8220 = vld [vmem:[#allocation4 + $0xd10] sm:$0xff]
    %v8221 = vld [vmem:[#allocation4 + $0xd18] sm:$0xff]
    %v8222 = vld [vmem:[#allocation4 + $0xd20] sm:$0xff]
    %v8223 = vld [vmem:[#allocation4 + $0xd28] sm:$0xff]
    %v8224 = vld [vmem:[#allocation4 + $0xd30] sm:$0xff]
    %v8225 = vld [vmem:[#allocation4 + $0xd38] sm:$0xff]
    %v8226 = vld [vmem:[#allocation4 + $0xd40] sm:$0xff]
    %v8227 = vld [vmem:[#allocation4 + $0xd48] sm:$0xff]
    %v8228 = vld [vmem:[#allocation4 + $0xd50] sm:$0xff]
    %v8229 = vld [vmem:[#allocation4 + $0xd58] sm:$0xff]
    %v8230 = vld [vmem:[#allocation4 + $0xd60] sm:$0xff]
    %v8231 = vld [vmem:[#allocation4 + $0xd68] sm:$0xff]
    %v8232 = vld [vmem:[#allocation4 + $0xd70] sm:$0xff]
    %v8233 = vld [vmem:[#allocation4 + $0xd78] sm:$0xff]
    %v8234 = vld [vmem:[#allocation4 + $0xd80] sm:$0xff]
    %v8235 = vld [vmem:[#allocation4 + $0xd88] sm:$0xff]
    %v8236 = vld [vmem:[#allocation4 + $0xd90] sm:$0xff]
    %v8237 = vld [vmem:[#allocation4 + $0xd98] sm:$0xff]
    %v8238 = vld [vmem:[#allocation4 + $0xda0] sm:$0xff]
    %v8239 = vld [vmem:[#allocation4 + $0xda8] sm:$0xff]
    %v8240 = vld [vmem:[#allocation4 + $0xdb0] sm:$0xff]
    %v8241 = vld [vmem:[#allocation4 + $0xdb8] sm:$0xff]
    %v8242 = vld [vmem:[#allocation4 + $0xdc0] sm:$0xff]
    %v8243 = vld [vmem:[#allocation4 + $0xdc8] sm:$0xff]
    %v8244 = vld [vmem:[#allocation4 + $0xdd0] sm:$0xff]
    %v8245 = vld [vmem:[#allocation4 + $0xdd8] sm:$0xff]
    %v8246 = vld [vmem:[#allocation4 + $0xde0] sm:$0xff]
    %v8247 = vld [vmem:[#allocation4 + $0xde8] sm:$0xff]
    %v8248 = vld [vmem:[#allocation4 + $0xdf0] sm:$0xff]
    %v8249 = vld [vmem:[#allocation4 + $0xdf8] sm:$0xff]
    %v8250 = vld [vmem:[#allocation4 + $0xe00] sm:$0xff]
    %v8251 = vld [vmem:[#allocation4 + $0xe08] sm:$0xff]
    %v8252 = vld [vmem:[#allocation4 + $0xe10] sm:$0xff]
    %v8253 = vld [vmem:[#allocation4 + $0xe18] sm:$0xff]
    %v8254 = vld [vmem:[#allocation4 + $0xe20] sm:$0xff]
    %v8255 = vld [vmem:[#allocation4 + $0xe28] sm:$0xff]
    %v8256 = vld [vmem:[#allocation4 + $0xe30] sm:$0xff]
    %v8257 = vld [vmem:[#allocation4 + $0xe38] sm:$0xff]
    %v8258 = vld [vmem:[#allocation4 + $0xe40] sm:$0xff]
    %v8259 = vld [vmem:[#allocation4 + $0xe48] sm:$0xff]
    %v8260 = vld [vmem:[#allocation4 + $0xe50] sm:$0xff]
    %v8261 = vld [vmem:[#allocation4 + $0xe58] sm:$0xff]
    %v8262 = vld [vmem:[#allocation4 + $0xe60] sm:$0xff]
    %v8263 = vld [vmem:[#allocation4 + $0xe68] sm:$0xff]
    %v8264 = vld [vmem:[#allocation4 + $0xe70] sm:$0xff]
    %v8265 = vld [vmem:[#allocation4 + $0xe78] sm:$0xff]
    %v8266 = vld [vmem:[#allocation4 + $0xe80] sm:$0xff]
    %v8267 = vld [vmem:[#allocation4 + $0xe88] sm:$0xff]
    %v8268 = vld [vmem:[#allocation4 + $0xe90] sm:$0xff]
    %v8269 = vld [vmem:[#allocation4 + $0xe98] sm:$0xff]
    %v8270 = vld [vmem:[#allocation4 + $0xea0] sm:$0xff]
    %v8271 = vld [vmem:[#allocation4 + $0xea8] sm:$0xff]
    %v8272 = vld [vmem:[#allocation4 + $0xeb0] sm:$0xff]
    %v8273 = vld [vmem:[#allocation4 + $0xeb8] sm:$0xff]
    %v8274 = vld [vmem:[#allocation4 + $0xec0] sm:$0xff]
    %v8275 = vld [vmem:[#allocation4 + $0xec8] sm:$0xff]
    %v8276 = vld [vmem:[#allocation4 + $0xed0] sm:$0xff]
    %v8277 = vld [vmem:[#allocation4 + $0xed8] sm:$0xff]
    %v8278 = vld [vmem:[#allocation4 + $0xee0] sm:$0xff]
    %v8279 = vld [vmem:[#allocation4 + $0xee8] sm:$0xff]
    %v8280 = vld [vmem:[#allocation4 + $0xef0] sm:$0xff]
    %v8281 = vld [vmem:[#allocation4 + $0xef8] sm:$0xff]
    %v8282 = vld [vmem:[#allocation4 + $0xf00] sm:$0xff]
    %v8283 = vld [vmem:[#allocation4 + $0xf08] sm:$0xff]
    %v8284 = vld [vmem:[#allocation4 + $0xf10] sm:$0xff]
    %v8285 = vld [vmem:[#allocation4 + $0xf18] sm:$0xff]
    %v8286 = vld [vmem:[#allocation4 + $0xf20] sm:$0xff]
    %v8287 = vld [vmem:[#allocation4 + $0xf28] sm:$0xff]
    %v8288 = vld [vmem:[#allocation4 + $0xf30] sm:$0xff]
    %v8289 = vld [vmem:[#allocation4 + $0xf38] sm:$0xff]
    %v8290 = vld [vmem:[#allocation4 + $0xf40] sm:$0xff]
    %v8291 = vld [vmem:[#allocation4 + $0xf48] sm:$0xff]
    %v8292 = vld [vmem:[#allocation4 + $0xf50] sm:$0xff]
    %v8293 = vld [vmem:[#allocation4 + $0xf58] sm:$0xff]
    %v8294 = vld [vmem:[#allocation4 + $0xf60] sm:$0xff]
    %v8295 = vld [vmem:[#allocation4 + $0xf68] sm:$0xff]
    %v8296 = vld [vmem:[#allocation4 + $0xf70] sm:$0xff]
    %v8297 = vld [vmem:[#allocation4 + $0xf78] sm:$0xff]
    %v8298 = vld [vmem:[#allocation4 + $0xf80] sm:$0xff]
    %v8299 = vld [vmem:[#allocation4 + $0xf88] sm:$0xff]
    %v8300 = vld [vmem:[#allocation4 + $0xf90] sm:$0xff]
    %v8301 = vld [vmem:[#allocation4 + $0xf98] sm:$0xff]
    %v8302 = vld [vmem:[#allocation4 + $0xfa0] sm:$0xff]
    %v8303 = vld [vmem:[#allocation4 + $0xfa8] sm:$0xff]
    %v8304 = vld [vmem:[#allocation4 + $0xfb0] sm:$0xff]
    %v8305 = vld [vmem:[#allocation4 + $0xfb8] sm:$0xff]
    %v8306 = vld [vmem:[#allocation4 + $0xfc0] sm:$0xff]
    %v8307 = vld [vmem:[#allocation4 + $0xfc8] sm:$0xff]
    %v8308 = vld [vmem:[#allocation4 + $0xfd0] sm:$0xff]
    %v8309 = vld [vmem:[#allocation4 + $0xfd8] sm:$0xff]
    %v8310 = vld [vmem:[#allocation4 + $0xfe0] sm:$0xff]
    %v8311 = vld [vmem:[#allocation4 + $0xfe8] sm:$0xff]
    %v8312 = vld [vmem:[#allocation4 + $0xff0] sm:$0xff]
    %v8313 = vld [vmem:[#allocation4 + $0xff8] sm:$0xff]
    %v8314 = vld [vmem:[#allocation4 + $0x1000] sm:$0xff]
    %v8315 = vld [vmem:[#allocation4 + $0x1008] sm:$0xff]
    %v8316 = vld [vmem:[#allocation4 + $0x1010] sm:$0xff]
    %v8317 = vld [vmem:[#allocation4 + $0x1018] sm:$0xff]
    %v8318 = vld [vmem:[#allocation4 + $0x1020] sm:$0xff]
    %v8319 = vld [vmem:[#allocation4 + $0x1028] sm:$0xff]
    %v8320 = vld [vmem:[#allocation4 + $0x1030] sm:$0xff]
    %v8321 = vld [vmem:[#allocation4 + $0x1038] sm:$0xff]
    %v8322 = vld [vmem:[#allocation4 + $0x1040] sm:$0xff]
    %v8323 = vld [vmem:[#allocation4 + $0x1048] sm:$0xff]
    %v8324 = vld [vmem:[#allocation4 + $0x1050] sm:$0xff]
    %v8325 = vld [vmem:[#allocation4 + $0x1058] sm:$0xff]
    %v8326 = vld [vmem:[#allocation4 + $0x1060] sm:$0xff]
    %v8327 = vld [vmem:[#allocation4 + $0x1068] sm:$0xff]
    %v8328 = vld [vmem:[#allocation4 + $0x1070] sm:$0xff]
    %v8329 = vld [vmem:[#allocation4 + $0x1078] sm:$0xff]
    %v8330 = vld [vmem:[#allocation4 + $0x1080] sm:$0xff]
    %v8331 = vld [vmem:[#allocation4 + $0x1088] sm:$0xff]
    %v8332 = vld [vmem:[#allocation4 + $0x1090] sm:$0xff]
    %v8333 = vld [vmem:[#allocation4 + $0x1098] sm:$0xff]
    %v8334 = vld [vmem:[#allocation4 + $0x10a0] sm:$0xff]
    %v8335 = vld [vmem:[#allocation4 + $0x10a8] sm:$0xff]
    %v8336 = vld [vmem:[#allocation4 + $0x10b0] sm:$0xff]
    %v8337 = vld [vmem:[#allocation4 + $0x10b8] sm:$0xff]
    %v8338 = vld [vmem:[#allocation4 + $0x10c0] sm:$0xff]
    %v8339 = vld [vmem:[#allocation4 + $0x10c8] sm:$0xff]
    %v8340 = vld [vmem:[#allocation4 + $0x10d0] sm:$0xff]
    %v8341 = vld [vmem:[#allocation4 + $0x10d8] sm:$0xff]
    %v8342 = vld [vmem:[#allocation4 + $0x10e0] sm:$0xff]
    %v8343 = vld [vmem:[#allocation4 + $0x10e8] sm:$0xff]
    %v8344 = vld [vmem:[#allocation4 + $0x10f0] sm:$0xff]
    %v8345 = vld [vmem:[#allocation4 + $0x10f8] sm:$0xff]
    %v8346 = vld [vmem:[#allocation4 + $0x1100] sm:$0xff]
    %v8347 = vld [vmem:[#allocation4 + $0x1108] sm:$0xff]
    %v8348 = vld [vmem:[#allocation4 + $0x1110] sm:$0xff]
    %v8349 = vld [vmem:[#allocation4 + $0x1118] sm:$0xff]
    %v8350 = vld [vmem:[#allocation4 + $0x1120] sm:$0xff]
    %v8351 = vld [vmem:[#allocation4 + $0x1128] sm:$0xff]
    %v8352 = vld [vmem:[#allocation4 + $0x1130] sm:$0xff]
    %v8353 = vld [vmem:[#allocation4 + $0x1138] sm:$0xff]
    %v8354 = vld [vmem:[#allocation4 + $0x1140] sm:$0xff]
    %v8355 = vld [vmem:[#allocation4 + $0x1148] sm:$0xff]
    %v8356 = vld [vmem:[#allocation4 + $0x1150] sm:$0xff]
    %v8357 = vld [vmem:[#allocation4 + $0x1158] sm:$0xff]
    %v8358 = vld [vmem:[#allocation4 + $0x1160] sm:$0xff]
    %v8359 = vld [vmem:[#allocation4 + $0x1168] sm:$0xff]
    %v8360 = vld [vmem:[#allocation4 + $0x1170] sm:$0xff]
    %v8361 = vld [vmem:[#allocation4 + $0x1178] sm:$0xff]
    %v8362 = vld [vmem:[#allocation4 + $0x1180] sm:$0xff]
    %v8363 = vld [vmem:[#allocation4 + $0x1188] sm:$0xff]
    %v8364 = vld [vmem:[#allocation4 + $0x1190] sm:$0xff]
    %v8365 = vld [vmem:[#allocation4 + $0x1198] sm:$0xff]
    %v8366 = vld [vmem:[#allocation4 + $0x11a0] sm:$0xff]
    %v8367 = vld [vmem:[#allocation4 + $0x11a8] sm:$0xff]
    %v8368 = vld [vmem:[#allocation4 + $0x11b0] sm:$0xff]
    %v8369 = vld [vmem:[#allocation4 + $0x11b8] sm:$0xff]
    %v8370 = vld [vmem:[#allocation4 + $0x11c0] sm:$0xff]
    %v8371 = vld [vmem:[#allocation4 + $0x11c8] sm:$0xff]
    %v8372 = vld [vmem:[#allocation4 + $0x11d0] sm:$0xff]
    %v8373 = vld [vmem:[#allocation4 + $0x11d8] sm:$0xff]
    %v8374 = vld [vmem:[#allocation4 + $0x11e0] sm:$0xff]
    %v8375 = vld [vmem:[#allocation4 + $0x11e8] sm:$0xff]
    %v8376 = vld [vmem:[#allocation4 + $0x11f0] sm:$0xff]
    %v8377 = vld [vmem:[#allocation4 + $0x11f8] sm:$0xff]
    %v8378 = vld [vmem:[#allocation10] sm:$0xff]
    %v8380 = vlaneseq
    %v8381 = vshrl.u32 %v8380, 7
    %v8382 = vsub.s32 0, %v8381
    %v8383 = vrot.slane %v8378, %v8382
    %v8384 = vlaneseq
    %v8385 = vshrl.u32 %v8384, 7
    %v8386 = vsub.s32 1, %v8385
    %v8387 = vrot.slane %v8378, %v8386
    %v8388 = vlaneseq
    %v8389 = vshrl.u32 %v8388, 7
    %v8390 = vsub.s32 2, %v8389
    %v8391 = vrot.slane %v8378, %v8390
    %v8392 = vlaneseq
    %v8393 = vshrl.u32 %v8392, 7
    %v8394 = vsub.s32 3, %v8393
    %v8395 = vrot.slane %v8378, %v8394
    %v8396 = vlaneseq
    %v8397 = vshrl.u32 %v8396, 7
    %v8398 = vsub.s32 4, %v8397
    %v8399 = vrot.slane %v8378, %v8398
    %v8400 = vlaneseq
    %v8401 = vshrl.u32 %v8400, 7
    %v8402 = vsub.s32 5, %v8401
    %v8403 = vrot.slane %v8378, %v8402
    %v8404 = vlaneseq
    %v8405 = vshrl.u32 %v8404, 7
    %v8406 = vsub.s32 6, %v8405
    %v8407 = vrot.slane %v8378, %v8406
    %v8408 = vlaneseq
    %v8409 = vshrl.u32 %v8408, 7
    %v8410 = vsub.s32 7, %v8409
    %v8411 = vrot.slane %v8378, %v8410
    %8420 = vmatprep.subr.bf16.mxu0 %v7803
    %8421 = vmatpush1.bf16.msra.mxu0 %v7802
    %8422 = vmatprep.subr.bf16.mxu0 %v7811
    %8423 = vmatpush1.bf16.msra.mxu0 %v7810
    %8424 = vmatprep.subr.bf16.mxu0 %v7819
    %8425 = vmatpush1.bf16.msra.mxu0 %v7818
    %8426 = vmatprep.subr.bf16.mxu0 %v7827
    %8427 = vmatpush1.bf16.msra.mxu0 %v7826
    %8428 = vmatprep.subr.bf16.mxu0 %v7835
    %8429 = vmatpush1.bf16.msra.mxu0 %v7834
    %8430 = vmatprep.subr.bf16.mxu0 %v7843
    %8431 = vmatpush1.bf16.msra.mxu0 %v7842
    %8432 = vmatprep.subr.bf16.mxu0 %v7851
    %8433 = vmatpush1.bf16.msra.mxu0 %v7850
    %8434 = vmatprep.subr.bf16.mxu0 %v7859
    %8435 = vmatpush1.bf16.msra.mxu0 %v7858
    %8436 = vmatprep.subr.bf16.mxu0 %v7867
    %8437 = vmatpush1.bf16.msra.mxu0 %v7866
    %8438 = vmatprep.subr.bf16.mxu0 %v7875
    %8439 = vmatpush1.bf16.msra.mxu0 %v7874
    %8440 = vmatprep.subr.bf16.mxu0 %v7883
    %8441 = vmatpush1.bf16.msra.mxu0 %v7882
    %8442 = vmatprep.subr.bf16.mxu0 %v7891
    %8443 = vmatpush1.bf16.msra.mxu0 %v7890
    %8444 = vmatprep.subr.bf16.mxu0 %v7899
    %8445 = vmatpush1.bf16.msra.mxu0 %v7898
    %8446 = vmatprep.subr.bf16.mxu0 %v7907
    %8447 = vmatpush1.bf16.msra.mxu0 %v7906
    %8448 = vmatprep.subr.bf16.mxu0 %v7915
    %8449 = vmatpush1.bf16.msra.mxu0 %v7914
    %8450 = vmatprep.subr.bf16.mxu0 %v7923
    %8451 = vmatpush1.bf16.msra.mxu0 %v7922
    %8452 = vmatprep.mubr.bf16.mxu0 %v7790
    %8453 = vmatmul.mubr.bf16.gmra.mrb[0].mxu0 %v7789
    %v8454 = vpop.f32.mrb[0].mxu0
    %v8455 = vadd.f32 %v8383, %v8454
    %v8456 = vpop.f32.mrb[0].mxu0
    %v8457 = vadd.f32 %v8387, %v8456
    %v8458 = vpop.f32.mrb[0].mxu0
    %v8459 = vpop.f32.mrb[0].mxu0
    %8460 = vdwg.mxu0
    %8461 = vmatprep.subr.bf16.mxu0 %v7931
    %8462 = vmatpush1.bf16.msra.mxu0 %v7930
    %8463 = vmatprep.subr.bf16.mxu0 %v7939
    %8464 = vmatpush1.bf16.msra.mxu0 %v7938
    %8465 = vmatprep.subr.bf16.mxu0 %v7947
    %8466 = vmatpush1.bf16.msra.mxu0 %v7946
    %8467 = vmatprep.subr.bf16.mxu0 %v7955
    %8468 = vmatpush1.bf16.msra.mxu0 %v7954
    %8469 = vmatprep.subr.bf16.mxu0 %v7963
    %8470 = vmatpush1.bf16.msra.mxu0 %v7962
    %8471 = vmatprep.subr.bf16.mxu0 %v7971
    %8472 = vmatpush1.bf16.msra.mxu0 %v7970
    %8473 = vmatprep.subr.bf16.mxu0 %v7979
    %8474 = vmatpush1.bf16.msra.mxu0 %v7978
    %8475 = vmatprep.subr.bf16.mxu0 %v7987
    %8476 = vmatpush1.bf16.msra.mxu0 %v7986
    %8477 = vmatprep.subr.bf16.mxu0 %v7995
    %8478 = vmatpush1.bf16.msra.mxu0 %v7994
    %8479 = vmatprep.subr.bf16.mxu0 %v8003
    %8480 = vmatpush1.bf16.msra.mxu0 %v8002
    %8481 = vmatprep.subr.bf16.mxu0 %v8011
    %8482 = vmatpush1.bf16.msra.mxu0 %v8010
    %8483 = vmatprep.subr.bf16.mxu0 %v8019
    %8484 = vmatpush1.bf16.msra.mxu0 %v8018
    %8485 = vmatprep.subr.bf16.mxu0 %v8027
    %8486 = vmatpush1.bf16.msra.mxu0 %v8026
    %8487 = vmatprep.subr.bf16.mxu0 %v8035
    %8488 = vmatpush1.bf16.msra.mxu0 %v8034
    %8489 = vmatprep.subr.bf16.mxu0 %v8043
    %8490 = vmatpush1.bf16.msra.mxu0 %v8042
    %8491 = vmatprep.subr.bf16.mxu0 %v8051
    %8492 = vmatpush1.bf16.msra.mxu0 %v8050
    %8493 = vmatprep.mubr.bf16.mxu0 %v7792
    %8494 = vmatmul.mubr.bf16.gmra.mrb[0].mxu0 %v7791
    %v8495 = vpop.f32.mrb[0].mxu0
    %v8496 = vadd.f32 %v8455, %v8495
    %v8497 = vpop.f32.mrb[0].mxu0
    %v8498 = vadd.f32 %v8457, %v8497
    %v8499 = vpop.f32.mrb[0].mxu0
    %v8500 = vpop.f32.mrb[0].mxu0
    %8501 = vdwg.mxu0
    %8502 = vmatprep.subr.bf16.mxu0 %v8059
    %8503 = vmatpush1.bf16.msra.mxu0 %v8058
    %8504 = vmatprep.subr.bf16.mxu0 %v8067
    %8505 = vmatpush1.bf16.msra.mxu0 %v8066
    %8506 = vmatprep.subr.bf16.mxu0 %v8075
    %8507 = vmatpush1.bf16.msra.mxu0 %v8074
    %8508 = vmatprep.subr.bf16.mxu0 %v8083
    %8509 = vmatpush1.bf16.msra.mxu0 %v8082
    %8510 = vmatprep.subr.bf16.mxu0 %v8091
    %8511 = vmatpush1.bf16.msra.mxu0 %v8090
    %8512 = vmatprep.subr.bf16.mxu0 %v8099
    %8513 = vmatpush1.bf16.msra.mxu0 %v8098
    %8514 = vmatprep.subr.bf16.mxu0 %v8107
    %8515 = vmatpush1.bf16.msra.mxu0 %v8106
    %8516 = vmatprep.subr.bf16.mxu0 %v8115
    %8517 = vmatpush1.bf16.msra.mxu0 %v8114
    %8518 = vmatprep.subr.bf16.mxu0 %v8123
    %8519 = vmatpush1.bf16.msra.mxu0 %v8122
    %8520 = vmatprep.subr.bf16.mxu0 %v8131
    %8521 = vmatpush1.bf16.msra.mxu0 %v8130
    %8522 = vmatprep.subr.bf16.mxu0 %v8139
    %8523 = vmatpush1.bf16.msra.mxu0 %v8138
    %8524 = vmatprep.subr.bf16.mxu0 %v8147
    %8525 = vmatpush1.bf16.msra.mxu0 %v8146
    %8526 = vmatprep.subr.bf16.mxu0 %v8155
    %8527 = vmatpush1.bf16.msra.mxu0 %v8154
    %8528 = vmatprep.subr.bf16.mxu0 %v8163
    %8529 = vmatpush1.bf16.msra.mxu0 %v8162
    %8530 = vmatprep.subr.bf16.mxu0 %v8171
    %8531 = vmatpush1.bf16.msra.mxu0 %v8170
    %8532 = vmatprep.subr.bf16.mxu0 %v8179
    %8533 = vmatpush1.bf16.msra.mxu0 %v8178
    %8534 = vmatprep.mubr.bf16.mxu0 %v7794
    %8535 = vmatmul.mubr.bf16.gmra.mrb[0].mxu0 %v7793
    %v8536 = vpop.f32.mrb[0].mxu0
    %v8537 = vadd.f32 %v8496, %v8536
    %v8538 = vpop.f32.mrb[0].mxu0
    %v8539 = vadd.f32 %v8498, %v8538
    %v8540 = vpop.f32.mrb[0].mxu0
    %v8541 = vpop.f32.mrb[0].mxu0
    %8542 = vdwg.mxu0
    %8543 = vmatprep.subr.bf16.mxu0 %v8187
    %8544 = vmatpush1.bf16.msra.mxu0 %v8186
    %8545 = vmatprep.subr.bf16.mxu0 %v8195
    %8546 = vmatpush1.bf16.msra.mxu0 %v8194
    %8547 = vmatprep.subr.bf16.mxu0 %v8203
    %8548 = vmatpush1.bf16.msra.mxu0 %v8202
    %8549 = vmatprep.subr.bf16.mxu0 %v8211
    %8550 = vmatpush1.bf16.msra.mxu0 %v8210
    %8551 = vmatprep.subr.bf16.mxu0 %v8219
    %8552 = vmatpush1.bf16.msra.mxu0 %v8218
    %8553 = vmatprep.subr.bf16.mxu0 %v8227
    %8554 = vmatpush1.bf16.msra.mxu0 %v8226
    %8555 = vmatprep.subr.bf16.mxu0 %v8235
    %8556 = vmatpush1.bf16.msra.mxu0 %v8234
    %8557 = vmatprep.subr.bf16.mxu0 %v8243
    %8558 = vmatpush1.bf16.msra.mxu0 %v8242
    %8559 = vmatprep.subr.bf16.mxu0 %v8251
    %8560 = vmatpush1.bf16.msra.mxu0 %v8250
    %8561 = vmatprep.subr.bf16.mxu0 %v8259
    %8562 = vmatpush1.bf16.msra.mxu0 %v8258
    %8563 = vmatprep.subr.bf16.mxu0 %v8267
    %8564 = vmatpush1.bf16.msra.mxu0 %v8266
    %8565 = vmatprep.subr.bf16.mxu0 %v8275
    %8566 = vmatpush1.bf16.msra.mxu0 %v8274
    %8567 = vmatprep.subr.bf16.mxu0 %v8283
    %8568 = vmatpush1.bf16.msra.mxu0 %v8282
    %8569 = vmatprep.subr.bf16.mxu0 %v8291
    %8570 = vmatpush1.bf16.msra.mxu0 %v8290
    %8571 = vmatprep.subr.bf16.mxu0 %v8299
    %8572 = vmatpush1.bf16.msra.mxu0 %v8298
    %8573 = vmatprep.subr.bf16.mxu0 %v8307
    %8574 = vmatpush1.bf16.msra.mxu0 %v8306
    %8575 = vmatprep.mubr.bf16.mxu0 %v7796
    %8576 = vmatmul.mubr.bf16.gmra.mrb[0].mxu0 %v7795
    %v8577 = vpop.f32.mrb[0].mxu0
    %v8578 = vadd.f32 %v8537, %v8577
    %v8579 = vpop.f32.mrb[0].mxu0
    %v8580 = vadd.f32 %v8539, %v8579
    %v8581 = vpop.f32.mrb[0].mxu0
    %v8582 = vpop.f32.mrb[0].mxu0
    %8583 = vdwg.mxu0
    %8584 = vmatprep.subr.bf16.mxu0 %v8315
    %8585 = vmatpush1.bf16.msra.mxu0 %v8314
    %8586 = vmatprep.subr.bf16.mxu0 %v8323
    %8587 = vmatpush1.bf16.msra.mxu0 %v8322
    %8588 = vmatprep.subr.bf16.mxu0 %v8331
    %8589 = vmatpush1.bf16.msra.mxu0 %v8330
    %8590 = vmatprep.subr.bf16.mxu0 %v8339
    %8591 = vmatpush1.bf16.msra.mxu0 %v8338
    %8592 = vmatprep.subr.bf16.mxu0 %v8347
    %8593 = vmatpush1.bf16.msra.mxu0 %v8346
    %8594 = vmatprep.subr.bf16.mxu0 %v8355
    %8595 = vmatpush1.bf16.msra.mxu0 %v8354
    %8596 = vmatprep.subr.bf16.mxu0 %v8363
    %8597 = vmatpush1.bf16.msra.mxu0 %v8362
    %8598 = vmatprep.subr.bf16.mxu0 %v8371
    %8599 = vmatpush1.bf16.msra.mxu0 %v8370
    %8600 = vmatprep.subr.bf16.mxu0 0
    %8601 = vmatpush1.bf16.msra.mxu0 0
    %8602 = vmatprep.subr.bf16.mxu0 0
    %8603 = vmatpush1.bf16.msra.mxu0 0
    %8604 = vmatprep.subr.bf16.mxu0 0
    %8605 = vmatpush1.bf16.msra.mxu0 0
    %8606 = vmatprep.subr.bf16.mxu0 0
    %8607 = vmatpush1.bf16.msra.mxu0 0
    %8608 = vmatprep.subr.bf16.mxu0 0
    %8609 = vmatpush1.bf16.msra.mxu0 0
    %8610 = vmatprep.subr.bf16.mxu0 0
    %8611 = vmatpush1.bf16.msra.mxu0 0
    %8612 = vmatprep.subr.bf16.mxu0 0
    %8613 = vmatpush1.bf16.msra.mxu0 0
    %8614 = vmatprep.subr.bf16.mxu0 0
    %8615 = vmatpush1.bf16.msra.mxu0 0
    %8616 = vmatprep.mubr.bf16.mxu0 0
    %8617 = vmatmul.mubr.bf16.gmra.mrb[0].mxu0 %v7797
    %v8618 = vpop.f32.mrb[0].mxu0
    %v8619 = vadd.f32 %v8578, %v8618
    %v8620 = vpop.f32.mrb[0].mxu0
    %v8621 = vadd.f32 %v8580, %v8620
    %v8622 = vpop.f32.mrb[0].mxu0
    %v8623 = vpop.f32.mrb[0].mxu0
    %8624 = vdwg.mxu0
    %8625 = vmatprep.subr.bf16.mxu0 %v7805
    %8626 = vmatpush1.bf16.msra.mxu0 %v7804
    %8627 = vmatprep.subr.bf16.mxu0 %v7813
    %8628 = vmatpush1.bf16.msra.mxu0 %v7812
    %8629 = vmatprep.subr.bf16.mxu0 %v7821
    %8630 = vmatpush1.bf16.msra.mxu0 %v7820
    %8631 = vmatprep.subr.bf16.mxu0 %v7829
    %8632 = vmatpush1.bf16.msra.mxu0 %v7828
    %8633 = vmatprep.subr.bf16.mxu0 %v7837
    %8634 = vmatpush1.bf16.msra.mxu0 %v7836
    %8635 = vmatprep.subr.bf16.mxu0 %v7845
    %8636 = vmatpush1.bf16.msra.mxu0 %v7844
    %8637 = vmatprep.subr.bf16.mxu0 %v7853
    %8638 = vmatpush1.bf16.msra.mxu0 %v7852
    %8639 = vmatprep.subr.bf16.mxu0 %v7861
    %8640 = vmatpush1.bf16.msra.mxu0 %v7860
    %8641 = vmatprep.subr.bf16.mxu0 %v7869
    %8642 = vmatpush1.bf16.msra.mxu0 %v7868
    %8643 = vmatprep.subr.bf16.mxu0 %v7877
    %8644 = vmatpush1.bf16.msra.mxu0 %v7876
    %8645 = vmatprep.subr.bf16.mxu0 %v7885
    %8646 = vmatpush1.bf16.msra.mxu0 %v7884
    %8647 = vmatprep.subr.bf16.mxu0 %v7893
    %8648 = vmatpush1.bf16.msra.mxu0 %v7892
    %8649 = vmatprep.subr.bf16.mxu0 %v7901
    %8650 = vmatpush1.bf16.msra.mxu0 %v7900
    %8651 = vmatprep.subr.bf16.mxu0 %v7909
    %8652 = vmatpush1.bf16.msra.mxu0 %v7908
    %8653 = vmatprep.subr.bf16.mxu0 %v7917
    %8654 = vmatpush1.bf16.msra.mxu0 %v7916
    %8655 = vmatprep.subr.bf16.mxu0 %v7925
    %8656 = vmatpush1.bf16.msra.mxu0 %v7924
    %8657 = vmatprep.mubr.bf16.mxu0 %v7790
    %8658 = vmatmul.mubr.bf16.gmra.mrb[0].mxu0 %v7789
    %v8659 = vpop.f32.mrb[0].mxu0
    %v8660 = vadd.f32 %v8391, %v8659
    %v8661 = vpop.f32.mrb[0].mxu0
    %v8662 = vadd.f32 %v8395, %v8661
    %v8663 = vpop.f32.mrb[0].mxu0
    %v8664 = vpop.f32.mrb[0].mxu0
    %8665 = vdwg.mxu0
    %8666 = vmatprep.subr.bf16.mxu0 %v7933
    %8667 = vmatpush1.bf16.msra.mxu0 %v7932
    %8668 = vmatprep.subr.bf16.mxu0 %v7941
    %8669 = vmatpush1.bf16.msra.mxu0 %v7940
    %8670 = vmatprep.subr.bf16.mxu0 %v7949
    %8671 = vmatpush1.bf16.msra.mxu0 %v7948
    %8672 = vmatprep.subr.bf16.mxu0 %v7957
    %8673 = vmatpush1.bf16.msra.mxu0 %v7956
    %8674 = vmatprep.subr.bf16.mxu0 %v7965
    %8675 = vmatpush1.bf16.msra.mxu0 %v7964
    %8676 = vmatprep.subr.bf16.mxu0 %v7973
    %8677 = vmatpush1.bf16.msra.mxu0 %v7972
    %8678 = vmatprep.subr.bf16.mxu0 %v7981
    %8679 = vmatpush1.bf16.msra.mxu0 %v7980
    %8680 = vmatprep.subr.bf16.mxu0 %v7989
    %8681 = vmatpush1.bf16.msra.mxu0 %v7988
    %8682 = vmatprep.subr.bf16.mxu0 %v7997
    %8683 = vmatpush1.bf16.msra.mxu0 %v7996
    %8684 = vmatprep.subr.bf16.mxu0 %v8005
    %8685 = vmatpush1.bf16.msra.mxu0 %v8004
    %8686 = vmatprep.subr.bf16.mxu0 %v8013
    %8687 = vmatpush1.bf16.msra.mxu0 %v8012
    %8688 = vmatprep.subr.bf16.mxu0 %v8021
    %8689 = vmatpush1.bf16.msra.mxu0 %v8020
    %8690 = vmatprep.subr.bf16.mxu0 %v8029
    %8691 = vmatpush1.bf16.msra.mxu0 %v8028
    %8692 = vmatprep.subr.bf16.mxu0 %v8037
    %8693 = vmatpush1.bf16.msra.mxu0 %v8036
    %8694 = vmatprep.subr.bf16.mxu0 %v8045
    %8695 = vmatpush1.bf16.msra.mxu0 %v8044
    %8696 = vmatprep.subr.bf16.mxu0 %v8053
    %8697 = vmatpush1.bf16.msra.mxu0 %v8052
    %8698 = vmatprep.mubr.bf16.mxu0 %v7792
    %8699 = vmatmul.mubr.bf16.gmra.mrb[0].mxu0 %v7791
    %v8700 = vpop.f32.mrb[0].mxu0
    %v8701 = vadd.f32 %v8660, %v8700
    %v8702 = vpop.f32.mrb[0].mxu0
    %v8703 = vadd.f32 %v8662, %v8702
    %v8704 = vpop.f32.mrb[0].mxu0
    %v8705 = vpop.f32.mrb[0].mxu0
    %8706 = vdwg.mxu0
    %8707 = vmatprep.subr.bf16.mxu0 %v8061
    %8708 = vmatpush1.bf16.msra.mxu0 %v8060
    %8709 = vmatprep.subr.bf16.mxu0 %v8069
    %8710 = vmatpush1.bf16.msra.mxu0 %v8068
    %8711 = vmatprep.subr.bf16.mxu0 %v8077
    %8712 = vmatpush1.bf16.msra.mxu0 %v8076
    %8713 = vmatprep.subr.bf16.mxu0 %v8085
    %8714 = vmatpush1.bf16.msra.mxu0 %v8084
    %8715 = vmatprep.subr.bf16.mxu0 %v8093
    %8716 = vmatpush1.bf16.msra.mxu0 %v8092
    %8717 = vmatprep.subr.bf16.mxu0 %v8101
    %8718 = vmatpush1.bf16.msra.mxu0 %v8100
    %8719 = vmatprep.subr.bf16.mxu0 %v8109
    %8720 = vmatpush1.bf16.msra.mxu0 %v8108
    %8721 = vmatprep.subr.bf16.mxu0 %v8117
    %8722 = vmatpush1.bf16.msra.mxu0 %v8116
    %8723 = vmatprep.subr.bf16.mxu0 %v8125
    %8724 = vmatpush1.bf16.msra.mxu0 %v8124
    %8725 = vmatprep.subr.bf16.mxu0 %v8133
    %8726 = vmatpush1.bf16.msra.mxu0 %v8132
    %8727 = vmatprep.subr.bf16.mxu0 %v8141
    %8728 = vmatpush1.bf16.msra.mxu0 %v8140
    %8729 = vmatprep.subr.bf16.mxu0 %v8149
    %8730 = vmatpush1.bf16.msra.mxu0 %v8148
    %8731 = vmatprep.subr.bf16.mxu0 %v8157
    %8732 = vmatpush1.bf16.msra.mxu0 %v8156
    %8733 = vmatprep.subr.bf16.mxu0 %v8165
    %8734 = vmatpush1.bf16.msra.mxu0 %v8164
    %8735 = vmatprep.subr.bf16.mxu0 %v8173
    %8736 = vmatpush1.bf16.msra.mxu0 %v8172
    %8737 = vmatprep.subr.bf16.mxu0 %v8181
    %8738 = vmatpush1.bf16.msra.mxu0 %v8180
    %8739 = vmatprep.mubr.bf16.mxu0 %v7794
    %8740 = vmatmul.mubr.bf16.gmra.mrb[0].mxu0 %v7793
    %v8741 = vpop.f32.mrb[0].mxu0
    %v8742 = vadd.f32 %v8701, %v8741
    %v8743 = vpop.f32.mrb[0].mxu0
    %v8744 = vadd.f32 %v8703, %v8743
    %v8745 = vpop.f32.mrb[0].mxu0
    %v8746 = vpop.f32.mrb[0].mxu0
    %8747 = vdwg.mxu0
    %8748 = vmatprep.subr.bf16.mxu0 %v8189
    %8749 = vmatpush1.bf16.msra.mxu0 %v8188
    %8750 = vmatprep.subr.bf16.mxu0 %v8197
    %8751 = vmatpush1.bf16.msra.mxu0 %v8196
    %8752 = vmatprep.subr.bf16.mxu0 %v8205
    %8753 = vmatpush1.bf16.msra.mxu0 %v8204
    %8754 = vmatprep.subr.bf16.mxu0 %v8213
    %8755 = vmatpush1.bf16.msra.mxu0 %v8212
    %8756 = vmatprep.subr.bf16.mxu0 %v8221
    %8757 = vmatpush1.bf16.msra.mxu0 %v8220
    %8758 = vmatprep.subr.bf16.mxu0 %v8229
    %8759 = vmatpush1.bf16.msra.mxu0 %v8228
    %8760 = vmatprep.subr.bf16.mxu0 %v8237
    %8761 = vmatpush1.bf16.msra.mxu0 %v8236
    %8762 = vmatprep.subr.bf16.mxu0 %v8245
    %8763 = vmatpush1.bf16.msra.mxu0 %v8244
    %8764 = vmatprep.subr.bf16.mxu0 %v8253
    %8765 = vmatpush1.bf16.msra.mxu0 %v8252
    %8766 = vmatprep.subr.bf16.mxu0 %v8261
    %8767 = vmatpush1.bf16.msra.mxu0 %v8260
    %8768 = vmatprep.subr.bf16.mxu0 %v8269
    %8769 = vmatpush1.bf16.msra.mxu0 %v8268
    %8770 = vmatprep.subr.bf16.mxu0 %v8277
    %8771 = vmatpush1.bf16.msra.mxu0 %v8276
    %8772 = vmatprep.subr.bf16.mxu0 %v8285
    %8773 = vmatpush1.bf16.msra.mxu0 %v8284
    %8774 = vmatprep.subr.bf16.mxu0 %v8293
    %8775 = vmatpush1.bf16.msra.mxu0 %v8292
    %8776 = vmatprep.subr.bf16.mxu0 %v8301
    %8777 = vmatpush1.bf16.msra.mxu0 %v8300
    %8778 = vmatprep.subr.bf16.mxu0 %v8309
    %8779 = vmatpush1.bf16.msra.mxu0 %v8308
    %8780 = vmatprep.mubr.bf16.mxu0 %v7796
    %8781 = vmatmul.mubr.bf16.gmra.mrb[0].mxu0 %v7795
    %v8782 = vpop.f32.mrb[0].mxu0
    %v8783 = vadd.f32 %v8742, %v8782
    %v8784 = vpop.f32.mrb[0].mxu0
    %v8785 = vadd.f32 %v8744, %v8784
    %v8786 = vpop.f32.mrb[0].mxu0
    %v8787 = vpop.f32.mrb[0].mxu0
    %8788 = vdwg.mxu0
    %8789 = vmatprep.subr.bf16.mxu0 %v8317
    %8790 = vmatpush1.bf16.msra.mxu0 %v8316
    %8791 = vmatprep.subr.bf16.mxu0 %v8325
    %8792 = vmatpush1.bf16.msra.mxu0 %v8324
    %8793 = vmatprep.subr.bf16.mxu0 %v8333
    %8794 = vmatpush1.bf16.msra.mxu0 %v8332
    %8795 = vmatprep.subr.bf16.mxu0 %v8341
    %8796 = vmatpush1.bf16.msra.mxu0 %v8340
    %8797 = vmatprep.subr.bf16.mxu0 %v8349
    %8798 = vmatpush1.bf16.msra.mxu0 %v8348
    %8799 = vmatprep.subr.bf16.mxu0 %v8357
    %8800 = vmatpush1.bf16.msra.mxu0 %v8356
    %8801 = vmatprep.subr.bf16.mxu0 %v8365
    %8802 = vmatpush1.bf16.msra.mxu0 %v8364
    %8803 = vmatprep.subr.bf16.mxu0 %v8373
    %8804 = vmatpush1.bf16.msra.mxu0 %v8372
    %8805 = vmatprep.subr.bf16.mxu0 0
    %8806 = vmatpush1.bf16.msra.mxu0 0
    %8807 = vmatprep.subr.bf16.mxu0 0
    %8808 = vmatpush1.bf16.msra.mxu0 0
    %8809 = vmatprep.subr.bf16.mxu0 0
    %8810 = vmatpush1.bf16.msra.mxu0 0
    %8811 = vmatprep.subr.bf16.mxu0 0
    %8812 = vmatpush1.bf16.msra.mxu0 0
    %8813 = vmatprep.subr.bf16.mxu0 0
    %8814 = vmatpush1.bf16.msra.mxu0 0
    %8815 = vmatprep.subr.bf16.mxu0 0
    %8816 = vmatpush1.bf16.msra.mxu0 0
    %8817 = vmatprep.subr.bf16.mxu0 0
    %8818 = vmatpush1.bf16.msra.mxu0 0
    %8819 = vmatprep.subr.bf16.mxu0 0
    %8820 = vmatpush1.bf16.msra.mxu0 0
    %8821 = vmatprep.mubr.bf16.mxu0 0
    %8822 = vmatmul.mubr.bf16.gmra.mrb[0].mxu0 %v7797
    %v8823 = vpop.f32.mrb[0].mxu0
    %v8824 = vadd.f32 %v8783, %v8823
    %v8825 = vpop.f32.mrb[0].mxu0
    %v8826 = vadd.f32 %v8785, %v8825
    %v8827 = vpop.f32.mrb[0].mxu0
    %v8828 = vpop.f32.mrb[0].mxu0
    %8829 = vdwg.mxu0
    %8830 = vmatprep.subr.bf16.mxu0 %v7807
    %8831 = vmatpush1.bf16.msra.mxu0 %v7806
    %8832 = vmatprep.subr.bf16.mxu0 %v7815
    %8833 = vmatpush1.bf16.msra.mxu0 %v7814
    %8834 = vmatprep.subr.bf16.mxu0 %v7823
    %8835 = vmatpush1.bf16.msra.mxu0 %v7822
    %8836 = vmatprep.subr.bf16.mxu0 %v7831
    %8837 = vmatpush1.bf16.msra.mxu0 %v7830
    %8838 = vmatprep.subr.bf16.mxu0 %v7839
    %8839 = vmatpush1.bf16.msra.mxu0 %v7838
    %8840 = vmatprep.subr.bf16.mxu0 %v7847
    %8841 = vmatpush1.bf16.msra.mxu0 %v7846
    %8842 = vmatprep.subr.bf16.mxu0 %v7855
    %8843 = vmatpush1.bf16.msra.mxu0 %v7854
    %8844 = vmatprep.subr.bf16.mxu0 %v7863
    %8845 = vmatpush1.bf16.msra.mxu0 %v7862
    %8846 = vmatprep.subr.bf16.mxu0 %v7871
    %8847 = vmatpush1.bf16.msra.mxu0 %v7870
    %8848 = vmatprep.subr.bf16.mxu0 %v7879
    %8849 = vmatpush1.bf16.msra.mxu0 %v7878
    %8850 = vmatprep.subr.bf16.mxu0 %v7887
    %8851 = vmatpush1.bf16.msra.mxu0 %v7886
    %8852 = vmatprep.subr.bf16.mxu0 %v7895
    %8853 = vmatpush1.bf16.msra.mxu0 %v7894
    %8854 = vmatprep.subr.bf16.mxu0 %v7903
    %8855 = vmatpush1.bf16.msra.mxu0 %v7902
    %8856 = vmatprep.subr.bf16.mxu0 %v7911
    %8857 = vmatpush1.bf16.msra.mxu0 %v7910
    %8858 = vmatprep.subr.bf16.mxu0 %v7919
    %8859 = vmatpush1.bf16.msra.mxu0 %v7918
    %8860 = vmatprep.subr.bf16.mxu0 %v7927
    %8861 = vmatpush1.bf16.msra.mxu0 %v7926
    %8862 = vmatprep.mubr.bf16.mxu0 %v7790
    %8863 = vmatmul.mubr.bf16.gmra.mrb[0].mxu0 %v7789
    %v8864 = vpop.f32.mrb[0].mxu0
    %v8865 = vadd.f32 %v8399, %v8864
    %v8866 = vpop.f32.mrb[0].mxu0
    %v8867 = vadd.f32 %v8403, %v8866
    %v8868 = vpop.f32.mrb[0].mxu0
    %v8869 = vpop.f32.mrb[0].mxu0
    %8870 = vdwg.mxu0
    %8871 = vmatprep.subr.bf16.mxu0 %v7935
    %8872 = vmatpush1.bf16.msra.mxu0 %v7934
    %8873 = vmatprep.subr.bf16.mxu0 %v7943
    %8874 = vmatpush1.bf16.msra.mxu0 %v7942
    %8875 = vmatprep.subr.bf16.mxu0 %v7951
    %8876 = vmatpush1.bf16.msra.mxu0 %v7950
    %8877 = vmatprep.subr.bf16.mxu0 %v7959
    %8878 = vmatpush1.bf16.msra.mxu0 %v7958
    %8879 = vmatprep.subr.bf16.mxu0 %v7967
    %8880 = vmatpush1.bf16.msra.mxu0 %v7966
    %8881 = vmatprep.subr.bf16.mxu0 %v7975
    %8882 = vmatpush1.bf16.msra.mxu0 %v7974
    %8883 = vmatprep.subr.bf16.mxu0 %v7983
    %8884 = vmatpush1.bf16.msra.mxu0 %v7982
    %8885 = vmatprep.subr.bf16.mxu0 %v7991
    %8886 = vmatpush1.bf16.msra.mxu0 %v7990
    %8887 = vmatprep.subr.bf16.mxu0 %v7999
    %8888 = vmatpush1.bf16.msra.mxu0 %v7998
    %8889 = vmatprep.subr.bf16.mxu0 %v8007
    %8890 = vmatpush1.bf16.msra.mxu0 %v8006
    %8891 = vmatprep.subr.bf16.mxu0 %v8015
    %8892 = vmatpush1.bf16.msra.mxu0 %v8014
    %8893 = vmatprep.subr.bf16.mxu0 %v8023
    %8894 = vmatpush1.bf16.msra.mxu0 %v8022
    %8895 = vmatprep.subr.bf16.mxu0 %v8031
    %8896 = vmatpush1.bf16.msra.mxu0 %v8030
    %8897 = vmatprep.subr.bf16.mxu0 %v8039
    %8898 = vmatpush1.bf16.msra.mxu0 %v8038
    %8899 = vmatprep.subr.bf16.mxu0 %v8047
    %8900 = vmatpush1.bf16.msra.mxu0 %v8046
    %8901 = vmatprep.subr.bf16.mxu0 %v8055
    %8902 = vmatpush1.bf16.msra.mxu0 %v8054
    %8903 = vmatprep.mubr.bf16.mxu0 %v7792
    %8904 = vmatmul.mubr.bf16.gmra.mrb[0].mxu0 %v7791
    %v8905 = vpop.f32.mrb[0].mxu0
    %v8906 = vadd.f32 %v8865, %v8905
    %v8907 = vpop.f32.mrb[0].mxu0
    %v8908 = vadd.f32 %v8867, %v8907
    %v8909 = vpop.f32.mrb[0].mxu0
    %v8910 = vpop.f32.mrb[0].mxu0
    %8911 = vdwg.mxu0
    %8912 = vmatprep.subr.bf16.mxu0 %v8063
    %8913 = vmatpush1.bf16.msra.mxu0 %v8062
    %8914 = vmatprep.subr.bf16.mxu0 %v8071
    %8915 = vmatpush1.bf16.msra.mxu0 %v8070
    %8916 = vmatprep.subr.bf16.mxu0 %v8079
    %8917 = vmatpush1.bf16.msra.mxu0 %v8078
    %8918 = vmatprep.subr.bf16.mxu0 %v8087
    %8919 = vmatpush1.bf16.msra.mxu0 %v8086
    %8920 = vmatprep.subr.bf16.mxu0 %v8095
    %8921 = vmatpush1.bf16.msra.mxu0 %v8094
    %8922 = vmatprep.subr.bf16.mxu0 %v8103
    %8923 = vmatpush1.bf16.msra.mxu0 %v8102
    %8924 = vmatprep.subr.bf16.mxu0 %v8111
    %8925 = vmatpush1.bf16.msra.mxu0 %v8110
    %8926 = vmatprep.subr.bf16.mxu0 %v8119
    %8927 = vmatpush1.bf16.msra.mxu0 %v8118
    %8928 = vmatprep.subr.bf16.mxu0 %v8127
    %8929 = vmatpush1.bf16.msra.mxu0 %v8126
    %8930 = vmatprep.subr.bf16.mxu0 %v8135
    %8931 = vmatpush1.bf16.msra.mxu0 %v8134
    %8932 = vmatprep.subr.bf16.mxu0 %v8143
    %8933 = vmatpush1.bf16.msra.mxu0 %v8142
    %8934 = vmatprep.subr.bf16.mxu0 %v8151
    %8935 = vmatpush1.bf16.msra.mxu0 %v8150
    %8936 = vmatprep.subr.bf16.mxu0 %v8159
    %8937 = vmatpush1.bf16.msra.mxu0 %v8158
    %8938 = vmatprep.subr.bf16.mxu0 %v8167
    %8939 = vmatpush1.bf16.msra.mxu0 %v8166
    %8940 = vmatprep.subr.bf16.mxu0 %v8175
    %8941 = vmatpush1.bf16.msra.mxu0 %v8174
    %8942 = vmatprep.subr.bf16.mxu0 %v8183
    %8943 = vmatpush1.bf16.msra.mxu0 %v8182
    %8944 = vmatprep.mubr.bf16.mxu0 %v7794
    %8945 = vmatmul.mubr.bf16.gmra.mrb[0].mxu0 %v7793
    %v8946 = vpop.f32.mrb[0].mxu0
    %v8947 = vadd.f32 %v8906, %v8946
    %v8948 = vpop.f32.mrb[0].mxu0
    %v8949 = vadd.f32 %v8908, %v8948
    %v8950 = vpop.f32.mrb[0].mxu0
    %v8951 = vpop.f32.mrb[0].mxu0
    %8952 = vdwg.mxu0
    %8953 = vmatprep.subr.bf16.mxu0 %v8191
    %8954 = vmatpush1.bf16.msra.mxu0 %v8190
    %8955 = vmatprep.subr.bf16.mxu0 %v8199
    %8956 = vmatpush1.bf16.msra.mxu0 %v8198
    %8957 = vmatprep.subr.bf16.mxu0 %v8207
    %8958 = vmatpush1.bf16.msra.mxu0 %v8206
    %8959 = vmatprep.subr.bf16.mxu0 %v8215
    %8960 = vmatpush1.bf16.msra.mxu0 %v8214
    %8961 = vmatprep.subr.bf16.mxu0 %v8223
    %8962 = vmatpush1.bf16.msra.mxu0 %v8222
    %8963 = vmatprep.subr.bf16.mxu0 %v8231
    %8964 = vmatpush1.bf16.msra.mxu0 %v8230
    %8965 = vmatprep.subr.bf16.mxu0 %v8239
    %8966 = vmatpush1.bf16.msra.mxu0 %v8238
    %8967 = vmatprep.subr.bf16.mxu0 %v8247
    %8968 = vmatpush1.bf16.msra.mxu0 %v8246
    %8969 = vmatprep.subr.bf16.mxu0 %v8255
    %8970 = vmatpush1.bf16.msra.mxu0 %v8254
    %8971 = vmatprep.subr.bf16.mxu0 %v8263
    %8972 = vmatpush1.bf16.msra.mxu0 %v8262
    %8973 = vmatprep.subr.bf16.mxu0 %v8271
    %8974 = vmatpush1.bf16.msra.mxu0 %v8270
    %8975 = vmatprep.subr.bf16.mxu0 %v8279
    %8976 = vmatpush1.bf16.msra.mxu0 %v8278
    %8977 = vmatprep.subr.bf16.mxu0 %v8287
    %8978 = vmatpush1.bf16.msra.mxu0 %v8286
    %8979 = vmatprep.subr.bf16.mxu0 %v8295
    %8980 = vmatpush1.bf16.msra.mxu0 %v8294
    %8981 = vmatprep.subr.bf16.mxu0 %v8303
    %8982 = vmatpush1.bf16.msra.mxu0 %v8302
    %8983 = vmatprep.subr.bf16.mxu0 %v8311
    %8984 = vmatpush1.bf16.msra.mxu0 %v8310
    %8985 = vmatprep.mubr.bf16.mxu0 %v7796
    %8986 = vmatmul.mubr.bf16.gmra.mrb[0].mxu0 %v7795
    %v8987 = vpop.f32.mrb[0].mxu0
    %v8988 = vadd.f32 %v8947, %v8987
    %v8989 = vpop.f32.mrb[0].mxu0
    %v8990 = vadd.f32 %v8949, %v8989
    %v8991 = vpop.f32.mrb[0].mxu0
    %v8992 = vpop.f32.mrb[0].mxu0
    %8993 = vdwg.mxu0
    %8994 = vmatprep.subr.bf16.mxu0 %v8319
    %8995 = vmatpush1.bf16.msra.mxu0 %v8318
    %8996 = vmatprep.subr.bf16.mxu0 %v8327
    %8997 = vmatpush1.bf16.msra.mxu0 %v8326
    %8998 = vmatprep.subr.bf16.mxu0 %v8335
    %8999 = vmatpush1.bf16.msra.mxu0 %v8334
    %9000 = vmatprep.subr.bf16.mxu0 %v8343
    %9001 = vmatpush1.bf16.msra.mxu0 %v8342
    %9002 = vmatprep.subr.bf16.mxu0 %v8351
    %9003 = vmatpush1.bf16.msra.mxu0 %v8350
    %9004 = vmatprep.subr.bf16.mxu0 %v8359
    %9005 = vmatpush1.bf16.msra.mxu0 %v8358
    %9006 = vmatprep.subr.bf16.mxu0 %v8367
    %9007 = vmatpush1.bf16.msra.mxu0 %v8366
    %9008 = vmatprep.subr.bf16.mxu0 %v8375
    %9009 = vmatpush1.bf16.msra.mxu0 %v8374
    %9010 = vmatprep.subr.bf16.mxu0 0
    %9011 = vmatpush1.bf16.msra.mxu0 0
    %9012 = vmatprep.subr.bf16.mxu0 0
    %9013 = vmatpush1.bf16.msra.mxu0 0
    %9014 = vmatprep.subr.bf16.mxu0 0
    %9015 = vmatpush1.bf16.msra.mxu0 0
    %9016 = vmatprep.subr.bf16.mxu0 0
    %9017 = vmatpush1.bf16.msra.mxu0 0
    %9018 = vmatprep.subr.bf16.mxu0 0
    %9019 = vmatpush1.bf16.msra.mxu0 0
    %9020 = vmatprep.subr.bf16.mxu0 0
    %9021 = vmatpush1.bf16.msra.mxu0 0
    %9022 = vmatprep.subr.bf16.mxu0 0
    %9023 = vmatpush1.bf16.msra.mxu0 0
    %9024 = vmatprep.subr.bf16.mxu0 0
    %9025 = vmatpush1.bf16.msra.mxu0 0
    %9026 = vmatprep.mubr.bf16.mxu0 0
    %9027 = vmatmul.mubr.bf16.gmra.mrb[0].mxu0 %v7797
    %v9028 = vpop.f32.mrb[0].mxu0
    %v9029 = vadd.f32 %v8988, %v9028
    %v9030 = vpop.f32.mrb[0].mxu0
    %v9031 = vadd.f32 %v8990, %v9030
    %v9032 = vpop.f32.mrb[0].mxu0
    %v9033 = vpop.f32.mrb[0].mxu0
    %9034 = vdwg.mxu0
    %9035 = vmatprep.subr.bf16.mxu0 %v7809
    %9036 = vmatpush1.bf16.msra.mxu0 %v7808
    %9037 = vmatprep.subr.bf16.mxu0 %v7817
    %9038 = vmatpush1.bf16.msra.mxu0 %v7816
    %9039 = vmatprep.subr.bf16.mxu0 %v7825
    %9040 = vmatpush1.bf16.msra.mxu0 %v7824
    %9041 = vmatprep.subr.bf16.mxu0 %v7833
    %9042 = vmatpush1.bf16.msra.mxu0 %v7832
    %9043 = vmatprep.subr.bf16.mxu0 %v7841
    %9044 = vmatpush1.bf16.msra.mxu0 %v7840
    %9045 = vmatprep.subr.bf16.mxu0 %v7849
    %9046 = vmatpush1.bf16.msra.mxu0 %v7848
    %9047 = vmatprep.subr.bf16.mxu0 %v7857
    %9048 = vmatpush1.bf16.msra.mxu0 %v7856
    %9049 = vmatprep.subr.bf16.mxu0 %v7865
    %9050 = vmatpush1.bf16.msra.mxu0 %v7864
    %9051 = vmatprep.subr.bf16.mxu0 %v7873
    %9052 = vmatpush1.bf16.msra.mxu0 %v7872
    %9053 = vmatprep.subr.bf16.mxu0 %v7881
    %9054 = vmatpush1.bf16.msra.mxu0 %v7880
    %9055 = vmatprep.subr.bf16.mxu0 %v7889
    %9056 = vmatpush1.bf16.msra.mxu0 %v7888
    %9057 = vmatprep.subr.bf16.mxu0 %v7897
    %9058 = vmatpush1.bf16.msra.mxu0 %v7896
    %9059 = vmatprep.subr.bf16.mxu0 %v7905
    %9060 = vmatpush1.bf16.msra.mxu0 %v7904
    %9061 = vmatprep.subr.bf16.mxu0 %v7913
    %9062 = vmatpush1.bf16.msra.mxu0 %v7912
    %9063 = vmatprep.subr.bf16.mxu0 %v7921
    %9064 = vmatpush1.bf16.msra.mxu0 %v7920
    %9065 = vmatprep.subr.bf16.mxu0 %v7929
    %9066 = vmatpush1.bf16.msra.mxu0 %v7928
    %9067 = vmatprep.mubr.bf16.mxu0 %v7790
    %9068 = vmatmul.mubr.bf16.gmra.mrb[0].mxu0 %v7789
    %v9069 = vpop.f32.mrb[0].mxu0
    %v9070 = vadd.f32 %v8407, %v9069
    %v9071 = vpop.f32.mrb[0].mxu0
    %v9072 = vadd.f32 %v8411, %v9071
    %v9073 = vpop.f32.mrb[0].mxu0
    %v9074 = vpop.f32.mrb[0].mxu0
    %9075 = vdwg.mxu0
    %9076 = vmatprep.subr.bf16.mxu0 %v7937
    %9077 = vmatpush1.bf16.msra.mxu0 %v7936
    %9078 = vmatprep.subr.bf16.mxu0 %v7945
    %9079 = vmatpush1.bf16.msra.mxu0 %v7944
    %9080 = vmatprep.subr.bf16.mxu0 %v7953
    %9081 = vmatpush1.bf16.msra.mxu0 %v7952
    %9082 = vmatprep.subr.bf16.mxu0 %v7961
    %9083 = vmatpush1.bf16.msra.mxu0 %v7960
    %9084 = vmatprep.subr.bf16.mxu0 %v7969
    %9085 = vmatpush1.bf16.msra.mxu0 %v7968
    %9086 = vmatprep.subr.bf16.mxu0 %v7977
    %9087 = vmatpush1.bf16.msra.mxu0 %v7976
    %9088 = vmatprep.subr.bf16.mxu0 %v7985
    %9089 = vmatpush1.bf16.msra.mxu0 %v7984
    %9090 = vmatprep.subr.bf16.mxu0 %v7993
    %9091 = vmatpush1.bf16.msra.mxu0 %v7992
    %9092 = vmatprep.subr.bf16.mxu0 %v8001
    %9093 = vmatpush1.bf16.msra.mxu0 %v8000
    %9094 = vmatprep.subr.bf16.mxu0 %v8009
    %9095 = vmatpush1.bf16.msra.mxu0 %v8008
    %9096 = vmatprep.subr.bf16.mxu0 %v8017
    %9097 = vmatpush1.bf16.msra.mxu0 %v8016
    %9098 = vmatprep.subr.bf16.mxu0 %v8025
    %9099 = vmatpush1.bf16.msra.mxu0 %v8024
    %9100 = vmatprep.subr.bf16.mxu0 %v8033
    %9101 = vmatpush1.bf16.msra.mxu0 %v8032
    %9102 = vmatprep.subr.bf16.mxu0 %v8041
    %9103 = vmatpush1.bf16.msra.mxu0 %v8040
    %9104 = vmatprep.subr.bf16.mxu0 %v8049
    %9105 = vmatpush1.bf16.msra.mxu0 %v8048
    %9106 = vmatprep.subr.bf16.mxu0 %v8057
    %9107 = vmatpush1.bf16.msra.mxu0 %v8056
    %9108 = vmatprep.mubr.bf16.mxu0 %v7792
    %9109 = vmatmul.mubr.bf16.gmra.mrb[0].mxu0 %v7791
    %v9110 = vpop.f32.mrb[0].mxu0
    %v9111 = vadd.f32 %v9070, %v9110
    %v9112 = vpop.f32.mrb[0].mxu0
    %v9113 = vadd.f32 %v9072, %v9112
    %v9114 = vpop.f32.mrb[0].mxu0
    %v9115 = vpop.f32.mrb[0].mxu0
    %9116 = vdwg.mxu0
    %9117 = vmatprep.subr.bf16.mxu0 %v8065
    %9118 = vmatpush1.bf16.msra.mxu0 %v8064
    %9119 = vmatprep.subr.bf16.mxu0 %v8073
    %9120 = vmatpush1.bf16.msra.mxu0 %v8072
    %9121 = vmatprep.subr.bf16.mxu0 %v8081
    %9122 = vmatpush1.bf16.msra.mxu0 %v8080
    %9123 = vmatprep.subr.bf16.mxu0 %v8089
    %9124 = vmatpush1.bf16.msra.mxu0 %v8088
    %9125 = vmatprep.subr.bf16.mxu0 %v8097
    %9126 = vmatpush1.bf16.msra.mxu0 %v8096
    %9127 = vmatprep.subr.bf16.mxu0 %v8105
    %9128 = vmatpush1.bf16.msra.mxu0 %v8104
    %9129 = vmatprep.subr.bf16.mxu0 %v8113
    %9130 = vmatpush1.bf16.msra.mxu0 %v8112
    %9131 = vmatprep.subr.bf16.mxu0 %v8121
    %9132 = vmatpush1.bf16.msra.mxu0 %v8120
    %9133 = vmatprep.subr.bf16.mxu0 %v8129
    %9134 = vmatpush1.bf16.msra.mxu0 %v8128
    %9135 = vmatprep.subr.bf16.mxu0 %v8137
    %9136 = vmatpush1.bf16.msra.mxu0 %v8136
    %9137 = vmatprep.subr.bf16.mxu0 %v8145
    %9138 = vmatpush1.bf16.msra.mxu0 %v8144
    %9139 = vmatprep.subr.bf16.mxu0 %v8153
    %9140 = vmatpush1.bf16.msra.mxu0 %v8152
    %9141 = vmatprep.subr.bf16.mxu0 %v8161
    %9142 = vmatpush1.bf16.msra.mxu0 %v8160
    %9143 = vmatprep.subr.bf16.mxu0 %v8169
    %9144 = vmatpush1.bf16.msra.mxu0 %v8168
    %9145 = vmatprep.subr.bf16.mxu0 %v8177
    %9146 = vmatpush1.bf16.msra.mxu0 %v8176
    %9147 = vmatprep.subr.bf16.mxu0 %v8185
    %9148 = vmatpush1.bf16.msra.mxu0 %v8184
    %9149 = vmatprep.mubr.bf16.mxu0 %v7794
    %9150 = vmatmul.mubr.bf16.gmra.mrb[0].mxu0 %v7793
    %v9151 = vpop.f32.mrb[0].mxu0
    %v9152 = vadd.f32 %v9111, %v9151
    %v9153 = vpop.f32.mrb[0].mxu0
    %v9154 = vadd.f32 %v9113, %v9153
    %v9155 = vpop.f32.mrb[0].mxu0
    %v9156 = vpop.f32.mrb[0].mxu0
    %9157 = vdwg.mxu0
    %9158 = vmatprep.subr.bf16.mxu0 %v8193
    %9159 = vmatpush1.bf16.msra.mxu0 %v8192
    %9160 = vmatprep.subr.bf16.mxu0 %v8201
    %9161 = vmatpush1.bf16.msra.mxu0 %v8200
    %9162 = vmatprep.subr.bf16.mxu0 %v8209
    %9163 = vmatpush1.bf16.msra.mxu0 %v8208
    %9164 = vmatprep.subr.bf16.mxu0 %v8217
    %9165 = vmatpush1.bf16.msra.mxu0 %v8216
    %9166 = vmatprep.subr.bf16.mxu0 %v8225
    %9167 = vmatpush1.bf16.msra.mxu0 %v8224
    %9168 = vmatprep.subr.bf16.mxu0 %v8233
    %9169 = vmatpush1.bf16.msra.mxu0 %v8232
    %9170 = vmatprep.subr.bf16.mxu0 %v8241
    %9171 = vmatpush1.bf16.msra.mxu0 %v8240
    %9172 = vmatprep.subr.bf16.mxu0 %v8249
    %9173 = vmatpush1.bf16.msra.mxu0 %v8248
    %9174 = vmatprep.subr.bf16.mxu0 %v8257
    %9175 = vmatpush1.bf16.msra.mxu0 %v8256
    %9176 = vmatprep.subr.bf16.mxu0 %v8265
    %9177 = vmatpush1.bf16.msra.mxu0 %v8264
    %9178 = vmatprep.subr.bf16.mxu0 %v8273
    %9179 = vmatpush1.bf16.msra.mxu0 %v8272
    %9180 = vmatprep.subr.bf16.mxu0 %v8281
    %9181 = vmatpush1.bf16.msra.mxu0 %v8280
    %9182 = vmatprep.subr.bf16.mxu0 %v8289
    %9183 = vmatpush1.bf16.msra.mxu0 %v8288
    %9184 = vmatprep.subr.bf16.mxu0 %v8297
    %9185 = vmatpush1.bf16.msra.mxu0 %v8296
    %9186 = vmatprep.subr.bf16.mxu0 %v8305
    %9187 = vmatpush1.bf16.msra.mxu0 %v8304
    %9188 = vmatprep.subr.bf16.mxu0 %v8313
    %9189 = vmatpush1.bf16.msra.mxu0 %v8312
    %9190 = vmatprep.mubr.bf16.mxu0 %v7796
    %9191 = vmatmul.mubr.bf16.gmra.mrb[0].mxu0 %v7795
    %v9192 = vpop.f32.mrb[0].mxu0
    %v9193 = vadd.f32 %v9152, %v9192
    %v9194 = vpop.f32.mrb[0].mxu0
    %v9195 = vadd.f32 %v9154, %v9194
    %v9196 = vpop.f32.mrb[0].mxu0
    %v9197 = vpop.f32.mrb[0].mxu0
    %9198 = vdwg.mxu0
    %9199 = vmatprep.subr.bf16.mxu0 %v8321
    %9200 = vmatpush1.bf16.msra.mxu0 %v8320
    %9201 = vmatprep.subr.bf16.mxu0 %v8329
    %9202 = vmatpush1.bf16.msra.mxu0 %v8328
    %9203 = vmatprep.subr.bf16.mxu0 %v8337
    %9204 = vmatpush1.bf16.msra.mxu0 %v8336
    %9205 = vmatprep.subr.bf16.mxu0 %v8345
    %9206 = vmatpush1.bf16.msra.mxu0 %v8344
    %9207 = vmatprep.subr.bf16.mxu0 %v8353
    %9208 = vmatpush1.bf16.msra.mxu0 %v8352
    %9209 = vmatprep.subr.bf16.mxu0 %v8361
    %9210 = vmatpush1.bf16.msra.mxu0 %v8360
    %9211 = vmatprep.subr.bf16.mxu0 %v8369
    %9212 = vmatpush1.bf16.msra.mxu0 %v8368
    %9213 = vmatprep.subr.bf16.mxu0 %v8377
    %9214 = vmatpush1.bf16.msra.mxu0 %v8376
    %9215 = vmatprep.subr.bf16.mxu0 0
    %9216 = vmatpush1.bf16.msra.mxu0 0
    %9217 = vmatprep.subr.bf16.mxu0 0
    %9218 = vmatpush1.bf16.msra.mxu0 0
    %9219 = vmatprep.subr.bf16.mxu0 0
    %9220 = vmatpush1.bf16.msra.mxu0 0
    %9221 = vmatprep.subr.bf16.mxu0 0
    %9222 = vmatpush1.bf16.msra.mxu0 0
    %9223 = vmatprep.subr.bf16.mxu0 0
    %9224 = vmatpush1.bf16.msra.mxu0 0
    %9225 = vmatprep.subr.bf16.mxu0 0
    %9226 = vmatpush1.bf16.msra.mxu0 0
    %9227 = vmatprep.subr.bf16.mxu0 0
    %9228 = vmatpush1.bf16.msra.mxu0 0
    %9229 = vmatprep.subr.bf16.mxu0 0
    %9230 = vmatpush1.bf16.msra.mxu0 0
    %9231 = vmatprep.mubr.bf16.mxu0 0
    %9232 = vmatmul.mubr.bf16.gmra.mrb[0].mxu0 %v7797
    %v9233 = vpop.f32.mrb[0].mxu0
    %v9234 = vadd.f32 %v9193, %v9233
    %v9235 = vpop.f32.mrb[0].mxu0
    %v9236 = vadd.f32 %v9195, %v9235
    %v9237 = vpop.f32.mrb[0].mxu0
    %v9238 = vpop.f32.mrb[0].mxu0
    %9239 = vdwg.mxu0
    %s9240 = smul.u32 %s2646, 4
    %s9241 = sshll.u32 %s9240, 4
    %9242 = dma.done %s207, %s9241
    %v9243 = vpack.c.bf16 %v8619, %v8619
    %v9244 = vpack.c.bf16 %v8621, %v8621
    %v9245 = vpack.c.bf16 %v8824, %v8824
    %v9246 = vpack.c.bf16 %v8826, %v8826
    %v9247 = vpack.c.bf16 %v9029, %v9029
    %v9248 = vpack.c.bf16 %v9031, %v9031
    %v9249 = vpack.c.bf16 %v9234, %v9234
    %v9250 = vpack.c.bf16 %v9236, %v9236
    %v9251 = vld [vmem:[#allocation5] sm:$0xff]
    %v9252 = vld [vmem:[#allocation5 + $0x8] sm:$0xff]
    %v9253 = vld [vmem:[#allocation5 + $0x10] sm:$0xff]
    %v9254 = vld [vmem:[#allocation5 + $0x18] sm:$0xff]
    %v9255 = vld [vmem:[#allocation5 + $0x20] sm:$0xff]
    %v9256 = vld [vmem:[#allocation5 + $0x28] sm:$0xff]
    %v9257 = vld [vmem:[#allocation5 + $0x30] sm:$0xff]
    %v9258 = vld [vmem:[#allocation5 + $0x38] sm:$0xff]
    %v9259 = vld [vmem:[#allocation5 + $0x40] sm:$0xff]
    %v9260 = vld [vmem:[#allocation5 + $0x48] sm:$0xff]
    %v9261 = vld [vmem:[#allocation5 + $0x50] sm:$0xff]
    %v9262 = vld [vmem:[#allocation5 + $0x58] sm:$0xff]
    %v9263 = vld [vmem:[#allocation5 + $0x60] sm:$0xff]
    %v9264 = vld [vmem:[#allocation5 + $0x68] sm:$0xff]
    %v9265 = vld [vmem:[#allocation5 + $0x70] sm:$0xff]
    %v9266 = vld [vmem:[#allocation5 + $0x78] sm:$0xff]
    %v9267 = vld [vmem:[#allocation5 + $0x80] sm:$0xff]
    %v9268 = vld [vmem:[#allocation5 + $0x88] sm:$0xff]
    %v9269 = vld [vmem:[#allocation5 + $0x90] sm:$0xff]
    %v9270 = vld [vmem:[#allocation5 + $0x98] sm:$0xff]
    %v9271 = vld [vmem:[#allocation5 + $0xa0] sm:$0xff]
    %v9272 = vld [vmem:[#allocation5 + $0xa8] sm:$0xff]
    %v9273 = vld [vmem:[#allocation5 + $0xb0] sm:$0xff]
    %v9274 = vld [vmem:[#allocation5 + $0xb8] sm:$0xff]
    %v9275 = vld [vmem:[#allocation5 + $0xc0] sm:$0xff]
    %v9276 = vld [vmem:[#allocation5 + $0xc8] sm:$0xff]
    %v9277 = vld [vmem:[#allocation5 + $0xd0] sm:$0xff]
    %v9278 = vld [vmem:[#allocation5 + $0xd8] sm:$0xff]
    %v9279 = vld [vmem:[#allocation5 + $0xe0] sm:$0xff]
    %v9280 = vld [vmem:[#allocation5 + $0xe8] sm:$0xff]
    %v9281 = vld [vmem:[#allocation5 + $0xf0] sm:$0xff]
    %v9282 = vld [vmem:[#allocation5 + $0xf8] sm:$0xff]
    %v9283 = vld [vmem:[#allocation5 + $0x100] sm:$0xff]
    %v9284 = vld [vmem:[#allocation5 + $0x108] sm:$0xff]
    %v9285 = vld [vmem:[#allocation5 + $0x110] sm:$0xff]
    %v9286 = vld [vmem:[#allocation5 + $0x118] sm:$0xff]
    %v9287 = vld [vmem:[#allocation5 + $0x120] sm:$0xff]
    %v9288 = vld [vmem:[#allocation5 + $0x128] sm:$0xff]
    %v9289 = vld [vmem:[#allocation5 + $0x130] sm:$0xff]
    %v9290 = vld [vmem:[#allocation5 + $0x138] sm:$0xff]
    %v9291 = vld [vmem:[#allocation5 + $0x140] sm:$0xff]
    %v9292 = vld [vmem:[#allocation5 + $0x148] sm:$0xff]
    %v9293 = vld [vmem:[#allocation5 + $0x150] sm:$0xff]
    %v9294 = vld [vmem:[#allocation5 + $0x158] sm:$0xff]
    %v9295 = vld [vmem:[#allocation5 + $0x160] sm:$0xff]
    %v9296 = vld [vmem:[#allocation5 + $0x168] sm:$0xff]
    %v9297 = vld [vmem:[#allocation5 + $0x170] sm:$0xff]
    %v9298 = vld [vmem:[#allocation5 + $0x178] sm:$0xff]
    %v9299 = vld [vmem:[#allocation5 + $0x180] sm:$0xff]
    %v9300 = vld [vmem:[#allocation5 + $0x188] sm:$0xff]
    %v9301 = vld [vmem:[#allocation5 + $0x190] sm:$0xff]
    %v9302 = vld [vmem:[#allocation5 + $0x198] sm:$0xff]
    %v9303 = vld [vmem:[#allocation5 + $0x1a0] sm:$0xff]
    %v9304 = vld [vmem:[#allocation5 + $0x1a8] sm:$0xff]
    %v9305 = vld [vmem:[#allocation5 + $0x1b0] sm:$0xff]
    %v9306 = vld [vmem:[#allocation5 + $0x1b8] sm:$0xff]
    %v9307 = vld [vmem:[#allocation5 + $0x1c0] sm:$0xff]
    %v9308 = vld [vmem:[#allocation5 + $0x1c8] sm:$0xff]
    %v9309 = vld [vmem:[#allocation5 + $0x1d0] sm:$0xff]
    %v9310 = vld [vmem:[#allocation5 + $0x1d8] sm:$0xff]
    %v9311 = vld [vmem:[#allocation5 + $0x1e0] sm:$0xff]
    %v9312 = vld [vmem:[#allocation5 + $0x1e8] sm:$0xff]
    %v9313 = vld [vmem:[#allocation5 + $0x1f0] sm:$0xff]
    %v9314 = vld [vmem:[#allocation5 + $0x1f8] sm:$0xff]
    %v9315 = vld [vmem:[#allocation5 + $0x200] sm:$0xff]
    %v9316 = vld [vmem:[#allocation5 + $0x208] sm:$0xff]
    %v9317 = vld [vmem:[#allocation5 + $0x210] sm:$0xff]
    %v9318 = vld [vmem:[#allocation5 + $0x218] sm:$0xff]
    %v9319 = vld [vmem:[#allocation5 + $0x220] sm:$0xff]
    %v9320 = vld [vmem:[#allocation5 + $0x228] sm:$0xff]
    %v9321 = vld [vmem:[#allocation5 + $0x230] sm:$0xff]
    %v9322 = vld [vmem:[#allocation5 + $0x238] sm:$0xff]
    %v9323 = vld [vmem:[#allocation5 + $0x240] sm:$0xff]
    %v9324 = vld [vmem:[#allocation5 + $0x248] sm:$0xff]
    %v9325 = vld [vmem:[#allocation5 + $0x250] sm:$0xff]
    %v9326 = vld [vmem:[#allocation5 + $0x258] sm:$0xff]
    %v9327 = vld [vmem:[#allocation5 + $0x260] sm:$0xff]
    %v9328 = vld [vmem:[#allocation5 + $0x268] sm:$0xff]
    %v9329 = vld [vmem:[#allocation5 + $0x270] sm:$0xff]
    %v9330 = vld [vmem:[#allocation5 + $0x278] sm:$0xff]
    %v9331 = vld [vmem:[#allocation5 + $0x280] sm:$0xff]
    %v9332 = vld [vmem:[#allocation5 + $0x288] sm:$0xff]
    %v9333 = vld [vmem:[#allocation5 + $0x290] sm:$0xff]
    %v9334 = vld [vmem:[#allocation5 + $0x298] sm:$0xff]
    %v9335 = vld [vmem:[#allocation5 + $0x2a0] sm:$0xff]
    %v9336 = vld [vmem:[#allocation5 + $0x2a8] sm:$0xff]
    %v9337 = vld [vmem:[#allocation5 + $0x2b0] sm:$0xff]
    %v9338 = vld [vmem:[#allocation5 + $0x2b8] sm:$0xff]
    %v9339 = vld [vmem:[#allocation5 + $0x2c0] sm:$0xff]
    %v9340 = vld [vmem:[#allocation5 + $0x2c8] sm:$0xff]
    %v9341 = vld [vmem:[#allocation5 + $0x2d0] sm:$0xff]
    %v9342 = vld [vmem:[#allocation5 + $0x2d8] sm:$0xff]
    %v9343 = vld [vmem:[#allocation5 + $0x2e0] sm:$0xff]
    %v9344 = vld [vmem:[#allocation5 + $0x2e8] sm:$0xff]
    %v9345 = vld [vmem:[#allocation5 + $0x2f0] sm:$0xff]
    %v9346 = vld [vmem:[#allocation5 + $0x2f8] sm:$0xff]
    %v9347 = vld [vmem:[#allocation5 + $0x300] sm:$0xff]
    %v9348 = vld [vmem:[#allocation5 + $0x308] sm:$0xff]
    %v9349 = vld [vmem:[#allocation5 + $0x310] sm:$0xff]
    %v9350 = vld [vmem:[#allocation5 + $0x318] sm:$0xff]
    %v9351 = vld [vmem:[#allocation5 + $0x320] sm:$0xff]
    %v9352 = vld [vmem:[#allocation5 + $0x328] sm:$0xff]
    %v9353 = vld [vmem:[#allocation5 + $0x330] sm:$0xff]
    %v9354 = vld [vmem:[#allocation5 + $0x338] sm:$0xff]
    %v9355 = vld [vmem:[#allocation5 + $0x340] sm:$0xff]
    %v9356 = vld [vmem:[#allocation5 + $0x348] sm:$0xff]
    %v9357 = vld [vmem:[#allocation5 + $0x350] sm:$0xff]
    %v9358 = vld [vmem:[#allocation5 + $0x358] sm:$0xff]
    %v9359 = vld [vmem:[#allocation5 + $0x360] sm:$0xff]
    %v9360 = vld [vmem:[#allocation5 + $0x368] sm:$0xff]
    %v9361 = vld [vmem:[#allocation5 + $0x370] sm:$0xff]
    %v9362 = vld [vmem:[#allocation5 + $0x378] sm:$0xff]
    %v9363 = vld [vmem:[#allocation5 + $0x380] sm:$0xff]
    %v9364 = vld [vmem:[#allocation5 + $0x388] sm:$0xff]
    %v9365 = vld [vmem:[#allocation5 + $0x390] sm:$0xff]
    %v9366 = vld [vmem:[#allocation5 + $0x398] sm:$0xff]
    %v9367 = vld [vmem:[#allocation5 + $0x3a0] sm:$0xff]
    %v9368 = vld [vmem:[#allocation5 + $0x3a8] sm:$0xff]
    %v9369 = vld [vmem:[#allocation5 + $0x3b0] sm:$0xff]
    %v9370 = vld [vmem:[#allocation5 + $0x3b8] sm:$0xff]
    %v9371 = vld [vmem:[#allocation5 + $0x3c0] sm:$0xff]
    %v9372 = vld [vmem:[#allocation5 + $0x3c8] sm:$0xff]
    %v9373 = vld [vmem:[#allocation5 + $0x3d0] sm:$0xff]
    %v9374 = vld [vmem:[#allocation5 + $0x3d8] sm:$0xff]
    %v9375 = vld [vmem:[#allocation5 + $0x3e0] sm:$0xff]
    %v9376 = vld [vmem:[#allocation5 + $0x3e8] sm:$0xff]
    %v9377 = vld [vmem:[#allocation5 + $0x3f0] sm:$0xff]
    %v9378 = vld [vmem:[#allocation5 + $0x3f8] sm:$0xff]
    %v9379 = vld [vmem:[#allocation5 + $0x400] sm:$0xff]
    %v9380 = vld [vmem:[#allocation5 + $0x408] sm:$0xff]
    %v9381 = vld [vmem:[#allocation5 + $0x410] sm:$0xff]
    %v9382 = vld [vmem:[#allocation5 + $0x418] sm:$0xff]
    %v9383 = vld [vmem:[#allocation5 + $0x420] sm:$0xff]
    %v9384 = vld [vmem:[#allocation5 + $0x428] sm:$0xff]
    %v9385 = vld [vmem:[#allocation5 + $0x430] sm:$0xff]
    %v9386 = vld [vmem:[#allocation5 + $0x438] sm:$0xff]
    %v9387 = vld [vmem:[#allocation5 + $0x440] sm:$0xff]
    %v9388 = vld [vmem:[#allocation5 + $0x448] sm:$0xff]
    %v9389 = vld [vmem:[#allocation5 + $0x450] sm:$0xff]
    %v9390 = vld [vmem:[#allocation5 + $0x458] sm:$0xff]
    %v9391 = vld [vmem:[#allocation5 + $0x460] sm:$0xff]
    %v9392 = vld [vmem:[#allocation5 + $0x468] sm:$0xff]
    %v9393 = vld [vmem:[#allocation5 + $0x470] sm:$0xff]
    %v9394 = vld [vmem:[#allocation5 + $0x478] sm:$0xff]
    %v9395 = vld [vmem:[#allocation5 + $0x480] sm:$0xff]
    %v9396 = vld [vmem:[#allocation5 + $0x488] sm:$0xff]
    %v9397 = vld [vmem:[#allocation5 + $0x490] sm:$0xff]
    %v9398 = vld [vmem:[#allocation5 + $0x498] sm:$0xff]
    %v9399 = vld [vmem:[#allocation5 + $0x4a0] sm:$0xff]
    %v9400 = vld [vmem:[#allocation5 + $0x4a8] sm:$0xff]
    %v9401 = vld [vmem:[#allocation5 + $0x4b0] sm:$0xff]
    %v9402 = vld [vmem:[#allocation5 + $0x4b8] sm:$0xff]
    %v9403 = vld [vmem:[#allocation5 + $0x4c0] sm:$0xff]
    %v9404 = vld [vmem:[#allocation5 + $0x4c8] sm:$0xff]
    %v9405 = vld [vmem:[#allocation5 + $0x4d0] sm:$0xff]
    %v9406 = vld [vmem:[#allocation5 + $0x4d8] sm:$0xff]
    %v9407 = vld [vmem:[#allocation5 + $0x4e0] sm:$0xff]
    %v9408 = vld [vmem:[#allocation5 + $0x4e8] sm:$0xff]
    %v9409 = vld [vmem:[#allocation5 + $0x4f0] sm:$0xff]
    %v9410 = vld [vmem:[#allocation5 + $0x4f8] sm:$0xff]
    %v9411 = vld [vmem:[#allocation5 + $0x500] sm:$0xff]
    %v9412 = vld [vmem:[#allocation5 + $0x508] sm:$0xff]
    %v9413 = vld [vmem:[#allocation5 + $0x510] sm:$0xff]
    %v9414 = vld [vmem:[#allocation5 + $0x518] sm:$0xff]
    %v9415 = vld [vmem:[#allocation5 + $0x520] sm:$0xff]
    %v9416 = vld [vmem:[#allocation5 + $0x528] sm:$0xff]
    %v9417 = vld [vmem:[#allocation5 + $0x530] sm:$0xff]
    %v9418 = vld [vmem:[#allocation5 + $0x538] sm:$0xff]
    %v9419 = vld [vmem:[#allocation5 + $0x540] sm:$0xff]
    %v9420 = vld [vmem:[#allocation5 + $0x548] sm:$0xff]
    %v9421 = vld [vmem:[#allocation5 + $0x550] sm:$0xff]
    %v9422 = vld [vmem:[#allocation5 + $0x558] sm:$0xff]
    %v9423 = vld [vmem:[#allocation5 + $0x560] sm:$0xff]
    %v9424 = vld [vmem:[#allocation5 + $0x568] sm:$0xff]
    %v9425 = vld [vmem:[#allocation5 + $0x570] sm:$0xff]
    %v9426 = vld [vmem:[#allocation5 + $0x578] sm:$0xff]
    %v9427 = vld [vmem:[#allocation5 + $0x580] sm:$0xff]
    %v9428 = vld [vmem:[#allocation5 + $0x588] sm:$0xff]
    %v9429 = vld [vmem:[#allocation5 + $0x590] sm:$0xff]
    %v9430 = vld [vmem:[#allocation5 + $0x598] sm:$0xff]
    %v9431 = vld [vmem:[#allocation5 + $0x5a0] sm:$0xff]
    %v9432 = vld [vmem:[#allocation5 + $0x5a8] sm:$0xff]
    %v9433 = vld [vmem:[#allocation5 + $0x5b0] sm:$0xff]
    %v9434 = vld [vmem:[#allocation5 + $0x5b8] sm:$0xff]
    %v9435 = vld [vmem:[#allocation5 + $0x5c0] sm:$0xff]
    %v9436 = vld [vmem:[#allocation5 + $0x5c8] sm:$0xff]
    %v9437 = vld [vmem:[#allocation5 + $0x5d0] sm:$0xff]
    %v9438 = vld [vmem:[#allocation5 + $0x5d8] sm:$0xff]
    %v9439 = vld [vmem:[#allocation5 + $0x5e0] sm:$0xff]
    %v9440 = vld [vmem:[#allocation5 + $0x5e8] sm:$0xff]
    %v9441 = vld [vmem:[#allocation5 + $0x5f0] sm:$0xff]
    %v9442 = vld [vmem:[#allocation5 + $0x5f8] sm:$0xff]
    %v9443 = vld [vmem:[#allocation5 + $0x600] sm:$0xff]
    %v9444 = vld [vmem:[#allocation5 + $0x608] sm:$0xff]
    %v9445 = vld [vmem:[#allocation5 + $0x610] sm:$0xff]
    %v9446 = vld [vmem:[#allocation5 + $0x618] sm:$0xff]
    %v9447 = vld [vmem:[#allocation5 + $0x620] sm:$0xff]
    %v9448 = vld [vmem:[#allocation5 + $0x628] sm:$0xff]
    %v9449 = vld [vmem:[#allocation5 + $0x630] sm:$0xff]
    %v9450 = vld [vmem:[#allocation5 + $0x638] sm:$0xff]
    %v9451 = vld [vmem:[#allocation5 + $0x640] sm:$0xff]
    %v9452 = vld [vmem:[#allocation5 + $0x648] sm:$0xff]
    %v9453 = vld [vmem:[#allocation5 + $0x650] sm:$0xff]
    %v9454 = vld [vmem:[#allocation5 + $0x658] sm:$0xff]
    %v9455 = vld [vmem:[#allocation5 + $0x660] sm:$0xff]
    %v9456 = vld [vmem:[#allocation5 + $0x668] sm:$0xff]
    %v9457 = vld [vmem:[#allocation5 + $0x670] sm:$0xff]
    %v9458 = vld [vmem:[#allocation5 + $0x678] sm:$0xff]
    %v9459 = vld [vmem:[#allocation5 + $0x680] sm:$0xff]
    %v9460 = vld [vmem:[#allocation5 + $0x688] sm:$0xff]
    %v9461 = vld [vmem:[#allocation5 + $0x690] sm:$0xff]
    %v9462 = vld [vmem:[#allocation5 + $0x698] sm:$0xff]
    %v9463 = vld [vmem:[#allocation5 + $0x6a0] sm:$0xff]
    %v9464 = vld [vmem:[#allocation5 + $0x6a8] sm:$0xff]
    %v9465 = vld [vmem:[#allocation5 + $0x6b0] sm:$0xff]
    %v9466 = vld [vmem:[#allocation5 + $0x6b8] sm:$0xff]
    %v9467 = vld [vmem:[#allocation5 + $0x6c0] sm:$0xff]
    %v9468 = vld [vmem:[#allocation5 + $0x6c8] sm:$0xff]
    %v9469 = vld [vmem:[#allocation5 + $0x6d0] sm:$0xff]
    %v9470 = vld [vmem:[#allocation5 + $0x6d8] sm:$0xff]
    %v9471 = vld [vmem:[#allocation5 + $0x6e0] sm:$0xff]
    %v9472 = vld [vmem:[#allocation5 + $0x6e8] sm:$0xff]
    %v9473 = vld [vmem:[#allocation5 + $0x6f0] sm:$0xff]
    %v9474 = vld [vmem:[#allocation5 + $0x6f8] sm:$0xff]
    %v9475 = vld [vmem:[#allocation5 + $0x700] sm:$0xff]
    %v9476 = vld [vmem:[#allocation5 + $0x708] sm:$0xff]
    %v9477 = vld [vmem:[#allocation5 + $0x710] sm:$0xff]
    %v9478 = vld [vmem:[#allocation5 + $0x718] sm:$0xff]
    %v9479 = vld [vmem:[#allocation5 + $0x720] sm:$0xff]
    %v9480 = vld [vmem:[#allocation5 + $0x728] sm:$0xff]
    %v9481 = vld [vmem:[#allocation5 + $0x730] sm:$0xff]
    %v9482 = vld [vmem:[#allocation5 + $0x738] sm:$0xff]
    %v9483 = vld [vmem:[#allocation5 + $0x740] sm:$0xff]
    %v9484 = vld [vmem:[#allocation5 + $0x748] sm:$0xff]
    %v9485 = vld [vmem:[#allocation5 + $0x750] sm:$0xff]
    %v9486 = vld [vmem:[#allocation5 + $0x758] sm:$0xff]
    %v9487 = vld [vmem:[#allocation5 + $0x760] sm:$0xff]
    %v9488 = vld [vmem:[#allocation5 + $0x768] sm:$0xff]
    %v9489 = vld [vmem:[#allocation5 + $0x770] sm:$0xff]
    %v9490 = vld [vmem:[#allocation5 + $0x778] sm:$0xff]
    %v9491 = vld [vmem:[#allocation5 + $0x780] sm:$0xff]
    %v9492 = vld [vmem:[#allocation5 + $0x788] sm:$0xff]
    %v9493 = vld [vmem:[#allocation5 + $0x790] sm:$0xff]
    %v9494 = vld [vmem:[#allocation5 + $0x798] sm:$0xff]
    %v9495 = vld [vmem:[#allocation5 + $0x7a0] sm:$0xff]
    %v9496 = vld [vmem:[#allocation5 + $0x7a8] sm:$0xff]
    %v9497 = vld [vmem:[#allocation5 + $0x7b0] sm:$0xff]
    %v9498 = vld [vmem:[#allocation5 + $0x7b8] sm:$0xff]
    %v9499 = vld [vmem:[#allocation5 + $0x7c0] sm:$0xff]
    %v9500 = vld [vmem:[#allocation5 + $0x7c8] sm:$0xff]
    %v9501 = vld [vmem:[#allocation5 + $0x7d0] sm:$0xff]
    %v9502 = vld [vmem:[#allocation5 + $0x7d8] sm:$0xff]
    %v9503 = vld [vmem:[#allocation5 + $0x7e0] sm:$0xff]
    %v9504 = vld [vmem:[#allocation5 + $0x7e8] sm:$0xff]
    %v9505 = vld [vmem:[#allocation5 + $0x7f0] sm:$0xff]
    %v9506 = vld [vmem:[#allocation5 + $0x7f8] sm:$0xff]
    %v9507 = vld [vmem:[#allocation12] sm:$0xf]
    %v9509 = vlaneseq
    %v9510 = vshrl.u32 %v9509, 7
    %v9511 = vsub.s32 0, %v9510
    %v9512 = vrot.slane %v9507, %v9511
    %v9513 = vlaneseq
    %v9514 = vshrl.u32 %v9513, 7
    %v9515 = vsub.s32 1, %v9514
    %v9516 = vrot.slane %v9507, %v9515
    %v9517 = vlaneseq
    %v9518 = vshrl.u32 %v9517, 7
    %v9519 = vsub.s32 2, %v9518
    %v9520 = vrot.slane %v9507, %v9519
    %v9521 = vlaneseq
    %v9522 = vshrl.u32 %v9521, 7
    %v9523 = vsub.s32 3, %v9522
    %v9524 = vrot.slane %v9507, %v9523
    %9529 = vmatprep.subr.bf16.mxu0 %v9252
    %9530 = vmatpush1.bf16.msra.mxu0 %v9251
    %9531 = vmatprep.subr.bf16.mxu0 %v9256
    %9532 = vmatpush1.bf16.msra.mxu0 %v9255
    %9533 = vmatprep.subr.bf16.mxu0 %v9260
    %9534 = vmatpush1.bf16.msra.mxu0 %v9259
    %9535 = vmatprep.subr.bf16.mxu0 %v9264
    %9536 = vmatpush1.bf16.msra.mxu0 %v9263
    %9537 = vmatprep.subr.bf16.mxu0 %v9268
    %9538 = vmatpush1.bf16.msra.mxu0 %v9267
    %9539 = vmatprep.subr.bf16.mxu0 %v9272
    %9540 = vmatpush1.bf16.msra.mxu0 %v9271
    %9541 = vmatprep.subr.bf16.mxu0 %v9276
    %9542 = vmatpush1.bf16.msra.mxu0 %v9275
    %9543 = vmatprep.subr.bf16.mxu0 %v9280
    %9544 = vmatpush1.bf16.msra.mxu0 %v9279
    %9545 = vmatprep.subr.bf16.mxu0 %v9284
    %9546 = vmatpush1.bf16.msra.mxu0 %v9283
    %9547 = vmatprep.subr.bf16.mxu0 %v9288
    %9548 = vmatpush1.bf16.msra.mxu0 %v9287
    %9549 = vmatprep.subr.bf16.mxu0 %v9292
    %9550 = vmatpush1.bf16.msra.mxu0 %v9291
    %9551 = vmatprep.subr.bf16.mxu0 %v9296
    %9552 = vmatpush1.bf16.msra.mxu0 %v9295
    %9553 = vmatprep.subr.bf16.mxu0 %v9300
    %9554 = vmatpush1.bf16.msra.mxu0 %v9299
    %9555 = vmatprep.subr.bf16.mxu0 %v9304
    %9556 = vmatpush1.bf16.msra.mxu0 %v9303
    %9557 = vmatprep.subr.bf16.mxu0 %v9308
    %9558 = vmatpush1.bf16.msra.mxu0 %v9307
    %9559 = vmatprep.subr.bf16.mxu0 %v9312
    %9560 = vmatpush1.bf16.msra.mxu0 %v9311
    %9561 = vmatprep.mubr.bf16.mxu0 %v9244
    %9562 = vmatmul.mubr.bf16.gmra.mrb[0].mxu0 %v9243
    %v9563 = vpop.f32.mrb[0].mxu0
    %v9564 = vadd.f32 %v9512, %v9563
    %v9565 = vpop.f32.mrb[0].mxu0
    %v9566 = vadd.f32 %v9516, %v9565
    %v9567 = vpop.f32.mrb[0].mxu0
    %v9568 = vpop.f32.mrb[0].mxu0
    %9569 = vdwg.mxu0
    %9570 = vmatprep.subr.bf16.mxu0 %v9316
    %9571 = vmatpush1.bf16.msra.mxu0 %v9315
    %9572 = vmatprep.subr.bf16.mxu0 %v9320
    %9573 = vmatpush1.bf16.msra.mxu0 %v9319
    %9574 = vmatprep.subr.bf16.mxu0 %v9324
    %9575 = vmatpush1.bf16.msra.mxu0 %v9323
    %9576 = vmatprep.subr.bf16.mxu0 %v9328
    %9577 = vmatpush1.bf16.msra.mxu0 %v9327
    %9578 = vmatprep.subr.bf16.mxu0 %v9332
    %9579 = vmatpush1.bf16.msra.mxu0 %v9331
    %9580 = vmatprep.subr.bf16.mxu0 %v9336
    %9581 = vmatpush1.bf16.msra.mxu0 %v9335
    %9582 = vmatprep.subr.bf16.mxu0 %v9340
    %9583 = vmatpush1.bf16.msra.mxu0 %v9339
    %9584 = vmatprep.subr.bf16.mxu0 %v9344
    %9585 = vmatpush1.bf16.msra.mxu0 %v9343
    %9586 = vmatprep.subr.bf16.mxu0 %v9348
    %9587 = vmatpush1.bf16.msra.mxu0 %v9347
    %9588 = vmatprep.subr.bf16.mxu0 %v9352
    %9589 = vmatpush1.bf16.msra.mxu0 %v9351
    %9590 = vmatprep.subr.bf16.mxu0 %v9356
    %9591 = vmatpush1.bf16.msra.mxu0 %v9355
    %9592 = vmatprep.subr.bf16.mxu0 %v9360
    %9593 = vmatpush1.bf16.msra.mxu0 %v9359
    %9594 = vmatprep.subr.bf16.mxu0 %v9364
    %9595 = vmatpush1.bf16.msra.mxu0 %v9363
    %9596 = vmatprep.subr.bf16.mxu0 %v9368
    %9597 = vmatpush1.bf16.msra.mxu0 %v9367
    %9598 = vmatprep.subr.bf16.mxu0 %v9372
    %9599 = vmatpush1.bf16.msra.mxu0 %v9371
    %9600 = vmatprep.subr.bf16.mxu0 %v9376
    %9601 = vmatpush1.bf16.msra.mxu0 %v9375
    %9602 = vmatprep.mubr.bf16.mxu0 %v9246
    %9603 = vmatmul.mubr.bf16.gmra.mrb[0].mxu0 %v9245
    %v9604 = vpop.f32.mrb[0].mxu0
    %v9605 = vadd.f32 %v9564, %v9604
    %v9606 = vpop.f32.mrb[0].mxu0
    %v9607 = vadd.f32 %v9566, %v9606
    %v9608 = vpop.f32.mrb[0].mxu0
    %v9609 = vpop.f32.mrb[0].mxu0
    %9610 = vdwg.mxu0
    %9611 = vmatprep.subr.bf16.mxu0 %v9380
    %9612 = vmatpush1.bf16.msra.mxu0 %v9379
    %9613 = vmatprep.subr.bf16.mxu0 %v9384
    %9614 = vmatpush1.bf16.msra.mxu0 %v9383
    %9615 = vmatprep.subr.bf16.mxu0 %v9388
    %9616 = vmatpush1.bf16.msra.mxu0 %v9387
    %9617 = vmatprep.subr.bf16.mxu0 %v9392
    %9618 = vmatpush1.bf16.msra.mxu0 %v9391
    %9619 = vmatprep.subr.bf16.mxu0 %v9396
    %9620 = vmatpush1.bf16.msra.mxu0 %v9395
    %9621 = vmatprep.subr.bf16.mxu0 %v9400
    %9622 = vmatpush1.bf16.msra.mxu0 %v9399
    %9623 = vmatprep.subr.bf16.mxu0 %v9404
    %9624 = vmatpush1.bf16.msra.mxu0 %v9403
    %9625 = vmatprep.subr.bf16.mxu0 %v9408
    %9626 = vmatpush1.bf16.msra.mxu0 %v9407
    %9627 = vmatprep.subr.bf16.mxu0 %v9412
    %9628 = vmatpush1.bf16.msra.mxu0 %v9411
    %9629 = vmatprep.subr.bf16.mxu0 %v9416
    %9630 = vmatpush1.bf16.msra.mxu0 %v9415
    %9631 = vmatprep.subr.bf16.mxu0 %v9420
    %9632 = vmatpush1.bf16.msra.mxu0 %v9419
    %9633 = vmatprep.subr.bf16.mxu0 %v9424
    %9634 = vmatpush1.bf16.msra.mxu0 %v9423
    %9635 = vmatprep.subr.bf16.mxu0 %v9428
    %9636 = vmatpush1.bf16.msra.mxu0 %v9427
    %9637 = vmatprep.subr.bf16.mxu0 %v9432
    %9638 = vmatpush1.bf16.msra.mxu0 %v9431
    %9639 = vmatprep.subr.bf16.mxu0 %v9436
    %9640 = vmatpush1.bf16.msra.mxu0 %v9435
    %9641 = vmatprep.subr.bf16.mxu0 %v9440
    %9642 = vmatpush1.bf16.msra.mxu0 %v9439
    %9643 = vmatprep.mubr.bf16.mxu0 %v9248
    %9644 = vmatmul.mubr.bf16.gmra.mrb[0].mxu0 %v9247
    %v9645 = vpop.f32.mrb[0].mxu0
    %v9646 = vadd.f32 %v9605, %v9645
    %v9647 = vpop.f32.mrb[0].mxu0
    %v9648 = vadd.f32 %v9607, %v9647
    %v9649 = vpop.f32.mrb[0].mxu0
    %v9650 = vpop.f32.mrb[0].mxu0
    %9651 = vdwg.mxu0
    %9652 = vmatprep.subr.bf16.mxu0 %v9444
    %9653 = vmatpush1.bf16.msra.mxu0 %v9443
    %9654 = vmatprep.subr.bf16.mxu0 %v9448
    %9655 = vmatpush1.bf16.msra.mxu0 %v9447
    %9656 = vmatprep.subr.bf16.mxu0 %v9452
    %9657 = vmatpush1.bf16.msra.mxu0 %v9451
    %9658 = vmatprep.subr.bf16.mxu0 %v9456
    %9659 = vmatpush1.bf16.msra.mxu0 %v9455
    %9660 = vmatprep.subr.bf16.mxu0 %v9460
    %9661 = vmatpush1.bf16.msra.mxu0 %v9459
    %9662 = vmatprep.subr.bf16.mxu0 %v9464
    %9663 = vmatpush1.bf16.msra.mxu0 %v9463
    %9664 = vmatprep.subr.bf16.mxu0 %v9468
    %9665 = vmatpush1.bf16.msra.mxu0 %v9467
    %9666 = vmatprep.subr.bf16.mxu0 %v9472
    %9667 = vmatpush1.bf16.msra.mxu0 %v9471
    %9668 = vmatprep.subr.bf16.mxu0 %v9476
    %9669 = vmatpush1.bf16.msra.mxu0 %v9475
    %9670 = vmatprep.subr.bf16.mxu0 %v9480
    %9671 = vmatpush1.bf16.msra.mxu0 %v9479
    %9672 = vmatprep.subr.bf16.mxu0 %v9484
    %9673 = vmatpush1.bf16.msra.mxu0 %v9483
    %9674 = vmatprep.subr.bf16.mxu0 %v9488
    %9675 = vmatpush1.bf16.msra.mxu0 %v9487
    %9676 = vmatprep.subr.bf16.mxu0 %v9492
    %9677 = vmatpush1.bf16.msra.mxu0 %v9491
    %9678 = vmatprep.subr.bf16.mxu0 %v9496
    %9679 = vmatpush1.bf16.msra.mxu0 %v9495
    %9680 = vmatprep.subr.bf16.mxu0 %v9500
    %9681 = vmatpush1.bf16.msra.mxu0 %v9499
    %9682 = vmatprep.subr.bf16.mxu0 %v9504
    %9683 = vmatpush1.bf16.msra.mxu0 %v9503
    %9684 = vmatprep.mubr.bf16.mxu0 %v9250
    %9685 = vmatmul.mubr.bf16.gmra.mrb[0].mxu0 %v9249
    %v9686 = vpop.f32.mrb[0].mxu0
    %v9687 = vadd.f32 %v9646, %v9686
    %v9688 = vpop.f32.mrb[0].mxu0
    %v9689 = vadd.f32 %v9648, %v9688
    %v9690 = vpop.f32.mrb[0].mxu0
    %v9691 = vpop.f32.mrb[0].mxu0
    %9692 = vdwg.mxu0
    %9693 = vmatprep.subr.bf16.mxu0 %v9254
    %9694 = vmatpush1.bf16.msra.mxu0 %v9253
    %9695 = vmatprep.subr.bf16.mxu0 %v9258
    %9696 = vmatpush1.bf16.msra.mxu0 %v9257
    %9697 = vmatprep.subr.bf16.mxu0 %v9262
    %9698 = vmatpush1.bf16.msra.mxu0 %v9261
    %9699 = vmatprep.subr.bf16.mxu0 %v9266
    %9700 = vmatpush1.bf16.msra.mxu0 %v9265
    %9701 = vmatprep.subr.bf16.mxu0 %v9270
    %9702 = vmatpush1.bf16.msra.mxu0 %v9269
    %9703 = vmatprep.subr.bf16.mxu0 %v9274
    %9704 = vmatpush1.bf16.msra.mxu0 %v9273
    %9705 = vmatprep.subr.bf16.mxu0 %v9278
    %9706 = vmatpush1.bf16.msra.mxu0 %v9277
    %9707 = vmatprep.subr.bf16.mxu0 %v9282
    %9708 = vmatpush1.bf16.msra.mxu0 %v9281
    %9709 = vmatprep.subr.bf16.mxu0 %v9286
    %9710 = vmatpush1.bf16.msra.mxu0 %v9285
    %9711 = vmatprep.subr.bf16.mxu0 %v9290
    %9712 = vmatpush1.bf16.msra.mxu0 %v9289
    %9713 = vmatprep.subr.bf16.mxu0 %v9294
    %9714 = vmatpush1.bf16.msra.mxu0 %v9293
    %9715 = vmatprep.subr.bf16.mxu0 %v9298
    %9716 = vmatpush1.bf16.msra.mxu0 %v9297
    %9717 = vmatprep.subr.bf16.mxu0 %v9302
    %9718 = vmatpush1.bf16.msra.mxu0 %v9301
    %9719 = vmatprep.subr.bf16.mxu0 %v9306
    %9720 = vmatpush1.bf16.msra.mxu0 %v9305
    %9721 = vmatprep.subr.bf16.mxu0 %v9310
    %9722 = vmatpush1.bf16.msra.mxu0 %v9309
    %9723 = vmatprep.subr.bf16.mxu0 %v9314
    %9724 = vmatpush1.bf16.msra.mxu0 %v9313
    %9725 = vmatprep.mubr.bf16.mxu0 %v9244
    %9726 = vmatmul.mubr.bf16.gmra.mrb[0].mxu0 %v9243
    %v9727 = vpop.f32.mrb[0].mxu0
    %v9728 = vadd.f32 %v9520, %v9727
    %v9729 = vpop.f32.mrb[0].mxu0
    %v9730 = vadd.f32 %v9524, %v9729
    %v9731 = vpop.f32.mrb[0].mxu0
    %v9732 = vpop.f32.mrb[0].mxu0
    %9733 = vdwg.mxu0
    %9734 = vmatprep.subr.bf16.mxu0 %v9318
    %9735 = vmatpush1.bf16.msra.mxu0 %v9317
    %9736 = vmatprep.subr.bf16.mxu0 %v9322
    %9737 = vmatpush1.bf16.msra.mxu0 %v9321
    %9738 = vmatprep.subr.bf16.mxu0 %v9326
    %9739 = vmatpush1.bf16.msra.mxu0 %v9325
    %9740 = vmatprep.subr.bf16.mxu0 %v9330
    %9741 = vmatpush1.bf16.msra.mxu0 %v9329
    %9742 = vmatprep.subr.bf16.mxu0 %v9334
    %9743 = vmatpush1.bf16.msra.mxu0 %v9333
    %9744 = vmatprep.subr.bf16.mxu0 %v9338
    %9745 = vmatpush1.bf16.msra.mxu0 %v9337
    %9746 = vmatprep.subr.bf16.mxu0 %v9342
    %9747 = vmatpush1.bf16.msra.mxu0 %v9341
    %9748 = vmatprep.subr.bf16.mxu0 %v9346
    %9749 = vmatpush1.bf16.msra.mxu0 %v9345
    %9750 = vmatprep.subr.bf16.mxu0 %v9350
    %9751 = vmatpush1.bf16.msra.mxu0 %v9349
    %9752 = vmatprep.subr.bf16.mxu0 %v9354
    %9753 = vmatpush1.bf16.msra.mxu0 %v9353
    %9754 = vmatprep.subr.bf16.mxu0 %v9358
    %9755 = vmatpush1.bf16.msra.mxu0 %v9357
    %9756 = vmatprep.subr.bf16.mxu0 %v9362
    %9757 = vmatpush1.bf16.msra.mxu0 %v9361
    %9758 = vmatprep.subr.bf16.mxu0 %v9366
    %9759 = vmatpush1.bf16.msra.mxu0 %v9365
    %9760 = vmatprep.subr.bf16.mxu0 %v9370
    %9761 = vmatpush1.bf16.msra.mxu0 %v9369
    %9762 = vmatprep.subr.bf16.mxu0 %v9374
    %9763 = vmatpush1.bf16.msra.mxu0 %v9373
    %9764 = vmatprep.subr.bf16.mxu0 %v9378
    %9765 = vmatpush1.bf16.msra.mxu0 %v9377
    %9766 = vmatprep.mubr.bf16.mxu0 %v9246
    %9767 = vmatmul.mubr.bf16.gmra.mrb[0].mxu0 %v9245
    %v9768 = vpop.f32.mrb[0].mxu0
    %v9769 = vadd.f32 %v9728, %v9768
    %v9770 = vpop.f32.mrb[0].mxu0
    %v9771 = vadd.f32 %v9730, %v9770
    %v9772 = vpop.f32.mrb[0].mxu0
    %v9773 = vpop.f32.mrb[0].mxu0
    %9774 = vdwg.mxu0
    %9775 = vmatprep.subr.bf16.mxu0 %v9382
    %9776 = vmatpush1.bf16.msra.mxu0 %v9381
    %9777 = vmatprep.subr.bf16.mxu0 %v9386
    %9778 = vmatpush1.bf16.msra.mxu0 %v9385
    %9779 = vmatprep.subr.bf16.mxu0 %v9390
    %9780 = vmatpush1.bf16.msra.mxu0 %v9389
    %9781 = vmatprep.subr.bf16.mxu0 %v9394
    %9782 = vmatpush1.bf16.msra.mxu0 %v9393
    %9783 = vmatprep.subr.bf16.mxu0 %v9398
    %9784 = vmatpush1.bf16.msra.mxu0 %v9397
    %9785 = vmatprep.subr.bf16.mxu0 %v9402
    %9786 = vmatpush1.bf16.msra.mxu0 %v9401
    %9787 = vmatprep.subr.bf16.mxu0 %v9406
    %9788 = vmatpush1.bf16.msra.mxu0 %v9405
    %9789 = vmatprep.subr.bf16.mxu0 %v9410
    %9790 = vmatpush1.bf16.msra.mxu0 %v9409
    %9791 = vmatprep.subr.bf16.mxu0 %v9414
    %9792 = vmatpush1.bf16.msra.mxu0 %v9413
    %9793 = vmatprep.subr.bf16.mxu0 %v9418
    %9794 = vmatpush1.bf16.msra.mxu0 %v9417
    %9795 = vmatprep.subr.bf16.mxu0 %v9422
    %9796 = vmatpush1.bf16.msra.mxu0 %v9421
    %9797 = vmatprep.subr.bf16.mxu0 %v9426
    %9798 = vmatpush1.bf16.msra.mxu0 %v9425
    %9799 = vmatprep.subr.bf16.mxu0 %v9430
    %9800 = vmatpush1.bf16.msra.mxu0 %v9429
    %9801 = vmatprep.subr.bf16.mxu0 %v9434
    %9802 = vmatpush1.bf16.msra.mxu0 %v9433
    %9803 = vmatprep.subr.bf16.mxu0 %v9438
    %9804 = vmatpush1.bf16.msra.mxu0 %v9437
    %9805 = vmatprep.subr.bf16.mxu0 %v9442
    %9806 = vmatpush1.bf16.msra.mxu0 %v9441
    %9807 = vmatprep.mubr.bf16.mxu0 %v9248
    %9808 = vmatmul.mubr.bf16.gmra.mrb[0].mxu0 %v9247
    %v9809 = vpop.f32.mrb[0].mxu0
    %v9810 = vadd.f32 %v9769, %v9809
    %v9811 = vpop.f32.mrb[0].mxu0
    %v9812 = vadd.f32 %v9771, %v9811
    %v9813 = vpop.f32.mrb[0].mxu0
    %v9814 = vpop.f32.mrb[0].mxu0
    %9815 = vdwg.mxu0
    %9816 = vmatprep.subr.bf16.mxu0 %v9446
    %9817 = vmatpush1.bf16.msra.mxu0 %v9445
    %9818 = vmatprep.subr.bf16.mxu0 %v9450
    %9819 = vmatpush1.bf16.msra.mxu0 %v9449
    %9820 = vmatprep.subr.bf16.mxu0 %v9454
    %9821 = vmatpush1.bf16.msra.mxu0 %v9453
    %9822 = vmatprep.subr.bf16.mxu0 %v9458
    %9823 = vmatpush1.bf16.msra.mxu0 %v9457
    %9824 = vmatprep.subr.bf16.mxu0 %v9462
    %9825 = vmatpush1.bf16.msra.mxu0 %v9461
    %9826 = vmatprep.subr.bf16.mxu0 %v9466
    %9827 = vmatpush1.bf16.msra.mxu0 %v9465
    %9828 = vmatprep.subr.bf16.mxu0 %v9470
    %9829 = vmatpush1.bf16.msra.mxu0 %v9469
    %9830 = vmatprep.subr.bf16.mxu0 %v9474
    %9831 = vmatpush1.bf16.msra.mxu0 %v9473
    %9832 = vmatprep.subr.bf16.mxu0 %v9478
    %9833 = vmatpush1.bf16.msra.mxu0 %v9477
    %9834 = vmatprep.subr.bf16.mxu0 %v9482
    %9835 = vmatpush1.bf16.msra.mxu0 %v9481
    %9836 = vmatprep.subr.bf16.mxu0 %v9486
    %9837 = vmatpush1.bf16.msra.mxu0 %v9485
    %9838 = vmatprep.subr.bf16.mxu0 %v9490
    %9839 = vmatpush1.bf16.msra.mxu0 %v9489
    %9840 = vmatprep.subr.bf16.mxu0 %v9494
    %9841 = vmatpush1.bf16.msra.mxu0 %v9493
    %9842 = vmatprep.subr.bf16.mxu0 %v9498
    %9843 = vmatpush1.bf16.msra.mxu0 %v9497
    %9844 = vmatprep.subr.bf16.mxu0 %v9502
    %9845 = vmatpush1.bf16.msra.mxu0 %v9501
    %9846 = vmatprep.subr.bf16.mxu0 %v9506
    %9847 = vmatpush1.bf16.msra.mxu0 %v9505
    %9848 = vmatprep.mubr.bf16.mxu0 %v9250
    %9849 = vmatmul.mubr.bf16.gmra.mrb[0].mxu0 %v9249
    %v9850 = vpop.f32.mrb[0].mxu0
    %v9851 = vadd.f32 %v9810, %v9850
    %v9852 = vpop.f32.mrb[0].mxu0
    %v9853 = vadd.f32 %v9812, %v9852
    %v9854 = vpop.f32.mrb[0].mxu0
    %v9855 = vpop.f32.mrb[0].mxu0
    %9856 = vdwg.mxu0
    %v9857 = vpack.c.bf16 %v9687, %v9687
    %v9858 = vpack.c.bf16 %v9689, %v9689
    %v9859 = vpack.c.bf16 %v9851, %v9851
    %v9860 = vpack.c.bf16 %v9853, %v9853
    %v9861 = vld [vmem:[%s16] sm:$0xf]
    %v9862 = vld [vmem:[%s16 + $0x4] sm:$0xf]
    %v9863 = vld [vmem:[%s16 + $0x8] sm:$0xf]
    %v9864 = vld [vmem:[%s16 + $0xc] sm:$0xf]
    %v9865 = vld [vmem:[%s16 + $0x10] sm:$0xf]
    %v9866 = vld [vmem:[%s16 + $0x14] sm:$0xf]
    %v9867 = vld [vmem:[%s16 + $0x18] sm:$0xf]
    %v9868 = vld [vmem:[%s16 + $0x1c] sm:$0xf]
    %v9869 = vld [vmem:[%s16 + $0x20] sm:$0xf]
    %v9870 = vld [vmem:[%s16 + $0x24] sm:$0xf]
    %v9871 = vld [vmem:[%s16 + $0x28] sm:$0xf]
    %v9872 = vld [vmem:[%s16 + $0x2c] sm:$0xf]
    %v9873 = vld [vmem:[%s16 + $0x30] sm:$0xf]
    %v9874 = vld [vmem:[%s16 + $0x34] sm:$0xf]
    %v9875 = vld [vmem:[%s16 + $0x38] sm:$0xf]
    %v9876 = vld [vmem:[%s16 + $0x3c] sm:$0xf]
    %v9877 = vld [vmem:[%s16 + $0x40] sm:$0xf]
    %v9878 = vld [vmem:[%s16 + $0x44] sm:$0xf]
    %v9879 = vld [vmem:[%s16 + $0x48] sm:$0xf]
    %v9880 = vld [vmem:[%s16 + $0x4c] sm:$0xf]
    %v9881 = vld [vmem:[%s16 + $0x50] sm:$0xf]
    %v9882 = vld [vmem:[%s16 + $0x54] sm:$0xf]
    %v9883 = vld [vmem:[%s16 + $0x58] sm:$0xf]
    %v9884 = vld [vmem:[%s16 + $0x5c] sm:$0xf]
    %v9885 = vld [vmem:[%s16 + $0x60] sm:$0xf]
    %v9886 = vld [vmem:[%s16 + $0x64] sm:$0xf]
    %v9887 = vld [vmem:[%s16 + $0x68] sm:$0xf]
    %v9888 = vld [vmem:[%s16 + $0x6c] sm:$0xf]
    %v9889 = vld [vmem:[%s16 + $0x70] sm:$0xf]
    %v9890 = vld [vmem:[%s16 + $0x74] sm:$0xf]
    %v9891 = vld [vmem:[%s16 + $0x78] sm:$0xf]
    %v9892 = vld [vmem:[%s16 + $0x7c] sm:$0xf]
    %v9893 = vld [vmem:[%s16 + $0x80] sm:$0xf]
    %v9894 = vld [vmem:[%s16 + $0x84] sm:$0xf]
    %v9895 = vld [vmem:[%s16 + $0x88] sm:$0xf]
    %v9896 = vld [vmem:[%s16 + $0x8c] sm:$0xf]
    %v9897 = vld [vmem:[%s16 + $0x90] sm:$0xf]
    %v9898 = vld [vmem:[%s16 + $0x94] sm:$0xf]
    %v9899 = vld [vmem:[%s16 + $0x98] sm:$0xf]
    %v9900 = vld [vmem:[%s16 + $0x9c] sm:$0xf]
    %v9901 = vld [vmem:[%s16 + $0xa0] sm:$0xf]
    %v9902 = vld [vmem:[%s16 + $0xa4] sm:$0xf]
    %v9903 = vld [vmem:[%s16 + $0xa8] sm:$0xf]
    %v9904 = vld [vmem:[%s16 + $0xac] sm:$0xf]
    %v9905 = vld [vmem:[%s16 + $0xb0] sm:$0xf]
    %v9906 = vld [vmem:[%s16 + $0xb4] sm:$0xf]
    %v9907 = vld [vmem:[%s16 + $0xb8] sm:$0xf]
    %v9908 = vld [vmem:[%s16 + $0xbc] sm:$0xf]
    %v9909 = vld [vmem:[%s16 + $0xc0] sm:$0xf]
    %v9910 = vld [vmem:[%s16 + $0xc4] sm:$0xf]
    %v9911 = vld [vmem:[%s16 + $0xc8] sm:$0xf]
    %v9912 = vld [vmem:[%s16 + $0xcc] sm:$0xf]
    %v9913 = vld [vmem:[%s16 + $0xd0] sm:$0xf]
    %v9914 = vld [vmem:[%s16 + $0xd4] sm:$0xf]
    %v9915 = vld [vmem:[%s16 + $0xd8] sm:$0xf]
    %v9916 = vld [vmem:[%s16 + $0xdc] sm:$0xf]
    %v9917 = vld [vmem:[%s16 + $0xe0] sm:$0xf]
    %v9918 = vld [vmem:[%s16 + $0xe4] sm:$0xf]
    %v9919 = vld [vmem:[%s16 + $0xe8] sm:$0xf]
    %v9920 = vld [vmem:[%s16 + $0xec] sm:$0xf]
    %v9921 = vld [vmem:[%s16 + $0xf0] sm:$0xf]
    %v9922 = vld [vmem:[%s16 + $0xf4] sm:$0xf]
    %v9923 = vld [vmem:[%s16 + $0xf8] sm:$0xf]
    %v9924 = vld [vmem:[%s16 + $0xfc] sm:$0xf]
    %v9925 = vld [vmem:[#allocation13] sm:$0x1]
    %v9927 = vlaneseq
    %v9928 = vshrl.u32 %v9927, 7
    %v9929 = vsub.s32 0, %v9928
    %v9930 = vrot.slane %v9925, %v9929
    %v9996 = vunpack.c.l.b16 %v9861
    %v9997 = vunpack.c.l.b16 %v9862
    %v9998 = vunpack.c.l.b16 %v9863
    %v9999 = vunpack.c.l.b16 %v9864
    %v10000 = vunpack.c.l.b16 %v9865
    %v10001 = vunpack.c.l.b16 %v9866
    %v10002 = vunpack.c.l.b16 %v9867
    %v10003 = vunpack.c.l.b16 %v9868
    %v10004 = vunpack.c.l.b16 %v9869
    %v10005 = vunpack.c.l.b16 %v9870
    %v10006 = vunpack.c.l.b16 %v9871
    %v10007 = vunpack.c.l.b16 %v9872
    %v10008 = vunpack.c.l.b16 %v9873
    %v10009 = vunpack.c.l.b16 %v9874
    %v10010 = vunpack.c.l.b16 %v9875
    %v10011 = vunpack.c.l.b16 %v9876
    %v10012 = vunpack.c.l.b16 %v9877
    %v10013 = vunpack.c.l.b16 %v9878
    %v10014 = vunpack.c.l.b16 %v9879
    %v10015 = vunpack.c.l.b16 %v9880
    %v10016 = vunpack.c.l.b16 %v9881
    %v10017 = vunpack.c.l.b16 %v9882
    %v10018 = vunpack.c.l.b16 %v9883
    %v10019 = vunpack.c.l.b16 %v9884
    %v10020 = vunpack.c.l.b16 %v9885
    %v10021 = vunpack.c.l.b16 %v9886
    %v10022 = vunpack.c.l.b16 %v9887
    %v10023 = vunpack.c.l.b16 %v9888
    %v10024 = vunpack.c.l.b16 %v9889
    %v10025 = vunpack.c.l.b16 %v9890
    %v10026 = vunpack.c.l.b16 %v9891
    %v10027 = vunpack.c.l.b16 %v9892
    %v10028 = vunpack.c.l.b16 %v9893
    %v10029 = vunpack.c.l.b16 %v9894
    %v10030 = vunpack.c.l.b16 %v9895
    %v10031 = vunpack.c.l.b16 %v9896
    %v10032 = vunpack.c.l.b16 %v9897
    %v10033 = vunpack.c.l.b16 %v9898
    %v10034 = vunpack.c.l.b16 %v9899
    %v10035 = vunpack.c.l.b16 %v9900
    %v10036 = vunpack.c.l.b16 %v9901
    %v10037 = vunpack.c.l.b16 %v9902
    %v10038 = vunpack.c.l.b16 %v9903
    %v10039 = vunpack.c.l.b16 %v9904
    %v10040 = vunpack.c.l.b16 %v9905
    %v10041 = vunpack.c.l.b16 %v9906
    %v10042 = vunpack.c.l.b16 %v9907
    %v10043 = vunpack.c.l.b16 %v9908
    %v10044 = vunpack.c.l.b16 %v9909
    %v10045 = vunpack.c.l.b16 %v9910
    %v10046 = vunpack.c.l.b16 %v9911
    %v10047 = vunpack.c.l.b16 %v9912
    %v10048 = vunpack.c.l.b16 %v9913
    %v10049 = vunpack.c.l.b16 %v9914
    %v10050 = vunpack.c.l.b16 %v9915
    %v10051 = vunpack.c.l.b16 %v9916
    %v10052 = vunpack.c.l.b16 %v9917
    %v10053 = vunpack.c.l.b16 %v9918
    %v10054 = vunpack.c.l.b16 %v9919
    %v10055 = vunpack.c.l.b16 %v9920
    %v10056 = vunpack.c.l.b16 %v9921
    %v10057 = vunpack.c.l.b16 %v9922
    %v10058 = vunpack.c.l.b16 %v9923
    %v10059 = vunpack.c.l.b16 %v9924
    %v10060 = vpack.c.b16 %v9997, %v9996
    %v10061 = vpack.c.b16 %v9999, %v9998
    %v10062 = vpack.c.b16 %v10001, %v10000
    %v10063 = vpack.c.b16 %v10003, %v10002
    %v10064 = vpack.c.b16 %v10005, %v10004
    %v10065 = vpack.c.b16 %v10007, %v10006
    %v10066 = vpack.c.b16 %v10009, %v10008
    %v10067 = vpack.c.b16 %v10011, %v10010
    %v10068 = vpack.c.b16 %v10013, %v10012
    %v10069 = vpack.c.b16 %v10015, %v10014
    %v10070 = vpack.c.b16 %v10017, %v10016
    %v10071 = vpack.c.b16 %v10019, %v10018
    %v10072 = vpack.c.b16 %v10021, %v10020
    %v10073 = vpack.c.b16 %v10023, %v10022
    %v10074 = vpack.c.b16 %v10025, %v10024
    %v10075 = vpack.c.b16 %v10027, %v10026
    %v10076 = vpack.c.b16 %v10029, %v10028
    %v10077 = vpack.c.b16 %v10031, %v10030
    %v10078 = vpack.c.b16 %v10033, %v10032
    %v10079 = vpack.c.b16 %v10035, %v10034
    %v10080 = vpack.c.b16 %v10037, %v10036
    %v10081 = vpack.c.b16 %v10039, %v10038
    %v10082 = vpack.c.b16 %v10041, %v10040
    %v10083 = vpack.c.b16 %v10043, %v10042
    %v10084 = vpack.c.b16 %v10045, %v10044
    %v10085 = vpack.c.b16 %v10047, %v10046
    %v10086 = vpack.c.b16 %v10049, %v10048
    %v10087 = vpack.c.b16 %v10051, %v10050
    %v10088 = vpack.c.b16 %v10053, %v10052
    %v10089 = vpack.c.b16 %v10055, %v10054
    %v10090 = vpack.c.b16 %v10057, %v10056
    %v10091 = vpack.c.b16 %v10059, %v10058
    %10124 = vmatprep.subr.bf16.mxu0 0
    %10125 = vmatpush1.bf16.msra.mxu0 %v10060
    %10126 = vmatprep.subr.bf16.mxu0 0
    %10127 = vmatpush1.bf16.msra.mxu0 %v10061
    %10128 = vmatprep.subr.bf16.mxu0 0
    %10129 = vmatpush1.bf16.msra.mxu0 %v10062
    %10130 = vmatprep.subr.bf16.mxu0 0
    %10131 = vmatpush1.bf16.msra.mxu0 %v10063
    %10132 = vmatprep.subr.bf16.mxu0 0
    %10133 = vmatpush1.bf16.msra.mxu0 %v10064
    %10134 = vmatprep.subr.bf16.mxu0 0
    %10135 = vmatpush1.bf16.msra.mxu0 %v10065
    %10136 = vmatprep.subr.bf16.mxu0 0
    %10137 = vmatpush1.bf16.msra.mxu0 %v10066
    %10138 = vmatprep.subr.bf16.mxu0 0
    %10139 = vmatpush1.bf16.msra.mxu0 %v10067
    %10140 = vmatprep.subr.bf16.mxu0 0
    %10141 = vmatpush1.bf16.msra.mxu0 %v10068
    %10142 = vmatprep.subr.bf16.mxu0 0
    %10143 = vmatpush1.bf16.msra.mxu0 %v10069
    %10144 = vmatprep.subr.bf16.mxu0 0
    %10145 = vmatpush1.bf16.msra.mxu0 %v10070
    %10146 = vmatprep.subr.bf16.mxu0 0
    %10147 = vmatpush1.bf16.msra.mxu0 %v10071
    %10148 = vmatprep.subr.bf16.mxu0 0
    %10149 = vmatpush1.bf16.msra.mxu0 %v10072
    %10150 = vmatprep.subr.bf16.mxu0 0
    %10151 = vmatpush1.bf16.msra.mxu0 %v10073
    %10152 = vmatprep.subr.bf16.mxu0 0
    %10153 = vmatpush1.bf16.msra.mxu0 %v10074
    %10154 = vmatprep.subr.bf16.mxu0 0
    %10155 = vmatpush1.bf16.msra.mxu0 %v10075
    %10156 = vmatprep.mubr.bf16.mxu0 %v9858
    %10157 = vmatmul.mubr.bf16.gmra.mrb[0].mxu0 %v9857
    %v10158 = vpop.f32.mrb[0].mxu0
    %v10159 = vadd.f32 %v9930, %v10158
    %v10160 = vpop.f32.mrb[0].mxu0
    %v10161 = vpop.f32.mrb[0].mxu0
    %v10162 = vpop.f32.mrb[0].mxu0
    %10163 = vdwg.mxu0
    %10164 = vmatprep.subr.bf16.mxu0 0
    %10165 = vmatpush1.bf16.msra.mxu0 %v10076
    %10166 = vmatprep.subr.bf16.mxu0 0
    %10167 = vmatpush1.bf16.msra.mxu0 %v10077
    %10168 = vmatprep.subr.bf16.mxu0 0
    %10169 = vmatpush1.bf16.msra.mxu0 %v10078
    %10170 = vmatprep.subr.bf16.mxu0 0
    %10171 = vmatpush1.bf16.msra.mxu0 %v10079
    %10172 = vmatprep.subr.bf16.mxu0 0
    %10173 = vmatpush1.bf16.msra.mxu0 %v10080
    %10174 = vmatprep.subr.bf16.mxu0 0
    %10175 = vmatpush1.bf16.msra.mxu0 %v10081
    %10176 = vmatprep.subr.bf16.mxu0 0
    %10177 = vmatpush1.bf16.msra.mxu0 %v10082
    %10178 = vmatprep.subr.bf16.mxu0 0
    %10179 = vmatpush1.bf16.msra.mxu0 %v10083
    %10180 = vmatprep.subr.bf16.mxu0 0
    %10181 = vmatpush1.bf16.msra.mxu0 %v10084
    %10182 = vmatprep.subr.bf16.mxu0 0
    %10183 = vmatpush1.bf16.msra.mxu0 %v10085
    %10184 = vmatprep.subr.bf16.mxu0 0
    %10185 = vmatpush1.bf16.msra.mxu0 %v10086
    %10186 = vmatprep.subr.bf16.mxu0 0
    %10187 = vmatpush1.bf16.msra.mxu0 %v10087
    %10188 = vmatprep.subr.bf16.mxu0 0
    %10189 = vmatpush1.bf16.msra.mxu0 %v10088
    %10190 = vmatprep.subr.bf16.mxu0 0
    %10191 = vmatpush1.bf16.msra.mxu0 %v10089
    %10192 = vmatprep.subr.bf16.mxu0 0
    %10193 = vmatpush1.bf16.msra.mxu0 %v10090
    %10194 = vmatprep.subr.bf16.mxu0 0
    %10195 = vmatpush1.bf16.msra.mxu0 %v10091
    %10196 = vmatprep.mubr.bf16.mxu0 %v9860
    %10197 = vmatmul.mubr.bf16.gmra.mrb[0].mxu0 %v9859
    %v10198 = vpop.f32.mrb[0].mxu0
    %v10199 = vadd.f32 %v10159, %v10198
    %v10200 = vpop.f32.mrb[0].mxu0
    %v10201 = vpop.f32.mrb[0].mxu0
    %v10202 = vpop.f32.mrb[0].mxu0
    %10203 = vdwg.mxu0
    %vm10204 = vcmask 74752
    %10205 = vst.msk [vmem:[#allocation15] sm:$0x3] %vm10204, %v10199
    // Predicated region
    $region74: #{fashion_mnist_cnn_forward.1} parent=1 // pred_check
      _
    $region75: #{fashion_mnist_cnn_forward.1} parent=1 // pred_check_branch
      %10207 = sbr.rel (0) target = $region77
    $region76: #{fashion_mnist_cnn_forward.1} parent=1 // pred_region
      %s10209 = ssub.s32 32, 32
      %10210 = vsyncadd [#allocation9], %s10209
      %s10212 = sshll.u32 [#allocation15], 4
      %s10213 = int_to_ptr.vmem [resolvable:$true] %s10212
      %10215 = dma.vmem_to_hbm [thread:$0]  %s10213, 32, %s18, [#allocation9]
    $region77: #{fashion_mnist_cnn_forward.1} parent=1 // pred_fallthru
      _
    // Predicated region
    $region78: #{fashion_mnist_cnn_forward.1} parent=1 // pred_check
      _
    $region79: #{fashion_mnist_cnn_forward.1} parent=1 // pred_check_branch
      %10217 = sbr.rel (0) target = $region81
    $region80: #{fashion_mnist_cnn_forward.1} parent=1 // pred_region
      %10218 = dma.done [#allocation9], 32
    $region81: #{fashion_mnist_cnn_forward.1} parent=1 // pred_fallthru
      _
    %10219 = vsyncpa [#allocation8], 1
    %10220 = vsyncpa [#allocation11], 1
    %10221 = vsyncpa [#allocation14], 1
    %10222 = vsyncpa [#allocation9], 1
  %10223 = vsyncmov [#allocation6]
  %s10224 = vpop.sfrf %10223
  %p10225 = scmp.eq.s32.totalorder %s10224, 0
  %p10226 = pneg %p10225
  %10228 = shalt.err (%p10226)
  %s10229 = scalar_lea.sflag [#allocation6], 1
  %10230 = vsyncmov %s10229
  %s10231 = vpop.sfrf %10230
  %p10232 = scmp.eq.s32.totalorder %s10231, 0
  %p10233 = pneg %p10232
  %10235 = shalt.err (%p10233)
  %s10236 = scalar_lea.sflag [#allocation6], 2
  %10237 = vsyncmov %s10236
  %s10238 = vpop.sfrf %10237
  %p10239 = scmp.eq.s32.totalorder %s10238, 0
  %p10240 = pneg %p10239
  %10242 = shalt.err (%p10240)
  %s10243 = scalar_lea.sflag [#allocation6], 3
  %10244 = vsyncmov %s10243
  %s10245 = vpop.sfrf %10244
  %p10246 = scmp.eq.s32.totalorder %s10245, 0
  %p10247 = pneg %p10246
  %10249 = shalt.err (%p10247)

</llo_original>
